<compile_context>
chip_gen: v7x
topology: tpu7x:2x2x1
jax: 0.10.0
libtpu: 0.0.40
codegen_flags: <defaults>
</compile_context>

<pallas_src>
import functools

import jax
import jax.numpy as jnp
from jax import lax
from jax.experimental import pallas as pl
from jax.experimental.pallas import tpu as pltpu

K0 = 5          # conv0 kernel size
PAD0 = 2        # conv0 padding
K1 = 7          # conv_spatial kernel size
DIL = 3         # conv_spatial dilation
PAD1 = 9        # conv_spatial padding
HALO = PAD0 + PAD1   # 11: input-row halo a band needs on each side
XL = 8          # left  column pad of the HBM image (>= PAD0)
XR = 8          # right column pad beyond Wp       (>= PAD0)
LPAD1 = 16      # left  zero strip in conv_spatial scratch (>= PAD1, mult of 8)
RPAD1 = 16      # right zero strip in conv_spatial scratch (>= PAD1, mult of 8)


def _round_up(n, m):
    return ((n + m - 1) // m) * m


def _make_kernel(*, band_h, H, W, Wp, Cp, cdt):
    """Builds the per-(batch, band) kernel with static sizes closed over."""
    E = band_h + 2 * PAD1        # conv0 output rows needed by conv_spatial
    xrows = band_h + 2 * HALO    # x rows needed per band (incl. halo)

    def kernel(x_hbm, w0_ref, b0_ref, w1_ref, w2_ref, b2_ref, o_ref,
               xbuf, pad1, sem):
        b = pl.program_id(0)
        r = pl.program_id(1)

        # ---- fetch this band's x rows (with halo) from HBM ----
        cp = pltpu.make_async_copy(
            x_hbm.at[b, pl.ds(r * band_h, xrows)], xbuf, sem.at[0])
        cp.start()

        # While the DMA is in flight, (re)zero the thin column halo strips of
        # the conv_spatial scratch.  Done every step -> both grid axes can be
        # "parallel" (megacore-safe); the interior is fully overwritten below.
        pad1[:, pl.ds(0, LPAD1), :] = jnp.zeros((E, LPAD1, Cp), cdt)
        pad1[:, pl.ds(LPAD1 + Wp, RPAD1), :] = jnp.zeros((E, RPAD1, Cp), cdt)

        cp.wait()

        # ---- depthwise 5x5 conv, pad 2, on the extended row range ----
        # acc0 local row a <-> image row r*band_h - PAD1 + a.
        # Taps are sliced straight from the VMEM ref (no shifted copies);
        # out-of-image x is zero in HBM, matching conv0's zero padding.
        acc0 = None
        for ky in range(K0):
            for kx in range(K0):
                tap = xbuf[pl.ds(ky, E), pl.ds(XL - PAD0 + kx, Wp), :]
                term = (tap * w0_ref[ky, kx, :]).astype(jnp.float32)
                acc0 = term if acc0 is None else acc0 + term
        acc0 = acc0 + b0_ref[0, :]

        # conv_spatial's zero padding is w.r.t. the real H x W image, so zero
        # every acc0 element that falls outside it (halo rows / padded cols).
        g0 = r * band_h - PAD1
        row_ids = g0 + lax.broadcasted_iota(jnp.int32, (E, Wp, 1), 0)
        col_ids = lax.broadcasted_iota(jnp.int32, (E, Wp, 1), 1)
        inside = (row_ids >= 0) & (row_ids < H) & (col_ids < W)
        acc0 = jnp.where(inside, acc0, 0.0)

        pad1[:, pl.ds(LPAD1, Wp), :] = acc0.astype(cdt)

        # ---- depthwise 7x7 conv, dilation 3, pad 9 ----
        acc1 = None
        for ky in range(K1):
            for kx in range(K1):
                tap = pad1[pl.ds(ky * DIL, band_h),
                           pl.ds(LPAD1 - PAD1 + kx * DIL, Wp), :]
                term = (tap * w1_ref[ky, kx, :]).astype(jnp.float32)
                acc1 = term if acc1 is None else acc1 + term

        # ---- pointwise 1x1 conv on the MXU (b1 is pre-folded into b2) ----
        attn = jnp.dot(acc1.astype(cdt).reshape(band_h * Wp, Cp), w2_ref[...],
                       preferred_element_type=jnp.float32)
        attn = attn.reshape(band_h, Wp, Cp) + b2_ref[0, :]

        # ---- gate: re-read x from VMEM instead of keeping it live ----
        xc = xbuf[pl.ds(HALO, band_h), pl.ds(XL, Wp), :]
        o_ref[...] = (xc.astype(jnp.float32) * attn).astype(o_ref.dtype)

    return kernel


def lka_forward(x_nchw, params, *, band_h=None, compute_dtype=jnp.float32,
                vmem_limit_bytes=48 * 1024 * 1024):
    """x_nchw: (B, C, H, W) float32. params: (w0, b0, w1, b1, w2, b2).

    compute_dtype=jnp.bfloat16 enables the fast depthwise/MXU path
    (f32 accumulation); jnp.float32 matches PyTorch f32 numerics closely.
    vmem_limit_bytes: keep <= ~48 MiB for v7x (64 MiB physical); v5e/v6e
    (128 MiB) can raise it and use bigger bands.
    """
    w0, b0, w1, b1, w2, b2 = params
    B, C, H, W = x_nchw.shape
    cdt = compute_dtype

    Cp = _round_up(max(C, 128), 128)       # lane-dense channels
    Wp = _round_up(W, 16)                  # free (band_h*Wp, Cp) reshape
    if band_h is None:
        band_h = min(32, _round_up(H, 8))
    NB = pl.cdiv(H, band_h)
    Hp = NB * band_h

    # NHWC, zero-padded: 11-row halo top/bottom, >=2-col halo left/right,
    # channels padded to a multiple of 128.
    x = jnp.transpose(x_nchw, (0, 2, 3, 1)).astype(cdt)
    x = jnp.pad(x, ((0, 0),
                    (HALO, HALO + (Hp - H)),
                    (XL, (Wp - W) + XR),
                    (0, Cp - C)))

    pc = Cp - C
    w0p = jnp.pad(w0, ((0, 0), (0, 0), (0, pc))).astype(cdt)
    w1p = jnp.pad(w1, ((0, 0), (0, 0), (0, pc))).astype(cdt)
    w2p = jnp.pad(w2, ((0, pc), (0, pc))).astype(cdt)
    b0p = jnp.pad(b0, ((0, 0), (0, pc))).astype(jnp.float32)
    # Fold conv_spatial's bias through the 1x1 conv: (a + b1)@w2 + b2.
    b2e = (jnp.dot(b1.astype(jnp.float32), w2.astype(jnp.float32))
           + b2.astype(jnp.float32))
    b2e = jnp.pad(b2e, ((0, 0), (0, pc)))

    kernel = _make_kernel(band_h=band_h, H=H, W=W, Wp=Wp, Cp=Cp, cdt=cdt)

    E = band_h + 2 * PAD1
    xrows = band_h + 2 * HALO
    Wtot = XL + Wp + XR

    out = pl.pallas_call(
        kernel,
        out_shape=jax.ShapeDtypeStruct((B, Hp, Wp, Cp), jnp.float32),
        grid_spec=pltpu.PrefetchScalarGridSpec(
            num_scalar_prefetch=0,
            grid=(B, NB),
            in_specs=[
                pl.BlockSpec(memory_space=pl.ANY),                    # x (HBM)
                pl.BlockSpec((K0, K0, Cp), lambda b, r: (0, 0, 0)),   # w0
                pl.BlockSpec((1, Cp), lambda b, r: (0, 0)),           # b0
                pl.BlockSpec((K1, K1, Cp), lambda b, r: (0, 0, 0)),   # w1
                pl.BlockSpec((Cp, Cp), lambda b, r: (0, 0)),          # w2
                pl.BlockSpec((1, Cp), lambda b, r: (0, 0)),           # b2_eff
            ],
            out_specs=pl.BlockSpec((pl.Squeezed(), band_h, Wp, Cp),
                                   lambda b, r: (b, r, 0, 0)),
            scratch_shapes=[
                pltpu.VMEM((xrows, Wtot, Cp), cdt),                 # x band
                pltpu.VMEM((E, LPAD1 + Wp + RPAD1, Cp), cdt),       # conv0 out
                pltpu.SemaphoreType.DMA((1,)),
            ],
        ),
        compiler_params=pltpu.CompilerParams(
            dimension_semantics=("parallel", "parallel"),
            vmem_limit_bytes=vmem_limit_bytes,
        ),
    )(x, w0p, b0p, w1p, w2p, b2e)

    out = out[:, :H, :W, :C]
    return jnp.transpose(out, (0, 3, 1, 2))  # back to NCHW


def lka_reference(x_nchw, params):
    """Plain-JAX f32 reference (NHWC convs) for validation."""
    w0, b0, w1, b1, w2, b2 = params
    x = jnp.transpose(x_nchw, (0, 2, 3, 1)).astype(jnp.float32)
    C = x.shape[-1]
    dn = ("NHWC", "HWIO", "NHWC")
    hp = lax.Precision.HIGHEST
    a = lax.conv_general_dilated(
        x, w0.reshape(K0, K0, 1, C), (1, 1), [(PAD0, PAD0), (PAD0, PAD0)],
        dimension_numbers=dn, feature_group_count=C,
        precision=hp) + b0.reshape(1, 1, 1, C)
    a = lax.conv_general_dilated(
        a, w1.reshape(K1, K1, 1, C), (1, 1), [(PAD1, PAD1), (PAD1, PAD1)],
        rhs_dilation=(DIL, DIL), dimension_numbers=dn,
        feature_group_count=C, precision=hp) + b1.reshape(1, 1, 1, C)
    a = lax.conv_general_dilated(
        a, w2.reshape(1, 1, C, C), (1, 1), [(0, 0), (0, 0)],
        dimension_numbers=dn, precision=hp) + b2.reshape(1, 1, 1, C)
    out = x * a
    return jnp.transpose(out, (0, 3, 1, 2))


def init_params(key, dim):
    """Deterministic synthetic weights matching LKA(dim) shapes.

    PyTorch shapes: conv0.w (dim,1,5,5), conv_spatial.w (dim,1,7,7),
    conv1.w (dim,dim,1,1).  Stored here as (kH,kW,C), (kH,kW,C), (Cin,Cout).
    """
    ks = jax.random.split(key, 6)
    w0 = jax.random.normal(ks[0], (K0, K0, dim), jnp.float32) * 0.1
    b0 = jax.random.normal(ks[1], (1, dim), jnp.float32) * 0.1
    w1 = jax.random.normal(ks[2], (K1, K1, dim), jnp.float32) * 0.05
    b1 = jax.random.normal(ks[3], (1, dim), jnp.float32) * 0.1
    w2 = jax.random.normal(ks[4], (dim, dim), jnp.float32) * 0.3
    b2 = jax.random.normal(ks[5], (1, dim), jnp.float32) * 0.1
    return (w0, b0, w1, b1, w2, b2)


if __name__ == "__main__":
    B, C, H, W = 2, 4, 16, 16
    key = jax.random.PRNGKey(0)
    kx_, kp_ = jax.random.split(key)
    x = jax.random.normal(kx_, (B, C, H, W), jnp.float32)
    params = init_params(kp_, C)

    ref = jax.block_until_ready(lka_reference(x, params))

    # f32 path (closest to PyTorch numerics), 2 row bands of 8 rows each.
    out_f32 = jax.block_until_ready(
        jax.jit(functools.partial(lka_forward, band_h=8,
                                  compute_dtype=jnp.float32))(x, params))
    assert out_f32.shape == (B, C, H, W)
    err = jnp.max(jnp.abs(out_f32 - ref))
    assert jnp.allclose(out_f32, ref, atol=5e-3, rtol=5e-3), (
        f"f32 mismatch: max abs err {err}")

    # bf16 fast path (bf16 taps + bf16 MXU, f32 accumulation): looser tol.
    out_bf16 = jax.block_until_ready(
        jax.jit(functools.partial(lka_forward, band_h=8,
                                  compute_dtype=jnp.bfloat16))(x, params))
    errb = jnp.max(jnp.abs(out_bf16 - ref))
    assert jnp.allclose(out_bf16, ref, atol=1e-1, rtol=1e-1), (
        f"bf16 mismatch: max abs err {errb}")

    # Odd shape: exercises row/column masking and W/H padding in the bander.
    B2, C2, H2, W2 = 1, 4, 13, 12
    x2 = jax.random.normal(jax.random.PRNGKey(1), (B2, C2, H2, W2),
                           jnp.float32)
    p2 = init_params(jax.random.PRNGKey(2), C2)
    ref2 = jax.block_until_ready(lka_reference(x2, p2))
    out2 = jax.block_until_ready(
        jax.jit(functools.partial(lka_forward, band_h=8,
                                  compute_dtype=jnp.float32))(x2, p2))
    assert out2.shape == (B2, C2, H2, W2)
    err2 = jnp.max(jnp.abs(out2 - ref2))
    assert jnp.allclose(out2, ref2, atol=5e-3, rtol=5e-3), (
        f"odd-shape mismatch: max abs err {err2}")

    print("KERNEL_OK")
</pallas_src>

<mosaic_0001>
module attributes {stable_mosaic.version = 11 : i64} {
  func.func @kernel(%arg0: i32, %arg1: i32, %arg2: memref<2x38x32x128xf32, #tpu.memory_space<any>>, %arg3: memref<5x5x128xf32, #tpu.memory_space<vmem>>, %arg4: memref<1x128xf32, #tpu.memory_space<vmem>>, %arg5: memref<7x7x128xf32, #tpu.memory_space<vmem>>, %arg6: memref<128x128xf32, #tpu.memory_space<vmem>>, %arg7: memref<1x128xf32, #tpu.memory_space<vmem>>, %arg8: memref<1x8x16x128xf32, #tpu.memory_space<vmem>>, %arg9: memref<30x32x128xf32, #tpu.memory_space<vmem>>, %arg10: memref<26x48x128xf32, #tpu.memory_space<vmem>>, %arg11: memref<1x!tpu.dma_semaphore, #tpu.memory_space<semaphore_mem>>) attributes {dimension_semantics = [#tpu.dimension_semantics<parallel>, #tpu.dimension_semantics<parallel>], iteration_bounds = array<i64: 2, 2>, scalar_prefetch = 0 : i64, scratch_operands = 3 : i64, tpu.core_type = #tpu.core_type<tc>, window_params = [{}, {pipeline_mode = #tpu.pipeline_mode<synchronous>, transform_indices = @transform_1, window_bounds = array<i64: 5, 5, 128>}, {pipeline_mode = #tpu.pipeline_mode<synchronous>, transform_indices = @transform_2, window_bounds = array<i64: 1, 128>}, {pipeline_mode = #tpu.pipeline_mode<synchronous>, transform_indices = @transform_3, window_bounds = array<i64: 7, 7, 128>}, {pipeline_mode = #tpu.pipeline_mode<synchronous>, transform_indices = @transform_4, window_bounds = array<i64: 128, 128>}, {pipeline_mode = #tpu.pipeline_mode<synchronous>, transform_indices = @transform_5, window_bounds = array<i64: 1, 128>}, {transform_indices = @transform_6, window_bounds = array<i64: 1, 8, 16, 128>}]} {
    %c8_i32 = arith.constant 8 : i32
    %0 = arith.muli %arg1, %c8_i32 : i32
    %c0_i32 = arith.constant 0 : i32
    %c0_i32_0 = arith.constant 0 : i32
    %c0_i32_1 = arith.constant 0 : i32
    %1 = tpu.memref_slice %arg2[%arg0, %0, %c0_i32_0, %c0_i32_1] : memref<2x38x32x128xf32, #tpu.memory_space<any>> -> memref<1x30x32x128xf32, #tpu.memory_space<any>>
    %2 = tpu.memref_squeeze %1 : memref<1x30x32x128xf32, #tpu.memory_space<any>> -> memref<30x32x128xf32, #tpu.memory_space<any>>
    %3 = tpu.memref_slice %arg11[%c0_i32] : memref<1x!tpu.dma_semaphore, #tpu.memory_space<semaphore_mem>> -> memref<1x!tpu.dma_semaphore, #tpu.memory_space<semaphore_mem>>
    %4 = tpu.memref_squeeze %3 : memref<1x!tpu.dma_semaphore, #tpu.memory_space<semaphore_mem>> -> memref<!tpu.dma_semaphore, #tpu.memory_space<semaphore_mem>>
    tpu.enqueue_dma source(%2 : memref<30x32x128xf32, #tpu.memory_space<any>>) target(%arg9 : memref<30x32x128xf32, #tpu.memory_space<vmem>>) target_semaphore(%4 : memref<!tpu.dma_semaphore, #tpu.memory_space<semaphore_mem>>)
    %cst = arith.constant 0.000000e+00 : f32
    %5 = vector.broadcast %cst : f32 to vector<26x16x128xf32>
    %c0 = arith.constant 0 : index
    %c0_2 = arith.constant 0 : index
    %c0_3 = arith.constant 0 : index
    %6 = vector.load %arg10[%c0, %c0_2, %c0_3] : memref<26x48x128xf32, #tpu.memory_space<vmem>>, vector<26x16x128xf32>
    tpu.vector_store %arg10[%c0, %c0_2, %c0_3], %5 {strides = array<i32>} : memref<26x48x128xf32, #tpu.memory_space<vmem>>, vector<26x16x128xf32>,
    %cst_4 = arith.constant 0.000000e+00 : f32
    %7 = vector.broadcast %cst_4 : f32 to vector<26x16x128xf32>
    %c0_5 = arith.constant 0 : index
    %c32 = arith.constant 32 : index
    %c0_6 = arith.constant 0 : index
    %8 = vector.load %arg10[%c0_5, %c32, %c0_6] : memref<26x48x128xf32, #tpu.memory_space<vmem>>, vector<26x16x128xf32>
    tpu.vector_store %arg10[%c0_5, %c32, %c0_6], %7 {strides = array<i32>} : memref<26x48x128xf32, #tpu.memory_space<vmem>>, vector<26x16x128xf32>,
    %c0_i32_7 = arith.constant 0 : i32
    %c0_i32_8 = arith.constant 0 : i32
    %c0_i32_9 = arith.constant 0 : i32
    %9 = tpu.memref_slice %arg2[%arg0, %0, %c0_i32_8, %c0_i32_9] : memref<2x38x32x128xf32, #tpu.memory_space<any>> -> memref<1x30x32x128xf32, #tpu.memory_space<any>>
    %10 = tpu.memref_squeeze %9 : memref<1x30x32x128xf32, #tpu.memory_space<any>> -> memref<30x32x128xf32, #tpu.memory_space<any>>
    %11 = tpu.memref_slice %arg11[%c0_i32_7] : memref<1x!tpu.dma_semaphore, #tpu.memory_space<semaphore_mem>> -> memref<1x!tpu.dma_semaphore, #tpu.memory_space<semaphore_mem>>
    %12 = tpu.memref_squeeze %11 : memref<1x!tpu.dma_semaphore, #tpu.memory_space<semaphore_mem>> -> memref<!tpu.dma_semaphore, #tpu.memory_space<semaphore_mem>>
    tpu.wait_dma2 semaphore(%12 : memref<!tpu.dma_semaphore, #tpu.memory_space<semaphore_mem>>) src(%10 : memref<30x32x128xf32, #tpu.memory_space<any>>) dst(%arg9 : memref<30x32x128xf32, #tpu.memory_space<vmem>>)
    %c0_10 = arith.constant 0 : index
    %c6 = arith.constant 6 : index
    %c0_11 = arith.constant 0 : index
    %13 = vector.load %arg9[%c0_10, %c6, %c0_11] : memref<30x32x128xf32, #tpu.memory_space<vmem>>, vector<26x16x128xf32>
    %c0_12 = arith.constant 0 : index
    %c0_13 = arith.constant 0 : index
    %c0_14 = arith.constant 0 : index
    %14 = vector.load %arg3[%c0_12, %c0_13, %c0_14] : memref<5x5x128xf32, #tpu.memory_space<vmem>>, vector<1x1x128xf32>
    %15 = vector.shape_cast %14 : vector<1x1x128xf32> to vector<128xf32>
    %16 = vector.shape_cast %15 : vector<128xf32> to vector<1x1x128xf32>
    %17 = vector.broadcast %16 : vector<1x1x128xf32> to vector<26x16x128xf32>
    %18 = arith.mulf %13, %17 : vector<26x16x128xf32>
    %c0_15 = arith.constant 0 : index
    %c7 = arith.constant 7 : index
    %c0_16 = arith.constant 0 : index
    %19 = vector.load %arg9[%c0_15, %c7, %c0_16] : memref<30x32x128xf32, #tpu.memory_space<vmem>>, vector<26x16x128xf32>
    %c0_17 = arith.constant 0 : index
    %c1 = arith.constant 1 : index
    %c0_18 = arith.constant 0 : index
    %20 = vector.load %arg3[%c0_17, %c1, %c0_18] : memref<5x5x128xf32, #tpu.memory_space<vmem>>, vector<1x1x128xf32>
    %21 = vector.shape_cast %20 : vector<1x1x128xf32> to vector<128xf32>
    %22 = vector.shape_cast %21 : vector<128xf32> to vector<1x1x128xf32>
    %23 = vector.broadcast %22 : vector<1x1x128xf32> to vector<26x16x128xf32>
    %24 = arith.mulf %19, %23 : vector<26x16x128xf32>
    %25 = arith.addf %18, %24 : vector<26x16x128xf32>
    %c0_19 = arith.constant 0 : index
    %c8 = arith.constant 8 : index
    %c0_20 = arith.constant 0 : index
    %26 = vector.load %arg9[%c0_19, %c8, %c0_20] : memref<30x32x128xf32, #tpu.memory_space<vmem>>, vector<26x16x128xf32>
    %c0_21 = arith.constant 0 : index
    %c2 = arith.constant 2 : index
    %c0_22 = arith.constant 0 : index
    %27 = vector.load %arg3[%c0_21, %c2, %c0_22] : memref<5x5x128xf32, #tpu.memory_space<vmem>>, vector<1x1x128xf32>
    %28 = vector.shape_cast %27 : vector<1x1x128xf32> to vector<128xf32>
    %29 = vector.shape_cast %28 : vector<128xf32> to vector<1x1x128xf32>
    %30 = vector.broadcast %29 : vector<1x1x128xf32> to vector<26x16x128xf32>
    %31 = arith.mulf %26, %30 : vector<26x16x128xf32>
    %32 = arith.addf %25, %31 : vector<26x16x128xf32>
    %c0_23 = arith.constant 0 : index
    %c9 = arith.constant 9 : index
    %c0_24 = arith.constant 0 : index
    %33 = vector.load %arg9[%c0_23, %c9, %c0_24] : memref<30x32x128xf32, #tpu.memory_space<vmem>>, vector<26x16x128xf32>
    %c0_25 = arith.constant 0 : index
    %c3 = arith.constant 3 : index
    %c0_26 = arith.constant 0 : index
    %34 = vector.load %arg3[%c0_25, %c3, %c0_26] : memref<5x5x128xf32, #tpu.memory_space<vmem>>, vector<1x1x128xf32>
    %35 = vector.shape_cast %34 : vector<1x1x128xf32> to vector<128xf32>
    %36 = vector.shape_cast %35 : vector<128xf32> to vector<1x1x128xf32>
    %37 = vector.broadcast %36 : vector<1x1x128xf32> to vector<26x16x128xf32>
    %38 = arith.mulf %33, %37 : vector<26x16x128xf32>
    %39 = arith.addf %32, %38 : vector<26x16x128xf32>
    %c0_27 = arith.constant 0 : index
    %c10 = arith.constant 10 : index
    %c0_28 = arith.constant 0 : index
    %40 = vector.load %arg9[%c0_27, %c10, %c0_28] : memref<30x32x128xf32, #tpu.memory_space<vmem>>, vector<26x16x128xf32>
    %c0_29 = arith.constant 0 : index
    %c4 = arith.constant 4 : index
    %c0_30 = arith.constant 0 : index
    %41 = vector.load %arg3[%c0_29, %c4, %c0_30] : memref<5x5x128xf32, #tpu.memory_space<vmem>>, vector<1x1x128xf32>
    %42 = vector.shape_cast %41 : vector<1x1x128xf32> to vector<128xf32>
    %43 = vector.shape_cast %42 : vector<128xf32> to vector<1x1x128xf32>
    %44 = vector.broadcast %43 : vector<1x1x128xf32> to vector<26x16x128xf32>
    %45 = arith.mulf %40, %44 : vector<26x16x128xf32>
    %46 = arith.addf %39, %45 : vector<26x16x128xf32>
    %c1_31 = arith.constant 1 : index
    %c6_32 = arith.constant 6 : index
    %c0_33 = arith.constant 0 : index
    %47 = vector.load %arg9[%c1_31, %c6_32, %c0_33] : memref<30x32x128xf32, #tpu.memory_space<vmem>>, vector<26x16x128xf32>
    %c1_34 = arith.constant 1 : index
    %c0_35 = arith.constant 0 : index
    %c0_36 = arith.constant 0 : index
    %48 = vector.load %arg3[%c1_34, %c0_35, %c0_36] : memref<5x5x128xf32, #tpu.memory_space<vmem>>, vector<1x1x128xf32>
    %49 = vector.shape_cast %48 : vector<1x1x128xf32> to vector<128xf32>
    %50 = vector.shape_cast %49 : vector<128xf32> to vector<1x1x128xf32>
    %51 = vector.broadcast %50 : vector<1x1x128xf32> to vector<26x16x128xf32>
    %52 = arith.mulf %47, %51 : vector<26x16x128xf32>
    %53 = arith.addf %46, %52 : vector<26x16x128xf32>
    %c1_37 = arith.constant 1 : index
    %c7_38 = arith.constant 7 : index
    %c0_39 = arith.constant 0 : index
    %54 = vector.load %arg9[%c1_37, %c7_38, %c0_39] : memref<30x32x128xf32, #tpu.memory_space<vmem>>, vector<26x16x128xf32>
    %c1_40 = arith.constant 1 : index
    %c1_41 = arith.constant 1 : index
    %c0_42 = arith.constant 0 : index
    %55 = vector.load %arg3[%c1_40, %c1_41, %c0_42] : memref<5x5x128xf32, #tpu.memory_space<vmem>>, vector<1x1x128xf32>
    %56 = vector.shape_cast %55 : vector<1x1x128xf32> to vector<128xf32>
    %57 = vector.shape_cast %56 : vector<128xf32> to vector<1x1x128xf32>
    %58 = vector.broadcast %57 : vector<1x1x128xf32> to vector<26x16x128xf32>
    %59 = arith.mulf %54, %58 : vector<26x16x128xf32>
    %60 = arith.addf %53, %59 : vector<26x16x128xf32>
    %c1_43 = arith.constant 1 : index
    %c8_44 = arith.constant 8 : index
    %c0_45 = arith.constant 0 : index
    %61 = vector.load %arg9[%c1_43, %c8_44, %c0_45] : memref<30x32x128xf32, #tpu.memory_space<vmem>>, vector<26x16x128xf32>
    %c1_46 = arith.constant 1 : index
    %c2_47 = arith.constant 2 : index
    %c0_48 = arith.constant 0 : index
    %62 = vector.load %arg3[%c1_46, %c2_47, %c0_48] : memref<5x5x128xf32, #tpu.memory_space<vmem>>, vector<1x1x128xf32>
    %63 = vector.shape_cast %62 : vector<1x1x128xf32> to vector<128xf32>
    %64 = vector.shape_cast %63 : vector<128xf32> to vector<1x1x128xf32>
    %65 = vector.broadcast %64 : vector<1x1x128xf32> to vector<26x16x128xf32>
    %66 = arith.mulf %61, %65 : vector<26x16x128xf32>
    %67 = arith.addf %60, %66 : vector<26x16x128xf32>
    %c1_49 = arith.constant 1 : index
    %c9_50 = arith.constant 9 : index
    %c0_51 = arith.constant 0 : index
    %68 = vector.load %arg9[%c1_49, %c9_50, %c0_51] : memref<30x32x128xf32, #tpu.memory_space<vmem>>, vector<26x16x128xf32>
    %c1_52 = arith.constant 1 : index
    %c3_53 = arith.constant 3 : index
    %c0_54 = arith.constant 0 : index
    %69 = vector.load %arg3[%c1_52, %c3_53, %c0_54] : memref<5x5x128xf32, #tpu.memory_space<vmem>>, vector<1x1x128xf32>
    %70 = vector.shape_cast %69 : vector<1x1x128xf32> to vector<128xf32>
    %71 = vector.shape_cast %70 : vector<128xf32> to vector<1x1x128xf32>
    %72 = vector.broadcast %71 : vector<1x1x128xf32> to vector<26x16x128xf32>
    %73 = arith.mulf %68, %72 : vector<26x16x128xf32>
    %74 = arith.addf %67, %73 : vector<26x16x128xf32>
    %c1_55 = arith.constant 1 : index
    %c10_56 = arith.constant 10 : index
    %c0_57 = arith.constant 0 : index
    %75 = vector.load %arg9[%c1_55, %c10_56, %c0_57] : memref<30x32x128xf32, #tpu.memory_space<vmem>>, vector<26x16x128xf32>
    %c1_58 = arith.constant 1 : index
    %c4_59 = arith.constant 4 : index
    %c0_60 = arith.constant 0 : index
    %76 = vector.load %arg3[%c1_58, %c4_59, %c0_60] : memref<5x5x128xf32, #tpu.memory_space<vmem>>, vector<1x1x128xf32>
    %77 = vector.shape_cast %76 : vector<1x1x128xf32> to vector<128xf32>
    %78 = vector.shape_cast %77 : vector<128xf32> to vector<1x1x128xf32>
    %79 = vector.broadcast %78 : vector<1x1x128xf32> to vector<26x16x128xf32>
    %80 = arith.mulf %75, %79 : vector<26x16x128xf32>
    %81 = arith.addf %74, %80 : vector<26x16x128xf32>
    %c2_61 = arith.constant 2 : index
    %c6_62 = arith.constant 6 : index
    %c0_63 = arith.constant 0 : index
    %82 = vector.load %arg9[%c2_61, %c6_62, %c0_63] : memref<30x32x128xf32, #tpu.memory_space<vmem>>, vector<26x16x128xf32>
    %c2_64 = arith.constant 2 : index
    %c0_65 = arith.constant 0 : index
    %c0_66 = arith.constant 0 : index
    %83 = vector.load %arg3[%c2_64, %c0_65, %c0_66] : memref<5x5x128xf32, #tpu.memory_space<vmem>>, vector<1x1x128xf32>
    %84 = vector.shape_cast %83 : vector<1x1x128xf32> to vector<128xf32>
    %85 = vector.shape_cast %84 : vector<128xf32> to vector<1x1x128xf32>
    %86 = vector.broadcast %85 : vector<1x1x128xf32> to vector<26x16x128xf32>
    %87 = arith.mulf %82, %86 : vector<26x16x128xf32>
    %88 = arith.addf %81, %87 : vector<26x16x128xf32>
    %c2_67 = arith.constant 2 : index
    %c7_68 = arith.constant 7 : index
    %c0_69 = arith.constant 0 : index
    %89 = vector.load %arg9[%c2_67, %c7_68, %c0_69] : memref<30x32x128xf32, #tpu.memory_space<vmem>>, vector<26x16x128xf32>
    %c2_70 = arith.constant 2 : index
    %c1_71 = arith.constant 1 : index
    %c0_72 = arith.constant 0 : index
    %90 = vector.load %arg3[%c2_70, %c1_71, %c0_72] : memref<5x5x128xf32, #tpu.memory_space<vmem>>, vector<1x1x128xf32>
    %91 = vector.shape_cast %90 : vector<1x1x128xf32> to vector<128xf32>
    %92 = vector.shape_cast %91 : vector<128xf32> to vector<1x1x128xf32>
    %93 = vector.broadcast %92 : vector<1x1x128xf32> to vector<26x16x128xf32>
    %94 = arith.mulf %89, %93 : vector<26x16x128xf32>
    %95 = arith.addf %88, %94 : vector<26x16x128xf32>
    %c2_73 = arith.constant 2 : index
    %c8_74 = arith.constant 8 : index
    %c0_75 = arith.constant 0 : index
    %96 = vector.load %arg9[%c2_73, %c8_74, %c0_75] : memref<30x32x128xf32, #tpu.memory_space<vmem>>, vector<26x16x128xf32>
    %c2_76 = arith.constant 2 : index
    %c2_77 = arith.constant 2 : index
    %c0_78 = arith.constant 0 : index
    %97 = vector.load %arg3[%c2_76, %c2_77, %c0_78] : memref<5x5x128xf32, #tpu.memory_space<vmem>>, vector<1x1x128xf32>
    %98 = vector.shape_cast %97 : vector<1x1x128xf32> to vector<128xf32>
    %99 = vector.shape_cast %98 : vector<128xf32> to vector<1x1x128xf32>
    %100 = vector.broadcast %99 : vector<1x1x128xf32> to vector<26x16x128xf32>
    %101 = arith.mulf %96, %100 : vector<26x16x128xf32>
    %102 = arith.addf %95, %101 : vector<26x16x128xf32>
    %c2_79 = arith.constant 2 : index
    %c9_80 = arith.constant 9 : index
    %c0_81 = arith.constant 0 : index
    %103 = vector.load %arg9[%c2_79, %c9_80, %c0_81] : memref<30x32x128xf32, #tpu.memory_space<vmem>>, vector<26x16x128xf32>
    %c2_82 = arith.constant 2 : index
    %c3_83 = arith.constant 3 : index
    %c0_84 = arith.constant 0 : index
    %104 = vector.load %arg3[%c2_82, %c3_83, %c0_84] : memref<5x5x128xf32, #tpu.memory_space<vmem>>, vector<1x1x128xf32>
    %105 = vector.shape_cast %104 : vector<1x1x128xf32> to vector<128xf32>
    %106 = vector.shape_cast %105 : vector<128xf32> to vector<1x1x128xf32>
    %107 = vector.broadcast %106 : vector<1x1x128xf32> to vector<26x16x128xf32>
    %108 = arith.mulf %103, %107 : vector<26x16x128xf32>
    %109 = arith.addf %102, %108 : vector<26x16x128xf32>
    %c2_85 = arith.constant 2 : index
    %c10_86 = arith.constant 10 : index
    %c0_87 = arith.constant 0 : index
    %110 = vector.load %arg9[%c2_85, %c10_86, %c0_87] : memref<30x32x128xf32, #tpu.memory_space<vmem>>, vector<26x16x128xf32>
    %c2_88 = arith.constant 2 : index
    %c4_89 = arith.constant 4 : index
    %c0_90 = arith.constant 0 : index
    %111 = vector.load %arg3[%c2_88, %c4_89, %c0_90] : memref<5x5x128xf32, #tpu.memory_space<vmem>>, vector<1x1x128xf32>
    %112 = vector.shape_cast %111 : vector<1x1x128xf32> to vector<128xf32>
    %113 = vector.shape_cast %112 : vector<128xf32> to vector<1x1x128xf32>
    %114 = vector.broadcast %113 : vector<1x1x128xf32> to vector<26x16x128xf32>
    %115 = arith.mulf %110, %114 : vector<26x16x128xf32>
    %116 = arith.addf %109, %115 : vector<26x16x128xf32>
    %c3_91 = arith.constant 3 : index
    %c6_92 = arith.constant 6 : index
    %c0_93 = arith.constant 0 : index
    %117 = vector.load %arg9[%c3_91, %c6_92, %c0_93] : memref<30x32x128xf32, #tpu.memory_space<vmem>>, vector<26x16x128xf32>
    %c3_94 = arith.constant 3 : index
    %c0_95 = arith.constant 0 : index
    %c0_96 = arith.constant 0 : index
    %118 = vector.load %arg3[%c3_94, %c0_95, %c0_96] : memref<5x5x128xf32, #tpu.memory_space<vmem>>, vector<1x1x128xf32>
    %119 = vector.shape_cast %118 : vector<1x1x128xf32> to vector<128xf32>
    %120 = vector.shape_cast %119 : vector<128xf32> to vector<1x1x128xf32>
    %121 = vector.broadcast %120 : vector<1x1x128xf32> to vector<26x16x128xf32>
    %122 = arith.mulf %117, %121 : vector<26x16x128xf32>
    %123 = arith.addf %116, %122 : vector<26x16x128xf32>
    %c3_97 = arith.constant 3 : index
    %c7_98 = arith.constant 7 : index
    %c0_99 = arith.constant 0 : index
    %124 = vector.load %arg9[%c3_97, %c7_98, %c0_99] : memref<30x32x128xf32, #tpu.memory_space<vmem>>, vector<26x16x128xf32>
    %c3_100 = arith.constant 3 : index
    %c1_101 = arith.constant 1 : index
    %c0_102 = arith.constant 0 : index
    %125 = vector.load %arg3[%c3_100, %c1_101, %c0_102] : memref<5x5x128xf32, #tpu.memory_space<vmem>>, vector<1x1x128xf32>
    %126 = vector.shape_cast %125 : vector<1x1x128xf32> to vector<128xf32>
    %127 = vector.shape_cast %126 : vector<128xf32> to vector<1x1x128xf32>
    %128 = vector.broadcast %127 : vector<1x1x128xf32> to vector<26x16x128xf32>
    %129 = arith.mulf %124, %128 : vector<26x16x128xf32>
    %130 = arith.addf %123, %129 : vector<26x16x128xf32>
    %c3_103 = arith.constant 3 : index
    %c8_104 = arith.constant 8 : index
    %c0_105 = arith.constant 0 : index
    %131 = vector.load %arg9[%c3_103, %c8_104, %c0_105] : memref<30x32x128xf32, #tpu.memory_space<vmem>>, vector<26x16x128xf32>
    %c3_106 = arith.constant 3 : index
    %c2_107 = arith.constant 2 : index
    %c0_108 = arith.constant 0 : index
    %132 = vector.load %arg3[%c3_106, %c2_107, %c0_108] : memref<5x5x128xf32, #tpu.memory_space<vmem>>, vector<1x1x128xf32>
    %133 = vector.shape_cast %132 : vector<1x1x128xf32> to vector<128xf32>
    %134 = vector.shape_cast %133 : vector<128xf32> to vector<1x1x128xf32>
    %135 = vector.broadcast %134 : vector<1x1x128xf32> to vector<26x16x128xf32>
    %136 = arith.mulf %131, %135 : vector<26x16x128xf32>
    %137 = arith.addf %130, %136 : vector<26x16x128xf32>
    %c3_109 = arith.constant 3 : index
    %c9_110 = arith.constant 9 : index
    %c0_111 = arith.constant 0 : index
    %138 = vector.load %arg9[%c3_109, %c9_110, %c0_111] : memref<30x32x128xf32, #tpu.memory_space<vmem>>, vector<26x16x128xf32>
    %c3_112 = arith.constant 3 : index
    %c3_113 = arith.constant 3 : index
    %c0_114 = arith.constant 0 : index
    %139 = vector.load %arg3[%c3_112, %c3_113, %c0_114] : memref<5x5x128xf32, #tpu.memory_space<vmem>>, vector<1x1x128xf32>
    %140 = vector.shape_cast %139 : vector<1x1x128xf32> to vector<128xf32>
    %141 = vector.shape_cast %140 : vector<128xf32> to vector<1x1x128xf32>
    %142 = vector.broadcast %141 : vector<1x1x128xf32> to vector<26x16x128xf32>
    %143 = arith.mulf %138, %142 : vector<26x16x128xf32>
    %144 = arith.addf %137, %143 : vector<26x16x128xf32>
    %c3_115 = arith.constant 3 : index
    %c10_116 = arith.constant 10 : index
    %c0_117 = arith.constant 0 : index
    %145 = vector.load %arg9[%c3_115, %c10_116, %c0_117] : memref<30x32x128xf32, #tpu.memory_space<vmem>>, vector<26x16x128xf32>
    %c3_118 = arith.constant 3 : index
    %c4_119 = arith.constant 4 : index
    %c0_120 = arith.constant 0 : index
    %146 = vector.load %arg3[%c3_118, %c4_119, %c0_120] : memref<5x5x128xf32, #tpu.memory_space<vmem>>, vector<1x1x128xf32>
    %147 = vector.shape_cast %146 : vector<1x1x128xf32> to vector<128xf32>
    %148 = vector.shape_cast %147 : vector<128xf32> to vector<1x1x128xf32>
    %149 = vector.broadcast %148 : vector<1x1x128xf32> to vector<26x16x128xf32>
    %150 = arith.mulf %145, %149 : vector<26x16x128xf32>
    %151 = arith.addf %144, %150 : vector<26x16x128xf32>
    %c4_121 = arith.constant 4 : index
    %c6_122 = arith.constant 6 : index
    %c0_123 = arith.constant 0 : index
    %152 = vector.load %arg9[%c4_121, %c6_122, %c0_123] : memref<30x32x128xf32, #tpu.memory_space<vmem>>, vector<26x16x128xf32>
    %c4_124 = arith.constant 4 : index
    %c0_125 = arith.constant 0 : index
    %c0_126 = arith.constant 0 : index
    %153 = vector.load %arg3[%c4_124, %c0_125, %c0_126] : memref<5x5x128xf32, #tpu.memory_space<vmem>>, vector<1x1x128xf32>
    %154 = vector.shape_cast %153 : vector<1x1x128xf32> to vector<128xf32>
    %155 = vector.shape_cast %154 : vector<128xf32> to vector<1x1x128xf32>
    %156 = vector.broadcast %155 : vector<1x1x128xf32> to vector<26x16x128xf32>
    %157 = arith.mulf %152, %156 : vector<26x16x128xf32>
    %158 = arith.addf %151, %157 : vector<26x16x128xf32>
    %c4_127 = arith.constant 4 : index
    %c7_128 = arith.constant 7 : index
    %c0_129 = arith.constant 0 : index
    %159 = vector.load %arg9[%c4_127, %c7_128, %c0_129] : memref<30x32x128xf32, #tpu.memory_space<vmem>>, vector<26x16x128xf32>
    %c4_130 = arith.constant 4 : index
    %c1_131 = arith.constant 1 : index
    %c0_132 = arith.constant 0 : index
    %160 = vector.load %arg3[%c4_130, %c1_131, %c0_132] : memref<5x5x128xf32, #tpu.memory_space<vmem>>, vector<1x1x128xf32>
    %161 = vector.shape_cast %160 : vector<1x1x128xf32> to vector<128xf32>
    %162 = vector.shape_cast %161 : vector<128xf32> to vector<1x1x128xf32>
    %163 = vector.broadcast %162 : vector<1x1x128xf32> to vector<26x16x128xf32>
    %164 = arith.mulf %159, %163 : vector<26x16x128xf32>
    %165 = arith.addf %158, %164 : vector<26x16x128xf32>
    %c4_133 = arith.constant 4 : index
    %c8_134 = arith.constant 8 : index
    %c0_135 = arith.constant 0 : index
    %166 = vector.load %arg9[%c4_133, %c8_134, %c0_135] : memref<30x32x128xf32, #tpu.memory_space<vmem>>, vector<26x16x128xf32>
    %c4_136 = arith.constant 4 : index
    %c2_137 = arith.constant 2 : index
    %c0_138 = arith.constant 0 : index
    %167 = vector.load %arg3[%c4_136, %c2_137, %c0_138] : memref<5x5x128xf32, #tpu.memory_space<vmem>>, vector<1x1x128xf32>
    %168 = vector.shape_cast %167 : vector<1x1x128xf32> to vector<128xf32>
    %169 = vector.shape_cast %168 : vector<128xf32> to vector<1x1x128xf32>
    %170 = vector.broadcast %169 : vector<1x1x128xf32> to vector<26x16x128xf32>
    %171 = arith.mulf %166, %170 : vector<26x16x128xf32>
    %172 = arith.addf %165, %171 : vector<26x16x128xf32>
    %c4_139 = arith.constant 4 : index
    %c9_140 = arith.constant 9 : index
    %c0_141 = arith.constant 0 : index
    %173 = vector.load %arg9[%c4_139, %c9_140, %c0_141] : memref<30x32x128xf32, #tpu.memory_space<vmem>>, vector<26x16x128xf32>
    %c4_142 = arith.constant 4 : index
    %c3_143 = arith.constant 3 : index
    %c0_144 = arith.constant 0 : index
    %174 = vector.load %arg3[%c4_142, %c3_143, %c0_144] : memref<5x5x128xf32, #tpu.memory_space<vmem>>, vector<1x1x128xf32>
    %175 = vector.shape_cast %174 : vector<1x1x128xf32> to vector<128xf32>
    %176 = vector.shape_cast %175 : vector<128xf32> to vector<1x1x128xf32>
    %177 = vector.broadcast %176 : vector<1x1x128xf32> to vector<26x16x128xf32>
    %178 = arith.mulf %173, %177 : vector<26x16x128xf32>
    %179 = arith.addf %172, %178 : vector<26x16x128xf32>
    %c4_145 = arith.constant 4 : index
    %c10_146 = arith.constant 10 : index
    %c0_147 = arith.constant 0 : index
    %180 = vector.load %arg9[%c4_145, %c10_146, %c0_147] : memref<30x32x128xf32, #tpu.memory_space<vmem>>, vector<26x16x128xf32>
    %c4_148 = arith.constant 4 : index
    %c4_149 = arith.constant 4 : index
    %c0_150 = arith.constant 0 : index
    %181 = vector.load %arg3[%c4_148, %c4_149, %c0_150] : memref<5x5x128xf32, #tpu.memory_space<vmem>>, vector<1x1x128xf32>
    %182 = vector.shape_cast %181 : vector<1x1x128xf32> to vector<128xf32>
    %183 = vector.shape_cast %182 : vector<128xf32> to vector<1x1x128xf32>
    %184 = vector.broadcast %183 : vector<1x1x128xf32> to vector<26x16x128xf32>
    %185 = arith.mulf %180, %184 : vector<26x16x128xf32>
    %186 = arith.addf %179, %185 : vector<26x16x128xf32>
    %c0_151 = arith.constant 0 : index
    %c0_152 = arith.constant 0 : index
    %187 = vector.load %arg4[%c0_151, %c0_152] : memref<1x128xf32, #tpu.memory_space<vmem>>, vector<1x128xf32>
    %188 = vector.shape_cast %187 : vector<1x128xf32> to vector<128xf32>
    %189 = vector.shape_cast %188 : vector<128xf32> to vector<1x1x128xf32>
    %190 = vector.broadcast %189 : vector<1x1x128xf32> to vector<26x16x128xf32>
    %191 = arith.addf %186, %190 : vector<26x16x128xf32>
    %c8_i32_153 = arith.constant 8 : i32
    %192 = arith.muli %arg1, %c8_i32_153 : i32
    %c9_i32 = arith.constant 9 : i32
    %193 = arith.subi %192, %c9_i32 : i32
    %194 = tpu.iota {dimensions = array<i32: 0>} : vector<26x16x1xi32>
    %195 = vector.broadcast %193 : i32 to vector<26x16x1xi32>
    %196 = arith.addi %195, %194 : vector<26x16x1xi32>
    %197 = tpu.iota {dimensions = array<i32: 1>} : vector<26x16x1xi32>
    %c0_i32_154 = arith.constant 0 : i32
    %198 = vector.broadcast %c0_i32_154 : i32 to vector<26x16x1xi32>
    %199 = arith.cmpi sge, %196, %198 : vector<26x16x1xi32>
    %c16_i32 = arith.constant 16 : i32
    %200 = vector.broadcast %c16_i32 : i32 to vector<26x16x1xi32>
    %201 = arith.cmpi slt, %196, %200 : vector<26x16x1xi32>
    %202 = arith.andi %199, %201 : vector<26x16x1xi1>
    %c16_i32_155 = arith.constant 16 : i32
    %203 = vector.broadcast %c16_i32_155 : i32 to vector<26x16x1xi32>
    %204 = arith.cmpi slt, %197, %203 : vector<26x16x1xi32>
    %205 = arith.andi %202, %204 : vector<26x16x1xi1>
    %cst_156 = arith.constant 0.000000e+00 : f32
    %206 = vector.shape_cast %205 : vector<26x16x1xi1> to vector<26x16x1xi1>
    %207 = vector.broadcast %206 : vector<26x16x1xi1> to vector<26x16x128xi1>
    %208 = vector.broadcast %cst_156 : f32 to vector<26x16x128xf32>
    %209 = arith.select %207, %191, %208 : vector<26x16x128xi1>, vector<26x16x128xf32>
    %c0_157 = arith.constant 0 : index
    %c16 = arith.constant 16 : index
    %c0_158 = arith.constant 0 : index
    %210 = vector.load %arg10[%c0_157, %c16, %c0_158] : memref<26x48x128xf32, #tpu.memory_space<vmem>>, vector<26x16x128xf32>
    tpu.vector_store %arg10[%c0_157, %c16, %c0_158], %209 {strides = array<i32>} : memref<26x48x128xf32, #tpu.memory_space<vmem>>, vector<26x16x128xf32>,
    %c0_159 = arith.constant 0 : index
    %c7_160 = arith.constant 7 : index
    %c0_161 = arith.constant 0 : index
    %211 = vector.load %arg10[%c0_159, %c7_160, %c0_161] : memref<26x48x128xf32, #tpu.memory_space<vmem>>, vector<8x16x128xf32>
    %c0_162 = arith.constant 0 : index
    %c0_163 = arith.constant 0 : index
    %c0_164 = arith.constant 0 : index
    %212 = vector.load %arg5[%c0_162, %c0_163, %c0_164] : memref<7x7x128xf32, #tpu.memory_space<vmem>>, vector<1x1x128xf32>
    %213 = vector.shape_cast %212 : vector<1x1x128xf32> to vector<128xf32>
    %214 = vector.shape_cast %213 : vector<128xf32> to vector<1x1x128xf32>
    %215 = vector.broadcast %214 : vector<1x1x128xf32> to vector<8x16x128xf32>
    %216 = arith.mulf %211, %215 : vector<8x16x128xf32>
    %c0_165 = arith.constant 0 : index
    %c10_166 = arith.constant 10 : index
    %c0_167 = arith.constant 0 : index
    %217 = vector.load %arg10[%c0_165, %c10_166, %c0_167] : memref<26x48x128xf32, #tpu.memory_space<vmem>>, vector<8x16x128xf32>
    %c0_168 = arith.constant 0 : index
    %c1_169 = arith.constant 1 : index
    %c0_170 = arith.constant 0 : index
    %218 = vector.load %arg5[%c0_168, %c1_169, %c0_170] : memref<7x7x128xf32, #tpu.memory_space<vmem>>, vector<1x1x128xf32>
    %219 = vector.shape_cast %218 : vector<1x1x128xf32> to vector<128xf32>
    %220 = vector.shape_cast %219 : vector<128xf32> to vector<1x1x128xf32>
    %221 = vector.broadcast %220 : vector<1x1x128xf32> to vector<8x16x128xf32>
    %222 = arith.mulf %217, %221 : vector<8x16x128xf32>
    %223 = arith.addf %216, %222 : vector<8x16x128xf32>
    %c0_171 = arith.constant 0 : index
    %c13 = arith.constant 13 : index
    %c0_172 = arith.constant 0 : index
    %224 = vector.load %arg10[%c0_171, %c13, %c0_172] : memref<26x48x128xf32, #tpu.memory_space<vmem>>, vector<8x16x128xf32>
    %c0_173 = arith.constant 0 : index
    %c2_174 = arith.constant 2 : index
    %c0_175 = arith.constant 0 : index
    %225 = vector.load %arg5[%c0_173, %c2_174, %c0_175] : memref<7x7x128xf32, #tpu.memory_space<vmem>>, vector<1x1x128xf32>
    %226 = vector.shape_cast %225 : vector<1x1x128xf32> to vector<128xf32>
    %227 = vector.shape_cast %226 : vector<128xf32> to vector<1x1x128xf32>
    %228 = vector.broadcast %227 : vector<1x1x128xf32> to vector<8x16x128xf32>
    %229 = arith.mulf %224, %228 : vector<8x16x128xf32>
    %230 = arith.addf %223, %229 : vector<8x16x128xf32>
    %c0_176 = arith.constant 0 : index
    %c16_177 = arith.constant 16 : index
    %c0_178 = arith.constant 0 : index
    %231 = vector.load %arg10[%c0_176, %c16_177, %c0_178] : memref<26x48x128xf32, #tpu.memory_space<vmem>>, vector<8x16x128xf32>
    %c0_179 = arith.constant 0 : index
    %c3_180 = arith.constant 3 : index
    %c0_181 = arith.constant 0 : index
    %232 = vector.load %arg5[%c0_179, %c3_180, %c0_181] : memref<7x7x128xf32, #tpu.memory_space<vmem>>, vector<1x1x128xf32>
    %233 = vector.shape_cast %232 : vector<1x1x128xf32> to vector<128xf32>
    %234 = vector.shape_cast %233 : vector<128xf32> to vector<1x1x128xf32>
    %235 = vector.broadcast %234 : vector<1x1x128xf32> to vector<8x16x128xf32>
    %236 = arith.mulf %231, %235 : vector<8x16x128xf32>
    %237 = arith.addf %230, %236 : vector<8x16x128xf32>
    %c0_182 = arith.constant 0 : index
    %c19 = arith.constant 19 : index
    %c0_183 = arith.constant 0 : index
    %238 = vector.load %arg10[%c0_182, %c19, %c0_183] : memref<26x48x128xf32, #tpu.memory_space<vmem>>, vector<8x16x128xf32>
    %c0_184 = arith.constant 0 : index
    %c4_185 = arith.constant 4 : index
    %c0_186 = arith.constant 0 : index
    %239 = vector.load %arg5[%c0_184, %c4_185, %c0_186] : memref<7x7x128xf32, #tpu.memory_space<vmem>>, vector<1x1x128xf32>
    %240 = vector.shape_cast %239 : vector<1x1x128xf32> to vector<128xf32>
    %241 = vector.shape_cast %240 : vector<128xf32> to vector<1x1x128xf32>
    %242 = vector.broadcast %241 : vector<1x1x128xf32> to vector<8x16x128xf32>
    %243 = arith.mulf %238, %242 : vector<8x16x128xf32>
    %244 = arith.addf %237, %243 : vector<8x16x128xf32>
    %c0_187 = arith.constant 0 : index
    %c22 = arith.constant 22 : index
    %c0_188 = arith.constant 0 : index
    %245 = vector.load %arg10[%c0_187, %c22, %c0_188] : memref<26x48x128xf32, #tpu.memory_space<vmem>>, vector<8x16x128xf32>
    %c0_189 = arith.constant 0 : index
    %c5 = arith.constant 5 : index
    %c0_190 = arith.constant 0 : index
    %246 = vector.load %arg5[%c0_189, %c5, %c0_190] : memref<7x7x128xf32, #tpu.memory_space<vmem>>, vector<1x1x128xf32>
    %247 = vector.shape_cast %246 : vector<1x1x128xf32> to vector<128xf32>
    %248 = vector.shape_cast %247 : vector<128xf32> to vector<1x1x128xf32>
    %249 = vector.broadcast %248 : vector<1x1x128xf32> to vector<8x16x128xf32>
    %250 = arith.mulf %245, %249 : vector<8x16x128xf32>
    %251 = arith.addf %244, %250 : vector<8x16x128xf32>
    %c0_191 = arith.constant 0 : index
    %c25 = arith.constant 25 : index
    %c0_192 = arith.constant 0 : index
    %252 = vector.load %arg10[%c0_191, %c25, %c0_192] : memref<26x48x128xf32, #tpu.memory_space<vmem>>, vector<8x16x128xf32>
    %c0_193 = arith.constant 0 : index
    %c6_194 = arith.constant 6 : index
    %c0_195 = arith.constant 0 : index
    %253 = vector.load %arg5[%c0_193, %c6_194, %c0_195] : memref<7x7x128xf32, #tpu.memory_space<vmem>>, vector<1x1x128xf32>
    %254 = vector.shape_cast %253 : vector<1x1x128xf32> to vector<128xf32>
    %255 = vector.shape_cast %254 : vector<128xf32> to vector<1x1x128xf32>
    %256 = vector.broadcast %255 : vector<1x1x128xf32> to vector<8x16x128xf32>
    %257 = arith.mulf %252, %256 : vector<8x16x128xf32>
    %258 = arith.addf %251, %257 : vector<8x16x128xf32>
    %c3_196 = arith.constant 3 : index
    %c7_197 = arith.constant 7 : index
    %c0_198 = arith.constant 0 : index
    %259 = vector.load %arg10[%c3_196, %c7_197, %c0_198] : memref<26x48x128xf32, #tpu.memory_space<vmem>>, vector<8x16x128xf32>
    %c1_199 = arith.constant 1 : index
    %c0_200 = arith.constant 0 : index
    %c0_201 = arith.constant 0 : index
    %260 = vector.load %arg5[%c1_199, %c0_200, %c0_201] : memref<7x7x128xf32, #tpu.memory_space<vmem>>, vector<1x1x128xf32>
    %261 = vector.shape_cast %260 : vector<1x1x128xf32> to vector<128xf32>
    %262 = vector.shape_cast %261 : vector<128xf32> to vector<1x1x128xf32>
    %263 = vector.broadcast %262 : vector<1x1x128xf32> to vector<8x16x128xf32>
    %264 = arith.mulf %259, %263 : vector<8x16x128xf32>
    %265 = arith.addf %258, %264 : vector<8x16x128xf32>
    %c3_202 = arith.constant 3 : index
    %c10_203 = arith.constant 10 : index
    %c0_204 = arith.constant 0 : index
    %266 = vector.load %arg10[%c3_202, %c10_203, %c0_204] : memref<26x48x128xf32, #tpu.memory_space<vmem>>, vector<8x16x128xf32>
    %c1_205 = arith.constant 1 : index
    %c1_206 = arith.constant 1 : index
    %c0_207 = arith.constant 0 : index
    %267 = vector.load %arg5[%c1_205, %c1_206, %c0_207] : memref<7x7x128xf32, #tpu.memory_space<vmem>>, vector<1x1x128xf32>
    %268 = vector.shape_cast %267 : vector<1x1x128xf32> to vector<128xf32>
    %269 = vector.shape_cast %268 : vector<128xf32> to vector<1x1x128xf32>
    %270 = vector.broadcast %269 : vector<1x1x128xf32> to vector<8x16x128xf32>
    %271 = arith.mulf %266, %270 : vector<8x16x128xf32>
    %272 = arith.addf %265, %271 : vector<8x16x128xf32>
    %c3_208 = arith.constant 3 : index
    %c13_209 = arith.constant 13 : index
    %c0_210 = arith.constant 0 : index
    %273 = vector.load %arg10[%c3_208, %c13_209, %c0_210] : memref<26x48x128xf32, #tpu.memory_space<vmem>>, vector<8x16x128xf32>
    %c1_211 = arith.constant 1 : index
    %c2_212 = arith.constant 2 : index
    %c0_213 = arith.constant 0 : index
    %274 = vector.load %arg5[%c1_211, %c2_212, %c0_213] : memref<7x7x128xf32, #tpu.memory_space<vmem>>, vector<1x1x128xf32>
    %275 = vector.shape_cast %274 : vector<1x1x128xf32> to vector<128xf32>
    %276 = vector.shape_cast %275 : vector<128xf32> to vector<1x1x128xf32>
    %277 = vector.broadcast %276 : vector<1x1x128xf32> to vector<8x16x128xf32>
    %278 = arith.mulf %273, %277 : vector<8x16x128xf32>
    %279 = arith.addf %272, %278 : vector<8x16x128xf32>
    %c3_214 = arith.constant 3 : index
    %c16_215 = arith.constant 16 : index
    %c0_216 = arith.constant 0 : index
    %280 = vector.load %arg10[%c3_214, %c16_215, %c0_216] : memref<26x48x128xf32, #tpu.memory_space<vmem>>, vector<8x16x128xf32>
    %c1_217 = arith.constant 1 : index
    %c3_218 = arith.constant 3 : index
    %c0_219 = arith.constant 0 : index
    %281 = vector.load %arg5[%c1_217, %c3_218, %c0_219] : memref<7x7x128xf32, #tpu.memory_space<vmem>>, vector<1x1x128xf32>
    %282 = vector.shape_cast %281 : vector<1x1x128xf32> to vector<128xf32>
    %283 = vector.shape_cast %282 : vector<128xf32> to vector<1x1x128xf32>
    %284 = vector.broadcast %283 : vector<1x1x128xf32> to vector<8x16x128xf32>
    %285 = arith.mulf %280, %284 : vector<8x16x128xf32>
    %286 = arith.addf %279, %285 : vector<8x16x128xf32>
    %c3_220 = arith.constant 3 : index
    %c19_221 = arith.constant 19 : index
    %c0_222 = arith.constant 0 : index
    %287 = vector.load %arg10[%c3_220, %c19_221, %c0_222] : memref<26x48x128xf32, #tpu.memory_space<vmem>>, vector<8x16x128xf32>
    %c1_223 = arith.constant 1 : index
    %c4_224 = arith.constant 4 : index
    %c0_225 = arith.constant 0 : index
    %288 = vector.load %arg5[%c1_223, %c4_224, %c0_225] : memref<7x7x128xf32, #tpu.memory_space<vmem>>, vector<1x1x128xf32>
    %289 = vector.shape_cast %288 : vector<1x1x128xf32> to vector<128xf32>
    %290 = vector.shape_cast %289 : vector<128xf32> to vector<1x1x128xf32>
    %291 = vector.broadcast %290 : vector<1x1x128xf32> to vector<8x16x128xf32>
    %292 = arith.mulf %287, %291 : vector<8x16x128xf32>
    %293 = arith.addf %286, %292 : vector<8x16x128xf32>
    %c3_226 = arith.constant 3 : index
    %c22_227 = arith.constant 22 : index
    %c0_228 = arith.constant 0 : index
    %294 = vector.load %arg10[%c3_226, %c22_227, %c0_228] : memref<26x48x128xf32, #tpu.memory_space<vmem>>, vector<8x16x128xf32>
    %c1_229 = arith.constant 1 : index
    %c5_230 = arith.constant 5 : index
    %c0_231 = arith.constant 0 : index
    %295 = vector.load %arg5[%c1_229, %c5_230, %c0_231] : memref<7x7x128xf32, #tpu.memory_space<vmem>>, vector<1x1x128xf32>
    %296 = vector.shape_cast %295 : vector<1x1x128xf32> to vector<128xf32>
    %297 = vector.shape_cast %296 : vector<128xf32> to vector<1x1x128xf32>
    %298 = vector.broadcast %297 : vector<1x1x128xf32> to vector<8x16x128xf32>
    %299 = arith.mulf %294, %298 : vector<8x16x128xf32>
    %300 = arith.addf %293, %299 : vector<8x16x128xf32>
    %c3_232 = arith.constant 3 : index
    %c25_233 = arith.constant 25 : index
    %c0_234 = arith.constant 0 : index
    %301 = vector.load %arg10[%c3_232, %c25_233, %c0_234] : memref<26x48x128xf32, #tpu.memory_space<vmem>>, vector<8x16x128xf32>
    %c1_235 = arith.constant 1 : index
    %c6_236 = arith.constant 6 : index
    %c0_237 = arith.constant 0 : index
    %302 = vector.load %arg5[%c1_235, %c6_236, %c0_237] : memref<7x7x128xf32, #tpu.memory_space<vmem>>, vector<1x1x128xf32>
    %303 = vector.shape_cast %302 : vector<1x1x128xf32> to vector<128xf32>
    %304 = vector.shape_cast %303 : vector<128xf32> to vector<1x1x128xf32>
    %305 = vector.broadcast %304 : vector<1x1x128xf32> to vector<8x16x128xf32>
    %306 = arith.mulf %301, %305 : vector<8x16x128xf32>
    %307 = arith.addf %300, %306 : vector<8x16x128xf32>
    %c6_238 = arith.constant 6 : index
    %c7_239 = arith.constant 7 : index
    %c0_240 = arith.constant 0 : index
    %308 = vector.load %arg10[%c6_238, %c7_239, %c0_240] : memref<26x48x128xf32, #tpu.memory_space<vmem>>, vector<8x16x128xf32>
    %c2_241 = arith.constant 2 : index
    %c0_242 = arith.constant 0 : index
    %c0_243 = arith.constant 0 : index
    %309 = vector.load %arg5[%c2_241, %c0_242, %c0_243] : memref<7x7x128xf32, #tpu.memory_space<vmem>>, vector<1x1x128xf32>
    %310 = vector.shape_cast %309 : vector<1x1x128xf32> to vector<128xf32>
    %311 = vector.shape_cast %310 : vector<128xf32> to vector<1x1x128xf32>
    %312 = vector.broadcast %311 : vector<1x1x128xf32> to vector<8x16x128xf32>
    %313 = arith.mulf %308, %312 : vector<8x16x128xf32>
    %314 = arith.addf %307, %313 : vector<8x16x128xf32>
    %c6_244 = arith.constant 6 : index
    %c10_245 = arith.constant 10 : index
    %c0_246 = arith.constant 0 : index
    %315 = vector.load %arg10[%c6_244, %c10_245, %c0_246] : memref<26x48x128xf32, #tpu.memory_space<vmem>>, vector<8x16x128xf32>
    %c2_247 = arith.constant 2 : index
    %c1_248 = arith.constant 1 : index
    %c0_249 = arith.constant 0 : index
    %316 = vector.load %arg5[%c2_247, %c1_248, %c0_249] : memref<7x7x128xf32, #tpu.memory_space<vmem>>, vector<1x1x128xf32>
    %317 = vector.shape_cast %316 : vector<1x1x128xf32> to vector<128xf32>
    %318 = vector.shape_cast %317 : vector<128xf32> to vector<1x1x128xf32>
    %319 = vector.broadcast %318 : vector<1x1x128xf32> to vector<8x16x128xf32>
    %320 = arith.mulf %315, %319 : vector<8x16x128xf32>
    %321 = arith.addf %314, %320 : vector<8x16x128xf32>
    %c6_250 = arith.constant 6 : index
    %c13_251 = arith.constant 13 : index
    %c0_252 = arith.constant 0 : index
    %322 = vector.load %arg10[%c6_250, %c13_251, %c0_252] : memref<26x48x128xf32, #tpu.memory_space<vmem>>, vector<8x16x128xf32>
    %c2_253 = arith.constant 2 : index
    %c2_254 = arith.constant 2 : index
    %c0_255 = arith.constant 0 : index
    %323 = vector.load %arg5[%c2_253, %c2_254, %c0_255] : memref<7x7x128xf32, #tpu.memory_space<vmem>>, vector<1x1x128xf32>
    %324 = vector.shape_cast %323 : vector<1x1x128xf32> to vector<128xf32>
    %325 = vector.shape_cast %324 : vector<128xf32> to vector<1x1x128xf32>
    %326 = vector.broadcast %325 : vector<1x1x128xf32> to vector<8x16x128xf32>
    %327 = arith.mulf %322, %326 : vector<8x16x128xf32>
    %328 = arith.addf %321, %327 : vector<8x16x128xf32>
    %c6_256 = arith.constant 6 : index
    %c16_257 = arith.constant 16 : index
    %c0_258 = arith.constant 0 : index
    %329 = vector.load %arg10[%c6_256, %c16_257, %c0_258] : memref<26x48x128xf32, #tpu.memory_space<vmem>>, vector<8x16x128xf32>
    %c2_259 = arith.constant 2 : index
    %c3_260 = arith.constant 3 : index
    %c0_261 = arith.constant 0 : index
    %330 = vector.load %arg5[%c2_259, %c3_260, %c0_261] : memref<7x7x128xf32, #tpu.memory_space<vmem>>, vector<1x1x128xf32>
    %331 = vector.shape_cast %330 : vector<1x1x128xf32> to vector<128xf32>
    %332 = vector.shape_cast %331 : vector<128xf32> to vector<1x1x128xf32>
    %333 = vector.broadcast %332 : vector<1x1x128xf32> to vector<8x16x128xf32>
    %334 = arith.mulf %329, %333 : vector<8x16x128xf32>
    %335 = arith.addf %328, %334 : vector<8x16x128xf32>
    %c6_262 = arith.constant 6 : index
    %c19_263 = arith.constant 19 : index
    %c0_264 = arith.constant 0 : index
    %336 = vector.load %arg10[%c6_262, %c19_263, %c0_264] : memref<26x48x128xf32, #tpu.memory_space<vmem>>, vector<8x16x128xf32>
    %c2_265 = arith.constant 2 : index
    %c4_266 = arith.constant 4 : index
    %c0_267 = arith.constant 0 : index
    %337 = vector.load %arg5[%c2_265, %c4_266, %c0_267] : memref<7x7x128xf32, #tpu.memory_space<vmem>>, vector<1x1x128xf32>
    %338 = vector.shape_cast %337 : vector<1x1x128xf32> to vector<128xf32>
    %339 = vector.shape_cast %338 : vector<128xf32> to vector<1x1x128xf32>
    %340 = vector.broadcast %339 : vector<1x1x128xf32> to vector<8x16x128xf32>
    %341 = arith.mulf %336, %340 : vector<8x16x128xf32>
    %342 = arith.addf %335, %341 : vector<8x16x128xf32>
    %c6_268 = arith.constant 6 : index
    %c22_269 = arith.constant 22 : index
    %c0_270 = arith.constant 0 : index
    %343 = vector.load %arg10[%c6_268, %c22_269, %c0_270] : memref<26x48x128xf32, #tpu.memory_space<vmem>>, vector<8x16x128xf32>
    %c2_271 = arith.constant 2 : index
    %c5_272 = arith.constant 5 : index
    %c0_273 = arith.constant 0 : index
    %344 = vector.load %arg5[%c2_271, %c5_272, %c0_273] : memref<7x7x128xf32, #tpu.memory_space<vmem>>, vector<1x1x128xf32>
    %345 = vector.shape_cast %344 : vector<1x1x128xf32> to vector<128xf32>
    %346 = vector.shape_cast %345 : vector<128xf32> to vector<1x1x128xf32>
    %347 = vector.broadcast %346 : vector<1x1x128xf32> to vector<8x16x128xf32>
    %348 = arith.mulf %343, %347 : vector<8x16x128xf32>
    %349 = arith.addf %342, %348 : vector<8x16x128xf32>
    %c6_274 = arith.constant 6 : index
    %c25_275 = arith.constant 25 : index
    %c0_276 = arith.constant 0 : index
    %350 = vector.load %arg10[%c6_274, %c25_275, %c0_276] : memref<26x48x128xf32, #tpu.memory_space<vmem>>, vector<8x16x128xf32>
    %c2_277 = arith.constant 2 : index
    %c6_278 = arith.constant 6 : index
    %c0_279 = arith.constant 0 : index
    %351 = vector.load %arg5[%c2_277, %c6_278, %c0_279] : memref<7x7x128xf32, #tpu.memory_space<vmem>>, vector<1x1x128xf32>
    %352 = vector.shape_cast %351 : vector<1x1x128xf32> to vector<128xf32>
    %353 = vector.shape_cast %352 : vector<128xf32> to vector<1x1x128xf32>
    %354 = vector.broadcast %353 : vector<1x1x128xf32> to vector<8x16x128xf32>
    %355 = arith.mulf %350, %354 : vector<8x16x128xf32>
    %356 = arith.addf %349, %355 : vector<8x16x128xf32>
    %c9_280 = arith.constant 9 : index
    %c7_281 = arith.constant 7 : index
    %c0_282 = arith.constant 0 : index
    %357 = vector.load %arg10[%c9_280, %c7_281, %c0_282] : memref<26x48x128xf32, #tpu.memory_space<vmem>>, vector<8x16x128xf32>
    %c3_283 = arith.constant 3 : index
    %c0_284 = arith.constant 0 : index
    %c0_285 = arith.constant 0 : index
    %358 = vector.load %arg5[%c3_283, %c0_284, %c0_285] : memref<7x7x128xf32, #tpu.memory_space<vmem>>, vector<1x1x128xf32>
    %359 = vector.shape_cast %358 : vector<1x1x128xf32> to vector<128xf32>
    %360 = vector.shape_cast %359 : vector<128xf32> to vector<1x1x128xf32>
    %361 = vector.broadcast %360 : vector<1x1x128xf32> to vector<8x16x128xf32>
    %362 = arith.mulf %357, %361 : vector<8x16x128xf32>
    %363 = arith.addf %356, %362 : vector<8x16x128xf32>
    %c9_286 = arith.constant 9 : index
    %c10_287 = arith.constant 10 : index
    %c0_288 = arith.constant 0 : index
    %364 = vector.load %arg10[%c9_286, %c10_287, %c0_288] : memref<26x48x128xf32, #tpu.memory_space<vmem>>, vector<8x16x128xf32>
    %c3_289 = arith.constant 3 : index
    %c1_290 = arith.constant 1 : index
    %c0_291 = arith.constant 0 : index
    %365 = vector.load %arg5[%c3_289, %c1_290, %c0_291] : memref<7x7x128xf32, #tpu.memory_space<vmem>>, vector<1x1x128xf32>
    %366 = vector.shape_cast %365 : vector<1x1x128xf32> to vector<128xf32>
    %367 = vector.shape_cast %366 : vector<128xf32> to vector<1x1x128xf32>
    %368 = vector.broadcast %367 : vector<1x1x128xf32> to vector<8x16x128xf32>
    %369 = arith.mulf %364, %368 : vector<8x16x128xf32>
    %370 = arith.addf %363, %369 : vector<8x16x128xf32>
    %c9_292 = arith.constant 9 : index
    %c13_293 = arith.constant 13 : index
    %c0_294 = arith.constant 0 : index
    %371 = vector.load %arg10[%c9_292, %c13_293, %c0_294] : memref<26x48x128xf32, #tpu.memory_space<vmem>>, vector<8x16x128xf32>
    %c3_295 = arith.constant 3 : index
    %c2_296 = arith.constant 2 : index
    %c0_297 = arith.constant 0 : index
    %372 = vector.load %arg5[%c3_295, %c2_296, %c0_297] : memref<7x7x128xf32, #tpu.memory_space<vmem>>, vector<1x1x128xf32>
    %373 = vector.shape_cast %372 : vector<1x1x128xf32> to vector<128xf32>
    %374 = vector.shape_cast %373 : vector<128xf32> to vector<1x1x128xf32>
    %375 = vector.broadcast %374 : vector<1x1x128xf32> to vector<8x16x128xf32>
    %376 = arith.mulf %371, %375 : vector<8x16x128xf32>
    %377 = arith.addf %370, %376 : vector<8x16x128xf32>
    %c9_298 = arith.constant 9 : index
    %c16_299 = arith.constant 16 : index
    %c0_300 = arith.constant 0 : index
    %378 = vector.load %arg10[%c9_298, %c16_299, %c0_300] : memref<26x48x128xf32, #tpu.memory_space<vmem>>, vector<8x16x128xf32>
    %c3_301 = arith.constant 3 : index
    %c3_302 = arith.constant 3 : index
    %c0_303 = arith.constant 0 : index
    %379 = vector.load %arg5[%c3_301, %c3_302, %c0_303] : memref<7x7x128xf32, #tpu.memory_space<vmem>>, vector<1x1x128xf32>
    %380 = vector.shape_cast %379 : vector<1x1x128xf32> to vector<128xf32>
    %381 = vector.shape_cast %380 : vector<128xf32> to vector<1x1x128xf32>
    %382 = vector.broadcast %381 : vector<1x1x128xf32> to vector<8x16x128xf32>
    %383 = arith.mulf %378, %382 : vector<8x16x128xf32>
    %384 = arith.addf %377, %383 : vector<8x16x128xf32>
    %c9_304 = arith.constant 9 : index
    %c19_305 = arith.constant 19 : index
    %c0_306 = arith.constant 0 : index
    %385 = vector.load %arg10[%c9_304, %c19_305, %c0_306] : memref<26x48x128xf32, #tpu.memory_space<vmem>>, vector<8x16x128xf32>
    %c3_307 = arith.constant 3 : index
    %c4_308 = arith.constant 4 : index
    %c0_309 = arith.constant 0 : index
    %386 = vector.load %arg5[%c3_307, %c4_308, %c0_309] : memref<7x7x128xf32, #tpu.memory_space<vmem>>, vector<1x1x128xf32>
    %387 = vector.shape_cast %386 : vector<1x1x128xf32> to vector<128xf32>
    %388 = vector.shape_cast %387 : vector<128xf32> to vector<1x1x128xf32>
    %389 = vector.broadcast %388 : vector<1x1x128xf32> to vector<8x16x128xf32>
    %390 = arith.mulf %385, %389 : vector<8x16x128xf32>
    %391 = arith.addf %384, %390 : vector<8x16x128xf32>
    %c9_310 = arith.constant 9 : index
    %c22_311 = arith.constant 22 : index
    %c0_312 = arith.constant 0 : index
    %392 = vector.load %arg10[%c9_310, %c22_311, %c0_312] : memref<26x48x128xf32, #tpu.memory_space<vmem>>, vector<8x16x128xf32>
    %c3_313 = arith.constant 3 : index
    %c5_314 = arith.constant 5 : index
    %c0_315 = arith.constant 0 : index
    %393 = vector.load %arg5[%c3_313, %c5_314, %c0_315] : memref<7x7x128xf32, #tpu.memory_space<vmem>>, vector<1x1x128xf32>
    %394 = vector.shape_cast %393 : vector<1x1x128xf32> to vector<128xf32>
    %395 = vector.shape_cast %394 : vector<128xf32> to vector<1x1x128xf32>
    %396 = vector.broadcast %395 : vector<1x1x128xf32> to vector<8x16x128xf32>
    %397 = arith.mulf %392, %396 : vector<8x16x128xf32>
    %398 = arith.addf %391, %397 : vector<8x16x128xf32>
    %c9_316 = arith.constant 9 : index
    %c25_317 = arith.constant 25 : index
    %c0_318 = arith.constant 0 : index
    %399 = vector.load %arg10[%c9_316, %c25_317, %c0_318] : memref<26x48x128xf32, #tpu.memory_space<vmem>>, vector<8x16x128xf32>
    %c3_319 = arith.constant 3 : index
    %c6_320 = arith.constant 6 : index
    %c0_321 = arith.constant 0 : index
    %400 = vector.load %arg5[%c3_319, %c6_320, %c0_321] : memref<7x7x128xf32, #tpu.memory_space<vmem>>, vector<1x1x128xf32>
    %401 = vector.shape_cast %400 : vector<1x1x128xf32> to vector<128xf32>
    %402 = vector.shape_cast %401 : vector<128xf32> to vector<1x1x128xf32>
    %403 = vector.broadcast %402 : vector<1x1x128xf32> to vector<8x16x128xf32>
    %404 = arith.mulf %399, %403 : vector<8x16x128xf32>
    %405 = arith.addf %398, %404 : vector<8x16x128xf32>
    %c12 = arith.constant 12 : index
    %c7_322 = arith.constant 7 : index
    %c0_323 = arith.constant 0 : index
    %406 = vector.load %arg10[%c12, %c7_322, %c0_323] : memref<26x48x128xf32, #tpu.memory_space<vmem>>, vector<8x16x128xf32>
    %c4_324 = arith.constant 4 : index
    %c0_325 = arith.constant 0 : index
    %c0_326 = arith.constant 0 : index
    %407 = vector.load %arg5[%c4_324, %c0_325, %c0_326] : memref<7x7x128xf32, #tpu.memory_space<vmem>>, vector<1x1x128xf32>
    %408 = vector.shape_cast %407 : vector<1x1x128xf32> to vector<128xf32>
    %409 = vector.shape_cast %408 : vector<128xf32> to vector<1x1x128xf32>
    %410 = vector.broadcast %409 : vector<1x1x128xf32> to vector<8x16x128xf32>
    %411 = arith.mulf %406, %410 : vector<8x16x128xf32>
    %412 = arith.addf %405, %411 : vector<8x16x128xf32>
    %c12_327 = arith.constant 12 : index
    %c10_328 = arith.constant 10 : index
    %c0_329 = arith.constant 0 : index
    %413 = vector.load %arg10[%c12_327, %c10_328, %c0_329] : memref<26x48x128xf32, #tpu.memory_space<vmem>>, vector<8x16x128xf32>
    %c4_330 = arith.constant 4 : index
    %c1_331 = arith.constant 1 : index
    %c0_332 = arith.constant 0 : index
    %414 = vector.load %arg5[%c4_330, %c1_331, %c0_332] : memref<7x7x128xf32, #tpu.memory_space<vmem>>, vector<1x1x128xf32>
    %415 = vector.shape_cast %414 : vector<1x1x128xf32> to vector<128xf32>
    %416 = vector.shape_cast %415 : vector<128xf32> to vector<1x1x128xf32>
    %417 = vector.broadcast %416 : vector<1x1x128xf32> to vector<8x16x128xf32>
    %418 = arith.mulf %413, %417 : vector<8x16x128xf32>
    %419 = arith.addf %412, %418 : vector<8x16x128xf32>
    %c12_333 = arith.constant 12 : index
    %c13_334 = arith.constant 13 : index
    %c0_335 = arith.constant 0 : index
    %420 = vector.load %arg10[%c12_333, %c13_334, %c0_335] : memref<26x48x128xf32, #tpu.memory_space<vmem>>, vector<8x16x128xf32>
    %c4_336 = arith.constant 4 : index
    %c2_337 = arith.constant 2 : index
    %c0_338 = arith.constant 0 : index
    %421 = vector.load %arg5[%c4_336, %c2_337, %c0_338] : memref<7x7x128xf32, #tpu.memory_space<vmem>>, vector<1x1x128xf32>
    %422 = vector.shape_cast %421 : vector<1x1x128xf32> to vector<128xf32>
    %423 = vector.shape_cast %422 : vector<128xf32> to vector<1x1x128xf32>
    %424 = vector.broadcast %423 : vector<1x1x128xf32> to vector<8x16x128xf32>
    %425 = arith.mulf %420, %424 : vector<8x16x128xf32>
    %426 = arith.addf %419, %425 : vector<8x16x128xf32>
    %c12_339 = arith.constant 12 : index
    %c16_340 = arith.constant 16 : index
    %c0_341 = arith.constant 0 : index
    %427 = vector.load %arg10[%c12_339, %c16_340, %c0_341] : memref<26x48x128xf32, #tpu.memory_space<vmem>>, vector<8x16x128xf32>
    %c4_342 = arith.constant 4 : index
    %c3_343 = arith.constant 3 : index
    %c0_344 = arith.constant 0 : index
    %428 = vector.load %arg5[%c4_342, %c3_343, %c0_344] : memref<7x7x128xf32, #tpu.memory_space<vmem>>, vector<1x1x128xf32>
    %429 = vector.shape_cast %428 : vector<1x1x128xf32> to vector<128xf32>
    %430 = vector.shape_cast %429 : vector<128xf32> to vector<1x1x128xf32>
    %431 = vector.broadcast %430 : vector<1x1x128xf32> to vector<8x16x128xf32>
    %432 = arith.mulf %427, %431 : vector<8x16x128xf32>
    %433 = arith.addf %426, %432 : vector<8x16x128xf32>
    %c12_345 = arith.constant 12 : index
    %c19_346 = arith.constant 19 : index
    %c0_347 = arith.constant 0 : index
    %434 = vector.load %arg10[%c12_345, %c19_346, %c0_347] : memref<26x48x128xf32, #tpu.memory_space<vmem>>, vector<8x16x128xf32>
    %c4_348 = arith.constant 4 : index
    %c4_349 = arith.constant 4 : index
    %c0_350 = arith.constant 0 : index
    %435 = vector.load %arg5[%c4_348, %c4_349, %c0_350] : memref<7x7x128xf32, #tpu.memory_space<vmem>>, vector<1x1x128xf32>
    %436 = vector.shape_cast %435 : vector<1x1x128xf32> to vector<128xf32>
    %437 = vector.shape_cast %436 : vector<128xf32> to vector<1x1x128xf32>
    %438 = vector.broadcast %437 : vector<1x1x128xf32> to vector<8x16x128xf32>
    %439 = arith.mulf %434, %438 : vector<8x16x128xf32>
    %440 = arith.addf %433, %439 : vector<8x16x128xf32>
    %c12_351 = arith.constant 12 : index
    %c22_352 = arith.constant 22 : index
    %c0_353 = arith.constant 0 : index
    %441 = vector.load %arg10[%c12_351, %c22_352, %c0_353] : memref<26x48x128xf32, #tpu.memory_space<vmem>>, vector<8x16x128xf32>
    %c4_354 = arith.constant 4 : index
    %c5_355 = arith.constant 5 : index
    %c0_356 = arith.constant 0 : index
    %442 = vector.load %arg5[%c4_354, %c5_355, %c0_356] : memref<7x7x128xf32, #tpu.memory_space<vmem>>, vector<1x1x128xf32>
    %443 = vector.shape_cast %442 : vector<1x1x128xf32> to vector<128xf32>
    %444 = vector.shape_cast %443 : vector<128xf32> to vector<1x1x128xf32>
    %445 = vector.broadcast %444 : vector<1x1x128xf32> to vector<8x16x128xf32>
    %446 = arith.mulf %441, %445 : vector<8x16x128xf32>
    %447 = arith.addf %440, %446 : vector<8x16x128xf32>
    %c12_357 = arith.constant 12 : index
    %c25_358 = arith.constant 25 : index
    %c0_359 = arith.constant 0 : index
    %448 = vector.load %arg10[%c12_357, %c25_358, %c0_359] : memref<26x48x128xf32, #tpu.memory_space<vmem>>, vector<8x16x128xf32>
    %c4_360 = arith.constant 4 : index
    %c6_361 = arith.constant 6 : index
    %c0_362 = arith.constant 0 : index
    %449 = vector.load %arg5[%c4_360, %c6_361, %c0_362] : memref<7x7x128xf32, #tpu.memory_space<vmem>>, vector<1x1x128xf32>
    %450 = vector.shape_cast %449 : vector<1x1x128xf32> to vector<128xf32>
    %451 = vector.shape_cast %450 : vector<128xf32> to vector<1x1x128xf32>
    %452 = vector.broadcast %451 : vector<1x1x128xf32> to vector<8x16x128xf32>
    %453 = arith.mulf %448, %452 : vector<8x16x128xf32>
    %454 = arith.addf %447, %453 : vector<8x16x128xf32>
    %c15 = arith.constant 15 : index
    %c7_363 = arith.constant 7 : index
    %c0_364 = arith.constant 0 : index
    %455 = vector.load %arg10[%c15, %c7_363, %c0_364] : memref<26x48x128xf32, #tpu.memory_space<vmem>>, vector<8x16x128xf32>
    %c5_365 = arith.constant 5 : index
    %c0_366 = arith.constant 0 : index
    %c0_367 = arith.constant 0 : index
    %456 = vector.load %arg5[%c5_365, %c0_366, %c0_367] : memref<7x7x128xf32, #tpu.memory_space<vmem>>, vector<1x1x128xf32>
    %457 = vector.shape_cast %456 : vector<1x1x128xf32> to vector<128xf32>
    %458 = vector.shape_cast %457 : vector<128xf32> to vector<1x1x128xf32>
    %459 = vector.broadcast %458 : vector<1x1x128xf32> to vector<8x16x128xf32>
    %460 = arith.mulf %455, %459 : vector<8x16x128xf32>
    %461 = arith.addf %454, %460 : vector<8x16x128xf32>
    %c15_368 = arith.constant 15 : index
    %c10_369 = arith.constant 10 : index
    %c0_370 = arith.constant 0 : index
    %462 = vector.load %arg10[%c15_368, %c10_369, %c0_370] : memref<26x48x128xf32, #tpu.memory_space<vmem>>, vector<8x16x128xf32>
    %c5_371 = arith.constant 5 : index
    %c1_372 = arith.constant 1 : index
    %c0_373 = arith.constant 0 : index
    %463 = vector.load %arg5[%c5_371, %c1_372, %c0_373] : memref<7x7x128xf32, #tpu.memory_space<vmem>>, vector<1x1x128xf32>
    %464 = vector.shape_cast %463 : vector<1x1x128xf32> to vector<128xf32>
    %465 = vector.shape_cast %464 : vector<128xf32> to vector<1x1x128xf32>
    %466 = vector.broadcast %465 : vector<1x1x128xf32> to vector<8x16x128xf32>
    %467 = arith.mulf %462, %466 : vector<8x16x128xf32>
    %468 = arith.addf %461, %467 : vector<8x16x128xf32>
    %c15_374 = arith.constant 15 : index
    %c13_375 = arith.constant 13 : index
    %c0_376 = arith.constant 0 : index
    %469 = vector.load %arg10[%c15_374, %c13_375, %c0_376] : memref<26x48x128xf32, #tpu.memory_space<vmem>>, vector<8x16x128xf32>
    %c5_377 = arith.constant 5 : index
    %c2_378 = arith.constant 2 : index
    %c0_379 = arith.constant 0 : index
    %470 = vector.load %arg5[%c5_377, %c2_378, %c0_379] : memref<7x7x128xf32, #tpu.memory_space<vmem>>, vector<1x1x128xf32>
    %471 = vector.shape_cast %470 : vector<1x1x128xf32> to vector<128xf32>
    %472 = vector.shape_cast %471 : vector<128xf32> to vector<1x1x128xf32>
    %473 = vector.broadcast %472 : vector<1x1x128xf32> to vector<8x16x128xf32>
    %474 = arith.mulf %469, %473 : vector<8x16x128xf32>
    %475 = arith.addf %468, %474 : vector<8x16x128xf32>
    %c15_380 = arith.constant 15 : index
    %c16_381 = arith.constant 16 : index
    %c0_382 = arith.constant 0 : index
    %476 = vector.load %arg10[%c15_380, %c16_381, %c0_382] : memref<26x48x128xf32, #tpu.memory_space<vmem>>, vector<8x16x128xf32>
    %c5_383 = arith.constant 5 : index
    %c3_384 = arith.constant 3 : index
    %c0_385 = arith.constant 0 : index
    %477 = vector.load %arg5[%c5_383, %c3_384, %c0_385] : memref<7x7x128xf32, #tpu.memory_space<vmem>>, vector<1x1x128xf32>
    %478 = vector.shape_cast %477 : vector<1x1x128xf32> to vector<128xf32>
    %479 = vector.shape_cast %478 : vector<128xf32> to vector<1x1x128xf32>
    %480 = vector.broadcast %479 : vector<1x1x128xf32> to vector<8x16x128xf32>
    %481 = arith.mulf %476, %480 : vector<8x16x128xf32>
    %482 = arith.addf %475, %481 : vector<8x16x128xf32>
    %c15_386 = arith.constant 15 : index
    %c19_387 = arith.constant 19 : index
    %c0_388 = arith.constant 0 : index
    %483 = vector.load %arg10[%c15_386, %c19_387, %c0_388] : memref<26x48x128xf32, #tpu.memory_space<vmem>>, vector<8x16x128xf32>
    %c5_389 = arith.constant 5 : index
    %c4_390 = arith.constant 4 : index
    %c0_391 = arith.constant 0 : index
    %484 = vector.load %arg5[%c5_389, %c4_390, %c0_391] : memref<7x7x128xf32, #tpu.memory_space<vmem>>, vector<1x1x128xf32>
    %485 = vector.shape_cast %484 : vector<1x1x128xf32> to vector<128xf32>
    %486 = vector.shape_cast %485 : vector<128xf32> to vector<1x1x128xf32>
    %487 = vector.broadcast %486 : vector<1x1x128xf32> to vector<8x16x128xf32>
    %488 = arith.mulf %483, %487 : vector<8x16x128xf32>
    %489 = arith.addf %482, %488 : vector<8x16x128xf32>
    %c15_392 = arith.constant 15 : index
    %c22_393 = arith.constant 22 : index
    %c0_394 = arith.constant 0 : index
    %490 = vector.load %arg10[%c15_392, %c22_393, %c0_394] : memref<26x48x128xf32, #tpu.memory_space<vmem>>, vector<8x16x128xf32>
    %c5_395 = arith.constant 5 : index
    %c5_396 = arith.constant 5 : index
    %c0_397 = arith.constant 0 : index
    %491 = vector.load %arg5[%c5_395, %c5_396, %c0_397] : memref<7x7x128xf32, #tpu.memory_space<vmem>>, vector<1x1x128xf32>
    %492 = vector.shape_cast %491 : vector<1x1x128xf32> to vector<128xf32>
    %493 = vector.shape_cast %492 : vector<128xf32> to vector<1x1x128xf32>
    %494 = vector.broadcast %493 : vector<1x1x128xf32> to vector<8x16x128xf32>
    %495 = arith.mulf %490, %494 : vector<8x16x128xf32>
    %496 = arith.addf %489, %495 : vector<8x16x128xf32>
    %c15_398 = arith.constant 15 : index
    %c25_399 = arith.constant 25 : index
    %c0_400 = arith.constant 0 : index
    %497 = vector.load %arg10[%c15_398, %c25_399, %c0_400] : memref<26x48x128xf32, #tpu.memory_space<vmem>>, vector<8x16x128xf32>
    %c5_401 = arith.constant 5 : index
    %c6_402 = arith.constant 6 : index
    %c0_403 = arith.constant 0 : index
    %498 = vector.load %arg5[%c5_401, %c6_402, %c0_403] : memref<7x7x128xf32, #tpu.memory_space<vmem>>, vector<1x1x128xf32>
    %499 = vector.shape_cast %498 : vector<1x1x128xf32> to vector<128xf32>
    %500 = vector.shape_cast %499 : vector<128xf32> to vector<1x1x128xf32>
    %501 = vector.broadcast %500 : vector<1x1x128xf32> to vector<8x16x128xf32>
    %502 = arith.mulf %497, %501 : vector<8x16x128xf32>
    %503 = arith.addf %496, %502 : vector<8x16x128xf32>
    %c18 = arith.constant 18 : index
    %c7_404 = arith.constant 7 : index
    %c0_405 = arith.constant 0 : index
    %504 = vector.load %arg10[%c18, %c7_404, %c0_405] : memref<26x48x128xf32, #tpu.memory_space<vmem>>, vector<8x16x128xf32>
    %c6_406 = arith.constant 6 : index
    %c0_407 = arith.constant 0 : index
    %c0_408 = arith.constant 0 : index
    %505 = vector.load %arg5[%c6_406, %c0_407, %c0_408] : memref<7x7x128xf32, #tpu.memory_space<vmem>>, vector<1x1x128xf32>
    %506 = vector.shape_cast %505 : vector<1x1x128xf32> to vector<128xf32>
    %507 = vector.shape_cast %506 : vector<128xf32> to vector<1x1x128xf32>
    %508 = vector.broadcast %507 : vector<1x1x128xf32> to vector<8x16x128xf32>
    %509 = arith.mulf %504, %508 : vector<8x16x128xf32>
    %510 = arith.addf %503, %509 : vector<8x16x128xf32>
    %c18_409 = arith.constant 18 : index
    %c10_410 = arith.constant 10 : index
    %c0_411 = arith.constant 0 : index
    %511 = vector.load %arg10[%c18_409, %c10_410, %c0_411] : memref<26x48x128xf32, #tpu.memory_space<vmem>>, vector<8x16x128xf32>
    %c6_412 = arith.constant 6 : index
    %c1_413 = arith.constant 1 : index
    %c0_414 = arith.constant 0 : index
    %512 = vector.load %arg5[%c6_412, %c1_413, %c0_414] : memref<7x7x128xf32, #tpu.memory_space<vmem>>, vector<1x1x128xf32>
    %513 = vector.shape_cast %512 : vector<1x1x128xf32> to vector<128xf32>
    %514 = vector.shape_cast %513 : vector<128xf32> to vector<1x1x128xf32>
    %515 = vector.broadcast %514 : vector<1x1x128xf32> to vector<8x16x128xf32>
    %516 = arith.mulf %511, %515 : vector<8x16x128xf32>
    %517 = arith.addf %510, %516 : vector<8x16x128xf32>
    %c18_415 = arith.constant 18 : index
    %c13_416 = arith.constant 13 : index
    %c0_417 = arith.constant 0 : index
    %518 = vector.load %arg10[%c18_415, %c13_416, %c0_417] : memref<26x48x128xf32, #tpu.memory_space<vmem>>, vector<8x16x128xf32>
    %c6_418 = arith.constant 6 : index
    %c2_419 = arith.constant 2 : index
    %c0_420 = arith.constant 0 : index
    %519 = vector.load %arg5[%c6_418, %c2_419, %c0_420] : memref<7x7x128xf32, #tpu.memory_space<vmem>>, vector<1x1x128xf32>
    %520 = vector.shape_cast %519 : vector<1x1x128xf32> to vector<128xf32>
    %521 = vector.shape_cast %520 : vector<128xf32> to vector<1x1x128xf32>
    %522 = vector.broadcast %521 : vector<1x1x128xf32> to vector<8x16x128xf32>
    %523 = arith.mulf %518, %522 : vector<8x16x128xf32>
    %524 = arith.addf %517, %523 : vector<8x16x128xf32>
    %c18_421 = arith.constant 18 : index
    %c16_422 = arith.constant 16 : index
    %c0_423 = arith.constant 0 : index
    %525 = vector.load %arg10[%c18_421, %c16_422, %c0_423] : memref<26x48x128xf32, #tpu.memory_space<vmem>>, vector<8x16x128xf32>
    %c6_424 = arith.constant 6 : index
    %c3_425 = arith.constant 3 : index
    %c0_426 = arith.constant 0 : index
    %526 = vector.load %arg5[%c6_424, %c3_425, %c0_426] : memref<7x7x128xf32, #tpu.memory_space<vmem>>, vector<1x1x128xf32>
    %527 = vector.shape_cast %526 : vector<1x1x128xf32> to vector<128xf32>
    %528 = vector.shape_cast %527 : vector<128xf32> to vector<1x1x128xf32>
    %529 = vector.broadcast %528 : vector<1x1x128xf32> to vector<8x16x128xf32>
    %530 = arith.mulf %525, %529 : vector<8x16x128xf32>
    %531 = arith.addf %524, %530 : vector<8x16x128xf32>
    %c18_427 = arith.constant 18 : index
    %c19_428 = arith.constant 19 : index
    %c0_429 = arith.constant 0 : index
    %532 = vector.load %arg10[%c18_427, %c19_428, %c0_429] : memref<26x48x128xf32, #tpu.memory_space<vmem>>, vector<8x16x128xf32>
    %c6_430 = arith.constant 6 : index
    %c4_431 = arith.constant 4 : index
    %c0_432 = arith.constant 0 : index
    %533 = vector.load %arg5[%c6_430, %c4_431, %c0_432] : memref<7x7x128xf32, #tpu.memory_space<vmem>>, vector<1x1x128xf32>
    %534 = vector.shape_cast %533 : vector<1x1x128xf32> to vector<128xf32>
    %535 = vector.shape_cast %534 : vector<128xf32> to vector<1x1x128xf32>
    %536 = vector.broadcast %535 : vector<1x1x128xf32> to vector<8x16x128xf32>
    %537 = arith.mulf %532, %536 : vector<8x16x128xf32>
    %538 = arith.addf %531, %537 : vector<8x16x128xf32>
    %c18_433 = arith.constant 18 : index
    %c22_434 = arith.constant 22 : index
    %c0_435 = arith.constant 0 : index
    %539 = vector.load %arg10[%c18_433, %c22_434, %c0_435] : memref<26x48x128xf32, #tpu.memory_space<vmem>>, vector<8x16x128xf32>
    %c6_436 = arith.constant 6 : index
    %c5_437 = arith.constant 5 : index
    %c0_438 = arith.constant 0 : index
    %540 = vector.load %arg5[%c6_436, %c5_437, %c0_438] : memref<7x7x128xf32, #tpu.memory_space<vmem>>, vector<1x1x128xf32>
    %541 = vector.shape_cast %540 : vector<1x1x128xf32> to vector<128xf32>
    %542 = vector.shape_cast %541 : vector<128xf32> to vector<1x1x128xf32>
    %543 = vector.broadcast %542 : vector<1x1x128xf32> to vector<8x16x128xf32>
    %544 = arith.mulf %539, %543 : vector<8x16x128xf32>
    %545 = arith.addf %538, %544 : vector<8x16x128xf32>
    %c18_439 = arith.constant 18 : index
    %c25_440 = arith.constant 25 : index
    %c0_441 = arith.constant 0 : index
    %546 = vector.load %arg10[%c18_439, %c25_440, %c0_441] : memref<26x48x128xf32, #tpu.memory_space<vmem>>, vector<8x16x128xf32>
    %c6_442 = arith.constant 6 : index
    %c6_443 = arith.constant 6 : index
    %c0_444 = arith.constant 0 : index
    %547 = vector.load %arg5[%c6_442, %c6_443, %c0_444] : memref<7x7x128xf32, #tpu.memory_space<vmem>>, vector<1x1x128xf32>
    %548 = vector.shape_cast %547 : vector<1x1x128xf32> to vector<128xf32>
    %549 = vector.shape_cast %548 : vector<128xf32> to vector<1x1x128xf32>
    %550 = vector.broadcast %549 : vector<1x1x128xf32> to vector<8x16x128xf32>
    %551 = arith.mulf %546, %550 : vector<8x16x128xf32>
    %552 = arith.addf %545, %551 : vector<8x16x128xf32>
    %553 = vector.shape_cast %552 : vector<8x16x128xf32> to vector<128x128xf32>
    %c0_445 = arith.constant 0 : index
    %c0_446 = arith.constant 0 : index
    %554 = vector.load %arg6[%c0_445, %c0_446] : memref<128x128xf32, #tpu.memory_space<vmem>>, vector<128x128xf32>
    %cst_447 = arith.constant dense<0.000000e+00> : vector<128x128xf32>
    %555 = tpu.matmul %553, %554, %cst_447 {dimension_numbers = #tpu.dot_dimension_numbers<[1], [0], [0], [1], [0, 0, 1, 1], [], []>} : vector<128x128xf32>, vector<128x128xf32>, vector<128x128xf32> -> vector<128x128xf32>
    %556 = vector.shape_cast %555 : vector<128x128xf32> to vector<8x16x128xf32>
    %c0_448 = arith.constant 0 : index
    %c0_449 = arith.constant 0 : index
    %557 = vector.load %arg7[%c0_448, %c0_449] : memref<1x128xf32, #tpu.memory_space<vmem>>, vector<1x128xf32>
    %558 = vector.shape_cast %557 : vector<1x128xf32> to vector<128xf32>
    %559 = vector.shape_cast %558 : vector<128xf32> to vector<1x1x128xf32>
    %560 = vector.broadcast %559 : vector<1x1x128xf32> to vector<8x16x128xf32>
    %561 = arith.addf %556, %560 : vector<8x16x128xf32>
    %c11 = arith.constant 11 : index
    %c8_450 = arith.constant 8 : index
    %c0_451 = arith.constant 0 : index
    %562 = vector.load %arg9[%c11, %c8_450, %c0_451] : memref<30x32x128xf32, #tpu.memory_space<vmem>>, vector<8x16x128xf32>
    %563 = arith.mulf %562, %561 : vector<8x16x128xf32>
    %c0_452 = arith.constant 0 : index
    %c0_453 = arith.constant 0 : index
    %c0_454 = arith.constant 0 : index
    %c0_455 = arith.constant 0 : index
    %564 = vector.load %arg8[%c0_452, %c0_453, %c0_454, %c0_455] : memref<1x8x16x128xf32, #tpu.memory_space<vmem>>, vector<1x8x16x128xf32>
    %565 = vector.shape_cast %564 : vector<1x8x16x128xf32> to vector<8x16x128xf32>
    %566 = vector.shape_cast %563 : vector<8x16x128xf32> to vector<1x8x16x128xf32>
    tpu.vector_store %arg8[%c0_452, %c0_453, %c0_454, %c0_455], %566 {strides = array<i32>} : memref<1x8x16x128xf32, #tpu.memory_space<vmem>>, vector<1x8x16x128xf32>,
    return
  }
  func.func @transform_1(%arg0: i32, %arg1: i32) -> (i32, i32, i32) {
    %c0_i32 = arith.constant 0 : i32
    %c0_i32_0 = arith.constant 0 : i32
    %c0_i32_1 = arith.constant 0 : i32
    %c0_i32_2 = arith.constant 0 : i32
    return %c0_i32, %c0_i32_0, %c0_i32_1 : i32, i32, i32
  }
  func.func @transform_2(%arg0: i32, %arg1: i32) -> (i32, i32) {
    %c0_i32 = arith.constant 0 : i32
    %c0_i32_0 = arith.constant 0 : i32
    %c0_i32_1 = arith.constant 0 : i32
    return %c0_i32, %c0_i32_0 : i32, i32
  }
  func.func @transform_3(%arg0: i32, %arg1: i32) -> (i32, i32, i32) {
    %c0_i32 = arith.constant 0 : i32
    %c0_i32_0 = arith.constant 0 : i32
    %c0_i32_1 = arith.constant 0 : i32
    %c0_i32_2 = arith.constant 0 : i32
    return %c0_i32, %c0_i32_0, %c0_i32_1 : i32, i32, i32
  }
  func.func @transform_4(%arg0: i32, %arg1: i32) -> (i32, i32) {
    %c0_i32 = arith.constant 0 : i32
    %c0_i32_0 = arith.constant 0 : i32
    %c0_i32_1 = arith.constant 0 : i32
    return %c0_i32, %c0_i32_0 : i32, i32
  }
  func.func @transform_5(%arg0: i32, %arg1: i32) -> (i32, i32) {
    %c0_i32 = arith.constant 0 : i32
    %c0_i32_0 = arith.constant 0 : i32
    %c0_i32_1 = arith.constant 0 : i32
    return %c0_i32, %c0_i32_0 : i32, i32
  }
  func.func @transform_6(%arg0: i32, %arg1: i32) -> (i32, i32, i32, i32) {
    %c0_i32 = arith.constant 0 : i32
    %c0_i32_0 = arith.constant 0 : i32
    %c0_i32_1 = arith.constant 0 : i32
    return %arg0, %arg1, %c0_i32, %c0_i32_0 : i32, i32, i32, i32
  }
}

</mosaic_0001>

<llo_original>
// kernel: lka_forward.1
$region0: #{lka_forward.1}
  #allocation0 [shape = 'u32[]', space=smem, size = 0x4, offset = 0x4, fixed_abs, tag = 'smem constant byte address 0x4 - core index']
  #allocation1 [shape = 'u32[144,128]{1,0:T(1,128)}', space=vmem, size = 0x12000, scoped, tag = 'internal scratch']
  #allocation2 [shape = 'f32[30,32,128]{2,1,0:T(8,128)}', space=vmem, size = 0x78000, scoped, tag = 'scratch operand']
  #allocation3 [shape = 'f32[26,48,128]{2,1,0:T(8,128)}', space=vmem, size = 0x9c000, scoped, tag = 'scratch operand']
  #allocation4 [shape = 's32[1]{0}', space=sflag, size = 0x4, scoped, tag = 'scratch operand']
  #allocation5 [shape = 's32[]', space=sflag, size = 0x4, offset = 0, fixed_abs, tag = 'sflag constant byte address 0x0 - dummy sync flag']
  %s0 = inlined_call_operand.vmem [shape: f32[2,38,32,128], index: 0, kind: input, shape index: {}]
  %s1 = inlined_call_operand.vmem [shape: f32[5,5,128], index: 1, kind: input, shape index: {}]
  %s2 = inlined_call_operand.vmem [shape: f32[1,128], index: 2, kind: input, shape index: {}]
  %s3 = inlined_call_operand.vmem [shape: f32[7,7,128], index: 3, kind: input, shape index: {}]
  %s4 = inlined_call_operand.vmem [shape: f32[128,128], index: 4, kind: input, shape index: {}]
  %s5 = inlined_call_operand.vmem [shape: f32[1,128], index: 5, kind: input, shape index: {}]
  %s6 = inlined_call_operand.vmem [shape: f32[2,16,16,128], index: 6, kind: output, shape index: {}]
  %s7 = sld [smem:[#allocation0]]
  $region87: #{lka_forward.1} parent=0
    _
  %s9 = ssub.s32 1, %s7
  %s10 = scalar_select 0, %s9, %s7
  loop: start=0, step=1, limit=6
  $region2: #{lka_forward.1} parent=0 // loop_pre_header
    _
  $region3: #{lka_forward.1} parent=0 // loop_header
    %s12 = sphi 0, %s16
    %p13 = scmp.ge.s32.totalorder %s12, 6
    %s19 = sphi 0, %s31
    %s20 = sphi 0, %s27
    %s21 = sphi 0, %s19
    %s22 = sphi 0, %s20
    %s23 = sphi 0, %s21
    %s24 = sphi 0, %s22
    %s32 = sphi 0, %s32
    %s34 = sphi 0, %s32
    %s35 = sphi 0, %s34
    %s49 = sphi 0, %s35
    %s53 = sphi 0, %s53
    %s55 = sphi 0, %s53
    %s56 = sphi 0, %s55
    %s70 = sphi 0, %s56
    %s74 = sphi 0, %s74
    %s76 = sphi 0, %s74
    %s77 = sphi 0, %s76
    %s91 = sphi 0, %s77
    %s95 = sphi 0, %s95
    %s97 = sphi 0, %s95
    %s98 = sphi 0, %s97
    %s112 = sphi 0, %s98
    %s116 = sphi 0, %s116
    %s118 = sphi 0, %s116
    %s119 = sphi 0, %s118
    %s133 = sphi 0, %s119
    %s141 = sphi 0, %s143
    %s144 = sphi 0, %s141
    %s145 = sphi 0, %s144
    %s161 = sphi 0, %s145
  $region4: #{lka_forward.1} parent=0 // loop_header_branch
    %15 = sbr.rel (%p13) target = $region8
  $region5: #{lka_forward.1} parent=0 // loop_body
    %s17 = ssub.s32 %s12, 1
    %s18 = ssub.s32 %s12, 2
    %s25 = sadd.s32 1, %s20
    %p26 = scmp.ge.s32.totalorder %s25, 2
    %s27 = scalar_select %p26, 0, %s25
    %s28 = sadd.s32 1, %s19
    %s29 = scalar_select %p26, %s28, %s19
    %p30 = scmp.ge.s32.totalorder %s29, 2
    %s31 = scalar_select %p30, 0, %s29
    %s33 = sadd.s32 %s32, 1
    %p36 = scmp.eq.s32.totalorder %s12, 3
    %p37 = scmp.ne.s32.totalorder %s32, %s34
    %p38 = scmp.eq.s32.totalorder %s12, 0
    %p39 = por %p37, %p38
    %p40 = scmp.ne.s32.totalorder %s32, %s34
    %p41 = scmp.eq.s32.totalorder %s17, 3
    %p42 = por %p40, %p41
    %p43 = scmp.ne.s32.totalorder %s34, %s35
    %p44 = scmp.eq.s32.totalorder %s17, 0
    %p45 = por %p43, %p44
    %p46 = scmp.ne.s32.totalorder %s34, %s35
    %p47 = scmp.eq.s32.totalorder %s18, 3
    %p48 = por %p46, %p47
    %p50 = scmp.ne.s32.totalorder %s35, %s49
    %p51 = scmp.eq.s32.totalorder %s18, 0
    %p52 = por %p50, %p51
    %s54 = sadd.s32 %s53, 1
    %p57 = scmp.eq.s32.totalorder %s12, 3
    %p58 = scmp.ne.s32.totalorder %s53, %s55
    %p59 = scmp.eq.s32.totalorder %s12, 0
    %p60 = por %p58, %p59
    %p61 = scmp.ne.s32.totalorder %s53, %s55
    %p62 = scmp.eq.s32.totalorder %s17, 3
    %p63 = por %p61, %p62
    %p64 = scmp.ne.s32.totalorder %s55, %s56
    %p65 = scmp.eq.s32.totalorder %s17, 0
    %p66 = por %p64, %p65
    %p67 = scmp.ne.s32.totalorder %s55, %s56
    %p68 = scmp.eq.s32.totalorder %s18, 3
    %p69 = por %p67, %p68
    %p71 = scmp.ne.s32.totalorder %s56, %s70
    %p72 = scmp.eq.s32.totalorder %s18, 0
    %p73 = por %p71, %p72
    %s75 = sadd.s32 %s74, 1
    %p78 = scmp.eq.s32.totalorder %s12, 3
    %p79 = scmp.ne.s32.totalorder %s74, %s76
    %p80 = scmp.eq.s32.totalorder %s12, 0
    %p81 = por %p79, %p80
    %p82 = scmp.ne.s32.totalorder %s74, %s76
    %p83 = scmp.eq.s32.totalorder %s17, 3
    %p84 = por %p82, %p83
    %p85 = scmp.ne.s32.totalorder %s76, %s77
    %p86 = scmp.eq.s32.totalorder %s17, 0
    %p87 = por %p85, %p86
    %p88 = scmp.ne.s32.totalorder %s76, %s77
    %p89 = scmp.eq.s32.totalorder %s18, 3
    %p90 = por %p88, %p89
    %p92 = scmp.ne.s32.totalorder %s77, %s91
    %p93 = scmp.eq.s32.totalorder %s18, 0
    %p94 = por %p92, %p93
    %s96 = sadd.s32 %s95, 1
    %p99 = scmp.eq.s32.totalorder %s12, 3
    %p100 = scmp.ne.s32.totalorder %s95, %s97
    %p101 = scmp.eq.s32.totalorder %s12, 0
    %p102 = por %p100, %p101
    %p103 = scmp.ne.s32.totalorder %s95, %s97
    %p104 = scmp.eq.s32.totalorder %s17, 3
    %p105 = por %p103, %p104
    %p106 = scmp.ne.s32.totalorder %s97, %s98
    %p107 = scmp.eq.s32.totalorder %s17, 0
    %p108 = por %p106, %p107
    %p109 = scmp.ne.s32.totalorder %s97, %s98
    %p110 = scmp.eq.s32.totalorder %s18, 3
    %p111 = por %p109, %p110
    %p113 = scmp.ne.s32.totalorder %s98, %s112
    %p114 = scmp.eq.s32.totalorder %s18, 0
    %p115 = por %p113, %p114
    %s117 = sadd.s32 %s116, 1
    %p120 = scmp.eq.s32.totalorder %s12, 3
    %p121 = scmp.ne.s32.totalorder %s116, %s118
    %p122 = scmp.eq.s32.totalorder %s12, 0
    %p123 = por %p121, %p122
    %p124 = scmp.ne.s32.totalorder %s116, %s118
    %p125 = scmp.eq.s32.totalorder %s17, 3
    %p126 = por %p124, %p125
    %p127 = scmp.ne.s32.totalorder %s118, %s119
    %p128 = scmp.eq.s32.totalorder %s17, 0
    %p129 = por %p127, %p128
    %p130 = scmp.ne.s32.totalorder %s118, %s119
    %p131 = scmp.eq.s32.totalorder %s18, 3
    %p132 = por %p130, %p131
    %p134 = scmp.ne.s32.totalorder %s119, %s133
    %p135 = scmp.eq.s32.totalorder %s18, 0
    %p136 = por %p134, %p135
    %s137 = ssub.s32 %s19, %s31
    %s138 = ssub.s32 %s20, %s27
    %s139 = sor.u32 %s137, %s138
    %p140 = scmp.eq.s32.totalorder %s139, 0
    %s142 = sadd.s32 %s141, 1
    %s143 = scalar_select %p140, %s141, %s142
    %p146 = pneg %p140
    %p147 = scmp.eq.s32.totalorder %s12, 3
    %p148 = por %p146, %p147
    %p149 = scmp.ne.s32.totalorder %s141, %s144
    %p150 = scmp.eq.s32.totalorder %s12, 0
    %p151 = por %p149, %p150
    %p152 = scmp.ne.s32.totalorder %s141, %s144
    %p153 = scmp.eq.s32.totalorder %s17, 3
    %p154 = por %p152, %p153
    %p155 = scmp.ne.s32.totalorder %s144, %s145
    %p156 = scmp.eq.s32.totalorder %s17, 0
    %p157 = por %p155, %p156
    %p158 = scmp.ne.s32.totalorder %s144, %s145
    %p159 = scmp.eq.s32.totalorder %s18, 3
    %p160 = por %p158, %p159
    %p162 = scmp.ne.s32.totalorder %s145, %s161
    %p163 = scmp.eq.s32.totalorder %s18, 0
    %p164 = por %p162, %p163
    %p165 = scmp.le.s32.totalorder 1, %s12
    %p166 = scmp.lt.s32.totalorder %s12, 5
    %p167 = pnand %p165, %p166
    %p168 = pneg %p167
    // Predicated region
    $region9: #{lka_forward.1} parent=5 // pred_check
      _
    $region10: #{lka_forward.1} parent=5 // pred_check_branch
      %170 = sbr.rel (%p167) target = $region12
    $region11: #{lka_forward.1} parent=5 // pred_region
      %s171 = ssub.s32 %s12, 1
      // Predicated region
      $region13: #{lka_forward.1} parent=11 // pred_check
        %p172 = pneg %p45
      $region14: #{lka_forward.1} parent=11 // pred_check_branch
        %174 = sbr.rel (%p172) target = $region16
      $region15: #{lka_forward.1} parent=11 // pred_region
        _
      $region16: #{lka_forward.1} parent=11 // pred_fallthru
        _
      // Predicated region
      $region17: #{lka_forward.1} parent=11 // pred_check
        %p175 = pneg %p66
      $region18: #{lka_forward.1} parent=11 // pred_check_branch
        %177 = sbr.rel (%p175) target = $region20
      $region19: #{lka_forward.1} parent=11 // pred_region
        _
      $region20: #{lka_forward.1} parent=11 // pred_fallthru
        _
      // Predicated region
      $region21: #{lka_forward.1} parent=11 // pred_check
        %p178 = pneg %p87
      $region22: #{lka_forward.1} parent=11 // pred_check_branch
        %180 = sbr.rel (%p178) target = $region24
      $region23: #{lka_forward.1} parent=11 // pred_region
        _
      $region24: #{lka_forward.1} parent=11 // pred_fallthru
        _
      // Predicated region
      $region25: #{lka_forward.1} parent=11 // pred_check
        %p181 = pneg %p108
      $region26: #{lka_forward.1} parent=11 // pred_check_branch
        %183 = sbr.rel (%p181) target = $region28
      $region27: #{lka_forward.1} parent=11 // pred_region
        _
      $region28: #{lka_forward.1} parent=11 // pred_fallthru
        _
      // Predicated region
      $region29: #{lka_forward.1} parent=11 // pred_check
        %p184 = pneg %p129
      $region30: #{lka_forward.1} parent=11 // pred_check_branch
        %186 = sbr.rel (%p184) target = $region32
      $region31: #{lka_forward.1} parent=11 // pred_region
        _
      $region32: #{lka_forward.1} parent=11 // pred_fallthru
        _
    $region12: #{lka_forward.1} parent=5 // pred_fallthru
      _
    %p187 = scmp.lt.s32.totalorder %s12, 4
    // Predicated region
    $region33: #{lka_forward.1} parent=5 // pred_check
      %p188 = pneg %p187
    $region34: #{lka_forward.1} parent=5 // pred_check_branch
      %190 = sbr.rel (%p188) target = $region36
    $region35: #{lka_forward.1} parent=5 // pred_region
      _
    $region36: #{lka_forward.1} parent=5 // pred_fallthru
      _
    %p191 = scmp.le.s32.totalorder 1, %s12
    %p192 = scmp.lt.s32.totalorder %s12, 5
    %p193 = pnand %p191, %p192
    %p194 = pneg %p193
    // Predicated region
    $region37: #{lka_forward.1} parent=5 // pred_check
      _
    $region38: #{lka_forward.1} parent=5 // pred_check_branch
      %196 = sbr.rel (%p193) target = $region40
    $region39: #{lka_forward.1} parent=5 // pred_region
      %s197 = ssub.s32 %s12, 1
      %p198 = pneg %p45
      %p199 = pneg %p42
      %p200 = pneg %p66
      %p201 = pneg %p63
      %p202 = pneg %p87
      %p203 = pneg %p84
      %p204 = pneg %p108
      %p205 = pneg %p105
      %p206 = pneg %p129
      %p207 = pneg %p126
      %p208 = pneg %p157
      %p209 = pneg %p154
      %s210 = smul.u32 8, %s22
      %p211 = scmp.lt.s32.totalorder %s21, 1
      %s212 = scalar_select %p211, %s21, 1
      %p213 = scmp.lt.s32.totalorder %s210, 15
      %s214 = scalar_select %p213, %s210, 15
      %s215 = smul.addr %s214, 2
      %s216 = smul.addr %s212, 32
      %s217 = sadd.s32 %s215, %s216
      %s218 = smul.addr %s217, 8
      %s219 = scalar_lea.vmem %s6, %s218
      %s220 = smul.u32 8, %s22
      %p221 = scmp.lt.s32.totalorder %s21, 1
      %s222 = scalar_select %p221, %s21, 1
      %p223 = scmp.lt.s32.totalorder %s220, 15
      %s224 = scalar_select %p223, %s220, 15
      %s225 = smul.addr %s224, 2
      %s226 = smul.addr %s222, 32
      %s227 = sadd.s32 %s225, %s226
      %s228 = smul.addr %s227, 8
      %s229 = scalar_lea.vmem %s6, %s228
      %s230 = smul.u32 8, %s22
      %s231 = smul.u32 %s22, 8
      %s232 = smul.u32 %s231, 32
      %s233 = smul.u32 %s21, 1216
      %s234 = sadd.s32 %s232, %s233
      %s235 = scalar_lea.vmem %s0, %s234
      %p237 = scmp.lt.u32.totalorder 960, 8
      %p238 = pneg %p237
      // Predicated region
      $region41: #{lka_forward.1} parent=39 // pred_check
        _
      $region42: #{lka_forward.1} parent=39 // pred_check_branch
        %240 = sbr.rel (%p237) target = $region44
      $region43: #{lka_forward.1} parent=39 // pred_region
        %s255 = sand.u32 960, 7
        %p256 = scmp.eq.s32.totalorder %s255, 0
        // Predicated region
        $region56: #{lka_forward.1} parent=43 // pred_check
          %p257 = pneg %p256
        $region57: #{lka_forward.1} parent=43 // pred_check_branch
          %259 = sbr.rel (%p257) target = $region59
        $region58: #{lka_forward.1} parent=43 // pred_region
          loop: start=0, step=1, limit=1
          $region60: #{lka_forward.1} parent=58 // loop_pre_header
            _
          $region61: #{lka_forward.1} parent=58 // loop_header
            %s261 = sphi 0, %s265
            %p262 = scmp.ge.s32.totalorder %s261, 1
            %s266 = sphi %s235, %s235
            %s267 = sphi [#allocation2], [#allocation2]
          $region62: #{lka_forward.1} parent=58 // loop_header_branch
            %264 = sbr.rel (%p262) target = $region66
          $region63: #{lka_forward.1} parent=58 // loop_body
            %v268 = vld [vmem:[%s266] sm:$0xff]
            %269 = vst [vmem:[%s267] sm:$0xff] %v268
            %v270 = vld [vmem:[%s266 + $0x8] sm:$0xff]
            %271 = vst [vmem:[%s267 + $0x8] sm:$0xff] %v270
            %v272 = vld [vmem:[%s266 + $0x10] sm:$0xff]
            %273 = vst [vmem:[%s267 + $0x10] sm:$0xff] %v272
            %v274 = vld [vmem:[%s266 + $0x18] sm:$0xff]
            %275 = vst [vmem:[%s267 + $0x18] sm:$0xff] %v274
            %v276 = vld [vmem:[%s266 + $0x20] sm:$0xff]
            %277 = vst [vmem:[%s267 + $0x20] sm:$0xff] %v276
            %v278 = vld [vmem:[%s266 + $0x28] sm:$0xff]
            %279 = vst [vmem:[%s267 + $0x28] sm:$0xff] %v278
            %v280 = vld [vmem:[%s266 + $0x30] sm:$0xff]
            %281 = vst [vmem:[%s267 + $0x30] sm:$0xff] %v280
            %v282 = vld [vmem:[%s266 + $0x38] sm:$0xff]
            %283 = vst [vmem:[%s267 + $0x38] sm:$0xff] %v282
            %v284 = vld [vmem:[%s266 + $0x40] sm:$0xff]
            %285 = vst [vmem:[%s267 + $0x40] sm:$0xff] %v284
            %v286 = vld [vmem:[%s266 + $0x48] sm:$0xff]
            %287 = vst [vmem:[%s267 + $0x48] sm:$0xff] %v286
            %v288 = vld [vmem:[%s266 + $0x50] sm:$0xff]
            %289 = vst [vmem:[%s267 + $0x50] sm:$0xff] %v288
            %v290 = vld [vmem:[%s266 + $0x58] sm:$0xff]
            %291 = vst [vmem:[%s267 + $0x58] sm:$0xff] %v290
            %v292 = vld [vmem:[%s266 + $0x60] sm:$0xff]
            %293 = vst [vmem:[%s267 + $0x60] sm:$0xff] %v292
            %v294 = vld [vmem:[%s266 + $0x68] sm:$0xff]
            %295 = vst [vmem:[%s267 + $0x68] sm:$0xff] %v294
            %v296 = vld [vmem:[%s266 + $0x70] sm:$0xff]
            %297 = vst [vmem:[%s267 + $0x70] sm:$0xff] %v296
            %v298 = vld [vmem:[%s266 + $0x78] sm:$0xff]
            %299 = vst [vmem:[%s267 + $0x78] sm:$0xff] %v298
            %v300 = vld [vmem:[%s266 + $0x80] sm:$0xff]
            %301 = vst [vmem:[%s267 + $0x80] sm:$0xff] %v300
            %v302 = vld [vmem:[%s266 + $0x88] sm:$0xff]
            %303 = vst [vmem:[%s267 + $0x88] sm:$0xff] %v302
            %v304 = vld [vmem:[%s266 + $0x90] sm:$0xff]
            %305 = vst [vmem:[%s267 + $0x90] sm:$0xff] %v304
            %v306 = vld [vmem:[%s266 + $0x98] sm:$0xff]
            %307 = vst [vmem:[%s267 + $0x98] sm:$0xff] %v306
            %v308 = vld [vmem:[%s266 + $0xa0] sm:$0xff]
            %309 = vst [vmem:[%s267 + $0xa0] sm:$0xff] %v308
            %v310 = vld [vmem:[%s266 + $0xa8] sm:$0xff]
            %311 = vst [vmem:[%s267 + $0xa8] sm:$0xff] %v310
            %v312 = vld [vmem:[%s266 + $0xb0] sm:$0xff]
            %313 = vst [vmem:[%s267 + $0xb0] sm:$0xff] %v312
            %v314 = vld [vmem:[%s266 + $0xb8] sm:$0xff]
            %315 = vst [vmem:[%s267 + $0xb8] sm:$0xff] %v314
            %v316 = vld [vmem:[%s266 + $0xc0] sm:$0xff]
            %317 = vst [vmem:[%s267 + $0xc0] sm:$0xff] %v316
            %v318 = vld [vmem:[%s266 + $0xc8] sm:$0xff]
            %319 = vst [vmem:[%s267 + $0xc8] sm:$0xff] %v318
            %v320 = vld [vmem:[%s266 + $0xd0] sm:$0xff]
            %321 = vst [vmem:[%s267 + $0xd0] sm:$0xff] %v320
            %v322 = vld [vmem:[%s266 + $0xd8] sm:$0xff]
            %323 = vst [vmem:[%s267 + $0xd8] sm:$0xff] %v322
            %v324 = vld [vmem:[%s266 + $0xe0] sm:$0xff]
            %325 = vst [vmem:[%s267 + $0xe0] sm:$0xff] %v324
            %v326 = vld [vmem:[%s266 + $0xe8] sm:$0xff]
            %327 = vst [vmem:[%s267 + $0xe8] sm:$0xff] %v326
            %v328 = vld [vmem:[%s266 + $0xf0] sm:$0xff]
            %329 = vst [vmem:[%s267 + $0xf0] sm:$0xff] %v328
            %v330 = vld [vmem:[%s266 + $0xf8] sm:$0xff]
            %331 = vst [vmem:[%s267 + $0xf8] sm:$0xff] %v330
            %v332 = vld [vmem:[%s266 + $0x100] sm:$0xff]
            %333 = vst [vmem:[%s267 + $0x100] sm:$0xff] %v332
            %v334 = vld [vmem:[%s266 + $0x108] sm:$0xff]
            %335 = vst [vmem:[%s267 + $0x108] sm:$0xff] %v334
            %v336 = vld [vmem:[%s266 + $0x110] sm:$0xff]
            %337 = vst [vmem:[%s267 + $0x110] sm:$0xff] %v336
            %v338 = vld [vmem:[%s266 + $0x118] sm:$0xff]
            %339 = vst [vmem:[%s267 + $0x118] sm:$0xff] %v338
            %v340 = vld [vmem:[%s266 + $0x120] sm:$0xff]
            %341 = vst [vmem:[%s267 + $0x120] sm:$0xff] %v340
            %v342 = vld [vmem:[%s266 + $0x128] sm:$0xff]
            %343 = vst [vmem:[%s267 + $0x128] sm:$0xff] %v342
            %v344 = vld [vmem:[%s266 + $0x130] sm:$0xff]
            %345 = vst [vmem:[%s267 + $0x130] sm:$0xff] %v344
            %v346 = vld [vmem:[%s266 + $0x138] sm:$0xff]
            %347 = vst [vmem:[%s267 + $0x138] sm:$0xff] %v346
            %v348 = vld [vmem:[%s266 + $0x140] sm:$0xff]
            %349 = vst [vmem:[%s267 + $0x140] sm:$0xff] %v348
            %v350 = vld [vmem:[%s266 + $0x148] sm:$0xff]
            %351 = vst [vmem:[%s267 + $0x148] sm:$0xff] %v350
            %v352 = vld [vmem:[%s266 + $0x150] sm:$0xff]
            %353 = vst [vmem:[%s267 + $0x150] sm:$0xff] %v352
            %v354 = vld [vmem:[%s266 + $0x158] sm:$0xff]
            %355 = vst [vmem:[%s267 + $0x158] sm:$0xff] %v354
            %v356 = vld [vmem:[%s266 + $0x160] sm:$0xff]
            %357 = vst [vmem:[%s267 + $0x160] sm:$0xff] %v356
            %v358 = vld [vmem:[%s266 + $0x168] sm:$0xff]
            %359 = vst [vmem:[%s267 + $0x168] sm:$0xff] %v358
            %v360 = vld [vmem:[%s266 + $0x170] sm:$0xff]
            %361 = vst [vmem:[%s267 + $0x170] sm:$0xff] %v360
            %v362 = vld [vmem:[%s266 + $0x178] sm:$0xff]
            %363 = vst [vmem:[%s267 + $0x178] sm:$0xff] %v362
            %v364 = vld [vmem:[%s266 + $0x180] sm:$0xff]
            %365 = vst [vmem:[%s267 + $0x180] sm:$0xff] %v364
            %v366 = vld [vmem:[%s266 + $0x188] sm:$0xff]
            %367 = vst [vmem:[%s267 + $0x188] sm:$0xff] %v366
            %v368 = vld [vmem:[%s266 + $0x190] sm:$0xff]
            %369 = vst [vmem:[%s267 + $0x190] sm:$0xff] %v368
            %v370 = vld [vmem:[%s266 + $0x198] sm:$0xff]
            %371 = vst [vmem:[%s267 + $0x198] sm:$0xff] %v370
            %v372 = vld [vmem:[%s266 + $0x1a0] sm:$0xff]
            %373 = vst [vmem:[%s267 + $0x1a0] sm:$0xff] %v372
            %v374 = vld [vmem:[%s266 + $0x1a8] sm:$0xff]
            %375 = vst [vmem:[%s267 + $0x1a8] sm:$0xff] %v374
            %v376 = vld [vmem:[%s266 + $0x1b0] sm:$0xff]
            %377 = vst [vmem:[%s267 + $0x1b0] sm:$0xff] %v376
            %v378 = vld [vmem:[%s266 + $0x1b8] sm:$0xff]
            %379 = vst [vmem:[%s267 + $0x1b8] sm:$0xff] %v378
            %v380 = vld [vmem:[%s266 + $0x1c0] sm:$0xff]
            %381 = vst [vmem:[%s267 + $0x1c0] sm:$0xff] %v380
            %v382 = vld [vmem:[%s266 + $0x1c8] sm:$0xff]
            %383 = vst [vmem:[%s267 + $0x1c8] sm:$0xff] %v382
            %v384 = vld [vmem:[%s266 + $0x1d0] sm:$0xff]
            %385 = vst [vmem:[%s267 + $0x1d0] sm:$0xff] %v384
            %v386 = vld [vmem:[%s266 + $0x1d8] sm:$0xff]
            %387 = vst [vmem:[%s267 + $0x1d8] sm:$0xff] %v386
            %v388 = vld [vmem:[%s266 + $0x1e0] sm:$0xff]
            %389 = vst [vmem:[%s267 + $0x1e0] sm:$0xff] %v388
            %v390 = vld [vmem:[%s266 + $0x1e8] sm:$0xff]
            %391 = vst [vmem:[%s267 + $0x1e8] sm:$0xff] %v390
            %v392 = vld [vmem:[%s266 + $0x1f0] sm:$0xff]
            %393 = vst [vmem:[%s267 + $0x1f0] sm:$0xff] %v392
            %v394 = vld [vmem:[%s266 + $0x1f8] sm:$0xff]
            %395 = vst [vmem:[%s267 + $0x1f8] sm:$0xff] %v394
            %v396 = vld [vmem:[%s266 + $0x200] sm:$0xff]
            %397 = vst [vmem:[%s267 + $0x200] sm:$0xff] %v396
            %v398 = vld [vmem:[%s266 + $0x208] sm:$0xff]
            %399 = vst [vmem:[%s267 + $0x208] sm:$0xff] %v398
            %v400 = vld [vmem:[%s266 + $0x210] sm:$0xff]
            %401 = vst [vmem:[%s267 + $0x210] sm:$0xff] %v400
            %v402 = vld [vmem:[%s266 + $0x218] sm:$0xff]
            %403 = vst [vmem:[%s267 + $0x218] sm:$0xff] %v402
            %v404 = vld [vmem:[%s266 + $0x220] sm:$0xff]
            %405 = vst [vmem:[%s267 + $0x220] sm:$0xff] %v404
            %v406 = vld [vmem:[%s266 + $0x228] sm:$0xff]
            %407 = vst [vmem:[%s267 + $0x228] sm:$0xff] %v406
            %v408 = vld [vmem:[%s266 + $0x230] sm:$0xff]
            %409 = vst [vmem:[%s267 + $0x230] sm:$0xff] %v408
            %v410 = vld [vmem:[%s266 + $0x238] sm:$0xff]
            %411 = vst [vmem:[%s267 + $0x238] sm:$0xff] %v410
            %v412 = vld [vmem:[%s266 + $0x240] sm:$0xff]
            %413 = vst [vmem:[%s267 + $0x240] sm:$0xff] %v412
            %v414 = vld [vmem:[%s266 + $0x248] sm:$0xff]
            %415 = vst [vmem:[%s267 + $0x248] sm:$0xff] %v414
            %v416 = vld [vmem:[%s266 + $0x250] sm:$0xff]
            %417 = vst [vmem:[%s267 + $0x250] sm:$0xff] %v416
            %v418 = vld [vmem:[%s266 + $0x258] sm:$0xff]
            %419 = vst [vmem:[%s267 + $0x258] sm:$0xff] %v418
            %v420 = vld [vmem:[%s266 + $0x260] sm:$0xff]
            %421 = vst [vmem:[%s267 + $0x260] sm:$0xff] %v420
            %v422 = vld [vmem:[%s266 + $0x268] sm:$0xff]
            %423 = vst [vmem:[%s267 + $0x268] sm:$0xff] %v422
            %v424 = vld [vmem:[%s266 + $0x270] sm:$0xff]
            %425 = vst [vmem:[%s267 + $0x270] sm:$0xff] %v424
            %v426 = vld [vmem:[%s266 + $0x278] sm:$0xff]
            %427 = vst [vmem:[%s267 + $0x278] sm:$0xff] %v426
            %v428 = vld [vmem:[%s266 + $0x280] sm:$0xff]
            %429 = vst [vmem:[%s267 + $0x280] sm:$0xff] %v428
            %v430 = vld [vmem:[%s266 + $0x288] sm:$0xff]
            %431 = vst [vmem:[%s267 + $0x288] sm:$0xff] %v430
            %v432 = vld [vmem:[%s266 + $0x290] sm:$0xff]
            %433 = vst [vmem:[%s267 + $0x290] sm:$0xff] %v432
            %v434 = vld [vmem:[%s266 + $0x298] sm:$0xff]
            %435 = vst [vmem:[%s267 + $0x298] sm:$0xff] %v434
            %v436 = vld [vmem:[%s266 + $0x2a0] sm:$0xff]
            %437 = vst [vmem:[%s267 + $0x2a0] sm:$0xff] %v436
            %v438 = vld [vmem:[%s266 + $0x2a8] sm:$0xff]
            %439 = vst [vmem:[%s267 + $0x2a8] sm:$0xff] %v438
            %v440 = vld [vmem:[%s266 + $0x2b0] sm:$0xff]
            %441 = vst [vmem:[%s267 + $0x2b0] sm:$0xff] %v440
            %v442 = vld [vmem:[%s266 + $0x2b8] sm:$0xff]
            %443 = vst [vmem:[%s267 + $0x2b8] sm:$0xff] %v442
            %v444 = vld [vmem:[%s266 + $0x2c0] sm:$0xff]
            %445 = vst [vmem:[%s267 + $0x2c0] sm:$0xff] %v444
            %v446 = vld [vmem:[%s266 + $0x2c8] sm:$0xff]
            %447 = vst [vmem:[%s267 + $0x2c8] sm:$0xff] %v446
            %v448 = vld [vmem:[%s266 + $0x2d0] sm:$0xff]
            %449 = vst [vmem:[%s267 + $0x2d0] sm:$0xff] %v448
            %v450 = vld [vmem:[%s266 + $0x2d8] sm:$0xff]
            %451 = vst [vmem:[%s267 + $0x2d8] sm:$0xff] %v450
            %v452 = vld [vmem:[%s266 + $0x2e0] sm:$0xff]
            %453 = vst [vmem:[%s267 + $0x2e0] sm:$0xff] %v452
            %v454 = vld [vmem:[%s266 + $0x2e8] sm:$0xff]
            %455 = vst [vmem:[%s267 + $0x2e8] sm:$0xff] %v454
            %v456 = vld [vmem:[%s266 + $0x2f0] sm:$0xff]
            %457 = vst [vmem:[%s267 + $0x2f0] sm:$0xff] %v456
            %v458 = vld [vmem:[%s266 + $0x2f8] sm:$0xff]
            %459 = vst [vmem:[%s267 + $0x2f8] sm:$0xff] %v458
            %v460 = vld [vmem:[%s266 + $0x300] sm:$0xff]
            %461 = vst [vmem:[%s267 + $0x300] sm:$0xff] %v460
            %v462 = vld [vmem:[%s266 + $0x308] sm:$0xff]
            %463 = vst [vmem:[%s267 + $0x308] sm:$0xff] %v462
            %v464 = vld [vmem:[%s266 + $0x310] sm:$0xff]
            %465 = vst [vmem:[%s267 + $0x310] sm:$0xff] %v464
            %v466 = vld [vmem:[%s266 + $0x318] sm:$0xff]
            %467 = vst [vmem:[%s267 + $0x318] sm:$0xff] %v466
            %v468 = vld [vmem:[%s266 + $0x320] sm:$0xff]
            %469 = vst [vmem:[%s267 + $0x320] sm:$0xff] %v468
            %v470 = vld [vmem:[%s266 + $0x328] sm:$0xff]
            %471 = vst [vmem:[%s267 + $0x328] sm:$0xff] %v470
            %v472 = vld [vmem:[%s266 + $0x330] sm:$0xff]
            %473 = vst [vmem:[%s267 + $0x330] sm:$0xff] %v472
            %v474 = vld [vmem:[%s266 + $0x338] sm:$0xff]
            %475 = vst [vmem:[%s267 + $0x338] sm:$0xff] %v474
            %v476 = vld [vmem:[%s266 + $0x340] sm:$0xff]
            %477 = vst [vmem:[%s267 + $0x340] sm:$0xff] %v476
            %v478 = vld [vmem:[%s266 + $0x348] sm:$0xff]
            %479 = vst [vmem:[%s267 + $0x348] sm:$0xff] %v478
            %v480 = vld [vmem:[%s266 + $0x350] sm:$0xff]
            %481 = vst [vmem:[%s267 + $0x350] sm:$0xff] %v480
            %v482 = vld [vmem:[%s266 + $0x358] sm:$0xff]
            %483 = vst [vmem:[%s267 + $0x358] sm:$0xff] %v482
            %v484 = vld [vmem:[%s266 + $0x360] sm:$0xff]
            %485 = vst [vmem:[%s267 + $0x360] sm:$0xff] %v484
            %v486 = vld [vmem:[%s266 + $0x368] sm:$0xff]
            %487 = vst [vmem:[%s267 + $0x368] sm:$0xff] %v486
            %v488 = vld [vmem:[%s266 + $0x370] sm:$0xff]
            %489 = vst [vmem:[%s267 + $0x370] sm:$0xff] %v488
            %v490 = vld [vmem:[%s266 + $0x378] sm:$0xff]
            %491 = vst [vmem:[%s267 + $0x378] sm:$0xff] %v490
            %v492 = vld [vmem:[%s266 + $0x380] sm:$0xff]
            %493 = vst [vmem:[%s267 + $0x380] sm:$0xff] %v492
            %v494 = vld [vmem:[%s266 + $0x388] sm:$0xff]
            %495 = vst [vmem:[%s267 + $0x388] sm:$0xff] %v494
            %v496 = vld [vmem:[%s266 + $0x390] sm:$0xff]
            %497 = vst [vmem:[%s267 + $0x390] sm:$0xff] %v496
            %v498 = vld [vmem:[%s266 + $0x398] sm:$0xff]
            %499 = vst [vmem:[%s267 + $0x398] sm:$0xff] %v498
            %v500 = vld [vmem:[%s266 + $0x3a0] sm:$0xff]
            %501 = vst [vmem:[%s267 + $0x3a0] sm:$0xff] %v500
            %v502 = vld [vmem:[%s266 + $0x3a8] sm:$0xff]
            %503 = vst [vmem:[%s267 + $0x3a8] sm:$0xff] %v502
            %v504 = vld [vmem:[%s266 + $0x3b0] sm:$0xff]
            %505 = vst [vmem:[%s267 + $0x3b0] sm:$0xff] %v504
            %v506 = vld [vmem:[%s266 + $0x3b8] sm:$0xff]
            %507 = vst [vmem:[%s267 + $0x3b8] sm:$0xff] %v506
          $region64: #{lka_forward.1} parent=58 // loop_footer
            %s265 = sadd.s32 1, %s261
          $region65: #{lka_forward.1} parent=58 // loop_footer_branch
            %260 = sbr.rel target = $region61
          $region66: #{lka_forward.1} parent=58 // loop_exit
            _
        $region59: #{lka_forward.1} parent=43 // pred_fallthru
          _
        %p508 = pneg %p256
        // Predicated region
        $region67: #{lka_forward.1} parent=43 // pred_check
          _
        $region68: #{lka_forward.1} parent=43 // pred_check_branch
          %510 = sbr.rel (%p256) target = $region70
        $region69: #{lka_forward.1} parent=43 // pred_region
          %s511 = sand.u32 960, 7
        $region70: #{lka_forward.1} parent=43 // pred_fallthru
          _
      $region44: #{lka_forward.1} parent=39 // pred_fallthru
        _
      // Predicated region
      $region45: #{lka_forward.1} parent=39 // pred_check
        %p241 = pneg %p237
      $region46: #{lka_forward.1} parent=39 // pred_check_branch
        %243 = sbr.rel (%p241) target = $region48
      $region47: #{lka_forward.1} parent=39 // pred_region
        %s244 = sshllo.u32 0, 960
        loop: start=0, step=1, limit=1
        $region49: #{lka_forward.1} parent=47 // loop_pre_header
          _
        $region50: #{lka_forward.1} parent=47 // loop_header
          %s246 = sphi 0, %s250
          %p247 = scmp.ge.s32.totalorder %s246, 1
          %s251 = sphi %s235, %s235
          %s252 = sphi [#allocation2], [#allocation2]
        $region51: #{lka_forward.1} parent=47 // loop_header_branch
          %249 = sbr.rel (%p247) target = $region55
        $region52: #{lka_forward.1} parent=47 // loop_body
          %v253 = vld [vmem:[%s251] sm:%s244]
          %254 = vst [vmem:[%s252] sm:%s244] %v253
        $region53: #{lka_forward.1} parent=47 // loop_footer
          %s250 = sadd.s32 1, %s246
        $region54: #{lka_forward.1} parent=47 // loop_footer_branch
          %245 = sbr.rel target = $region50
        $region55: #{lka_forward.1} parent=47 // loop_exit
          _
      $region48: #{lka_forward.1} parent=39 // pred_fallthru
        _
      // Predicated region
      $region71: #{lka_forward.1} parent=39 // pred_check
        _
      $region72: #{lka_forward.1} parent=39 // pred_check_branch
        %514 = sbr.rel (0) target = $region74
      $region73: #{lka_forward.1} parent=39 // pred_region
        %515 = vsyncadd [#allocation4], 15360
      $region74: #{lka_forward.1} parent=39 // pred_fallthru
        _
      %516 = vst [vmem:[#allocation3] sm:$0xff] 0.0
      %517 = vst [vmem:[#allocation3 + $0x8] sm:$0xff] 0.0
      %518 = vst [vmem:[#allocation3 + $0x30] sm:$0xff] 0.0
      %519 = vst [vmem:[#allocation3 + $0x38] sm:$0xff] 0.0
      %520 = vst [vmem:[#allocation3 + $0x60] sm:$0xff] 0.0
      %521 = vst [vmem:[#allocation3 + $0x68] sm:$0xff] 0.0
      %522 = vst [vmem:[#allocation3 + $0x90] sm:$0xff] 0.0
      %523 = vst [vmem:[#allocation3 + $0x98] sm:$0xff] 0.0
      %524 = vst [vmem:[#allocation3 + $0xc0] sm:$0xff] 0.0
      %525 = vst [vmem:[#allocation3 + $0xc8] sm:$0xff] 0.0
      %526 = vst [vmem:[#allocation3 + $0xf0] sm:$0xff] 0.0
      %527 = vst [vmem:[#allocation3 + $0xf8] sm:$0xff] 0.0
      %528 = vst [vmem:[#allocation3 + $0x120] sm:$0xff] 0.0
      %529 = vst [vmem:[#allocation3 + $0x128] sm:$0xff] 0.0
      %530 = vst [vmem:[#allocation3 + $0x150] sm:$0xff] 0.0
      %531 = vst [vmem:[#allocation3 + $0x158] sm:$0xff] 0.0
      %532 = vst [vmem:[#allocation3 + $0x180] sm:$0xff] 0.0
      %533 = vst [vmem:[#allocation3 + $0x188] sm:$0xff] 0.0
      %534 = vst [vmem:[#allocation3 + $0x1b0] sm:$0xff] 0.0
      %535 = vst [vmem:[#allocation3 + $0x1b8] sm:$0xff] 0.0
      %536 = vst [vmem:[#allocation3 + $0x1e0] sm:$0xff] 0.0
      %537 = vst [vmem:[#allocation3 + $0x1e8] sm:$0xff] 0.0
      %538 = vst [vmem:[#allocation3 + $0x210] sm:$0xff] 0.0
      %539 = vst [vmem:[#allocation3 + $0x218] sm:$0xff] 0.0
      %540 = vst [vmem:[#allocation3 + $0x240] sm:$0xff] 0.0
      %541 = vst [vmem:[#allocation3 + $0x248] sm:$0xff] 0.0
      %542 = vst [vmem:[#allocation3 + $0x270] sm:$0xff] 0.0
      %543 = vst [vmem:[#allocation3 + $0x278] sm:$0xff] 0.0
      %544 = vst [vmem:[#allocation3 + $0x2a0] sm:$0xff] 0.0
      %545 = vst [vmem:[#allocation3 + $0x2a8] sm:$0xff] 0.0
      %546 = vst [vmem:[#allocation3 + $0x2d0] sm:$0xff] 0.0
      %547 = vst [vmem:[#allocation3 + $0x2d8] sm:$0xff] 0.0
      %548 = vst [vmem:[#allocation3 + $0x300] sm:$0xff] 0.0
      %549 = vst [vmem:[#allocation3 + $0x308] sm:$0xff] 0.0
      %550 = vst [vmem:[#allocation3 + $0x330] sm:$0xff] 0.0
      %551 = vst [vmem:[#allocation3 + $0x338] sm:$0xff] 0.0
      %552 = vst [vmem:[#allocation3 + $0x360] sm:$0xff] 0.0
      %553 = vst [vmem:[#allocation3 + $0x368] sm:$0xff] 0.0
      %554 = vst [vmem:[#allocation3 + $0x390] sm:$0xff] 0.0
      %555 = vst [vmem:[#allocation3 + $0x398] sm:$0xff] 0.0
      %556 = vst [vmem:[#allocation3 + $0x3c0] sm:$0xff] 0.0
      %557 = vst [vmem:[#allocation3 + $0x3c8] sm:$0xff] 0.0
      %558 = vst [vmem:[#allocation3 + $0x3f0] sm:$0xff] 0.0
      %559 = vst [vmem:[#allocation3 + $0x3f8] sm:$0xff] 0.0
      %560 = vst [vmem:[#allocation3 + $0x420] sm:$0xff] 0.0
      %561 = vst [vmem:[#allocation3 + $0x428] sm:$0xff] 0.0
      %562 = vst [vmem:[#allocation3 + $0x450] sm:$0xff] 0.0
      %563 = vst [vmem:[#allocation3 + $0x458] sm:$0xff] 0.0
      %564 = vst [vmem:[#allocation3 + $0x480] sm:$0xff] 0.0
      %565 = vst [vmem:[#allocation3 + $0x488] sm:$0xff] 0.0
      %566 = vst [vmem:[#allocation3 + $0x4b0] sm:$0xff] 0.0
      %567 = vst [vmem:[#allocation3 + $0x4b8] sm:$0xff] 0.0
      %568 = vst [vmem:[#allocation3 + $0x20] sm:$0xff] 0.0
      %569 = vst [vmem:[#allocation3 + $0x28] sm:$0xff] 0.0
      %570 = vst [vmem:[#allocation3 + $0x50] sm:$0xff] 0.0
      %571 = vst [vmem:[#allocation3 + $0x58] sm:$0xff] 0.0
      %572 = vst [vmem:[#allocation3 + $0x80] sm:$0xff] 0.0
      %573 = vst [vmem:[#allocation3 + $0x88] sm:$0xff] 0.0
      %574 = vst [vmem:[#allocation3 + $0xb0] sm:$0xff] 0.0
      %575 = vst [vmem:[#allocation3 + $0xb8] sm:$0xff] 0.0
      %576 = vst [vmem:[#allocation3 + $0xe0] sm:$0xff] 0.0
      %577 = vst [vmem:[#allocation3 + $0xe8] sm:$0xff] 0.0
      %578 = vst [vmem:[#allocation3 + $0x110] sm:$0xff] 0.0
      %579 = vst [vmem:[#allocation3 + $0x118] sm:$0xff] 0.0
      %580 = vst [vmem:[#allocation3 + $0x140] sm:$0xff] 0.0
      %581 = vst [vmem:[#allocation3 + $0x148] sm:$0xff] 0.0
      %582 = vst [vmem:[#allocation3 + $0x170] sm:$0xff] 0.0
      %583 = vst [vmem:[#allocation3 + $0x178] sm:$0xff] 0.0
      %584 = vst [vmem:[#allocation3 + $0x1a0] sm:$0xff] 0.0
      %585 = vst [vmem:[#allocation3 + $0x1a8] sm:$0xff] 0.0
      %586 = vst [vmem:[#allocation3 + $0x1d0] sm:$0xff] 0.0
      %587 = vst [vmem:[#allocation3 + $0x1d8] sm:$0xff] 0.0
      %588 = vst [vmem:[#allocation3 + $0x200] sm:$0xff] 0.0
      %589 = vst [vmem:[#allocation3 + $0x208] sm:$0xff] 0.0
      %590 = vst [vmem:[#allocation3 + $0x230] sm:$0xff] 0.0
      %591 = vst [vmem:[#allocation3 + $0x238] sm:$0xff] 0.0
      %592 = vst [vmem:[#allocation3 + $0x260] sm:$0xff] 0.0
      %593 = vst [vmem:[#allocation3 + $0x268] sm:$0xff] 0.0
      %594 = vst [vmem:[#allocation3 + $0x290] sm:$0xff] 0.0
      %595 = vst [vmem:[#allocation3 + $0x298] sm:$0xff] 0.0
      %596 = vst [vmem:[#allocation3 + $0x2c0] sm:$0xff] 0.0
      %597 = vst [vmem:[#allocation3 + $0x2c8] sm:$0xff] 0.0
      %598 = vst [vmem:[#allocation3 + $0x2f0] sm:$0xff] 0.0
      %599 = vst [vmem:[#allocation3 + $0x2f8] sm:$0xff] 0.0
      %600 = vst [vmem:[#allocation3 + $0x320] sm:$0xff] 0.0
      %601 = vst [vmem:[#allocation3 + $0x328] sm:$0xff] 0.0
      %602 = vst [vmem:[#allocation3 + $0x350] sm:$0xff] 0.0
      %603 = vst [vmem:[#allocation3 + $0x358] sm:$0xff] 0.0
      %604 = vst [vmem:[#allocation3 + $0x380] sm:$0xff] 0.0
      %605 = vst [vmem:[#allocation3 + $0x388] sm:$0xff] 0.0
      %606 = vst [vmem:[#allocation3 + $0x3b0] sm:$0xff] 0.0
      %607 = vst [vmem:[#allocation3 + $0x3b8] sm:$0xff] 0.0
      %608 = vst [vmem:[#allocation3 + $0x3e0] sm:$0xff] 0.0
      %609 = vst [vmem:[#allocation3 + $0x3e8] sm:$0xff] 0.0
      %610 = vst [vmem:[#allocation3 + $0x410] sm:$0xff] 0.0
      %611 = vst [vmem:[#allocation3 + $0x418] sm:$0xff] 0.0
      %612 = vst [vmem:[#allocation3 + $0x440] sm:$0xff] 0.0
      %613 = vst [vmem:[#allocation3 + $0x448] sm:$0xff] 0.0
      %614 = vst [vmem:[#allocation3 + $0x470] sm:$0xff] 0.0
      %615 = vst [vmem:[#allocation3 + $0x478] sm:$0xff] 0.0
      %616 = vst [vmem:[#allocation3 + $0x4a0] sm:$0xff] 0.0
      %617 = vst [vmem:[#allocation3 + $0x4a8] sm:$0xff] 0.0
      %618 = vst [vmem:[#allocation3 + $0x4d0] sm:$0xff] 0.0
      %619 = vst [vmem:[#allocation3 + $0x4d8] sm:$0xff] 0.0
      %s620 = smul.u32 30, 32
      %s621 = smul.u32 %s620, 1
      %s622 = sshll.u32 %s621, 4
      %623 = dma.done [#allocation4], %s622
      %v624 = vld [vmem:[#allocation2 + $0x6] sm:$0xff]
      %v625 = vld [vmem:[#allocation2 + $0xe] sm:$0xff]
      %v626 = vld [vmem:[#allocation2 + $0x26] sm:$0xff]
      %v627 = vld [vmem:[#allocation2 + $0x2e] sm:$0xff]
      %v628 = vld [vmem:[#allocation2 + $0x46] sm:$0xff]
      %v629 = vld [vmem:[#allocation2 + $0x4e] sm:$0xff]
      %v630 = vld [vmem:[#allocation2 + $0x66] sm:$0xff]
      %v631 = vld [vmem:[#allocation2 + $0x6e] sm:$0xff]
      %v632 = vld [vmem:[#allocation2 + $0x86] sm:$0xff]
      %v633 = vld [vmem:[#allocation2 + $0x8e] sm:$0xff]
      %v634 = vld [vmem:[#allocation2 + $0xa6] sm:$0xff]
      %v635 = vld [vmem:[#allocation2 + $0xae] sm:$0xff]
      %v636 = vld [vmem:[#allocation2 + $0xc6] sm:$0xff]
      %v637 = vld [vmem:[#allocation2 + $0xce] sm:$0xff]
      %v638 = vld [vmem:[#allocation2 + $0xe6] sm:$0xff]
      %v639 = vld [vmem:[#allocation2 + $0xee] sm:$0xff]
      %v640 = vld [vmem:[#allocation2 + $0x106] sm:$0xff]
      %v641 = vld [vmem:[#allocation2 + $0x10e] sm:$0xff]
      %v642 = vld [vmem:[#allocation2 + $0x126] sm:$0xff]
      %v643 = vld [vmem:[#allocation2 + $0x12e] sm:$0xff]
      %v644 = vld [vmem:[#allocation2 + $0x146] sm:$0xff]
      %v645 = vld [vmem:[#allocation2 + $0x14e] sm:$0xff]
      %v646 = vld [vmem:[#allocation2 + $0x166] sm:$0xff]
      %v647 = vld [vmem:[#allocation2 + $0x16e] sm:$0xff]
      %v648 = vld [vmem:[#allocation2 + $0x186] sm:$0xff]
      %v649 = vld [vmem:[#allocation2 + $0x18e] sm:$0xff]
      %v650 = vld [vmem:[#allocation2 + $0x1a6] sm:$0xff]
      %v651 = vld [vmem:[#allocation2 + $0x1ae] sm:$0xff]
      %v652 = vld [vmem:[#allocation2 + $0x1c6] sm:$0xff]
      %v653 = vld [vmem:[#allocation2 + $0x1ce] sm:$0xff]
      %v654 = vld [vmem:[#allocation2 + $0x1e6] sm:$0xff]
      %v655 = vld [vmem:[#allocation2 + $0x1ee] sm:$0xff]
      %v656 = vld [vmem:[#allocation2 + $0x206] sm:$0xff]
      %v657 = vld [vmem:[#allocation2 + $0x20e] sm:$0xff]
      %v658 = vld [vmem:[#allocation2 + $0x226] sm:$0xff]
      %v659 = vld [vmem:[#allocation2 + $0x22e] sm:$0xff]
      %v660 = vld [vmem:[#allocation2 + $0x246] sm:$0xff]
      %v661 = vld [vmem:[#allocation2 + $0x24e] sm:$0xff]
      %v662 = vld [vmem:[#allocation2 + $0x266] sm:$0xff]
      %v663 = vld [vmem:[#allocation2 + $0x26e] sm:$0xff]
      %v664 = vld [vmem:[#allocation2 + $0x286] sm:$0xff]
      %v665 = vld [vmem:[#allocation2 + $0x28e] sm:$0xff]
      %v666 = vld [vmem:[#allocation2 + $0x2a6] sm:$0xff]
      %v667 = vld [vmem:[#allocation2 + $0x2ae] sm:$0xff]
      %v668 = vld [vmem:[#allocation2 + $0x2c6] sm:$0xff]
      %v669 = vld [vmem:[#allocation2 + $0x2ce] sm:$0xff]
      %v670 = vld [vmem:[#allocation2 + $0x2e6] sm:$0xff]
      %v671 = vld [vmem:[#allocation2 + $0x2ee] sm:$0xff]
      %v672 = vld [vmem:[#allocation2 + $0x306] sm:$0xff]
      %v673 = vld [vmem:[#allocation2 + $0x30e] sm:$0xff]
      %v674 = vld [vmem:[#allocation2 + $0x326] sm:$0xff]
      %v675 = vld [vmem:[#allocation2 + $0x32e] sm:$0xff]
      %v676 = vld [vmem:[%s1] sm:$0x1]
      %v677 = vlaneseq
      %v678 = vshrl.u32 %v677, 7
      %v679 = vsub.s32 0, %v678
      %v680 = vrot.slane %v676, %v679
      %v681 = vmul.f32 %v624, %v680
      %v682 = vmul.f32 %v625, %v680
      %v683 = vmul.f32 %v626, %v680
      %v684 = vmul.f32 %v627, %v680
      %v685 = vmul.f32 %v628, %v680
      %v686 = vmul.f32 %v629, %v680
      %v687 = vmul.f32 %v630, %v680
      %v688 = vmul.f32 %v631, %v680
      %v689 = vmul.f32 %v632, %v680
      %v690 = vmul.f32 %v633, %v680
      %v691 = vmul.f32 %v634, %v680
      %v692 = vmul.f32 %v635, %v680
      %v693 = vmul.f32 %v636, %v680
      %v694 = vmul.f32 %v637, %v680
      %v695 = vmul.f32 %v638, %v680
      %v696 = vmul.f32 %v639, %v680
      %v697 = vmul.f32 %v640, %v680
      %v698 = vmul.f32 %v641, %v680
      %v699 = vmul.f32 %v642, %v680
      %v700 = vmul.f32 %v643, %v680
      %v701 = vmul.f32 %v644, %v680
      %v702 = vmul.f32 %v645, %v680
      %v703 = vmul.f32 %v646, %v680
      %v704 = vmul.f32 %v647, %v680
      %v705 = vmul.f32 %v648, %v680
      %v706 = vmul.f32 %v649, %v680
      %v707 = vmul.f32 %v650, %v680
      %v708 = vmul.f32 %v651, %v680
      %v709 = vmul.f32 %v652, %v680
      %v710 = vmul.f32 %v653, %v680
      %v711 = vmul.f32 %v654, %v680
      %v712 = vmul.f32 %v655, %v680
      %v713 = vmul.f32 %v656, %v680
      %v714 = vmul.f32 %v657, %v680
      %v715 = vmul.f32 %v658, %v680
      %v716 = vmul.f32 %v659, %v680
      %v717 = vmul.f32 %v660, %v680
      %v718 = vmul.f32 %v661, %v680
      %v719 = vmul.f32 %v662, %v680
      %v720 = vmul.f32 %v663, %v680
      %v721 = vmul.f32 %v664, %v680
      %v722 = vmul.f32 %v665, %v680
      %v723 = vmul.f32 %v666, %v680
      %v724 = vmul.f32 %v667, %v680
      %v725 = vmul.f32 %v668, %v680
      %v726 = vmul.f32 %v669, %v680
      %v727 = vmul.f32 %v670, %v680
      %v728 = vmul.f32 %v671, %v680
      %v729 = vmul.f32 %v672, %v680
      %v730 = vmul.f32 %v673, %v680
      %v731 = vmul.f32 %v674, %v680
      %v732 = vmul.f32 %v675, %v680
      %v733 = vld [vmem:[#allocation2 + $0x7] sm:$0xff]
      %v734 = vld [vmem:[#allocation2 + $0xf] sm:$0xff]
      %v735 = vld [vmem:[#allocation2 + $0x27] sm:$0xff]
      %v736 = vld [vmem:[#allocation2 + $0x2f] sm:$0xff]
      %v737 = vld [vmem:[#allocation2 + $0x47] sm:$0xff]
      %v738 = vld [vmem:[#allocation2 + $0x4f] sm:$0xff]
      %v739 = vld [vmem:[#allocation2 + $0x67] sm:$0xff]
      %v740 = vld [vmem:[#allocation2 + $0x6f] sm:$0xff]
      %v741 = vld [vmem:[#allocation2 + $0x87] sm:$0xff]
      %v742 = vld [vmem:[#allocation2 + $0x8f] sm:$0xff]
      %v743 = vld [vmem:[#allocation2 + $0xa7] sm:$0xff]
      %v744 = vld [vmem:[#allocation2 + $0xaf] sm:$0xff]
      %v745 = vld [vmem:[#allocation2 + $0xc7] sm:$0xff]
      %v746 = vld [vmem:[#allocation2 + $0xcf] sm:$0xff]
      %v747 = vld [vmem:[#allocation2 + $0xe7] sm:$0xff]
      %v748 = vld [vmem:[#allocation2 + $0xef] sm:$0xff]
      %v749 = vld [vmem:[#allocation2 + $0x107] sm:$0xff]
      %v750 = vld [vmem:[#allocation2 + $0x10f] sm:$0xff]
      %v751 = vld [vmem:[#allocation2 + $0x127] sm:$0xff]
      %v752 = vld [vmem:[#allocation2 + $0x12f] sm:$0xff]
      %v753 = vld [vmem:[#allocation2 + $0x147] sm:$0xff]
      %v754 = vld [vmem:[#allocation2 + $0x14f] sm:$0xff]
      %v755 = vld [vmem:[#allocation2 + $0x167] sm:$0xff]
      %v756 = vld [vmem:[#allocation2 + $0x16f] sm:$0xff]
      %v757 = vld [vmem:[#allocation2 + $0x187] sm:$0xff]
      %v758 = vld [vmem:[#allocation2 + $0x18f] sm:$0xff]
      %v759 = vld [vmem:[#allocation2 + $0x1a7] sm:$0xff]
      %v760 = vld [vmem:[#allocation2 + $0x1af] sm:$0xff]
      %v761 = vld [vmem:[#allocation2 + $0x1c7] sm:$0xff]
      %v762 = vld [vmem:[#allocation2 + $0x1cf] sm:$0xff]
      %v763 = vld [vmem:[#allocation2 + $0x1e7] sm:$0xff]
      %v764 = vld [vmem:[#allocation2 + $0x1ef] sm:$0xff]
      %v765 = vld [vmem:[#allocation2 + $0x207] sm:$0xff]
      %v766 = vld [vmem:[#allocation2 + $0x20f] sm:$0xff]
      %v767 = vld [vmem:[#allocation2 + $0x227] sm:$0xff]
      %v768 = vld [vmem:[#allocation2 + $0x22f] sm:$0xff]
      %v769 = vld [vmem:[#allocation2 + $0x247] sm:$0xff]
      %v770 = vld [vmem:[#allocation2 + $0x24f] sm:$0xff]
      %v771 = vld [vmem:[#allocation2 + $0x267] sm:$0xff]
      %v772 = vld [vmem:[#allocation2 + $0x26f] sm:$0xff]
      %v773 = vld [vmem:[#allocation2 + $0x287] sm:$0xff]
      %v774 = vld [vmem:[#allocation2 + $0x28f] sm:$0xff]
      %v775 = vld [vmem:[#allocation2 + $0x2a7] sm:$0xff]
      %v776 = vld [vmem:[#allocation2 + $0x2af] sm:$0xff]
      %v777 = vld [vmem:[#allocation2 + $0x2c7] sm:$0xff]
      %v778 = vld [vmem:[#allocation2 + $0x2cf] sm:$0xff]
      %v779 = vld [vmem:[#allocation2 + $0x2e7] sm:$0xff]
      %v780 = vld [vmem:[#allocation2 + $0x2ef] sm:$0xff]
      %v781 = vld [vmem:[#allocation2 + $0x307] sm:$0xff]
      %v782 = vld [vmem:[#allocation2 + $0x30f] sm:$0xff]
      %v783 = vld [vmem:[#allocation2 + $0x327] sm:$0xff]
      %v784 = vld [vmem:[#allocation2 + $0x32f] sm:$0xff]
      %v785 = vld [vmem:[%s1 + $0x1] sm:$0x1]
      %v786 = vlaneseq
      %v787 = vshrl.u32 %v786, 7
      %v788 = vsub.s32 0, %v787
      %v789 = vrot.slane %v785, %v788
      %v790 = vmul.f32 %v733, %v789
      %v791 = vmul.f32 %v734, %v789
      %v792 = vmul.f32 %v735, %v789
      %v793 = vmul.f32 %v736, %v789
      %v794 = vmul.f32 %v737, %v789
      %v795 = vmul.f32 %v738, %v789
      %v796 = vmul.f32 %v739, %v789
      %v797 = vmul.f32 %v740, %v789
      %v798 = vmul.f32 %v741, %v789
      %v799 = vmul.f32 %v742, %v789
      %v800 = vmul.f32 %v743, %v789
      %v801 = vmul.f32 %v744, %v789
      %v802 = vmul.f32 %v745, %v789
      %v803 = vmul.f32 %v746, %v789
      %v804 = vmul.f32 %v747, %v789
      %v805 = vmul.f32 %v748, %v789
      %v806 = vmul.f32 %v749, %v789
      %v807 = vmul.f32 %v750, %v789
      %v808 = vmul.f32 %v751, %v789
      %v809 = vmul.f32 %v752, %v789
      %v810 = vmul.f32 %v753, %v789
      %v811 = vmul.f32 %v754, %v789
      %v812 = vmul.f32 %v755, %v789
      %v813 = vmul.f32 %v756, %v789
      %v814 = vmul.f32 %v757, %v789
      %v815 = vmul.f32 %v758, %v789
      %v816 = vmul.f32 %v759, %v789
      %v817 = vmul.f32 %v760, %v789
      %v818 = vmul.f32 %v761, %v789
      %v819 = vmul.f32 %v762, %v789
      %v820 = vmul.f32 %v763, %v789
      %v821 = vmul.f32 %v764, %v789
      %v822 = vmul.f32 %v765, %v789
      %v823 = vmul.f32 %v766, %v789
      %v824 = vmul.f32 %v767, %v789
      %v825 = vmul.f32 %v768, %v789
      %v826 = vmul.f32 %v769, %v789
      %v827 = vmul.f32 %v770, %v789
      %v828 = vmul.f32 %v771, %v789
      %v829 = vmul.f32 %v772, %v789
      %v830 = vmul.f32 %v773, %v789
      %v831 = vmul.f32 %v774, %v789
      %v832 = vmul.f32 %v775, %v789
      %v833 = vmul.f32 %v776, %v789
      %v834 = vmul.f32 %v777, %v789
      %v835 = vmul.f32 %v778, %v789
      %v836 = vmul.f32 %v779, %v789
      %v837 = vmul.f32 %v780, %v789
      %v838 = vmul.f32 %v781, %v789
      %v839 = vmul.f32 %v782, %v789
      %v840 = vmul.f32 %v783, %v789
      %v841 = vmul.f32 %v784, %v789
      %v842 = vadd.f32 %v681, %v790
      %v843 = vadd.f32 %v682, %v791
      %v844 = vadd.f32 %v683, %v792
      %v845 = vadd.f32 %v684, %v793
      %v846 = vadd.f32 %v685, %v794
      %v847 = vadd.f32 %v686, %v795
      %v848 = vadd.f32 %v687, %v796
      %v849 = vadd.f32 %v688, %v797
      %v850 = vadd.f32 %v689, %v798
      %v851 = vadd.f32 %v690, %v799
      %v852 = vadd.f32 %v691, %v800
      %v853 = vadd.f32 %v692, %v801
      %v854 = vadd.f32 %v693, %v802
      %v855 = vadd.f32 %v694, %v803
      %v856 = vadd.f32 %v695, %v804
      %v857 = vadd.f32 %v696, %v805
      %v858 = vadd.f32 %v697, %v806
      %v859 = vadd.f32 %v698, %v807
      %v860 = vadd.f32 %v699, %v808
      %v861 = vadd.f32 %v700, %v809
      %v862 = vadd.f32 %v701, %v810
      %v863 = vadd.f32 %v702, %v811
      %v864 = vadd.f32 %v703, %v812
      %v865 = vadd.f32 %v704, %v813
      %v866 = vadd.f32 %v705, %v814
      %v867 = vadd.f32 %v706, %v815
      %v868 = vadd.f32 %v707, %v816
      %v869 = vadd.f32 %v708, %v817
      %v870 = vadd.f32 %v709, %v818
      %v871 = vadd.f32 %v710, %v819
      %v872 = vadd.f32 %v711, %v820
      %v873 = vadd.f32 %v712, %v821
      %v874 = vadd.f32 %v713, %v822
      %v875 = vadd.f32 %v714, %v823
      %v876 = vadd.f32 %v715, %v824
      %v877 = vadd.f32 %v716, %v825
      %v878 = vadd.f32 %v717, %v826
      %v879 = vadd.f32 %v718, %v827
      %v880 = vadd.f32 %v719, %v828
      %v881 = vadd.f32 %v720, %v829
      %v882 = vadd.f32 %v721, %v830
      %v883 = vadd.f32 %v722, %v831
      %v884 = vadd.f32 %v723, %v832
      %v885 = vadd.f32 %v724, %v833
      %v886 = vadd.f32 %v725, %v834
      %v887 = vadd.f32 %v726, %v835
      %v888 = vadd.f32 %v727, %v836
      %v889 = vadd.f32 %v728, %v837
      %v890 = vadd.f32 %v729, %v838
      %v891 = vadd.f32 %v730, %v839
      %v892 = vadd.f32 %v731, %v840
      %v893 = vadd.f32 %v732, %v841
      %v894 = vld [vmem:[#allocation2 + $0x8] sm:$0xff]
      %v895 = vld [vmem:[#allocation2 + $0x10] sm:$0xff]
      %v896 = vld [vmem:[#allocation2 + $0x28] sm:$0xff]
      %v897 = vld [vmem:[#allocation2 + $0x30] sm:$0xff]
      %v898 = vld [vmem:[#allocation2 + $0x48] sm:$0xff]
      %v899 = vld [vmem:[#allocation2 + $0x50] sm:$0xff]
      %v900 = vld [vmem:[#allocation2 + $0x68] sm:$0xff]
      %v901 = vld [vmem:[#allocation2 + $0x70] sm:$0xff]
      %v902 = vld [vmem:[#allocation2 + $0x88] sm:$0xff]
      %v903 = vld [vmem:[#allocation2 + $0x90] sm:$0xff]
      %v904 = vld [vmem:[#allocation2 + $0xa8] sm:$0xff]
      %v905 = vld [vmem:[#allocation2 + $0xb0] sm:$0xff]
      %v906 = vld [vmem:[#allocation2 + $0xc8] sm:$0xff]
      %v907 = vld [vmem:[#allocation2 + $0xd0] sm:$0xff]
      %v908 = vld [vmem:[#allocation2 + $0xe8] sm:$0xff]
      %v909 = vld [vmem:[#allocation2 + $0xf0] sm:$0xff]
      %v910 = vld [vmem:[#allocation2 + $0x108] sm:$0xff]
      %v911 = vld [vmem:[#allocation2 + $0x110] sm:$0xff]
      %v912 = vld [vmem:[#allocation2 + $0x128] sm:$0xff]
      %v913 = vld [vmem:[#allocation2 + $0x130] sm:$0xff]
      %v914 = vld [vmem:[#allocation2 + $0x148] sm:$0xff]
      %v915 = vld [vmem:[#allocation2 + $0x150] sm:$0xff]
      %v916 = vld [vmem:[#allocation2 + $0x168] sm:$0xff]
      %v917 = vld [vmem:[#allocation2 + $0x170] sm:$0xff]
      %v918 = vld [vmem:[#allocation2 + $0x188] sm:$0xff]
      %v919 = vld [vmem:[#allocation2 + $0x190] sm:$0xff]
      %v920 = vld [vmem:[#allocation2 + $0x1a8] sm:$0xff]
      %v921 = vld [vmem:[#allocation2 + $0x1b0] sm:$0xff]
      %v922 = vld [vmem:[#allocation2 + $0x1c8] sm:$0xff]
      %v923 = vld [vmem:[#allocation2 + $0x1d0] sm:$0xff]
      %v924 = vld [vmem:[#allocation2 + $0x1e8] sm:$0xff]
      %v925 = vld [vmem:[#allocation2 + $0x1f0] sm:$0xff]
      %v926 = vld [vmem:[#allocation2 + $0x208] sm:$0xff]
      %v927 = vld [vmem:[#allocation2 + $0x210] sm:$0xff]
      %v928 = vld [vmem:[#allocation2 + $0x228] sm:$0xff]
      %v929 = vld [vmem:[#allocation2 + $0x230] sm:$0xff]
      %v930 = vld [vmem:[#allocation2 + $0x248] sm:$0xff]
      %v931 = vld [vmem:[#allocation2 + $0x250] sm:$0xff]
      %v932 = vld [vmem:[#allocation2 + $0x268] sm:$0xff]
      %v933 = vld [vmem:[#allocation2 + $0x270] sm:$0xff]
      %v934 = vld [vmem:[#allocation2 + $0x288] sm:$0xff]
      %v935 = vld [vmem:[#allocation2 + $0x290] sm:$0xff]
      %v936 = vld [vmem:[#allocation2 + $0x2a8] sm:$0xff]
      %v937 = vld [vmem:[#allocation2 + $0x2b0] sm:$0xff]
      %v938 = vld [vmem:[#allocation2 + $0x2c8] sm:$0xff]
      %v939 = vld [vmem:[#allocation2 + $0x2d0] sm:$0xff]
      %v940 = vld [vmem:[#allocation2 + $0x2e8] sm:$0xff]
      %v941 = vld [vmem:[#allocation2 + $0x2f0] sm:$0xff]
      %v942 = vld [vmem:[#allocation2 + $0x308] sm:$0xff]
      %v943 = vld [vmem:[#allocation2 + $0x310] sm:$0xff]
      %v944 = vld [vmem:[#allocation2 + $0x328] sm:$0xff]
      %v945 = vld [vmem:[#allocation2 + $0x330] sm:$0xff]
      %v946 = vld [vmem:[%s1 + $0x2] sm:$0x1]
      %v947 = vlaneseq
      %v948 = vshrl.u32 %v947, 7
      %v949 = vsub.s32 0, %v948
      %v950 = vrot.slane %v946, %v949
      %v951 = vmul.f32 %v894, %v950
      %v952 = vmul.f32 %v895, %v950
      %v953 = vmul.f32 %v896, %v950
      %v954 = vmul.f32 %v897, %v950
      %v955 = vmul.f32 %v898, %v950
      %v956 = vmul.f32 %v899, %v950
      %v957 = vmul.f32 %v900, %v950
      %v958 = vmul.f32 %v901, %v950
      %v959 = vmul.f32 %v902, %v950
      %v960 = vmul.f32 %v903, %v950
      %v961 = vmul.f32 %v904, %v950
      %v962 = vmul.f32 %v905, %v950
      %v963 = vmul.f32 %v906, %v950
      %v964 = vmul.f32 %v907, %v950
      %v965 = vmul.f32 %v908, %v950
      %v966 = vmul.f32 %v909, %v950
      %v967 = vmul.f32 %v910, %v950
      %v968 = vmul.f32 %v911, %v950
      %v969 = vmul.f32 %v912, %v950
      %v970 = vmul.f32 %v913, %v950
      %v971 = vmul.f32 %v914, %v950
      %v972 = vmul.f32 %v915, %v950
      %v973 = vmul.f32 %v916, %v950
      %v974 = vmul.f32 %v917, %v950
      %v975 = vmul.f32 %v918, %v950
      %v976 = vmul.f32 %v919, %v950
      %v977 = vmul.f32 %v920, %v950
      %v978 = vmul.f32 %v921, %v950
      %v979 = vmul.f32 %v922, %v950
      %v980 = vmul.f32 %v923, %v950
      %v981 = vmul.f32 %v924, %v950
      %v982 = vmul.f32 %v925, %v950
      %v983 = vmul.f32 %v926, %v950
      %v984 = vmul.f32 %v927, %v950
      %v985 = vmul.f32 %v928, %v950
      %v986 = vmul.f32 %v929, %v950
      %v987 = vmul.f32 %v930, %v950
      %v988 = vmul.f32 %v931, %v950
      %v989 = vmul.f32 %v932, %v950
      %v990 = vmul.f32 %v933, %v950
      %v991 = vmul.f32 %v934, %v950
      %v992 = vmul.f32 %v935, %v950
      %v993 = vmul.f32 %v936, %v950
      %v994 = vmul.f32 %v937, %v950
      %v995 = vmul.f32 %v938, %v950
      %v996 = vmul.f32 %v939, %v950
      %v997 = vmul.f32 %v940, %v950
      %v998 = vmul.f32 %v941, %v950
      %v999 = vmul.f32 %v942, %v950
      %v1000 = vmul.f32 %v943, %v950
      %v1001 = vmul.f32 %v944, %v950
      %v1002 = vmul.f32 %v945, %v950
      %v1003 = vadd.f32 %v842, %v951
      %v1004 = vadd.f32 %v843, %v952
      %v1005 = vadd.f32 %v844, %v953
      %v1006 = vadd.f32 %v845, %v954
      %v1007 = vadd.f32 %v846, %v955
      %v1008 = vadd.f32 %v847, %v956
      %v1009 = vadd.f32 %v848, %v957
      %v1010 = vadd.f32 %v849, %v958
      %v1011 = vadd.f32 %v850, %v959
      %v1012 = vadd.f32 %v851, %v960
      %v1013 = vadd.f32 %v852, %v961
      %v1014 = vadd.f32 %v853, %v962
      %v1015 = vadd.f32 %v854, %v963
      %v1016 = vadd.f32 %v855, %v964
      %v1017 = vadd.f32 %v856, %v965
      %v1018 = vadd.f32 %v857, %v966
      %v1019 = vadd.f32 %v858, %v967
      %v1020 = vadd.f32 %v859, %v968
      %v1021 = vadd.f32 %v860, %v969
      %v1022 = vadd.f32 %v861, %v970
      %v1023 = vadd.f32 %v862, %v971
      %v1024 = vadd.f32 %v863, %v972
      %v1025 = vadd.f32 %v864, %v973
      %v1026 = vadd.f32 %v865, %v974
      %v1027 = vadd.f32 %v866, %v975
      %v1028 = vadd.f32 %v867, %v976
      %v1029 = vadd.f32 %v868, %v977
      %v1030 = vadd.f32 %v869, %v978
      %v1031 = vadd.f32 %v870, %v979
      %v1032 = vadd.f32 %v871, %v980
      %v1033 = vadd.f32 %v872, %v981
      %v1034 = vadd.f32 %v873, %v982
      %v1035 = vadd.f32 %v874, %v983
      %v1036 = vadd.f32 %v875, %v984
      %v1037 = vadd.f32 %v876, %v985
      %v1038 = vadd.f32 %v877, %v986
      %v1039 = vadd.f32 %v878, %v987
      %v1040 = vadd.f32 %v879, %v988
      %v1041 = vadd.f32 %v880, %v989
      %v1042 = vadd.f32 %v881, %v990
      %v1043 = vadd.f32 %v882, %v991
      %v1044 = vadd.f32 %v883, %v992
      %v1045 = vadd.f32 %v884, %v993
      %v1046 = vadd.f32 %v885, %v994
      %v1047 = vadd.f32 %v886, %v995
      %v1048 = vadd.f32 %v887, %v996
      %v1049 = vadd.f32 %v888, %v997
      %v1050 = vadd.f32 %v889, %v998
      %v1051 = vadd.f32 %v890, %v999
      %v1052 = vadd.f32 %v891, %v1000
      %v1053 = vadd.f32 %v892, %v1001
      %v1054 = vadd.f32 %v893, %v1002
      %v1055 = vld [vmem:[#allocation2 + $0x9] sm:$0xff]
      %v1056 = vld [vmem:[#allocation2 + $0x11] sm:$0xff]
      %v1057 = vld [vmem:[#allocation2 + $0x29] sm:$0xff]
      %v1058 = vld [vmem:[#allocation2 + $0x31] sm:$0xff]
      %v1059 = vld [vmem:[#allocation2 + $0x49] sm:$0xff]
      %v1060 = vld [vmem:[#allocation2 + $0x51] sm:$0xff]
      %v1061 = vld [vmem:[#allocation2 + $0x69] sm:$0xff]
      %v1062 = vld [vmem:[#allocation2 + $0x71] sm:$0xff]
      %v1063 = vld [vmem:[#allocation2 + $0x89] sm:$0xff]
      %v1064 = vld [vmem:[#allocation2 + $0x91] sm:$0xff]
      %v1065 = vld [vmem:[#allocation2 + $0xa9] sm:$0xff]
      %v1066 = vld [vmem:[#allocation2 + $0xb1] sm:$0xff]
      %v1067 = vld [vmem:[#allocation2 + $0xc9] sm:$0xff]
      %v1068 = vld [vmem:[#allocation2 + $0xd1] sm:$0xff]
      %v1069 = vld [vmem:[#allocation2 + $0xe9] sm:$0xff]
      %v1070 = vld [vmem:[#allocation2 + $0xf1] sm:$0xff]
      %v1071 = vld [vmem:[#allocation2 + $0x109] sm:$0xff]
      %v1072 = vld [vmem:[#allocation2 + $0x111] sm:$0xff]
      %v1073 = vld [vmem:[#allocation2 + $0x129] sm:$0xff]
      %v1074 = vld [vmem:[#allocation2 + $0x131] sm:$0xff]
      %v1075 = vld [vmem:[#allocation2 + $0x149] sm:$0xff]
      %v1076 = vld [vmem:[#allocation2 + $0x151] sm:$0xff]
      %v1077 = vld [vmem:[#allocation2 + $0x169] sm:$0xff]
      %v1078 = vld [vmem:[#allocation2 + $0x171] sm:$0xff]
      %v1079 = vld [vmem:[#allocation2 + $0x189] sm:$0xff]
      %v1080 = vld [vmem:[#allocation2 + $0x191] sm:$0xff]
      %v1081 = vld [vmem:[#allocation2 + $0x1a9] sm:$0xff]
      %v1082 = vld [vmem:[#allocation2 + $0x1b1] sm:$0xff]
      %v1083 = vld [vmem:[#allocation2 + $0x1c9] sm:$0xff]
      %v1084 = vld [vmem:[#allocation2 + $0x1d1] sm:$0xff]
      %v1085 = vld [vmem:[#allocation2 + $0x1e9] sm:$0xff]
      %v1086 = vld [vmem:[#allocation2 + $0x1f1] sm:$0xff]
      %v1087 = vld [vmem:[#allocation2 + $0x209] sm:$0xff]
      %v1088 = vld [vmem:[#allocation2 + $0x211] sm:$0xff]
      %v1089 = vld [vmem:[#allocation2 + $0x229] sm:$0xff]
      %v1090 = vld [vmem:[#allocation2 + $0x231] sm:$0xff]
      %v1091 = vld [vmem:[#allocation2 + $0x249] sm:$0xff]
      %v1092 = vld [vmem:[#allocation2 + $0x251] sm:$0xff]
      %v1093 = vld [vmem:[#allocation2 + $0x269] sm:$0xff]
      %v1094 = vld [vmem:[#allocation2 + $0x271] sm:$0xff]
      %v1095 = vld [vmem:[#allocation2 + $0x289] sm:$0xff]
      %v1096 = vld [vmem:[#allocation2 + $0x291] sm:$0xff]
      %v1097 = vld [vmem:[#allocation2 + $0x2a9] sm:$0xff]
      %v1098 = vld [vmem:[#allocation2 + $0x2b1] sm:$0xff]
      %v1099 = vld [vmem:[#allocation2 + $0x2c9] sm:$0xff]
      %v1100 = vld [vmem:[#allocation2 + $0x2d1] sm:$0xff]
      %v1101 = vld [vmem:[#allocation2 + $0x2e9] sm:$0xff]
      %v1102 = vld [vmem:[#allocation2 + $0x2f1] sm:$0xff]
      %v1103 = vld [vmem:[#allocation2 + $0x309] sm:$0xff]
      %v1104 = vld [vmem:[#allocation2 + $0x311] sm:$0xff]
      %v1105 = vld [vmem:[#allocation2 + $0x329] sm:$0xff]
      %v1106 = vld [vmem:[#allocation2 + $0x331] sm:$0xff]
      %v1107 = vld [vmem:[%s1 + $0x3] sm:$0x1]
      %v1108 = vlaneseq
      %v1109 = vshrl.u32 %v1108, 7
      %v1110 = vsub.s32 0, %v1109
      %v1111 = vrot.slane %v1107, %v1110
      %v1112 = vmul.f32 %v1055, %v1111
      %v1113 = vmul.f32 %v1056, %v1111
      %v1114 = vmul.f32 %v1057, %v1111
      %v1115 = vmul.f32 %v1058, %v1111
      %v1116 = vmul.f32 %v1059, %v1111
      %v1117 = vmul.f32 %v1060, %v1111
      %v1118 = vmul.f32 %v1061, %v1111
      %v1119 = vmul.f32 %v1062, %v1111
      %v1120 = vmul.f32 %v1063, %v1111
      %v1121 = vmul.f32 %v1064, %v1111
      %v1122 = vmul.f32 %v1065, %v1111
      %v1123 = vmul.f32 %v1066, %v1111
      %v1124 = vmul.f32 %v1067, %v1111
      %v1125 = vmul.f32 %v1068, %v1111
      %v1126 = vmul.f32 %v1069, %v1111
      %v1127 = vmul.f32 %v1070, %v1111
      %v1128 = vmul.f32 %v1071, %v1111
      %v1129 = vmul.f32 %v1072, %v1111
      %v1130 = vmul.f32 %v1073, %v1111
      %v1131 = vmul.f32 %v1074, %v1111
      %v1132 = vmul.f32 %v1075, %v1111
      %v1133 = vmul.f32 %v1076, %v1111
      %v1134 = vmul.f32 %v1077, %v1111
      %v1135 = vmul.f32 %v1078, %v1111
      %v1136 = vmul.f32 %v1079, %v1111
      %v1137 = vmul.f32 %v1080, %v1111
      %v1138 = vmul.f32 %v1081, %v1111
      %v1139 = vmul.f32 %v1082, %v1111
      %v1140 = vmul.f32 %v1083, %v1111
      %v1141 = vmul.f32 %v1084, %v1111
      %v1142 = vmul.f32 %v1085, %v1111
      %v1143 = vmul.f32 %v1086, %v1111
      %v1144 = vmul.f32 %v1087, %v1111
      %v1145 = vmul.f32 %v1088, %v1111
      %v1146 = vmul.f32 %v1089, %v1111
      %v1147 = vmul.f32 %v1090, %v1111
      %v1148 = vmul.f32 %v1091, %v1111
      %v1149 = vmul.f32 %v1092, %v1111
      %v1150 = vmul.f32 %v1093, %v1111
      %v1151 = vmul.f32 %v1094, %v1111
      %v1152 = vmul.f32 %v1095, %v1111
      %v1153 = vmul.f32 %v1096, %v1111
      %v1154 = vmul.f32 %v1097, %v1111
      %v1155 = vmul.f32 %v1098, %v1111
      %v1156 = vmul.f32 %v1099, %v1111
      %v1157 = vmul.f32 %v1100, %v1111
      %v1158 = vmul.f32 %v1101, %v1111
      %v1159 = vmul.f32 %v1102, %v1111
      %v1160 = vmul.f32 %v1103, %v1111
      %v1161 = vmul.f32 %v1104, %v1111
      %v1162 = vmul.f32 %v1105, %v1111
      %v1163 = vmul.f32 %v1106, %v1111
      %v1164 = vadd.f32 %v1003, %v1112
      %v1165 = vadd.f32 %v1004, %v1113
      %v1166 = vadd.f32 %v1005, %v1114
      %v1167 = vadd.f32 %v1006, %v1115
      %v1168 = vadd.f32 %v1007, %v1116
      %v1169 = vadd.f32 %v1008, %v1117
      %v1170 = vadd.f32 %v1009, %v1118
      %v1171 = vadd.f32 %v1010, %v1119
      %v1172 = vadd.f32 %v1011, %v1120
      %v1173 = vadd.f32 %v1012, %v1121
      %v1174 = vadd.f32 %v1013, %v1122
      %v1175 = vadd.f32 %v1014, %v1123
      %v1176 = vadd.f32 %v1015, %v1124
      %v1177 = vadd.f32 %v1016, %v1125
      %v1178 = vadd.f32 %v1017, %v1126
      %v1179 = vadd.f32 %v1018, %v1127
      %v1180 = vadd.f32 %v1019, %v1128
      %v1181 = vadd.f32 %v1020, %v1129
      %v1182 = vadd.f32 %v1021, %v1130
      %v1183 = vadd.f32 %v1022, %v1131
      %v1184 = vadd.f32 %v1023, %v1132
      %v1185 = vadd.f32 %v1024, %v1133
      %v1186 = vadd.f32 %v1025, %v1134
      %v1187 = vadd.f32 %v1026, %v1135
      %v1188 = vadd.f32 %v1027, %v1136
      %v1189 = vadd.f32 %v1028, %v1137
      %v1190 = vadd.f32 %v1029, %v1138
      %v1191 = vadd.f32 %v1030, %v1139
      %v1192 = vadd.f32 %v1031, %v1140
      %v1193 = vadd.f32 %v1032, %v1141
      %v1194 = vadd.f32 %v1033, %v1142
      %v1195 = vadd.f32 %v1034, %v1143
      %v1196 = vadd.f32 %v1035, %v1144
      %v1197 = vadd.f32 %v1036, %v1145
      %v1198 = vadd.f32 %v1037, %v1146
      %v1199 = vadd.f32 %v1038, %v1147
      %v1200 = vadd.f32 %v1039, %v1148
      %v1201 = vadd.f32 %v1040, %v1149
      %v1202 = vadd.f32 %v1041, %v1150
      %v1203 = vadd.f32 %v1042, %v1151
      %v1204 = vadd.f32 %v1043, %v1152
      %v1205 = vadd.f32 %v1044, %v1153
      %v1206 = vadd.f32 %v1045, %v1154
      %v1207 = vadd.f32 %v1046, %v1155
      %v1208 = vadd.f32 %v1047, %v1156
      %v1209 = vadd.f32 %v1048, %v1157
      %v1210 = vadd.f32 %v1049, %v1158
      %v1211 = vadd.f32 %v1050, %v1159
      %v1212 = vadd.f32 %v1051, %v1160
      %v1213 = vadd.f32 %v1052, %v1161
      %v1214 = vadd.f32 %v1053, %v1162
      %v1215 = vadd.f32 %v1054, %v1163
      %v1216 = vld [vmem:[#allocation2 + $0xa] sm:$0xff]
      %v1217 = vld [vmem:[#allocation2 + $0x12] sm:$0xff]
      %v1218 = vld [vmem:[#allocation2 + $0x2a] sm:$0xff]
      %v1219 = vld [vmem:[#allocation2 + $0x32] sm:$0xff]
      %v1220 = vld [vmem:[#allocation2 + $0x4a] sm:$0xff]
      %v1221 = vld [vmem:[#allocation2 + $0x52] sm:$0xff]
      %v1222 = vld [vmem:[#allocation2 + $0x6a] sm:$0xff]
      %v1223 = vld [vmem:[#allocation2 + $0x72] sm:$0xff]
      %v1224 = vld [vmem:[#allocation2 + $0x8a] sm:$0xff]
      %v1225 = vld [vmem:[#allocation2 + $0x92] sm:$0xff]
      %v1226 = vld [vmem:[#allocation2 + $0xaa] sm:$0xff]
      %v1227 = vld [vmem:[#allocation2 + $0xb2] sm:$0xff]
      %v1228 = vld [vmem:[#allocation2 + $0xca] sm:$0xff]
      %v1229 = vld [vmem:[#allocation2 + $0xd2] sm:$0xff]
      %v1230 = vld [vmem:[#allocation2 + $0xea] sm:$0xff]
      %v1231 = vld [vmem:[#allocation2 + $0xf2] sm:$0xff]
      %v1232 = vld [vmem:[#allocation2 + $0x10a] sm:$0xff]
      %v1233 = vld [vmem:[#allocation2 + $0x112] sm:$0xff]
      %v1234 = vld [vmem:[#allocation2 + $0x12a] sm:$0xff]
      %v1235 = vld [vmem:[#allocation2 + $0x132] sm:$0xff]
      %v1236 = vld [vmem:[#allocation2 + $0x14a] sm:$0xff]
      %v1237 = vld [vmem:[#allocation2 + $0x152] sm:$0xff]
      %v1238 = vld [vmem:[#allocation2 + $0x16a] sm:$0xff]
      %v1239 = vld [vmem:[#allocation2 + $0x172] sm:$0xff]
      %v1240 = vld [vmem:[#allocation2 + $0x18a] sm:$0xff]
      %v1241 = vld [vmem:[#allocation2 + $0x192] sm:$0xff]
      %v1242 = vld [vmem:[#allocation2 + $0x1aa] sm:$0xff]
      %v1243 = vld [vmem:[#allocation2 + $0x1b2] sm:$0xff]
      %v1244 = vld [vmem:[#allocation2 + $0x1ca] sm:$0xff]
      %v1245 = vld [vmem:[#allocation2 + $0x1d2] sm:$0xff]
      %v1246 = vld [vmem:[#allocation2 + $0x1ea] sm:$0xff]
      %v1247 = vld [vmem:[#allocation2 + $0x1f2] sm:$0xff]
      %v1248 = vld [vmem:[#allocation2 + $0x20a] sm:$0xff]
      %v1249 = vld [vmem:[#allocation2 + $0x212] sm:$0xff]
      %v1250 = vld [vmem:[#allocation2 + $0x22a] sm:$0xff]
      %v1251 = vld [vmem:[#allocation2 + $0x232] sm:$0xff]
      %v1252 = vld [vmem:[#allocation2 + $0x24a] sm:$0xff]
      %v1253 = vld [vmem:[#allocation2 + $0x252] sm:$0xff]
      %v1254 = vld [vmem:[#allocation2 + $0x26a] sm:$0xff]
      %v1255 = vld [vmem:[#allocation2 + $0x272] sm:$0xff]
      %v1256 = vld [vmem:[#allocation2 + $0x28a] sm:$0xff]
      %v1257 = vld [vmem:[#allocation2 + $0x292] sm:$0xff]
      %v1258 = vld [vmem:[#allocation2 + $0x2aa] sm:$0xff]
      %v1259 = vld [vmem:[#allocation2 + $0x2b2] sm:$0xff]
      %v1260 = vld [vmem:[#allocation2 + $0x2ca] sm:$0xff]
      %v1261 = vld [vmem:[#allocation2 + $0x2d2] sm:$0xff]
      %v1262 = vld [vmem:[#allocation2 + $0x2ea] sm:$0xff]
      %v1263 = vld [vmem:[#allocation2 + $0x2f2] sm:$0xff]
      %v1264 = vld [vmem:[#allocation2 + $0x30a] sm:$0xff]
      %v1265 = vld [vmem:[#allocation2 + $0x312] sm:$0xff]
      %v1266 = vld [vmem:[#allocation2 + $0x32a] sm:$0xff]
      %v1267 = vld [vmem:[#allocation2 + $0x332] sm:$0xff]
      %v1268 = vld [vmem:[%s1 + $0x4] sm:$0x1]
      %v1269 = vlaneseq
      %v1270 = vshrl.u32 %v1269, 7
      %v1271 = vsub.s32 0, %v1270
      %v1272 = vrot.slane %v1268, %v1271
      %v1273 = vmul.f32 %v1216, %v1272
      %v1274 = vmul.f32 %v1217, %v1272
      %v1275 = vmul.f32 %v1218, %v1272
      %v1276 = vmul.f32 %v1219, %v1272
      %v1277 = vmul.f32 %v1220, %v1272
      %v1278 = vmul.f32 %v1221, %v1272
      %v1279 = vmul.f32 %v1222, %v1272
      %v1280 = vmul.f32 %v1223, %v1272
      %v1281 = vmul.f32 %v1224, %v1272
      %v1282 = vmul.f32 %v1225, %v1272
      %v1283 = vmul.f32 %v1226, %v1272
      %v1284 = vmul.f32 %v1227, %v1272
      %v1285 = vmul.f32 %v1228, %v1272
      %v1286 = vmul.f32 %v1229, %v1272
      %v1287 = vmul.f32 %v1230, %v1272
      %v1288 = vmul.f32 %v1231, %v1272
      %v1289 = vmul.f32 %v1232, %v1272
      %v1290 = vmul.f32 %v1233, %v1272
      %v1291 = vmul.f32 %v1234, %v1272
      %v1292 = vmul.f32 %v1235, %v1272
      %v1293 = vmul.f32 %v1236, %v1272
      %v1294 = vmul.f32 %v1237, %v1272
      %v1295 = vmul.f32 %v1238, %v1272
      %v1296 = vmul.f32 %v1239, %v1272
      %v1297 = vmul.f32 %v1240, %v1272
      %v1298 = vmul.f32 %v1241, %v1272
      %v1299 = vmul.f32 %v1242, %v1272
      %v1300 = vmul.f32 %v1243, %v1272
      %v1301 = vmul.f32 %v1244, %v1272
      %v1302 = vmul.f32 %v1245, %v1272
      %v1303 = vmul.f32 %v1246, %v1272
      %v1304 = vmul.f32 %v1247, %v1272
      %v1305 = vmul.f32 %v1248, %v1272
      %v1306 = vmul.f32 %v1249, %v1272
      %v1307 = vmul.f32 %v1250, %v1272
      %v1308 = vmul.f32 %v1251, %v1272
      %v1309 = vmul.f32 %v1252, %v1272
      %v1310 = vmul.f32 %v1253, %v1272
      %v1311 = vmul.f32 %v1254, %v1272
      %v1312 = vmul.f32 %v1255, %v1272
      %v1313 = vmul.f32 %v1256, %v1272
      %v1314 = vmul.f32 %v1257, %v1272
      %v1315 = vmul.f32 %v1258, %v1272
      %v1316 = vmul.f32 %v1259, %v1272
      %v1317 = vmul.f32 %v1260, %v1272
      %v1318 = vmul.f32 %v1261, %v1272
      %v1319 = vmul.f32 %v1262, %v1272
      %v1320 = vmul.f32 %v1263, %v1272
      %v1321 = vmul.f32 %v1264, %v1272
      %v1322 = vmul.f32 %v1265, %v1272
      %v1323 = vmul.f32 %v1266, %v1272
      %v1324 = vmul.f32 %v1267, %v1272
      %v1325 = vadd.f32 %v1164, %v1273
      %v1326 = vadd.f32 %v1165, %v1274
      %v1327 = vadd.f32 %v1166, %v1275
      %v1328 = vadd.f32 %v1167, %v1276
      %v1329 = vadd.f32 %v1168, %v1277
      %v1330 = vadd.f32 %v1169, %v1278
      %v1331 = vadd.f32 %v1170, %v1279
      %v1332 = vadd.f32 %v1171, %v1280
      %v1333 = vadd.f32 %v1172, %v1281
      %v1334 = vadd.f32 %v1173, %v1282
      %v1335 = vadd.f32 %v1174, %v1283
      %v1336 = vadd.f32 %v1175, %v1284
      %v1337 = vadd.f32 %v1176, %v1285
      %v1338 = vadd.f32 %v1177, %v1286
      %v1339 = vadd.f32 %v1178, %v1287
      %v1340 = vadd.f32 %v1179, %v1288
      %v1341 = vadd.f32 %v1180, %v1289
      %v1342 = vadd.f32 %v1181, %v1290
      %v1343 = vadd.f32 %v1182, %v1291
      %v1344 = vadd.f32 %v1183, %v1292
      %v1345 = vadd.f32 %v1184, %v1293
      %v1346 = vadd.f32 %v1185, %v1294
      %v1347 = vadd.f32 %v1186, %v1295
      %v1348 = vadd.f32 %v1187, %v1296
      %v1349 = vadd.f32 %v1188, %v1297
      %v1350 = vadd.f32 %v1189, %v1298
      %v1351 = vadd.f32 %v1190, %v1299
      %v1352 = vadd.f32 %v1191, %v1300
      %v1353 = vadd.f32 %v1192, %v1301
      %v1354 = vadd.f32 %v1193, %v1302
      %v1355 = vadd.f32 %v1194, %v1303
      %v1356 = vadd.f32 %v1195, %v1304
      %v1357 = vadd.f32 %v1196, %v1305
      %v1358 = vadd.f32 %v1197, %v1306
      %v1359 = vadd.f32 %v1198, %v1307
      %v1360 = vadd.f32 %v1199, %v1308
      %v1361 = vadd.f32 %v1200, %v1309
      %v1362 = vadd.f32 %v1201, %v1310
      %v1363 = vadd.f32 %v1202, %v1311
      %v1364 = vadd.f32 %v1203, %v1312
      %v1365 = vadd.f32 %v1204, %v1313
      %v1366 = vadd.f32 %v1205, %v1314
      %v1367 = vadd.f32 %v1206, %v1315
      %v1368 = vadd.f32 %v1207, %v1316
      %v1369 = vadd.f32 %v1208, %v1317
      %v1370 = vadd.f32 %v1209, %v1318
      %v1371 = vadd.f32 %v1210, %v1319
      %v1372 = vadd.f32 %v1211, %v1320
      %v1373 = vadd.f32 %v1212, %v1321
      %v1374 = vadd.f32 %v1213, %v1322
      %v1375 = vadd.f32 %v1214, %v1323
      %v1376 = vadd.f32 %v1215, %v1324
      %s1377 = scalar_lea.vmem [#allocation2], 32
      %v1378 = vld [vmem:[%s1377 + $0x6] sm:$0xff]
      %v1379 = vld [vmem:[%s1377 + $0xe] sm:$0xff]
      %v1380 = vld [vmem:[%s1377 + $0x26] sm:$0xff]
      %v1381 = vld [vmem:[%s1377 + $0x2e] sm:$0xff]
      %v1382 = vld [vmem:[%s1377 + $0x46] sm:$0xff]
      %v1383 = vld [vmem:[%s1377 + $0x4e] sm:$0xff]
      %v1384 = vld [vmem:[%s1377 + $0x66] sm:$0xff]
      %v1385 = vld [vmem:[%s1377 + $0x6e] sm:$0xff]
      %v1386 = vld [vmem:[%s1377 + $0x86] sm:$0xff]
      %v1387 = vld [vmem:[%s1377 + $0x8e] sm:$0xff]
      %v1388 = vld [vmem:[%s1377 + $0xa6] sm:$0xff]
      %v1389 = vld [vmem:[%s1377 + $0xae] sm:$0xff]
      %v1390 = vld [vmem:[%s1377 + $0xc6] sm:$0xff]
      %v1391 = vld [vmem:[%s1377 + $0xce] sm:$0xff]
      %v1392 = vld [vmem:[%s1377 + $0xe6] sm:$0xff]
      %v1393 = vld [vmem:[%s1377 + $0xee] sm:$0xff]
      %v1394 = vld [vmem:[%s1377 + $0x106] sm:$0xff]
      %v1395 = vld [vmem:[%s1377 + $0x10e] sm:$0xff]
      %v1396 = vld [vmem:[%s1377 + $0x126] sm:$0xff]
      %v1397 = vld [vmem:[%s1377 + $0x12e] sm:$0xff]
      %v1398 = vld [vmem:[%s1377 + $0x146] sm:$0xff]
      %v1399 = vld [vmem:[%s1377 + $0x14e] sm:$0xff]
      %v1400 = vld [vmem:[%s1377 + $0x166] sm:$0xff]
      %v1401 = vld [vmem:[%s1377 + $0x16e] sm:$0xff]
      %v1402 = vld [vmem:[%s1377 + $0x186] sm:$0xff]
      %v1403 = vld [vmem:[%s1377 + $0x18e] sm:$0xff]
      %v1404 = vld [vmem:[%s1377 + $0x1a6] sm:$0xff]
      %v1405 = vld [vmem:[%s1377 + $0x1ae] sm:$0xff]
      %v1406 = vld [vmem:[%s1377 + $0x1c6] sm:$0xff]
      %v1407 = vld [vmem:[%s1377 + $0x1ce] sm:$0xff]
      %v1408 = vld [vmem:[%s1377 + $0x1e6] sm:$0xff]
      %v1409 = vld [vmem:[%s1377 + $0x1ee] sm:$0xff]
      %v1410 = vld [vmem:[%s1377 + $0x206] sm:$0xff]
      %v1411 = vld [vmem:[%s1377 + $0x20e] sm:$0xff]
      %v1412 = vld [vmem:[%s1377 + $0x226] sm:$0xff]
      %v1413 = vld [vmem:[%s1377 + $0x22e] sm:$0xff]
      %v1414 = vld [vmem:[%s1377 + $0x246] sm:$0xff]
      %v1415 = vld [vmem:[%s1377 + $0x24e] sm:$0xff]
      %v1416 = vld [vmem:[%s1377 + $0x266] sm:$0xff]
      %v1417 = vld [vmem:[%s1377 + $0x26e] sm:$0xff]
      %v1418 = vld [vmem:[%s1377 + $0x286] sm:$0xff]
      %v1419 = vld [vmem:[%s1377 + $0x28e] sm:$0xff]
      %v1420 = vld [vmem:[%s1377 + $0x2a6] sm:$0xff]
      %v1421 = vld [vmem:[%s1377 + $0x2ae] sm:$0xff]
      %v1422 = vld [vmem:[%s1377 + $0x2c6] sm:$0xff]
      %v1423 = vld [vmem:[%s1377 + $0x2ce] sm:$0xff]
      %v1424 = vld [vmem:[%s1377 + $0x2e6] sm:$0xff]
      %v1425 = vld [vmem:[%s1377 + $0x2ee] sm:$0xff]
      %v1426 = vld [vmem:[%s1377 + $0x306] sm:$0xff]
      %v1427 = vld [vmem:[%s1377 + $0x30e] sm:$0xff]
      %v1428 = vld [vmem:[%s1377 + $0x326] sm:$0xff]
      %v1429 = vld [vmem:[%s1377 + $0x32e] sm:$0xff]
      %s1430 = scalar_lea.vmem %s1, 8
      %v1431 = vld [vmem:[%s1430] sm:$0x1]
      %v1432 = vlaneseq
      %v1433 = vshrl.u32 %v1432, 7
      %v1434 = vsub.s32 0, %v1433
      %v1435 = vrot.slane %v1431, %v1434
      %v1436 = vmul.f32 %v1378, %v1435
      %v1437 = vmul.f32 %v1379, %v1435
      %v1438 = vmul.f32 %v1380, %v1435
      %v1439 = vmul.f32 %v1381, %v1435
      %v1440 = vmul.f32 %v1382, %v1435
      %v1441 = vmul.f32 %v1383, %v1435
      %v1442 = vmul.f32 %v1384, %v1435
      %v1443 = vmul.f32 %v1385, %v1435
      %v1444 = vmul.f32 %v1386, %v1435
      %v1445 = vmul.f32 %v1387, %v1435
      %v1446 = vmul.f32 %v1388, %v1435
      %v1447 = vmul.f32 %v1389, %v1435
      %v1448 = vmul.f32 %v1390, %v1435
      %v1449 = vmul.f32 %v1391, %v1435
      %v1450 = vmul.f32 %v1392, %v1435
      %v1451 = vmul.f32 %v1393, %v1435
      %v1452 = vmul.f32 %v1394, %v1435
      %v1453 = vmul.f32 %v1395, %v1435
      %v1454 = vmul.f32 %v1396, %v1435
      %v1455 = vmul.f32 %v1397, %v1435
      %v1456 = vmul.f32 %v1398, %v1435
      %v1457 = vmul.f32 %v1399, %v1435
      %v1458 = vmul.f32 %v1400, %v1435
      %v1459 = vmul.f32 %v1401, %v1435
      %v1460 = vmul.f32 %v1402, %v1435
      %v1461 = vmul.f32 %v1403, %v1435
      %v1462 = vmul.f32 %v1404, %v1435
      %v1463 = vmul.f32 %v1405, %v1435
      %v1464 = vmul.f32 %v1406, %v1435
      %v1465 = vmul.f32 %v1407, %v1435
      %v1466 = vmul.f32 %v1408, %v1435
      %v1467 = vmul.f32 %v1409, %v1435
      %v1468 = vmul.f32 %v1410, %v1435
      %v1469 = vmul.f32 %v1411, %v1435
      %v1470 = vmul.f32 %v1412, %v1435
      %v1471 = vmul.f32 %v1413, %v1435
      %v1472 = vmul.f32 %v1414, %v1435
      %v1473 = vmul.f32 %v1415, %v1435
      %v1474 = vmul.f32 %v1416, %v1435
      %v1475 = vmul.f32 %v1417, %v1435
      %v1476 = vmul.f32 %v1418, %v1435
      %v1477 = vmul.f32 %v1419, %v1435
      %v1478 = vmul.f32 %v1420, %v1435
      %v1479 = vmul.f32 %v1421, %v1435
      %v1480 = vmul.f32 %v1422, %v1435
      %v1481 = vmul.f32 %v1423, %v1435
      %v1482 = vmul.f32 %v1424, %v1435
      %v1483 = vmul.f32 %v1425, %v1435
      %v1484 = vmul.f32 %v1426, %v1435
      %v1485 = vmul.f32 %v1427, %v1435
      %v1486 = vmul.f32 %v1428, %v1435
      %v1487 = vmul.f32 %v1429, %v1435
      %v1488 = vadd.f32 %v1325, %v1436
      %v1489 = vadd.f32 %v1326, %v1437
      %v1490 = vadd.f32 %v1327, %v1438
      %v1491 = vadd.f32 %v1328, %v1439
      %v1492 = vadd.f32 %v1329, %v1440
      %v1493 = vadd.f32 %v1330, %v1441
      %v1494 = vadd.f32 %v1331, %v1442
      %v1495 = vadd.f32 %v1332, %v1443
      %v1496 = vadd.f32 %v1333, %v1444
      %v1497 = vadd.f32 %v1334, %v1445
      %v1498 = vadd.f32 %v1335, %v1446
      %v1499 = vadd.f32 %v1336, %v1447
      %v1500 = vadd.f32 %v1337, %v1448
      %v1501 = vadd.f32 %v1338, %v1449
      %v1502 = vadd.f32 %v1339, %v1450
      %v1503 = vadd.f32 %v1340, %v1451
      %v1504 = vadd.f32 %v1341, %v1452
      %v1505 = vadd.f32 %v1342, %v1453
      %v1506 = vadd.f32 %v1343, %v1454
      %v1507 = vadd.f32 %v1344, %v1455
      %v1508 = vadd.f32 %v1345, %v1456
      %v1509 = vadd.f32 %v1346, %v1457
      %v1510 = vadd.f32 %v1347, %v1458
      %v1511 = vadd.f32 %v1348, %v1459
      %v1512 = vadd.f32 %v1349, %v1460
      %v1513 = vadd.f32 %v1350, %v1461
      %v1514 = vadd.f32 %v1351, %v1462
      %v1515 = vadd.f32 %v1352, %v1463
      %v1516 = vadd.f32 %v1353, %v1464
      %v1517 = vadd.f32 %v1354, %v1465
      %v1518 = vadd.f32 %v1355, %v1466
      %v1519 = vadd.f32 %v1356, %v1467
      %v1520 = vadd.f32 %v1357, %v1468
      %v1521 = vadd.f32 %v1358, %v1469
      %v1522 = vadd.f32 %v1359, %v1470
      %v1523 = vadd.f32 %v1360, %v1471
      %v1524 = vadd.f32 %v1361, %v1472
      %v1525 = vadd.f32 %v1362, %v1473
      %v1526 = vadd.f32 %v1363, %v1474
      %v1527 = vadd.f32 %v1364, %v1475
      %v1528 = vadd.f32 %v1365, %v1476
      %v1529 = vadd.f32 %v1366, %v1477
      %v1530 = vadd.f32 %v1367, %v1478
      %v1531 = vadd.f32 %v1368, %v1479
      %v1532 = vadd.f32 %v1369, %v1480
      %v1533 = vadd.f32 %v1370, %v1481
      %v1534 = vadd.f32 %v1371, %v1482
      %v1535 = vadd.f32 %v1372, %v1483
      %v1536 = vadd.f32 %v1373, %v1484
      %v1537 = vadd.f32 %v1374, %v1485
      %v1538 = vadd.f32 %v1375, %v1486
      %v1539 = vadd.f32 %v1376, %v1487
      %v1540 = vld [vmem:[%s1377 + $0x7] sm:$0xff]
      %v1541 = vld [vmem:[%s1377 + $0xf] sm:$0xff]
      %v1542 = vld [vmem:[%s1377 + $0x27] sm:$0xff]
      %v1543 = vld [vmem:[%s1377 + $0x2f] sm:$0xff]
      %v1544 = vld [vmem:[%s1377 + $0x47] sm:$0xff]
      %v1545 = vld [vmem:[%s1377 + $0x4f] sm:$0xff]
      %v1546 = vld [vmem:[%s1377 + $0x67] sm:$0xff]
      %v1547 = vld [vmem:[%s1377 + $0x6f] sm:$0xff]
      %v1548 = vld [vmem:[%s1377 + $0x87] sm:$0xff]
      %v1549 = vld [vmem:[%s1377 + $0x8f] sm:$0xff]
      %v1550 = vld [vmem:[%s1377 + $0xa7] sm:$0xff]
      %v1551 = vld [vmem:[%s1377 + $0xaf] sm:$0xff]
      %v1552 = vld [vmem:[%s1377 + $0xc7] sm:$0xff]
      %v1553 = vld [vmem:[%s1377 + $0xcf] sm:$0xff]
      %v1554 = vld [vmem:[%s1377 + $0xe7] sm:$0xff]
      %v1555 = vld [vmem:[%s1377 + $0xef] sm:$0xff]
      %v1556 = vld [vmem:[%s1377 + $0x107] sm:$0xff]
      %v1557 = vld [vmem:[%s1377 + $0x10f] sm:$0xff]
      %v1558 = vld [vmem:[%s1377 + $0x127] sm:$0xff]
      %v1559 = vld [vmem:[%s1377 + $0x12f] sm:$0xff]
      %v1560 = vld [vmem:[%s1377 + $0x147] sm:$0xff]
      %v1561 = vld [vmem:[%s1377 + $0x14f] sm:$0xff]
      %v1562 = vld [vmem:[%s1377 + $0x167] sm:$0xff]
      %v1563 = vld [vmem:[%s1377 + $0x16f] sm:$0xff]
      %v1564 = vld [vmem:[%s1377 + $0x187] sm:$0xff]
      %v1565 = vld [vmem:[%s1377 + $0x18f] sm:$0xff]
      %v1566 = vld [vmem:[%s1377 + $0x1a7] sm:$0xff]
      %v1567 = vld [vmem:[%s1377 + $0x1af] sm:$0xff]
      %v1568 = vld [vmem:[%s1377 + $0x1c7] sm:$0xff]
      %v1569 = vld [vmem:[%s1377 + $0x1cf] sm:$0xff]
      %v1570 = vld [vmem:[%s1377 + $0x1e7] sm:$0xff]
      %v1571 = vld [vmem:[%s1377 + $0x1ef] sm:$0xff]
      %v1572 = vld [vmem:[%s1377 + $0x207] sm:$0xff]
      %v1573 = vld [vmem:[%s1377 + $0x20f] sm:$0xff]
      %v1574 = vld [vmem:[%s1377 + $0x227] sm:$0xff]
      %v1575 = vld [vmem:[%s1377 + $0x22f] sm:$0xff]
      %v1576 = vld [vmem:[%s1377 + $0x247] sm:$0xff]
      %v1577 = vld [vmem:[%s1377 + $0x24f] sm:$0xff]
      %v1578 = vld [vmem:[%s1377 + $0x267] sm:$0xff]
      %v1579 = vld [vmem:[%s1377 + $0x26f] sm:$0xff]
      %v1580 = vld [vmem:[%s1377 + $0x287] sm:$0xff]
      %v1581 = vld [vmem:[%s1377 + $0x28f] sm:$0xff]
      %v1582 = vld [vmem:[%s1377 + $0x2a7] sm:$0xff]
      %v1583 = vld [vmem:[%s1377 + $0x2af] sm:$0xff]
      %v1584 = vld [vmem:[%s1377 + $0x2c7] sm:$0xff]
      %v1585 = vld [vmem:[%s1377 + $0x2cf] sm:$0xff]
      %v1586 = vld [vmem:[%s1377 + $0x2e7] sm:$0xff]
      %v1587 = vld [vmem:[%s1377 + $0x2ef] sm:$0xff]
      %v1588 = vld [vmem:[%s1377 + $0x307] sm:$0xff]
      %v1589 = vld [vmem:[%s1377 + $0x30f] sm:$0xff]
      %v1590 = vld [vmem:[%s1377 + $0x327] sm:$0xff]
      %v1591 = vld [vmem:[%s1377 + $0x32f] sm:$0xff]
      %v1592 = vld [vmem:[%s1430 + $0x1] sm:$0x1]
      %v1593 = vlaneseq
      %v1594 = vshrl.u32 %v1593, 7
      %v1595 = vsub.s32 0, %v1594
      %v1596 = vrot.slane %v1592, %v1595
      %v1597 = vmul.f32 %v1540, %v1596
      %v1598 = vmul.f32 %v1541, %v1596
      %v1599 = vmul.f32 %v1542, %v1596
      %v1600 = vmul.f32 %v1543, %v1596
      %v1601 = vmul.f32 %v1544, %v1596
      %v1602 = vmul.f32 %v1545, %v1596
      %v1603 = vmul.f32 %v1546, %v1596
      %v1604 = vmul.f32 %v1547, %v1596
      %v1605 = vmul.f32 %v1548, %v1596
      %v1606 = vmul.f32 %v1549, %v1596
      %v1607 = vmul.f32 %v1550, %v1596
      %v1608 = vmul.f32 %v1551, %v1596
      %v1609 = vmul.f32 %v1552, %v1596
      %v1610 = vmul.f32 %v1553, %v1596
      %v1611 = vmul.f32 %v1554, %v1596
      %v1612 = vmul.f32 %v1555, %v1596
      %v1613 = vmul.f32 %v1556, %v1596
      %v1614 = vmul.f32 %v1557, %v1596
      %v1615 = vmul.f32 %v1558, %v1596
      %v1616 = vmul.f32 %v1559, %v1596
      %v1617 = vmul.f32 %v1560, %v1596
      %v1618 = vmul.f32 %v1561, %v1596
      %v1619 = vmul.f32 %v1562, %v1596
      %v1620 = vmul.f32 %v1563, %v1596
      %v1621 = vmul.f32 %v1564, %v1596
      %v1622 = vmul.f32 %v1565, %v1596
      %v1623 = vmul.f32 %v1566, %v1596
      %v1624 = vmul.f32 %v1567, %v1596
      %v1625 = vmul.f32 %v1568, %v1596
      %v1626 = vmul.f32 %v1569, %v1596
      %v1627 = vmul.f32 %v1570, %v1596
      %v1628 = vmul.f32 %v1571, %v1596
      %v1629 = vmul.f32 %v1572, %v1596
      %v1630 = vmul.f32 %v1573, %v1596
      %v1631 = vmul.f32 %v1574, %v1596
      %v1632 = vmul.f32 %v1575, %v1596
      %v1633 = vmul.f32 %v1576, %v1596
      %v1634 = vmul.f32 %v1577, %v1596
      %v1635 = vmul.f32 %v1578, %v1596
      %v1636 = vmul.f32 %v1579, %v1596
      %v1637 = vmul.f32 %v1580, %v1596
      %v1638 = vmul.f32 %v1581, %v1596
      %v1639 = vmul.f32 %v1582, %v1596
      %v1640 = vmul.f32 %v1583, %v1596
      %v1641 = vmul.f32 %v1584, %v1596
      %v1642 = vmul.f32 %v1585, %v1596
      %v1643 = vmul.f32 %v1586, %v1596
      %v1644 = vmul.f32 %v1587, %v1596
      %v1645 = vmul.f32 %v1588, %v1596
      %v1646 = vmul.f32 %v1589, %v1596
      %v1647 = vmul.f32 %v1590, %v1596
      %v1648 = vmul.f32 %v1591, %v1596
      %v1649 = vadd.f32 %v1488, %v1597
      %v1650 = vadd.f32 %v1489, %v1598
      %v1651 = vadd.f32 %v1490, %v1599
      %v1652 = vadd.f32 %v1491, %v1600
      %v1653 = vadd.f32 %v1492, %v1601
      %v1654 = vadd.f32 %v1493, %v1602
      %v1655 = vadd.f32 %v1494, %v1603
      %v1656 = vadd.f32 %v1495, %v1604
      %v1657 = vadd.f32 %v1496, %v1605
      %v1658 = vadd.f32 %v1497, %v1606
      %v1659 = vadd.f32 %v1498, %v1607
      %v1660 = vadd.f32 %v1499, %v1608
      %v1661 = vadd.f32 %v1500, %v1609
      %v1662 = vadd.f32 %v1501, %v1610
      %v1663 = vadd.f32 %v1502, %v1611
      %v1664 = vadd.f32 %v1503, %v1612
      %v1665 = vadd.f32 %v1504, %v1613
      %v1666 = vadd.f32 %v1505, %v1614
      %v1667 = vadd.f32 %v1506, %v1615
      %v1668 = vadd.f32 %v1507, %v1616
      %v1669 = vadd.f32 %v1508, %v1617
      %v1670 = vadd.f32 %v1509, %v1618
      %v1671 = vadd.f32 %v1510, %v1619
      %v1672 = vadd.f32 %v1511, %v1620
      %v1673 = vadd.f32 %v1512, %v1621
      %v1674 = vadd.f32 %v1513, %v1622
      %v1675 = vadd.f32 %v1514, %v1623
      %v1676 = vadd.f32 %v1515, %v1624
      %v1677 = vadd.f32 %v1516, %v1625
      %v1678 = vadd.f32 %v1517, %v1626
      %v1679 = vadd.f32 %v1518, %v1627
      %v1680 = vadd.f32 %v1519, %v1628
      %v1681 = vadd.f32 %v1520, %v1629
      %v1682 = vadd.f32 %v1521, %v1630
      %v1683 = vadd.f32 %v1522, %v1631
      %v1684 = vadd.f32 %v1523, %v1632
      %v1685 = vadd.f32 %v1524, %v1633
      %v1686 = vadd.f32 %v1525, %v1634
      %v1687 = vadd.f32 %v1526, %v1635
      %v1688 = vadd.f32 %v1527, %v1636
      %v1689 = vadd.f32 %v1528, %v1637
      %v1690 = vadd.f32 %v1529, %v1638
      %v1691 = vadd.f32 %v1530, %v1639
      %v1692 = vadd.f32 %v1531, %v1640
      %v1693 = vadd.f32 %v1532, %v1641
      %v1694 = vadd.f32 %v1533, %v1642
      %v1695 = vadd.f32 %v1534, %v1643
      %v1696 = vadd.f32 %v1535, %v1644
      %v1697 = vadd.f32 %v1536, %v1645
      %v1698 = vadd.f32 %v1537, %v1646
      %v1699 = vadd.f32 %v1538, %v1647
      %v1700 = vadd.f32 %v1539, %v1648
      %v1701 = vld [vmem:[%s1377 + $0x8] sm:$0xff]
      %v1702 = vld [vmem:[%s1377 + $0x10] sm:$0xff]
      %v1703 = vld [vmem:[%s1377 + $0x28] sm:$0xff]
      %v1704 = vld [vmem:[%s1377 + $0x30] sm:$0xff]
      %v1705 = vld [vmem:[%s1377 + $0x48] sm:$0xff]
      %v1706 = vld [vmem:[%s1377 + $0x50] sm:$0xff]
      %v1707 = vld [vmem:[%s1377 + $0x68] sm:$0xff]
      %v1708 = vld [vmem:[%s1377 + $0x70] sm:$0xff]
      %v1709 = vld [vmem:[%s1377 + $0x88] sm:$0xff]
      %v1710 = vld [vmem:[%s1377 + $0x90] sm:$0xff]
      %v1711 = vld [vmem:[%s1377 + $0xa8] sm:$0xff]
      %v1712 = vld [vmem:[%s1377 + $0xb0] sm:$0xff]
      %v1713 = vld [vmem:[%s1377 + $0xc8] sm:$0xff]
      %v1714 = vld [vmem:[%s1377 + $0xd0] sm:$0xff]
      %v1715 = vld [vmem:[%s1377 + $0xe8] sm:$0xff]
      %v1716 = vld [vmem:[%s1377 + $0xf0] sm:$0xff]
      %v1717 = vld [vmem:[%s1377 + $0x108] sm:$0xff]
      %v1718 = vld [vmem:[%s1377 + $0x110] sm:$0xff]
      %v1719 = vld [vmem:[%s1377 + $0x128] sm:$0xff]
      %v1720 = vld [vmem:[%s1377 + $0x130] sm:$0xff]
      %v1721 = vld [vmem:[%s1377 + $0x148] sm:$0xff]
      %v1722 = vld [vmem:[%s1377 + $0x150] sm:$0xff]
      %v1723 = vld [vmem:[%s1377 + $0x168] sm:$0xff]
      %v1724 = vld [vmem:[%s1377 + $0x170] sm:$0xff]
      %v1725 = vld [vmem:[%s1377 + $0x188] sm:$0xff]
      %v1726 = vld [vmem:[%s1377 + $0x190] sm:$0xff]
      %v1727 = vld [vmem:[%s1377 + $0x1a8] sm:$0xff]
      %v1728 = vld [vmem:[%s1377 + $0x1b0] sm:$0xff]
      %v1729 = vld [vmem:[%s1377 + $0x1c8] sm:$0xff]
      %v1730 = vld [vmem:[%s1377 + $0x1d0] sm:$0xff]
      %v1731 = vld [vmem:[%s1377 + $0x1e8] sm:$0xff]
      %v1732 = vld [vmem:[%s1377 + $0x1f0] sm:$0xff]
      %v1733 = vld [vmem:[%s1377 + $0x208] sm:$0xff]
      %v1734 = vld [vmem:[%s1377 + $0x210] sm:$0xff]
      %v1735 = vld [vmem:[%s1377 + $0x228] sm:$0xff]
      %v1736 = vld [vmem:[%s1377 + $0x230] sm:$0xff]
      %v1737 = vld [vmem:[%s1377 + $0x248] sm:$0xff]
      %v1738 = vld [vmem:[%s1377 + $0x250] sm:$0xff]
      %v1739 = vld [vmem:[%s1377 + $0x268] sm:$0xff]
      %v1740 = vld [vmem:[%s1377 + $0x270] sm:$0xff]
      %v1741 = vld [vmem:[%s1377 + $0x288] sm:$0xff]
      %v1742 = vld [vmem:[%s1377 + $0x290] sm:$0xff]
      %v1743 = vld [vmem:[%s1377 + $0x2a8] sm:$0xff]
      %v1744 = vld [vmem:[%s1377 + $0x2b0] sm:$0xff]
      %v1745 = vld [vmem:[%s1377 + $0x2c8] sm:$0xff]
      %v1746 = vld [vmem:[%s1377 + $0x2d0] sm:$0xff]
      %v1747 = vld [vmem:[%s1377 + $0x2e8] sm:$0xff]
      %v1748 = vld [vmem:[%s1377 + $0x2f0] sm:$0xff]
      %v1749 = vld [vmem:[%s1377 + $0x308] sm:$0xff]
      %v1750 = vld [vmem:[%s1377 + $0x310] sm:$0xff]
      %v1751 = vld [vmem:[%s1377 + $0x328] sm:$0xff]
      %v1752 = vld [vmem:[%s1377 + $0x330] sm:$0xff]
      %v1753 = vld [vmem:[%s1430 + $0x2] sm:$0x1]
      %v1754 = vlaneseq
      %v1755 = vshrl.u32 %v1754, 7
      %v1756 = vsub.s32 0, %v1755
      %v1757 = vrot.slane %v1753, %v1756
      %v1758 = vmul.f32 %v1701, %v1757
      %v1759 = vmul.f32 %v1702, %v1757
      %v1760 = vmul.f32 %v1703, %v1757
      %v1761 = vmul.f32 %v1704, %v1757
      %v1762 = vmul.f32 %v1705, %v1757
      %v1763 = vmul.f32 %v1706, %v1757
      %v1764 = vmul.f32 %v1707, %v1757
      %v1765 = vmul.f32 %v1708, %v1757
      %v1766 = vmul.f32 %v1709, %v1757
      %v1767 = vmul.f32 %v1710, %v1757
      %v1768 = vmul.f32 %v1711, %v1757
      %v1769 = vmul.f32 %v1712, %v1757
      %v1770 = vmul.f32 %v1713, %v1757
      %v1771 = vmul.f32 %v1714, %v1757
      %v1772 = vmul.f32 %v1715, %v1757
      %v1773 = vmul.f32 %v1716, %v1757
      %v1774 = vmul.f32 %v1717, %v1757
      %v1775 = vmul.f32 %v1718, %v1757
      %v1776 = vmul.f32 %v1719, %v1757
      %v1777 = vmul.f32 %v1720, %v1757
      %v1778 = vmul.f32 %v1721, %v1757
      %v1779 = vmul.f32 %v1722, %v1757
      %v1780 = vmul.f32 %v1723, %v1757
      %v1781 = vmul.f32 %v1724, %v1757
      %v1782 = vmul.f32 %v1725, %v1757
      %v1783 = vmul.f32 %v1726, %v1757
      %v1784 = vmul.f32 %v1727, %v1757
      %v1785 = vmul.f32 %v1728, %v1757
      %v1786 = vmul.f32 %v1729, %v1757
      %v1787 = vmul.f32 %v1730, %v1757
      %v1788 = vmul.f32 %v1731, %v1757
      %v1789 = vmul.f32 %v1732, %v1757
      %v1790 = vmul.f32 %v1733, %v1757
      %v1791 = vmul.f32 %v1734, %v1757
      %v1792 = vmul.f32 %v1735, %v1757
      %v1793 = vmul.f32 %v1736, %v1757
      %v1794 = vmul.f32 %v1737, %v1757
      %v1795 = vmul.f32 %v1738, %v1757
      %v1796 = vmul.f32 %v1739, %v1757
      %v1797 = vmul.f32 %v1740, %v1757
      %v1798 = vmul.f32 %v1741, %v1757
      %v1799 = vmul.f32 %v1742, %v1757
      %v1800 = vmul.f32 %v1743, %v1757
      %v1801 = vmul.f32 %v1744, %v1757
      %v1802 = vmul.f32 %v1745, %v1757
      %v1803 = vmul.f32 %v1746, %v1757
      %v1804 = vmul.f32 %v1747, %v1757
      %v1805 = vmul.f32 %v1748, %v1757
      %v1806 = vmul.f32 %v1749, %v1757
      %v1807 = vmul.f32 %v1750, %v1757
      %v1808 = vmul.f32 %v1751, %v1757
      %v1809 = vmul.f32 %v1752, %v1757
      %v1810 = vadd.f32 %v1649, %v1758
      %v1811 = vadd.f32 %v1650, %v1759
      %v1812 = vadd.f32 %v1651, %v1760
      %v1813 = vadd.f32 %v1652, %v1761
      %v1814 = vadd.f32 %v1653, %v1762
      %v1815 = vadd.f32 %v1654, %v1763
      %v1816 = vadd.f32 %v1655, %v1764
      %v1817 = vadd.f32 %v1656, %v1765
      %v1818 = vadd.f32 %v1657, %v1766
      %v1819 = vadd.f32 %v1658, %v1767
      %v1820 = vadd.f32 %v1659, %v1768
      %v1821 = vadd.f32 %v1660, %v1769
      %v1822 = vadd.f32 %v1661, %v1770
      %v1823 = vadd.f32 %v1662, %v1771
      %v1824 = vadd.f32 %v1663, %v1772
      %v1825 = vadd.f32 %v1664, %v1773
      %v1826 = vadd.f32 %v1665, %v1774
      %v1827 = vadd.f32 %v1666, %v1775
      %v1828 = vadd.f32 %v1667, %v1776
      %v1829 = vadd.f32 %v1668, %v1777
      %v1830 = vadd.f32 %v1669, %v1778
      %v1831 = vadd.f32 %v1670, %v1779
      %v1832 = vadd.f32 %v1671, %v1780
      %v1833 = vadd.f32 %v1672, %v1781
      %v1834 = vadd.f32 %v1673, %v1782
      %v1835 = vadd.f32 %v1674, %v1783
      %v1836 = vadd.f32 %v1675, %v1784
      %v1837 = vadd.f32 %v1676, %v1785
      %v1838 = vadd.f32 %v1677, %v1786
      %v1839 = vadd.f32 %v1678, %v1787
      %v1840 = vadd.f32 %v1679, %v1788
      %v1841 = vadd.f32 %v1680, %v1789
      %v1842 = vadd.f32 %v1681, %v1790
      %v1843 = vadd.f32 %v1682, %v1791
      %v1844 = vadd.f32 %v1683, %v1792
      %v1845 = vadd.f32 %v1684, %v1793
      %v1846 = vadd.f32 %v1685, %v1794
      %v1847 = vadd.f32 %v1686, %v1795
      %v1848 = vadd.f32 %v1687, %v1796
      %v1849 = vadd.f32 %v1688, %v1797
      %v1850 = vadd.f32 %v1689, %v1798
      %v1851 = vadd.f32 %v1690, %v1799
      %v1852 = vadd.f32 %v1691, %v1800
      %v1853 = vadd.f32 %v1692, %v1801
      %v1854 = vadd.f32 %v1693, %v1802
      %v1855 = vadd.f32 %v1694, %v1803
      %v1856 = vadd.f32 %v1695, %v1804
      %v1857 = vadd.f32 %v1696, %v1805
      %v1858 = vadd.f32 %v1697, %v1806
      %v1859 = vadd.f32 %v1698, %v1807
      %v1860 = vadd.f32 %v1699, %v1808
      %v1861 = vadd.f32 %v1700, %v1809
      %v1862 = vld [vmem:[%s1377 + $0x9] sm:$0xff]
      %v1863 = vld [vmem:[%s1377 + $0x11] sm:$0xff]
      %v1864 = vld [vmem:[%s1377 + $0x29] sm:$0xff]
      %v1865 = vld [vmem:[%s1377 + $0x31] sm:$0xff]
      %v1866 = vld [vmem:[%s1377 + $0x49] sm:$0xff]
      %v1867 = vld [vmem:[%s1377 + $0x51] sm:$0xff]
      %v1868 = vld [vmem:[%s1377 + $0x69] sm:$0xff]
      %v1869 = vld [vmem:[%s1377 + $0x71] sm:$0xff]
      %v1870 = vld [vmem:[%s1377 + $0x89] sm:$0xff]
      %v1871 = vld [vmem:[%s1377 + $0x91] sm:$0xff]
      %v1872 = vld [vmem:[%s1377 + $0xa9] sm:$0xff]
      %v1873 = vld [vmem:[%s1377 + $0xb1] sm:$0xff]
      %v1874 = vld [vmem:[%s1377 + $0xc9] sm:$0xff]
      %v1875 = vld [vmem:[%s1377 + $0xd1] sm:$0xff]
      %v1876 = vld [vmem:[%s1377 + $0xe9] sm:$0xff]
      %v1877 = vld [vmem:[%s1377 + $0xf1] sm:$0xff]
      %v1878 = vld [vmem:[%s1377 + $0x109] sm:$0xff]
      %v1879 = vld [vmem:[%s1377 + $0x111] sm:$0xff]
      %v1880 = vld [vmem:[%s1377 + $0x129] sm:$0xff]
      %v1881 = vld [vmem:[%s1377 + $0x131] sm:$0xff]
      %v1882 = vld [vmem:[%s1377 + $0x149] sm:$0xff]
      %v1883 = vld [vmem:[%s1377 + $0x151] sm:$0xff]
      %v1884 = vld [vmem:[%s1377 + $0x169] sm:$0xff]
      %v1885 = vld [vmem:[%s1377 + $0x171] sm:$0xff]
      %v1886 = vld [vmem:[%s1377 + $0x189] sm:$0xff]
      %v1887 = vld [vmem:[%s1377 + $0x191] sm:$0xff]
      %v1888 = vld [vmem:[%s1377 + $0x1a9] sm:$0xff]
      %v1889 = vld [vmem:[%s1377 + $0x1b1] sm:$0xff]
      %v1890 = vld [vmem:[%s1377 + $0x1c9] sm:$0xff]
      %v1891 = vld [vmem:[%s1377 + $0x1d1] sm:$0xff]
      %v1892 = vld [vmem:[%s1377 + $0x1e9] sm:$0xff]
      %v1893 = vld [vmem:[%s1377 + $0x1f1] sm:$0xff]
      %v1894 = vld [vmem:[%s1377 + $0x209] sm:$0xff]
      %v1895 = vld [vmem:[%s1377 + $0x211] sm:$0xff]
      %v1896 = vld [vmem:[%s1377 + $0x229] sm:$0xff]
      %v1897 = vld [vmem:[%s1377 + $0x231] sm:$0xff]
      %v1898 = vld [vmem:[%s1377 + $0x249] sm:$0xff]
      %v1899 = vld [vmem:[%s1377 + $0x251] sm:$0xff]
      %v1900 = vld [vmem:[%s1377 + $0x269] sm:$0xff]
      %v1901 = vld [vmem:[%s1377 + $0x271] sm:$0xff]
      %v1902 = vld [vmem:[%s1377 + $0x289] sm:$0xff]
      %v1903 = vld [vmem:[%s1377 + $0x291] sm:$0xff]
      %v1904 = vld [vmem:[%s1377 + $0x2a9] sm:$0xff]
      %v1905 = vld [vmem:[%s1377 + $0x2b1] sm:$0xff]
      %v1906 = vld [vmem:[%s1377 + $0x2c9] sm:$0xff]
      %v1907 = vld [vmem:[%s1377 + $0x2d1] sm:$0xff]
      %v1908 = vld [vmem:[%s1377 + $0x2e9] sm:$0xff]
      %v1909 = vld [vmem:[%s1377 + $0x2f1] sm:$0xff]
      %v1910 = vld [vmem:[%s1377 + $0x309] sm:$0xff]
      %v1911 = vld [vmem:[%s1377 + $0x311] sm:$0xff]
      %v1912 = vld [vmem:[%s1377 + $0x329] sm:$0xff]
      %v1913 = vld [vmem:[%s1377 + $0x331] sm:$0xff]
      %v1914 = vld [vmem:[%s1430 + $0x3] sm:$0x1]
      %v1915 = vlaneseq
      %v1916 = vshrl.u32 %v1915, 7
      %v1917 = vsub.s32 0, %v1916
      %v1918 = vrot.slane %v1914, %v1917
      %v1919 = vmul.f32 %v1862, %v1918
      %v1920 = vmul.f32 %v1863, %v1918
      %v1921 = vmul.f32 %v1864, %v1918
      %v1922 = vmul.f32 %v1865, %v1918
      %v1923 = vmul.f32 %v1866, %v1918
      %v1924 = vmul.f32 %v1867, %v1918
      %v1925 = vmul.f32 %v1868, %v1918
      %v1926 = vmul.f32 %v1869, %v1918
      %v1927 = vmul.f32 %v1870, %v1918
      %v1928 = vmul.f32 %v1871, %v1918
      %v1929 = vmul.f32 %v1872, %v1918
      %v1930 = vmul.f32 %v1873, %v1918
      %v1931 = vmul.f32 %v1874, %v1918
      %v1932 = vmul.f32 %v1875, %v1918
      %v1933 = vmul.f32 %v1876, %v1918
      %v1934 = vmul.f32 %v1877, %v1918
      %v1935 = vmul.f32 %v1878, %v1918
      %v1936 = vmul.f32 %v1879, %v1918
      %v1937 = vmul.f32 %v1880, %v1918
      %v1938 = vmul.f32 %v1881, %v1918
      %v1939 = vmul.f32 %v1882, %v1918
      %v1940 = vmul.f32 %v1883, %v1918
      %v1941 = vmul.f32 %v1884, %v1918
      %v1942 = vmul.f32 %v1885, %v1918
      %v1943 = vmul.f32 %v1886, %v1918
      %v1944 = vmul.f32 %v1887, %v1918
      %v1945 = vmul.f32 %v1888, %v1918
      %v1946 = vmul.f32 %v1889, %v1918
      %v1947 = vmul.f32 %v1890, %v1918
      %v1948 = vmul.f32 %v1891, %v1918
      %v1949 = vmul.f32 %v1892, %v1918
      %v1950 = vmul.f32 %v1893, %v1918
      %v1951 = vmul.f32 %v1894, %v1918
      %v1952 = vmul.f32 %v1895, %v1918
      %v1953 = vmul.f32 %v1896, %v1918
      %v1954 = vmul.f32 %v1897, %v1918
      %v1955 = vmul.f32 %v1898, %v1918
      %v1956 = vmul.f32 %v1899, %v1918
      %v1957 = vmul.f32 %v1900, %v1918
      %v1958 = vmul.f32 %v1901, %v1918
      %v1959 = vmul.f32 %v1902, %v1918
      %v1960 = vmul.f32 %v1903, %v1918
      %v1961 = vmul.f32 %v1904, %v1918
      %v1962 = vmul.f32 %v1905, %v1918
      %v1963 = vmul.f32 %v1906, %v1918
      %v1964 = vmul.f32 %v1907, %v1918
      %v1965 = vmul.f32 %v1908, %v1918
      %v1966 = vmul.f32 %v1909, %v1918
      %v1967 = vmul.f32 %v1910, %v1918
      %v1968 = vmul.f32 %v1911, %v1918
      %v1969 = vmul.f32 %v1912, %v1918
      %v1970 = vmul.f32 %v1913, %v1918
      %v1971 = vadd.f32 %v1810, %v1919
      %v1972 = vadd.f32 %v1811, %v1920
      %v1973 = vadd.f32 %v1812, %v1921
      %v1974 = vadd.f32 %v1813, %v1922
      %v1975 = vadd.f32 %v1814, %v1923
      %v1976 = vadd.f32 %v1815, %v1924
      %v1977 = vadd.f32 %v1816, %v1925
      %v1978 = vadd.f32 %v1817, %v1926
      %v1979 = vadd.f32 %v1818, %v1927
      %v1980 = vadd.f32 %v1819, %v1928
      %v1981 = vadd.f32 %v1820, %v1929
      %v1982 = vadd.f32 %v1821, %v1930
      %v1983 = vadd.f32 %v1822, %v1931
      %v1984 = vadd.f32 %v1823, %v1932
      %v1985 = vadd.f32 %v1824, %v1933
      %v1986 = vadd.f32 %v1825, %v1934
      %v1987 = vadd.f32 %v1826, %v1935
      %v1988 = vadd.f32 %v1827, %v1936
      %v1989 = vadd.f32 %v1828, %v1937
      %v1990 = vadd.f32 %v1829, %v1938
      %v1991 = vadd.f32 %v1830, %v1939
      %v1992 = vadd.f32 %v1831, %v1940
      %v1993 = vadd.f32 %v1832, %v1941
      %v1994 = vadd.f32 %v1833, %v1942
      %v1995 = vadd.f32 %v1834, %v1943
      %v1996 = vadd.f32 %v1835, %v1944
      %v1997 = vadd.f32 %v1836, %v1945
      %v1998 = vadd.f32 %v1837, %v1946
      %v1999 = vadd.f32 %v1838, %v1947
      %v2000 = vadd.f32 %v1839, %v1948
      %v2001 = vadd.f32 %v1840, %v1949
      %v2002 = vadd.f32 %v1841, %v1950
      %v2003 = vadd.f32 %v1842, %v1951
      %v2004 = vadd.f32 %v1843, %v1952
      %v2005 = vadd.f32 %v1844, %v1953
      %v2006 = vadd.f32 %v1845, %v1954
      %v2007 = vadd.f32 %v1846, %v1955
      %v2008 = vadd.f32 %v1847, %v1956
      %v2009 = vadd.f32 %v1848, %v1957
      %v2010 = vadd.f32 %v1849, %v1958
      %v2011 = vadd.f32 %v1850, %v1959
      %v2012 = vadd.f32 %v1851, %v1960
      %v2013 = vadd.f32 %v1852, %v1961
      %v2014 = vadd.f32 %v1853, %v1962
      %v2015 = vadd.f32 %v1854, %v1963
      %v2016 = vadd.f32 %v1855, %v1964
      %v2017 = vadd.f32 %v1856, %v1965
      %v2018 = vadd.f32 %v1857, %v1966
      %v2019 = vadd.f32 %v1858, %v1967
      %v2020 = vadd.f32 %v1859, %v1968
      %v2021 = vadd.f32 %v1860, %v1969
      %v2022 = vadd.f32 %v1861, %v1970
      %v2023 = vld [vmem:[%s1377 + $0xa] sm:$0xff]
      %v2024 = vld [vmem:[%s1377 + $0x12] sm:$0xff]
      %v2025 = vld [vmem:[%s1377 + $0x2a] sm:$0xff]
      %v2026 = vld [vmem:[%s1377 + $0x32] sm:$0xff]
      %v2027 = vld [vmem:[%s1377 + $0x4a] sm:$0xff]
      %v2028 = vld [vmem:[%s1377 + $0x52] sm:$0xff]
      %v2029 = vld [vmem:[%s1377 + $0x6a] sm:$0xff]
      %v2030 = vld [vmem:[%s1377 + $0x72] sm:$0xff]
      %v2031 = vld [vmem:[%s1377 + $0x8a] sm:$0xff]
      %v2032 = vld [vmem:[%s1377 + $0x92] sm:$0xff]
      %v2033 = vld [vmem:[%s1377 + $0xaa] sm:$0xff]
      %v2034 = vld [vmem:[%s1377 + $0xb2] sm:$0xff]
      %v2035 = vld [vmem:[%s1377 + $0xca] sm:$0xff]
      %v2036 = vld [vmem:[%s1377 + $0xd2] sm:$0xff]
      %v2037 = vld [vmem:[%s1377 + $0xea] sm:$0xff]
      %v2038 = vld [vmem:[%s1377 + $0xf2] sm:$0xff]
      %v2039 = vld [vmem:[%s1377 + $0x10a] sm:$0xff]
      %v2040 = vld [vmem:[%s1377 + $0x112] sm:$0xff]
      %v2041 = vld [vmem:[%s1377 + $0x12a] sm:$0xff]
      %v2042 = vld [vmem:[%s1377 + $0x132] sm:$0xff]
      %v2043 = vld [vmem:[%s1377 + $0x14a] sm:$0xff]
      %v2044 = vld [vmem:[%s1377 + $0x152] sm:$0xff]
      %v2045 = vld [vmem:[%s1377 + $0x16a] sm:$0xff]
      %v2046 = vld [vmem:[%s1377 + $0x172] sm:$0xff]
      %v2047 = vld [vmem:[%s1377 + $0x18a] sm:$0xff]
      %v2048 = vld [vmem:[%s1377 + $0x192] sm:$0xff]
      %v2049 = vld [vmem:[%s1377 + $0x1aa] sm:$0xff]
      %v2050 = vld [vmem:[%s1377 + $0x1b2] sm:$0xff]
      %v2051 = vld [vmem:[%s1377 + $0x1ca] sm:$0xff]
      %v2052 = vld [vmem:[%s1377 + $0x1d2] sm:$0xff]
      %v2053 = vld [vmem:[%s1377 + $0x1ea] sm:$0xff]
      %v2054 = vld [vmem:[%s1377 + $0x1f2] sm:$0xff]
      %v2055 = vld [vmem:[%s1377 + $0x20a] sm:$0xff]
      %v2056 = vld [vmem:[%s1377 + $0x212] sm:$0xff]
      %v2057 = vld [vmem:[%s1377 + $0x22a] sm:$0xff]
      %v2058 = vld [vmem:[%s1377 + $0x232] sm:$0xff]
      %v2059 = vld [vmem:[%s1377 + $0x24a] sm:$0xff]
      %v2060 = vld [vmem:[%s1377 + $0x252] sm:$0xff]
      %v2061 = vld [vmem:[%s1377 + $0x26a] sm:$0xff]
      %v2062 = vld [vmem:[%s1377 + $0x272] sm:$0xff]
      %v2063 = vld [vmem:[%s1377 + $0x28a] sm:$0xff]
      %v2064 = vld [vmem:[%s1377 + $0x292] sm:$0xff]
      %v2065 = vld [vmem:[%s1377 + $0x2aa] sm:$0xff]
      %v2066 = vld [vmem:[%s1377 + $0x2b2] sm:$0xff]
      %v2067 = vld [vmem:[%s1377 + $0x2ca] sm:$0xff]
      %v2068 = vld [vmem:[%s1377 + $0x2d2] sm:$0xff]
      %v2069 = vld [vmem:[%s1377 + $0x2ea] sm:$0xff]
      %v2070 = vld [vmem:[%s1377 + $0x2f2] sm:$0xff]
      %v2071 = vld [vmem:[%s1377 + $0x30a] sm:$0xff]
      %v2072 = vld [vmem:[%s1377 + $0x312] sm:$0xff]
      %v2073 = vld [vmem:[%s1377 + $0x32a] sm:$0xff]
      %v2074 = vld [vmem:[%s1377 + $0x332] sm:$0xff]
      %v2075 = vld [vmem:[%s1430 + $0x4] sm:$0x1]
      %v2076 = vlaneseq
      %v2077 = vshrl.u32 %v2076, 7
      %v2078 = vsub.s32 0, %v2077
      %v2079 = vrot.slane %v2075, %v2078
      %v2080 = vmul.f32 %v2023, %v2079
      %v2081 = vmul.f32 %v2024, %v2079
      %v2082 = vmul.f32 %v2025, %v2079
      %v2083 = vmul.f32 %v2026, %v2079
      %v2084 = vmul.f32 %v2027, %v2079
      %v2085 = vmul.f32 %v2028, %v2079
      %v2086 = vmul.f32 %v2029, %v2079
      %v2087 = vmul.f32 %v2030, %v2079
      %v2088 = vmul.f32 %v2031, %v2079
      %v2089 = vmul.f32 %v2032, %v2079
      %v2090 = vmul.f32 %v2033, %v2079
      %v2091 = vmul.f32 %v2034, %v2079
      %v2092 = vmul.f32 %v2035, %v2079
      %v2093 = vmul.f32 %v2036, %v2079
      %v2094 = vmul.f32 %v2037, %v2079
      %v2095 = vmul.f32 %v2038, %v2079
      %v2096 = vmul.f32 %v2039, %v2079
      %v2097 = vmul.f32 %v2040, %v2079
      %v2098 = vmul.f32 %v2041, %v2079
      %v2099 = vmul.f32 %v2042, %v2079
      %v2100 = vmul.f32 %v2043, %v2079
      %v2101 = vmul.f32 %v2044, %v2079
      %v2102 = vmul.f32 %v2045, %v2079
      %v2103 = vmul.f32 %v2046, %v2079
      %v2104 = vmul.f32 %v2047, %v2079
      %v2105 = vmul.f32 %v2048, %v2079
      %v2106 = vmul.f32 %v2049, %v2079
      %v2107 = vmul.f32 %v2050, %v2079
      %v2108 = vmul.f32 %v2051, %v2079
      %v2109 = vmul.f32 %v2052, %v2079
      %v2110 = vmul.f32 %v2053, %v2079
      %v2111 = vmul.f32 %v2054, %v2079
      %v2112 = vmul.f32 %v2055, %v2079
      %v2113 = vmul.f32 %v2056, %v2079
      %v2114 = vmul.f32 %v2057, %v2079
      %v2115 = vmul.f32 %v2058, %v2079
      %v2116 = vmul.f32 %v2059, %v2079
      %v2117 = vmul.f32 %v2060, %v2079
      %v2118 = vmul.f32 %v2061, %v2079
      %v2119 = vmul.f32 %v2062, %v2079
      %v2120 = vmul.f32 %v2063, %v2079
      %v2121 = vmul.f32 %v2064, %v2079
      %v2122 = vmul.f32 %v2065, %v2079
      %v2123 = vmul.f32 %v2066, %v2079
      %v2124 = vmul.f32 %v2067, %v2079
      %v2125 = vmul.f32 %v2068, %v2079
      %v2126 = vmul.f32 %v2069, %v2079
      %v2127 = vmul.f32 %v2070, %v2079
      %v2128 = vmul.f32 %v2071, %v2079
      %v2129 = vmul.f32 %v2072, %v2079
      %v2130 = vmul.f32 %v2073, %v2079
      %v2131 = vmul.f32 %v2074, %v2079
      %v2132 = vadd.f32 %v1971, %v2080
      %v2133 = vadd.f32 %v1972, %v2081
      %v2134 = vadd.f32 %v1973, %v2082
      %v2135 = vadd.f32 %v1974, %v2083
      %v2136 = vadd.f32 %v1975, %v2084
      %v2137 = vadd.f32 %v1976, %v2085
      %v2138 = vadd.f32 %v1977, %v2086
      %v2139 = vadd.f32 %v1978, %v2087
      %v2140 = vadd.f32 %v1979, %v2088
      %v2141 = vadd.f32 %v1980, %v2089
      %v2142 = vadd.f32 %v1981, %v2090
      %v2143 = vadd.f32 %v1982, %v2091
      %v2144 = vadd.f32 %v1983, %v2092
      %v2145 = vadd.f32 %v1984, %v2093
      %v2146 = vadd.f32 %v1985, %v2094
      %v2147 = vadd.f32 %v1986, %v2095
      %v2148 = vadd.f32 %v1987, %v2096
      %v2149 = vadd.f32 %v1988, %v2097
      %v2150 = vadd.f32 %v1989, %v2098
      %v2151 = vadd.f32 %v1990, %v2099
      %v2152 = vadd.f32 %v1991, %v2100
      %v2153 = vadd.f32 %v1992, %v2101
      %v2154 = vadd.f32 %v1993, %v2102
      %v2155 = vadd.f32 %v1994, %v2103
      %v2156 = vadd.f32 %v1995, %v2104
      %v2157 = vadd.f32 %v1996, %v2105
      %v2158 = vadd.f32 %v1997, %v2106
      %v2159 = vadd.f32 %v1998, %v2107
      %v2160 = vadd.f32 %v1999, %v2108
      %v2161 = vadd.f32 %v2000, %v2109
      %v2162 = vadd.f32 %v2001, %v2110
      %v2163 = vadd.f32 %v2002, %v2111
      %v2164 = vadd.f32 %v2003, %v2112
      %v2165 = vadd.f32 %v2004, %v2113
      %v2166 = vadd.f32 %v2005, %v2114
      %v2167 = vadd.f32 %v2006, %v2115
      %v2168 = vadd.f32 %v2007, %v2116
      %v2169 = vadd.f32 %v2008, %v2117
      %v2170 = vadd.f32 %v2009, %v2118
      %v2171 = vadd.f32 %v2010, %v2119
      %v2172 = vadd.f32 %v2011, %v2120
      %v2173 = vadd.f32 %v2012, %v2121
      %v2174 = vadd.f32 %v2013, %v2122
      %v2175 = vadd.f32 %v2014, %v2123
      %v2176 = vadd.f32 %v2015, %v2124
      %v2177 = vadd.f32 %v2016, %v2125
      %v2178 = vadd.f32 %v2017, %v2126
      %v2179 = vadd.f32 %v2018, %v2127
      %v2180 = vadd.f32 %v2019, %v2128
      %v2181 = vadd.f32 %v2020, %v2129
      %v2182 = vadd.f32 %v2021, %v2130
      %v2183 = vadd.f32 %v2022, %v2131
      %s2184 = scalar_lea.vmem [#allocation2], 64
      %v2185 = vld [vmem:[%s2184 + $0x6] sm:$0xff]
      %v2186 = vld [vmem:[%s2184 + $0xe] sm:$0xff]
      %v2187 = vld [vmem:[%s2184 + $0x26] sm:$0xff]
      %v2188 = vld [vmem:[%s2184 + $0x2e] sm:$0xff]
      %v2189 = vld [vmem:[%s2184 + $0x46] sm:$0xff]
      %v2190 = vld [vmem:[%s2184 + $0x4e] sm:$0xff]
      %v2191 = vld [vmem:[%s2184 + $0x66] sm:$0xff]
      %v2192 = vld [vmem:[%s2184 + $0x6e] sm:$0xff]
      %v2193 = vld [vmem:[%s2184 + $0x86] sm:$0xff]
      %v2194 = vld [vmem:[%s2184 + $0x8e] sm:$0xff]
      %v2195 = vld [vmem:[%s2184 + $0xa6] sm:$0xff]
      %v2196 = vld [vmem:[%s2184 + $0xae] sm:$0xff]
      %v2197 = vld [vmem:[%s2184 + $0xc6] sm:$0xff]
      %v2198 = vld [vmem:[%s2184 + $0xce] sm:$0xff]
      %v2199 = vld [vmem:[%s2184 + $0xe6] sm:$0xff]
      %v2200 = vld [vmem:[%s2184 + $0xee] sm:$0xff]
      %v2201 = vld [vmem:[%s2184 + $0x106] sm:$0xff]
      %v2202 = vld [vmem:[%s2184 + $0x10e] sm:$0xff]
      %v2203 = vld [vmem:[%s2184 + $0x126] sm:$0xff]
      %v2204 = vld [vmem:[%s2184 + $0x12e] sm:$0xff]
      %v2205 = vld [vmem:[%s2184 + $0x146] sm:$0xff]
      %v2206 = vld [vmem:[%s2184 + $0x14e] sm:$0xff]
      %v2207 = vld [vmem:[%s2184 + $0x166] sm:$0xff]
      %v2208 = vld [vmem:[%s2184 + $0x16e] sm:$0xff]
      %v2209 = vld [vmem:[%s2184 + $0x186] sm:$0xff]
      %v2210 = vld [vmem:[%s2184 + $0x18e] sm:$0xff]
      %v2211 = vld [vmem:[%s2184 + $0x1a6] sm:$0xff]
      %v2212 = vld [vmem:[%s2184 + $0x1ae] sm:$0xff]
      %v2213 = vld [vmem:[%s2184 + $0x1c6] sm:$0xff]
      %v2214 = vld [vmem:[%s2184 + $0x1ce] sm:$0xff]
      %v2215 = vld [vmem:[%s2184 + $0x1e6] sm:$0xff]
      %v2216 = vld [vmem:[%s2184 + $0x1ee] sm:$0xff]
      %v2217 = vld [vmem:[%s2184 + $0x206] sm:$0xff]
      %v2218 = vld [vmem:[%s2184 + $0x20e] sm:$0xff]
      %v2219 = vld [vmem:[%s2184 + $0x226] sm:$0xff]
      %v2220 = vld [vmem:[%s2184 + $0x22e] sm:$0xff]
      %v2221 = vld [vmem:[%s2184 + $0x246] sm:$0xff]
      %v2222 = vld [vmem:[%s2184 + $0x24e] sm:$0xff]
      %v2223 = vld [vmem:[%s2184 + $0x266] sm:$0xff]
      %v2224 = vld [vmem:[%s2184 + $0x26e] sm:$0xff]
      %v2225 = vld [vmem:[%s2184 + $0x286] sm:$0xff]
      %v2226 = vld [vmem:[%s2184 + $0x28e] sm:$0xff]
      %v2227 = vld [vmem:[%s2184 + $0x2a6] sm:$0xff]
      %v2228 = vld [vmem:[%s2184 + $0x2ae] sm:$0xff]
      %v2229 = vld [vmem:[%s2184 + $0x2c6] sm:$0xff]
      %v2230 = vld [vmem:[%s2184 + $0x2ce] sm:$0xff]
      %v2231 = vld [vmem:[%s2184 + $0x2e6] sm:$0xff]
      %v2232 = vld [vmem:[%s2184 + $0x2ee] sm:$0xff]
      %v2233 = vld [vmem:[%s2184 + $0x306] sm:$0xff]
      %v2234 = vld [vmem:[%s2184 + $0x30e] sm:$0xff]
      %v2235 = vld [vmem:[%s2184 + $0x326] sm:$0xff]
      %v2236 = vld [vmem:[%s2184 + $0x32e] sm:$0xff]
      %s2237 = scalar_lea.vmem %s1, 16
      %v2238 = vld [vmem:[%s2237] sm:$0x1]
      %v2239 = vlaneseq
      %v2240 = vshrl.u32 %v2239, 7
      %v2241 = vsub.s32 0, %v2240
      %v2242 = vrot.slane %v2238, %v2241
      %v2243 = vmul.f32 %v2185, %v2242
      %v2244 = vmul.f32 %v2186, %v2242
      %v2245 = vmul.f32 %v2187, %v2242
      %v2246 = vmul.f32 %v2188, %v2242
      %v2247 = vmul.f32 %v2189, %v2242
      %v2248 = vmul.f32 %v2190, %v2242
      %v2249 = vmul.f32 %v2191, %v2242
      %v2250 = vmul.f32 %v2192, %v2242
      %v2251 = vmul.f32 %v2193, %v2242
      %v2252 = vmul.f32 %v2194, %v2242
      %v2253 = vmul.f32 %v2195, %v2242
      %v2254 = vmul.f32 %v2196, %v2242
      %v2255 = vmul.f32 %v2197, %v2242
      %v2256 = vmul.f32 %v2198, %v2242
      %v2257 = vmul.f32 %v2199, %v2242
      %v2258 = vmul.f32 %v2200, %v2242
      %v2259 = vmul.f32 %v2201, %v2242
      %v2260 = vmul.f32 %v2202, %v2242
      %v2261 = vmul.f32 %v2203, %v2242
      %v2262 = vmul.f32 %v2204, %v2242
      %v2263 = vmul.f32 %v2205, %v2242
      %v2264 = vmul.f32 %v2206, %v2242
      %v2265 = vmul.f32 %v2207, %v2242
      %v2266 = vmul.f32 %v2208, %v2242
      %v2267 = vmul.f32 %v2209, %v2242
      %v2268 = vmul.f32 %v2210, %v2242
      %v2269 = vmul.f32 %v2211, %v2242
      %v2270 = vmul.f32 %v2212, %v2242
      %v2271 = vmul.f32 %v2213, %v2242
      %v2272 = vmul.f32 %v2214, %v2242
      %v2273 = vmul.f32 %v2215, %v2242
      %v2274 = vmul.f32 %v2216, %v2242
      %v2275 = vmul.f32 %v2217, %v2242
      %v2276 = vmul.f32 %v2218, %v2242
      %v2277 = vmul.f32 %v2219, %v2242
      %v2278 = vmul.f32 %v2220, %v2242
      %v2279 = vmul.f32 %v2221, %v2242
      %v2280 = vmul.f32 %v2222, %v2242
      %v2281 = vmul.f32 %v2223, %v2242
      %v2282 = vmul.f32 %v2224, %v2242
      %v2283 = vmul.f32 %v2225, %v2242
      %v2284 = vmul.f32 %v2226, %v2242
      %v2285 = vmul.f32 %v2227, %v2242
      %v2286 = vmul.f32 %v2228, %v2242
      %v2287 = vmul.f32 %v2229, %v2242
      %v2288 = vmul.f32 %v2230, %v2242
      %v2289 = vmul.f32 %v2231, %v2242
      %v2290 = vmul.f32 %v2232, %v2242
      %v2291 = vmul.f32 %v2233, %v2242
      %v2292 = vmul.f32 %v2234, %v2242
      %v2293 = vmul.f32 %v2235, %v2242
      %v2294 = vmul.f32 %v2236, %v2242
      %v2295 = vadd.f32 %v2132, %v2243
      %v2296 = vadd.f32 %v2133, %v2244
      %v2297 = vadd.f32 %v2134, %v2245
      %v2298 = vadd.f32 %v2135, %v2246
      %v2299 = vadd.f32 %v2136, %v2247
      %v2300 = vadd.f32 %v2137, %v2248
      %v2301 = vadd.f32 %v2138, %v2249
      %v2302 = vadd.f32 %v2139, %v2250
      %v2303 = vadd.f32 %v2140, %v2251
      %v2304 = vadd.f32 %v2141, %v2252
      %v2305 = vadd.f32 %v2142, %v2253
      %v2306 = vadd.f32 %v2143, %v2254
      %v2307 = vadd.f32 %v2144, %v2255
      %v2308 = vadd.f32 %v2145, %v2256
      %v2309 = vadd.f32 %v2146, %v2257
      %v2310 = vadd.f32 %v2147, %v2258
      %v2311 = vadd.f32 %v2148, %v2259
      %v2312 = vadd.f32 %v2149, %v2260
      %v2313 = vadd.f32 %v2150, %v2261
      %v2314 = vadd.f32 %v2151, %v2262
      %v2315 = vadd.f32 %v2152, %v2263
      %v2316 = vadd.f32 %v2153, %v2264
      %v2317 = vadd.f32 %v2154, %v2265
      %v2318 = vadd.f32 %v2155, %v2266
      %v2319 = vadd.f32 %v2156, %v2267
      %v2320 = vadd.f32 %v2157, %v2268
      %v2321 = vadd.f32 %v2158, %v2269
      %v2322 = vadd.f32 %v2159, %v2270
      %v2323 = vadd.f32 %v2160, %v2271
      %v2324 = vadd.f32 %v2161, %v2272
      %v2325 = vadd.f32 %v2162, %v2273
      %v2326 = vadd.f32 %v2163, %v2274
      %v2327 = vadd.f32 %v2164, %v2275
      %v2328 = vadd.f32 %v2165, %v2276
      %v2329 = vadd.f32 %v2166, %v2277
      %v2330 = vadd.f32 %v2167, %v2278
      %v2331 = vadd.f32 %v2168, %v2279
      %v2332 = vadd.f32 %v2169, %v2280
      %v2333 = vadd.f32 %v2170, %v2281
      %v2334 = vadd.f32 %v2171, %v2282
      %v2335 = vadd.f32 %v2172, %v2283
      %v2336 = vadd.f32 %v2173, %v2284
      %v2337 = vadd.f32 %v2174, %v2285
      %v2338 = vadd.f32 %v2175, %v2286
      %v2339 = vadd.f32 %v2176, %v2287
      %v2340 = vadd.f32 %v2177, %v2288
      %v2341 = vadd.f32 %v2178, %v2289
      %v2342 = vadd.f32 %v2179, %v2290
      %v2343 = vadd.f32 %v2180, %v2291
      %v2344 = vadd.f32 %v2181, %v2292
      %v2345 = vadd.f32 %v2182, %v2293
      %v2346 = vadd.f32 %v2183, %v2294
      %v2347 = vld [vmem:[%s2184 + $0x7] sm:$0xff]
      %v2348 = vld [vmem:[%s2184 + $0xf] sm:$0xff]
      %v2349 = vld [vmem:[%s2184 + $0x27] sm:$0xff]
      %v2350 = vld [vmem:[%s2184 + $0x2f] sm:$0xff]
      %v2351 = vld [vmem:[%s2184 + $0x47] sm:$0xff]
      %v2352 = vld [vmem:[%s2184 + $0x4f] sm:$0xff]
      %v2353 = vld [vmem:[%s2184 + $0x67] sm:$0xff]
      %v2354 = vld [vmem:[%s2184 + $0x6f] sm:$0xff]
      %v2355 = vld [vmem:[%s2184 + $0x87] sm:$0xff]
      %v2356 = vld [vmem:[%s2184 + $0x8f] sm:$0xff]
      %v2357 = vld [vmem:[%s2184 + $0xa7] sm:$0xff]
      %v2358 = vld [vmem:[%s2184 + $0xaf] sm:$0xff]
      %v2359 = vld [vmem:[%s2184 + $0xc7] sm:$0xff]
      %v2360 = vld [vmem:[%s2184 + $0xcf] sm:$0xff]
      %v2361 = vld [vmem:[%s2184 + $0xe7] sm:$0xff]
      %v2362 = vld [vmem:[%s2184 + $0xef] sm:$0xff]
      %v2363 = vld [vmem:[%s2184 + $0x107] sm:$0xff]
      %v2364 = vld [vmem:[%s2184 + $0x10f] sm:$0xff]
      %v2365 = vld [vmem:[%s2184 + $0x127] sm:$0xff]
      %v2366 = vld [vmem:[%s2184 + $0x12f] sm:$0xff]
      %v2367 = vld [vmem:[%s2184 + $0x147] sm:$0xff]
      %v2368 = vld [vmem:[%s2184 + $0x14f] sm:$0xff]
      %v2369 = vld [vmem:[%s2184 + $0x167] sm:$0xff]
      %v2370 = vld [vmem:[%s2184 + $0x16f] sm:$0xff]
      %v2371 = vld [vmem:[%s2184 + $0x187] sm:$0xff]
      %v2372 = vld [vmem:[%s2184 + $0x18f] sm:$0xff]
      %v2373 = vld [vmem:[%s2184 + $0x1a7] sm:$0xff]
      %v2374 = vld [vmem:[%s2184 + $0x1af] sm:$0xff]
      %v2375 = vld [vmem:[%s2184 + $0x1c7] sm:$0xff]
      %v2376 = vld [vmem:[%s2184 + $0x1cf] sm:$0xff]
      %v2377 = vld [vmem:[%s2184 + $0x1e7] sm:$0xff]
      %v2378 = vld [vmem:[%s2184 + $0x1ef] sm:$0xff]
      %v2379 = vld [vmem:[%s2184 + $0x207] sm:$0xff]
      %v2380 = vld [vmem:[%s2184 + $0x20f] sm:$0xff]
      %v2381 = vld [vmem:[%s2184 + $0x227] sm:$0xff]
      %v2382 = vld [vmem:[%s2184 + $0x22f] sm:$0xff]
      %v2383 = vld [vmem:[%s2184 + $0x247] sm:$0xff]
      %v2384 = vld [vmem:[%s2184 + $0x24f] sm:$0xff]
      %v2385 = vld [vmem:[%s2184 + $0x267] sm:$0xff]
      %v2386 = vld [vmem:[%s2184 + $0x26f] sm:$0xff]
      %v2387 = vld [vmem:[%s2184 + $0x287] sm:$0xff]
      %v2388 = vld [vmem:[%s2184 + $0x28f] sm:$0xff]
      %v2389 = vld [vmem:[%s2184 + $0x2a7] sm:$0xff]
      %v2390 = vld [vmem:[%s2184 + $0x2af] sm:$0xff]
      %v2391 = vld [vmem:[%s2184 + $0x2c7] sm:$0xff]
      %v2392 = vld [vmem:[%s2184 + $0x2cf] sm:$0xff]
      %v2393 = vld [vmem:[%s2184 + $0x2e7] sm:$0xff]
      %v2394 = vld [vmem:[%s2184 + $0x2ef] sm:$0xff]
      %v2395 = vld [vmem:[%s2184 + $0x307] sm:$0xff]
      %v2396 = vld [vmem:[%s2184 + $0x30f] sm:$0xff]
      %v2397 = vld [vmem:[%s2184 + $0x327] sm:$0xff]
      %v2398 = vld [vmem:[%s2184 + $0x32f] sm:$0xff]
      %v2399 = vld [vmem:[%s2237 + $0x1] sm:$0x1]
      %v2400 = vlaneseq
      %v2401 = vshrl.u32 %v2400, 7
      %v2402 = vsub.s32 0, %v2401
      %v2403 = vrot.slane %v2399, %v2402
      %v2404 = vmul.f32 %v2347, %v2403
      %v2405 = vmul.f32 %v2348, %v2403
      %v2406 = vmul.f32 %v2349, %v2403
      %v2407 = vmul.f32 %v2350, %v2403
      %v2408 = vmul.f32 %v2351, %v2403
      %v2409 = vmul.f32 %v2352, %v2403
      %v2410 = vmul.f32 %v2353, %v2403
      %v2411 = vmul.f32 %v2354, %v2403
      %v2412 = vmul.f32 %v2355, %v2403
      %v2413 = vmul.f32 %v2356, %v2403
      %v2414 = vmul.f32 %v2357, %v2403
      %v2415 = vmul.f32 %v2358, %v2403
      %v2416 = vmul.f32 %v2359, %v2403
      %v2417 = vmul.f32 %v2360, %v2403
      %v2418 = vmul.f32 %v2361, %v2403
      %v2419 = vmul.f32 %v2362, %v2403
      %v2420 = vmul.f32 %v2363, %v2403
      %v2421 = vmul.f32 %v2364, %v2403
      %v2422 = vmul.f32 %v2365, %v2403
      %v2423 = vmul.f32 %v2366, %v2403
      %v2424 = vmul.f32 %v2367, %v2403
      %v2425 = vmul.f32 %v2368, %v2403
      %v2426 = vmul.f32 %v2369, %v2403
      %v2427 = vmul.f32 %v2370, %v2403
      %v2428 = vmul.f32 %v2371, %v2403
      %v2429 = vmul.f32 %v2372, %v2403
      %v2430 = vmul.f32 %v2373, %v2403
      %v2431 = vmul.f32 %v2374, %v2403
      %v2432 = vmul.f32 %v2375, %v2403
      %v2433 = vmul.f32 %v2376, %v2403
      %v2434 = vmul.f32 %v2377, %v2403
      %v2435 = vmul.f32 %v2378, %v2403
      %v2436 = vmul.f32 %v2379, %v2403
      %v2437 = vmul.f32 %v2380, %v2403
      %v2438 = vmul.f32 %v2381, %v2403
      %v2439 = vmul.f32 %v2382, %v2403
      %v2440 = vmul.f32 %v2383, %v2403
      %v2441 = vmul.f32 %v2384, %v2403
      %v2442 = vmul.f32 %v2385, %v2403
      %v2443 = vmul.f32 %v2386, %v2403
      %v2444 = vmul.f32 %v2387, %v2403
      %v2445 = vmul.f32 %v2388, %v2403
      %v2446 = vmul.f32 %v2389, %v2403
      %v2447 = vmul.f32 %v2390, %v2403
      %v2448 = vmul.f32 %v2391, %v2403
      %v2449 = vmul.f32 %v2392, %v2403
      %v2450 = vmul.f32 %v2393, %v2403
      %v2451 = vmul.f32 %v2394, %v2403
      %v2452 = vmul.f32 %v2395, %v2403
      %v2453 = vmul.f32 %v2396, %v2403
      %v2454 = vmul.f32 %v2397, %v2403
      %v2455 = vmul.f32 %v2398, %v2403
      %v2456 = vadd.f32 %v2295, %v2404
      %v2457 = vadd.f32 %v2296, %v2405
      %v2458 = vadd.f32 %v2297, %v2406
      %v2459 = vadd.f32 %v2298, %v2407
      %v2460 = vadd.f32 %v2299, %v2408
      %v2461 = vadd.f32 %v2300, %v2409
      %v2462 = vadd.f32 %v2301, %v2410
      %v2463 = vadd.f32 %v2302, %v2411
      %v2464 = vadd.f32 %v2303, %v2412
      %v2465 = vadd.f32 %v2304, %v2413
      %v2466 = vadd.f32 %v2305, %v2414
      %v2467 = vadd.f32 %v2306, %v2415
      %v2468 = vadd.f32 %v2307, %v2416
      %v2469 = vadd.f32 %v2308, %v2417
      %v2470 = vadd.f32 %v2309, %v2418
      %v2471 = vadd.f32 %v2310, %v2419
      %v2472 = vadd.f32 %v2311, %v2420
      %v2473 = vadd.f32 %v2312, %v2421
      %v2474 = vadd.f32 %v2313, %v2422
      %v2475 = vadd.f32 %v2314, %v2423
      %v2476 = vadd.f32 %v2315, %v2424
      %v2477 = vadd.f32 %v2316, %v2425
      %v2478 = vadd.f32 %v2317, %v2426
      %v2479 = vadd.f32 %v2318, %v2427
      %v2480 = vadd.f32 %v2319, %v2428
      %v2481 = vadd.f32 %v2320, %v2429
      %v2482 = vadd.f32 %v2321, %v2430
      %v2483 = vadd.f32 %v2322, %v2431
      %v2484 = vadd.f32 %v2323, %v2432
      %v2485 = vadd.f32 %v2324, %v2433
      %v2486 = vadd.f32 %v2325, %v2434
      %v2487 = vadd.f32 %v2326, %v2435
      %v2488 = vadd.f32 %v2327, %v2436
      %v2489 = vadd.f32 %v2328, %v2437
      %v2490 = vadd.f32 %v2329, %v2438
      %v2491 = vadd.f32 %v2330, %v2439
      %v2492 = vadd.f32 %v2331, %v2440
      %v2493 = vadd.f32 %v2332, %v2441
      %v2494 = vadd.f32 %v2333, %v2442
      %v2495 = vadd.f32 %v2334, %v2443
      %v2496 = vadd.f32 %v2335, %v2444
      %v2497 = vadd.f32 %v2336, %v2445
      %v2498 = vadd.f32 %v2337, %v2446
      %v2499 = vadd.f32 %v2338, %v2447
      %v2500 = vadd.f32 %v2339, %v2448
      %v2501 = vadd.f32 %v2340, %v2449
      %v2502 = vadd.f32 %v2341, %v2450
      %v2503 = vadd.f32 %v2342, %v2451
      %v2504 = vadd.f32 %v2343, %v2452
      %v2505 = vadd.f32 %v2344, %v2453
      %v2506 = vadd.f32 %v2345, %v2454
      %v2507 = vadd.f32 %v2346, %v2455
      %v2508 = vld [vmem:[%s2184 + $0x8] sm:$0xff]
      %v2509 = vld [vmem:[%s2184 + $0x10] sm:$0xff]
      %v2510 = vld [vmem:[%s2184 + $0x28] sm:$0xff]
      %v2511 = vld [vmem:[%s2184 + $0x30] sm:$0xff]
      %v2512 = vld [vmem:[%s2184 + $0x48] sm:$0xff]
      %v2513 = vld [vmem:[%s2184 + $0x50] sm:$0xff]
      %v2514 = vld [vmem:[%s2184 + $0x68] sm:$0xff]
      %v2515 = vld [vmem:[%s2184 + $0x70] sm:$0xff]
      %v2516 = vld [vmem:[%s2184 + $0x88] sm:$0xff]
      %v2517 = vld [vmem:[%s2184 + $0x90] sm:$0xff]
      %v2518 = vld [vmem:[%s2184 + $0xa8] sm:$0xff]
      %v2519 = vld [vmem:[%s2184 + $0xb0] sm:$0xff]
      %v2520 = vld [vmem:[%s2184 + $0xc8] sm:$0xff]
      %v2521 = vld [vmem:[%s2184 + $0xd0] sm:$0xff]
      %v2522 = vld [vmem:[%s2184 + $0xe8] sm:$0xff]
      %v2523 = vld [vmem:[%s2184 + $0xf0] sm:$0xff]
      %v2524 = vld [vmem:[%s2184 + $0x108] sm:$0xff]
      %v2525 = vld [vmem:[%s2184 + $0x110] sm:$0xff]
      %v2526 = vld [vmem:[%s2184 + $0x128] sm:$0xff]
      %v2527 = vld [vmem:[%s2184 + $0x130] sm:$0xff]
      %v2528 = vld [vmem:[%s2184 + $0x148] sm:$0xff]
      %v2529 = vld [vmem:[%s2184 + $0x150] sm:$0xff]
      %v2530 = vld [vmem:[%s2184 + $0x168] sm:$0xff]
      %v2531 = vld [vmem:[%s2184 + $0x170] sm:$0xff]
      %v2532 = vld [vmem:[%s2184 + $0x188] sm:$0xff]
      %v2533 = vld [vmem:[%s2184 + $0x190] sm:$0xff]
      %v2534 = vld [vmem:[%s2184 + $0x1a8] sm:$0xff]
      %v2535 = vld [vmem:[%s2184 + $0x1b0] sm:$0xff]
      %v2536 = vld [vmem:[%s2184 + $0x1c8] sm:$0xff]
      %v2537 = vld [vmem:[%s2184 + $0x1d0] sm:$0xff]
      %v2538 = vld [vmem:[%s2184 + $0x1e8] sm:$0xff]
      %v2539 = vld [vmem:[%s2184 + $0x1f0] sm:$0xff]
      %v2540 = vld [vmem:[%s2184 + $0x208] sm:$0xff]
      %v2541 = vld [vmem:[%s2184 + $0x210] sm:$0xff]
      %v2542 = vld [vmem:[%s2184 + $0x228] sm:$0xff]
      %v2543 = vld [vmem:[%s2184 + $0x230] sm:$0xff]
      %v2544 = vld [vmem:[%s2184 + $0x248] sm:$0xff]
      %v2545 = vld [vmem:[%s2184 + $0x250] sm:$0xff]
      %v2546 = vld [vmem:[%s2184 + $0x268] sm:$0xff]
      %v2547 = vld [vmem:[%s2184 + $0x270] sm:$0xff]
      %v2548 = vld [vmem:[%s2184 + $0x288] sm:$0xff]
      %v2549 = vld [vmem:[%s2184 + $0x290] sm:$0xff]
      %v2550 = vld [vmem:[%s2184 + $0x2a8] sm:$0xff]
      %v2551 = vld [vmem:[%s2184 + $0x2b0] sm:$0xff]
      %v2552 = vld [vmem:[%s2184 + $0x2c8] sm:$0xff]
      %v2553 = vld [vmem:[%s2184 + $0x2d0] sm:$0xff]
      %v2554 = vld [vmem:[%s2184 + $0x2e8] sm:$0xff]
      %v2555 = vld [vmem:[%s2184 + $0x2f0] sm:$0xff]
      %v2556 = vld [vmem:[%s2184 + $0x308] sm:$0xff]
      %v2557 = vld [vmem:[%s2184 + $0x310] sm:$0xff]
      %v2558 = vld [vmem:[%s2184 + $0x328] sm:$0xff]
      %v2559 = vld [vmem:[%s2184 + $0x330] sm:$0xff]
      %v2560 = vld [vmem:[%s2237 + $0x2] sm:$0x1]
      %v2561 = vlaneseq
      %v2562 = vshrl.u32 %v2561, 7
      %v2563 = vsub.s32 0, %v2562
      %v2564 = vrot.slane %v2560, %v2563
      %v2565 = vmul.f32 %v2508, %v2564
      %v2566 = vmul.f32 %v2509, %v2564
      %v2567 = vmul.f32 %v2510, %v2564
      %v2568 = vmul.f32 %v2511, %v2564
      %v2569 = vmul.f32 %v2512, %v2564
      %v2570 = vmul.f32 %v2513, %v2564
      %v2571 = vmul.f32 %v2514, %v2564
      %v2572 = vmul.f32 %v2515, %v2564
      %v2573 = vmul.f32 %v2516, %v2564
      %v2574 = vmul.f32 %v2517, %v2564
      %v2575 = vmul.f32 %v2518, %v2564
      %v2576 = vmul.f32 %v2519, %v2564
      %v2577 = vmul.f32 %v2520, %v2564
      %v2578 = vmul.f32 %v2521, %v2564
      %v2579 = vmul.f32 %v2522, %v2564
      %v2580 = vmul.f32 %v2523, %v2564
      %v2581 = vmul.f32 %v2524, %v2564
      %v2582 = vmul.f32 %v2525, %v2564
      %v2583 = vmul.f32 %v2526, %v2564
      %v2584 = vmul.f32 %v2527, %v2564
      %v2585 = vmul.f32 %v2528, %v2564
      %v2586 = vmul.f32 %v2529, %v2564
      %v2587 = vmul.f32 %v2530, %v2564
      %v2588 = vmul.f32 %v2531, %v2564
      %v2589 = vmul.f32 %v2532, %v2564
      %v2590 = vmul.f32 %v2533, %v2564
      %v2591 = vmul.f32 %v2534, %v2564
      %v2592 = vmul.f32 %v2535, %v2564
      %v2593 = vmul.f32 %v2536, %v2564
      %v2594 = vmul.f32 %v2537, %v2564
      %v2595 = vmul.f32 %v2538, %v2564
      %v2596 = vmul.f32 %v2539, %v2564
      %v2597 = vmul.f32 %v2540, %v2564
      %v2598 = vmul.f32 %v2541, %v2564
      %v2599 = vmul.f32 %v2542, %v2564
      %v2600 = vmul.f32 %v2543, %v2564
      %v2601 = vmul.f32 %v2544, %v2564
      %v2602 = vmul.f32 %v2545, %v2564
      %v2603 = vmul.f32 %v2546, %v2564
      %v2604 = vmul.f32 %v2547, %v2564
      %v2605 = vmul.f32 %v2548, %v2564
      %v2606 = vmul.f32 %v2549, %v2564
      %v2607 = vmul.f32 %v2550, %v2564
      %v2608 = vmul.f32 %v2551, %v2564
      %v2609 = vmul.f32 %v2552, %v2564
      %v2610 = vmul.f32 %v2553, %v2564
      %v2611 = vmul.f32 %v2554, %v2564
      %v2612 = vmul.f32 %v2555, %v2564
      %v2613 = vmul.f32 %v2556, %v2564
      %v2614 = vmul.f32 %v2557, %v2564
      %v2615 = vmul.f32 %v2558, %v2564
      %v2616 = vmul.f32 %v2559, %v2564
      %v2617 = vadd.f32 %v2456, %v2565
      %v2618 = vadd.f32 %v2457, %v2566
      %v2619 = vadd.f32 %v2458, %v2567
      %v2620 = vadd.f32 %v2459, %v2568
      %v2621 = vadd.f32 %v2460, %v2569
      %v2622 = vadd.f32 %v2461, %v2570
      %v2623 = vadd.f32 %v2462, %v2571
      %v2624 = vadd.f32 %v2463, %v2572
      %v2625 = vadd.f32 %v2464, %v2573
      %v2626 = vadd.f32 %v2465, %v2574
      %v2627 = vadd.f32 %v2466, %v2575
      %v2628 = vadd.f32 %v2467, %v2576
      %v2629 = vadd.f32 %v2468, %v2577
      %v2630 = vadd.f32 %v2469, %v2578
      %v2631 = vadd.f32 %v2470, %v2579
      %v2632 = vadd.f32 %v2471, %v2580
      %v2633 = vadd.f32 %v2472, %v2581
      %v2634 = vadd.f32 %v2473, %v2582
      %v2635 = vadd.f32 %v2474, %v2583
      %v2636 = vadd.f32 %v2475, %v2584
      %v2637 = vadd.f32 %v2476, %v2585
      %v2638 = vadd.f32 %v2477, %v2586
      %v2639 = vadd.f32 %v2478, %v2587
      %v2640 = vadd.f32 %v2479, %v2588
      %v2641 = vadd.f32 %v2480, %v2589
      %v2642 = vadd.f32 %v2481, %v2590
      %v2643 = vadd.f32 %v2482, %v2591
      %v2644 = vadd.f32 %v2483, %v2592
      %v2645 = vadd.f32 %v2484, %v2593
      %v2646 = vadd.f32 %v2485, %v2594
      %v2647 = vadd.f32 %v2486, %v2595
      %v2648 = vadd.f32 %v2487, %v2596
      %v2649 = vadd.f32 %v2488, %v2597
      %v2650 = vadd.f32 %v2489, %v2598
      %v2651 = vadd.f32 %v2490, %v2599
      %v2652 = vadd.f32 %v2491, %v2600
      %v2653 = vadd.f32 %v2492, %v2601
      %v2654 = vadd.f32 %v2493, %v2602
      %v2655 = vadd.f32 %v2494, %v2603
      %v2656 = vadd.f32 %v2495, %v2604
      %v2657 = vadd.f32 %v2496, %v2605
      %v2658 = vadd.f32 %v2497, %v2606
      %v2659 = vadd.f32 %v2498, %v2607
      %v2660 = vadd.f32 %v2499, %v2608
      %v2661 = vadd.f32 %v2500, %v2609
      %v2662 = vadd.f32 %v2501, %v2610
      %v2663 = vadd.f32 %v2502, %v2611
      %v2664 = vadd.f32 %v2503, %v2612
      %v2665 = vadd.f32 %v2504, %v2613
      %v2666 = vadd.f32 %v2505, %v2614
      %v2667 = vadd.f32 %v2506, %v2615
      %v2668 = vadd.f32 %v2507, %v2616
      %v2669 = vld [vmem:[%s2184 + $0x9] sm:$0xff]
      %v2670 = vld [vmem:[%s2184 + $0x11] sm:$0xff]
      %v2671 = vld [vmem:[%s2184 + $0x29] sm:$0xff]
      %v2672 = vld [vmem:[%s2184 + $0x31] sm:$0xff]
      %v2673 = vld [vmem:[%s2184 + $0x49] sm:$0xff]
      %v2674 = vld [vmem:[%s2184 + $0x51] sm:$0xff]
      %v2675 = vld [vmem:[%s2184 + $0x69] sm:$0xff]
      %v2676 = vld [vmem:[%s2184 + $0x71] sm:$0xff]
      %v2677 = vld [vmem:[%s2184 + $0x89] sm:$0xff]
      %v2678 = vld [vmem:[%s2184 + $0x91] sm:$0xff]
      %v2679 = vld [vmem:[%s2184 + $0xa9] sm:$0xff]
      %v2680 = vld [vmem:[%s2184 + $0xb1] sm:$0xff]
      %v2681 = vld [vmem:[%s2184 + $0xc9] sm:$0xff]
      %v2682 = vld [vmem:[%s2184 + $0xd1] sm:$0xff]
      %v2683 = vld [vmem:[%s2184 + $0xe9] sm:$0xff]
      %v2684 = vld [vmem:[%s2184 + $0xf1] sm:$0xff]
      %v2685 = vld [vmem:[%s2184 + $0x109] sm:$0xff]
      %v2686 = vld [vmem:[%s2184 + $0x111] sm:$0xff]
      %v2687 = vld [vmem:[%s2184 + $0x129] sm:$0xff]
      %v2688 = vld [vmem:[%s2184 + $0x131] sm:$0xff]
      %v2689 = vld [vmem:[%s2184 + $0x149] sm:$0xff]
      %v2690 = vld [vmem:[%s2184 + $0x151] sm:$0xff]
      %v2691 = vld [vmem:[%s2184 + $0x169] sm:$0xff]
      %v2692 = vld [vmem:[%s2184 + $0x171] sm:$0xff]
      %v2693 = vld [vmem:[%s2184 + $0x189] sm:$0xff]
      %v2694 = vld [vmem:[%s2184 + $0x191] sm:$0xff]
      %v2695 = vld [vmem:[%s2184 + $0x1a9] sm:$0xff]
      %v2696 = vld [vmem:[%s2184 + $0x1b1] sm:$0xff]
      %v2697 = vld [vmem:[%s2184 + $0x1c9] sm:$0xff]
      %v2698 = vld [vmem:[%s2184 + $0x1d1] sm:$0xff]
      %v2699 = vld [vmem:[%s2184 + $0x1e9] sm:$0xff]
      %v2700 = vld [vmem:[%s2184 + $0x1f1] sm:$0xff]
      %v2701 = vld [vmem:[%s2184 + $0x209] sm:$0xff]
      %v2702 = vld [vmem:[%s2184 + $0x211] sm:$0xff]
      %v2703 = vld [vmem:[%s2184 + $0x229] sm:$0xff]
      %v2704 = vld [vmem:[%s2184 + $0x231] sm:$0xff]
      %v2705 = vld [vmem:[%s2184 + $0x249] sm:$0xff]
      %v2706 = vld [vmem:[%s2184 + $0x251] sm:$0xff]
      %v2707 = vld [vmem:[%s2184 + $0x269] sm:$0xff]
      %v2708 = vld [vmem:[%s2184 + $0x271] sm:$0xff]
      %v2709 = vld [vmem:[%s2184 + $0x289] sm:$0xff]
      %v2710 = vld [vmem:[%s2184 + $0x291] sm:$0xff]
      %v2711 = vld [vmem:[%s2184 + $0x2a9] sm:$0xff]
      %v2712 = vld [vmem:[%s2184 + $0x2b1] sm:$0xff]
      %v2713 = vld [vmem:[%s2184 + $0x2c9] sm:$0xff]
      %v2714 = vld [vmem:[%s2184 + $0x2d1] sm:$0xff]
      %v2715 = vld [vmem:[%s2184 + $0x2e9] sm:$0xff]
      %v2716 = vld [vmem:[%s2184 + $0x2f1] sm:$0xff]
      %v2717 = vld [vmem:[%s2184 + $0x309] sm:$0xff]
      %v2718 = vld [vmem:[%s2184 + $0x311] sm:$0xff]
      %v2719 = vld [vmem:[%s2184 + $0x329] sm:$0xff]
      %v2720 = vld [vmem:[%s2184 + $0x331] sm:$0xff]
      %v2721 = vld [vmem:[%s2237 + $0x3] sm:$0x1]
      %v2722 = vlaneseq
      %v2723 = vshrl.u32 %v2722, 7
      %v2724 = vsub.s32 0, %v2723
      %v2725 = vrot.slane %v2721, %v2724
      %v2726 = vmul.f32 %v2669, %v2725
      %v2727 = vmul.f32 %v2670, %v2725
      %v2728 = vmul.f32 %v2671, %v2725
      %v2729 = vmul.f32 %v2672, %v2725
      %v2730 = vmul.f32 %v2673, %v2725
      %v2731 = vmul.f32 %v2674, %v2725
      %v2732 = vmul.f32 %v2675, %v2725
      %v2733 = vmul.f32 %v2676, %v2725
      %v2734 = vmul.f32 %v2677, %v2725
      %v2735 = vmul.f32 %v2678, %v2725
      %v2736 = vmul.f32 %v2679, %v2725
      %v2737 = vmul.f32 %v2680, %v2725
      %v2738 = vmul.f32 %v2681, %v2725
      %v2739 = vmul.f32 %v2682, %v2725
      %v2740 = vmul.f32 %v2683, %v2725
      %v2741 = vmul.f32 %v2684, %v2725
      %v2742 = vmul.f32 %v2685, %v2725
      %v2743 = vmul.f32 %v2686, %v2725
      %v2744 = vmul.f32 %v2687, %v2725
      %v2745 = vmul.f32 %v2688, %v2725
      %v2746 = vmul.f32 %v2689, %v2725
      %v2747 = vmul.f32 %v2690, %v2725
      %v2748 = vmul.f32 %v2691, %v2725
      %v2749 = vmul.f32 %v2692, %v2725
      %v2750 = vmul.f32 %v2693, %v2725
      %v2751 = vmul.f32 %v2694, %v2725
      %v2752 = vmul.f32 %v2695, %v2725
      %v2753 = vmul.f32 %v2696, %v2725
      %v2754 = vmul.f32 %v2697, %v2725
      %v2755 = vmul.f32 %v2698, %v2725
      %v2756 = vmul.f32 %v2699, %v2725
      %v2757 = vmul.f32 %v2700, %v2725
      %v2758 = vmul.f32 %v2701, %v2725
      %v2759 = vmul.f32 %v2702, %v2725
      %v2760 = vmul.f32 %v2703, %v2725
      %v2761 = vmul.f32 %v2704, %v2725
      %v2762 = vmul.f32 %v2705, %v2725
      %v2763 = vmul.f32 %v2706, %v2725
      %v2764 = vmul.f32 %v2707, %v2725
      %v2765 = vmul.f32 %v2708, %v2725
      %v2766 = vmul.f32 %v2709, %v2725
      %v2767 = vmul.f32 %v2710, %v2725
      %v2768 = vmul.f32 %v2711, %v2725
      %v2769 = vmul.f32 %v2712, %v2725
      %v2770 = vmul.f32 %v2713, %v2725
      %v2771 = vmul.f32 %v2714, %v2725
      %v2772 = vmul.f32 %v2715, %v2725
      %v2773 = vmul.f32 %v2716, %v2725
      %v2774 = vmul.f32 %v2717, %v2725
      %v2775 = vmul.f32 %v2718, %v2725
      %v2776 = vmul.f32 %v2719, %v2725
      %v2777 = vmul.f32 %v2720, %v2725
      %v2778 = vadd.f32 %v2617, %v2726
      %v2779 = vadd.f32 %v2618, %v2727
      %v2780 = vadd.f32 %v2619, %v2728
      %v2781 = vadd.f32 %v2620, %v2729
      %v2782 = vadd.f32 %v2621, %v2730
      %v2783 = vadd.f32 %v2622, %v2731
      %v2784 = vadd.f32 %v2623, %v2732
      %v2785 = vadd.f32 %v2624, %v2733
      %v2786 = vadd.f32 %v2625, %v2734
      %v2787 = vadd.f32 %v2626, %v2735
      %v2788 = vadd.f32 %v2627, %v2736
      %v2789 = vadd.f32 %v2628, %v2737
      %v2790 = vadd.f32 %v2629, %v2738
      %v2791 = vadd.f32 %v2630, %v2739
      %v2792 = vadd.f32 %v2631, %v2740
      %v2793 = vadd.f32 %v2632, %v2741
      %v2794 = vadd.f32 %v2633, %v2742
      %v2795 = vadd.f32 %v2634, %v2743
      %v2796 = vadd.f32 %v2635, %v2744
      %v2797 = vadd.f32 %v2636, %v2745
      %v2798 = vadd.f32 %v2637, %v2746
      %v2799 = vadd.f32 %v2638, %v2747
      %v2800 = vadd.f32 %v2639, %v2748
      %v2801 = vadd.f32 %v2640, %v2749
      %v2802 = vadd.f32 %v2641, %v2750
      %v2803 = vadd.f32 %v2642, %v2751
      %v2804 = vadd.f32 %v2643, %v2752
      %v2805 = vadd.f32 %v2644, %v2753
      %v2806 = vadd.f32 %v2645, %v2754
      %v2807 = vadd.f32 %v2646, %v2755
      %v2808 = vadd.f32 %v2647, %v2756
      %v2809 = vadd.f32 %v2648, %v2757
      %v2810 = vadd.f32 %v2649, %v2758
      %v2811 = vadd.f32 %v2650, %v2759
      %v2812 = vadd.f32 %v2651, %v2760
      %v2813 = vadd.f32 %v2652, %v2761
      %v2814 = vadd.f32 %v2653, %v2762
      %v2815 = vadd.f32 %v2654, %v2763
      %v2816 = vadd.f32 %v2655, %v2764
      %v2817 = vadd.f32 %v2656, %v2765
      %v2818 = vadd.f32 %v2657, %v2766
      %v2819 = vadd.f32 %v2658, %v2767
      %v2820 = vadd.f32 %v2659, %v2768
      %v2821 = vadd.f32 %v2660, %v2769
      %v2822 = vadd.f32 %v2661, %v2770
      %v2823 = vadd.f32 %v2662, %v2771
      %v2824 = vadd.f32 %v2663, %v2772
      %v2825 = vadd.f32 %v2664, %v2773
      %v2826 = vadd.f32 %v2665, %v2774
      %v2827 = vadd.f32 %v2666, %v2775
      %v2828 = vadd.f32 %v2667, %v2776
      %v2829 = vadd.f32 %v2668, %v2777
      %v2830 = vld [vmem:[%s2184 + $0xa] sm:$0xff]
      %v2831 = vld [vmem:[%s2184 + $0x12] sm:$0xff]
      %v2832 = vld [vmem:[%s2184 + $0x2a] sm:$0xff]
      %v2833 = vld [vmem:[%s2184 + $0x32] sm:$0xff]
      %v2834 = vld [vmem:[%s2184 + $0x4a] sm:$0xff]
      %v2835 = vld [vmem:[%s2184 + $0x52] sm:$0xff]
      %v2836 = vld [vmem:[%s2184 + $0x6a] sm:$0xff]
      %v2837 = vld [vmem:[%s2184 + $0x72] sm:$0xff]
      %v2838 = vld [vmem:[%s2184 + $0x8a] sm:$0xff]
      %v2839 = vld [vmem:[%s2184 + $0x92] sm:$0xff]
      %v2840 = vld [vmem:[%s2184 + $0xaa] sm:$0xff]
      %v2841 = vld [vmem:[%s2184 + $0xb2] sm:$0xff]
      %v2842 = vld [vmem:[%s2184 + $0xca] sm:$0xff]
      %v2843 = vld [vmem:[%s2184 + $0xd2] sm:$0xff]
      %v2844 = vld [vmem:[%s2184 + $0xea] sm:$0xff]
      %v2845 = vld [vmem:[%s2184 + $0xf2] sm:$0xff]
      %v2846 = vld [vmem:[%s2184 + $0x10a] sm:$0xff]
      %v2847 = vld [vmem:[%s2184 + $0x112] sm:$0xff]
      %v2848 = vld [vmem:[%s2184 + $0x12a] sm:$0xff]
      %v2849 = vld [vmem:[%s2184 + $0x132] sm:$0xff]
      %v2850 = vld [vmem:[%s2184 + $0x14a] sm:$0xff]
      %v2851 = vld [vmem:[%s2184 + $0x152] sm:$0xff]
      %v2852 = vld [vmem:[%s2184 + $0x16a] sm:$0xff]
      %v2853 = vld [vmem:[%s2184 + $0x172] sm:$0xff]
      %v2854 = vld [vmem:[%s2184 + $0x18a] sm:$0xff]
      %v2855 = vld [vmem:[%s2184 + $0x192] sm:$0xff]
      %v2856 = vld [vmem:[%s2184 + $0x1aa] sm:$0xff]
      %v2857 = vld [vmem:[%s2184 + $0x1b2] sm:$0xff]
      %v2858 = vld [vmem:[%s2184 + $0x1ca] sm:$0xff]
      %v2859 = vld [vmem:[%s2184 + $0x1d2] sm:$0xff]
      %v2860 = vld [vmem:[%s2184 + $0x1ea] sm:$0xff]
      %v2861 = vld [vmem:[%s2184 + $0x1f2] sm:$0xff]
      %v2862 = vld [vmem:[%s2184 + $0x20a] sm:$0xff]
      %v2863 = vld [vmem:[%s2184 + $0x212] sm:$0xff]
      %v2864 = vld [vmem:[%s2184 + $0x22a] sm:$0xff]
      %v2865 = vld [vmem:[%s2184 + $0x232] sm:$0xff]
      %v2866 = vld [vmem:[%s2184 + $0x24a] sm:$0xff]
      %v2867 = vld [vmem:[%s2184 + $0x252] sm:$0xff]
      %v2868 = vld [vmem:[%s2184 + $0x26a] sm:$0xff]
      %v2869 = vld [vmem:[%s2184 + $0x272] sm:$0xff]
      %v2870 = vld [vmem:[%s2184 + $0x28a] sm:$0xff]
      %v2871 = vld [vmem:[%s2184 + $0x292] sm:$0xff]
      %v2872 = vld [vmem:[%s2184 + $0x2aa] sm:$0xff]
      %v2873 = vld [vmem:[%s2184 + $0x2b2] sm:$0xff]
      %v2874 = vld [vmem:[%s2184 + $0x2ca] sm:$0xff]
      %v2875 = vld [vmem:[%s2184 + $0x2d2] sm:$0xff]
      %v2876 = vld [vmem:[%s2184 + $0x2ea] sm:$0xff]
      %v2877 = vld [vmem:[%s2184 + $0x2f2] sm:$0xff]
      %v2878 = vld [vmem:[%s2184 + $0x30a] sm:$0xff]
      %v2879 = vld [vmem:[%s2184 + $0x312] sm:$0xff]
      %v2880 = vld [vmem:[%s2184 + $0x32a] sm:$0xff]
      %v2881 = vld [vmem:[%s2184 + $0x332] sm:$0xff]
      %v2882 = vld [vmem:[%s2237 + $0x4] sm:$0x1]
      %v2883 = vlaneseq
      %v2884 = vshrl.u32 %v2883, 7
      %v2885 = vsub.s32 0, %v2884
      %v2886 = vrot.slane %v2882, %v2885
      %v2887 = vmul.f32 %v2830, %v2886
      %v2888 = vmul.f32 %v2831, %v2886
      %v2889 = vmul.f32 %v2832, %v2886
      %v2890 = vmul.f32 %v2833, %v2886
      %v2891 = vmul.f32 %v2834, %v2886
      %v2892 = vmul.f32 %v2835, %v2886
      %v2893 = vmul.f32 %v2836, %v2886
      %v2894 = vmul.f32 %v2837, %v2886
      %v2895 = vmul.f32 %v2838, %v2886
      %v2896 = vmul.f32 %v2839, %v2886
      %v2897 = vmul.f32 %v2840, %v2886
      %v2898 = vmul.f32 %v2841, %v2886
      %v2899 = vmul.f32 %v2842, %v2886
      %v2900 = vmul.f32 %v2843, %v2886
      %v2901 = vmul.f32 %v2844, %v2886
      %v2902 = vmul.f32 %v2845, %v2886
      %v2903 = vmul.f32 %v2846, %v2886
      %v2904 = vmul.f32 %v2847, %v2886
      %v2905 = vmul.f32 %v2848, %v2886
      %v2906 = vmul.f32 %v2849, %v2886
      %v2907 = vmul.f32 %v2850, %v2886
      %v2908 = vmul.f32 %v2851, %v2886
      %v2909 = vmul.f32 %v2852, %v2886
      %v2910 = vmul.f32 %v2853, %v2886
      %v2911 = vmul.f32 %v2854, %v2886
      %v2912 = vmul.f32 %v2855, %v2886
      %v2913 = vmul.f32 %v2856, %v2886
      %v2914 = vmul.f32 %v2857, %v2886
      %v2915 = vmul.f32 %v2858, %v2886
      %v2916 = vmul.f32 %v2859, %v2886
      %v2917 = vmul.f32 %v2860, %v2886
      %v2918 = vmul.f32 %v2861, %v2886
      %v2919 = vmul.f32 %v2862, %v2886
      %v2920 = vmul.f32 %v2863, %v2886
      %v2921 = vmul.f32 %v2864, %v2886
      %v2922 = vmul.f32 %v2865, %v2886
      %v2923 = vmul.f32 %v2866, %v2886
      %v2924 = vmul.f32 %v2867, %v2886
      %v2925 = vmul.f32 %v2868, %v2886
      %v2926 = vmul.f32 %v2869, %v2886
      %v2927 = vmul.f32 %v2870, %v2886
      %v2928 = vmul.f32 %v2871, %v2886
      %v2929 = vmul.f32 %v2872, %v2886
      %v2930 = vmul.f32 %v2873, %v2886
      %v2931 = vmul.f32 %v2874, %v2886
      %v2932 = vmul.f32 %v2875, %v2886
      %v2933 = vmul.f32 %v2876, %v2886
      %v2934 = vmul.f32 %v2877, %v2886
      %v2935 = vmul.f32 %v2878, %v2886
      %v2936 = vmul.f32 %v2879, %v2886
      %v2937 = vmul.f32 %v2880, %v2886
      %v2938 = vmul.f32 %v2881, %v2886
      %v2939 = vadd.f32 %v2778, %v2887
      %v2940 = vadd.f32 %v2779, %v2888
      %v2941 = vadd.f32 %v2780, %v2889
      %v2942 = vadd.f32 %v2781, %v2890
      %v2943 = vadd.f32 %v2782, %v2891
      %v2944 = vadd.f32 %v2783, %v2892
      %v2945 = vadd.f32 %v2784, %v2893
      %v2946 = vadd.f32 %v2785, %v2894
      %v2947 = vadd.f32 %v2786, %v2895
      %v2948 = vadd.f32 %v2787, %v2896
      %v2949 = vadd.f32 %v2788, %v2897
      %v2950 = vadd.f32 %v2789, %v2898
      %v2951 = vadd.f32 %v2790, %v2899
      %v2952 = vadd.f32 %v2791, %v2900
      %v2953 = vadd.f32 %v2792, %v2901
      %v2954 = vadd.f32 %v2793, %v2902
      %v2955 = vadd.f32 %v2794, %v2903
      %v2956 = vadd.f32 %v2795, %v2904
      %v2957 = vadd.f32 %v2796, %v2905
      %v2958 = vadd.f32 %v2797, %v2906
      %v2959 = vadd.f32 %v2798, %v2907
      %v2960 = vadd.f32 %v2799, %v2908
      %v2961 = vadd.f32 %v2800, %v2909
      %v2962 = vadd.f32 %v2801, %v2910
      %v2963 = vadd.f32 %v2802, %v2911
      %v2964 = vadd.f32 %v2803, %v2912
      %v2965 = vadd.f32 %v2804, %v2913
      %v2966 = vadd.f32 %v2805, %v2914
      %v2967 = vadd.f32 %v2806, %v2915
      %v2968 = vadd.f32 %v2807, %v2916
      %v2969 = vadd.f32 %v2808, %v2917
      %v2970 = vadd.f32 %v2809, %v2918
      %v2971 = vadd.f32 %v2810, %v2919
      %v2972 = vadd.f32 %v2811, %v2920
      %v2973 = vadd.f32 %v2812, %v2921
      %v2974 = vadd.f32 %v2813, %v2922
      %v2975 = vadd.f32 %v2814, %v2923
      %v2976 = vadd.f32 %v2815, %v2924
      %v2977 = vadd.f32 %v2816, %v2925
      %v2978 = vadd.f32 %v2817, %v2926
      %v2979 = vadd.f32 %v2818, %v2927
      %v2980 = vadd.f32 %v2819, %v2928
      %v2981 = vadd.f32 %v2820, %v2929
      %v2982 = vadd.f32 %v2821, %v2930
      %v2983 = vadd.f32 %v2822, %v2931
      %v2984 = vadd.f32 %v2823, %v2932
      %v2985 = vadd.f32 %v2824, %v2933
      %v2986 = vadd.f32 %v2825, %v2934
      %v2987 = vadd.f32 %v2826, %v2935
      %v2988 = vadd.f32 %v2827, %v2936
      %v2989 = vadd.f32 %v2828, %v2937
      %v2990 = vadd.f32 %v2829, %v2938
      %s2991 = scalar_lea.vmem [#allocation2], 96
      %v2992 = vld [vmem:[%s2991 + $0x6] sm:$0xff]
      %v2993 = vld [vmem:[%s2991 + $0xe] sm:$0xff]
      %v2994 = vld [vmem:[%s2991 + $0x26] sm:$0xff]
      %v2995 = vld [vmem:[%s2991 + $0x2e] sm:$0xff]
      %v2996 = vld [vmem:[%s2991 + $0x46] sm:$0xff]
      %v2997 = vld [vmem:[%s2991 + $0x4e] sm:$0xff]
      %v2998 = vld [vmem:[%s2991 + $0x66] sm:$0xff]
      %v2999 = vld [vmem:[%s2991 + $0x6e] sm:$0xff]
      %v3000 = vld [vmem:[%s2991 + $0x86] sm:$0xff]
      %v3001 = vld [vmem:[%s2991 + $0x8e] sm:$0xff]
      %v3002 = vld [vmem:[%s2991 + $0xa6] sm:$0xff]
      %v3003 = vld [vmem:[%s2991 + $0xae] sm:$0xff]
      %v3004 = vld [vmem:[%s2991 + $0xc6] sm:$0xff]
      %v3005 = vld [vmem:[%s2991 + $0xce] sm:$0xff]
      %v3006 = vld [vmem:[%s2991 + $0xe6] sm:$0xff]
      %v3007 = vld [vmem:[%s2991 + $0xee] sm:$0xff]
      %v3008 = vld [vmem:[%s2991 + $0x106] sm:$0xff]
      %v3009 = vld [vmem:[%s2991 + $0x10e] sm:$0xff]
      %v3010 = vld [vmem:[%s2991 + $0x126] sm:$0xff]
      %v3011 = vld [vmem:[%s2991 + $0x12e] sm:$0xff]
      %v3012 = vld [vmem:[%s2991 + $0x146] sm:$0xff]
      %v3013 = vld [vmem:[%s2991 + $0x14e] sm:$0xff]
      %v3014 = vld [vmem:[%s2991 + $0x166] sm:$0xff]
      %v3015 = vld [vmem:[%s2991 + $0x16e] sm:$0xff]
      %v3016 = vld [vmem:[%s2991 + $0x186] sm:$0xff]
      %v3017 = vld [vmem:[%s2991 + $0x18e] sm:$0xff]
      %v3018 = vld [vmem:[%s2991 + $0x1a6] sm:$0xff]
      %v3019 = vld [vmem:[%s2991 + $0x1ae] sm:$0xff]
      %v3020 = vld [vmem:[%s2991 + $0x1c6] sm:$0xff]
      %v3021 = vld [vmem:[%s2991 + $0x1ce] sm:$0xff]
      %v3022 = vld [vmem:[%s2991 + $0x1e6] sm:$0xff]
      %v3023 = vld [vmem:[%s2991 + $0x1ee] sm:$0xff]
      %v3024 = vld [vmem:[%s2991 + $0x206] sm:$0xff]
      %v3025 = vld [vmem:[%s2991 + $0x20e] sm:$0xff]
      %v3026 = vld [vmem:[%s2991 + $0x226] sm:$0xff]
      %v3027 = vld [vmem:[%s2991 + $0x22e] sm:$0xff]
      %v3028 = vld [vmem:[%s2991 + $0x246] sm:$0xff]
      %v3029 = vld [vmem:[%s2991 + $0x24e] sm:$0xff]
      %v3030 = vld [vmem:[%s2991 + $0x266] sm:$0xff]
      %v3031 = vld [vmem:[%s2991 + $0x26e] sm:$0xff]
      %v3032 = vld [vmem:[%s2991 + $0x286] sm:$0xff]
      %v3033 = vld [vmem:[%s2991 + $0x28e] sm:$0xff]
      %v3034 = vld [vmem:[%s2991 + $0x2a6] sm:$0xff]
      %v3035 = vld [vmem:[%s2991 + $0x2ae] sm:$0xff]
      %v3036 = vld [vmem:[%s2991 + $0x2c6] sm:$0xff]
      %v3037 = vld [vmem:[%s2991 + $0x2ce] sm:$0xff]
      %v3038 = vld [vmem:[%s2991 + $0x2e6] sm:$0xff]
      %v3039 = vld [vmem:[%s2991 + $0x2ee] sm:$0xff]
      %v3040 = vld [vmem:[%s2991 + $0x306] sm:$0xff]
      %v3041 = vld [vmem:[%s2991 + $0x30e] sm:$0xff]
      %v3042 = vld [vmem:[%s2991 + $0x326] sm:$0xff]
      %v3043 = vld [vmem:[%s2991 + $0x32e] sm:$0xff]
      %s3044 = scalar_lea.vmem %s1, 24
      %v3045 = vld [vmem:[%s3044] sm:$0x1]
      %v3046 = vlaneseq
      %v3047 = vshrl.u32 %v3046, 7
      %v3048 = vsub.s32 0, %v3047
      %v3049 = vrot.slane %v3045, %v3048
      %v3050 = vmul.f32 %v2992, %v3049
      %v3051 = vmul.f32 %v2993, %v3049
      %v3052 = vmul.f32 %v2994, %v3049
      %v3053 = vmul.f32 %v2995, %v3049
      %v3054 = vmul.f32 %v2996, %v3049
      %v3055 = vmul.f32 %v2997, %v3049
      %v3056 = vmul.f32 %v2998, %v3049
      %v3057 = vmul.f32 %v2999, %v3049
      %v3058 = vmul.f32 %v3000, %v3049
      %v3059 = vmul.f32 %v3001, %v3049
      %v3060 = vmul.f32 %v3002, %v3049
      %v3061 = vmul.f32 %v3003, %v3049
      %v3062 = vmul.f32 %v3004, %v3049
      %v3063 = vmul.f32 %v3005, %v3049
      %v3064 = vmul.f32 %v3006, %v3049
      %v3065 = vmul.f32 %v3007, %v3049
      %v3066 = vmul.f32 %v3008, %v3049
      %v3067 = vmul.f32 %v3009, %v3049
      %v3068 = vmul.f32 %v3010, %v3049
      %v3069 = vmul.f32 %v3011, %v3049
      %v3070 = vmul.f32 %v3012, %v3049
      %v3071 = vmul.f32 %v3013, %v3049
      %v3072 = vmul.f32 %v3014, %v3049
      %v3073 = vmul.f32 %v3015, %v3049
      %v3074 = vmul.f32 %v3016, %v3049
      %v3075 = vmul.f32 %v3017, %v3049
      %v3076 = vmul.f32 %v3018, %v3049
      %v3077 = vmul.f32 %v3019, %v3049
      %v3078 = vmul.f32 %v3020, %v3049
      %v3079 = vmul.f32 %v3021, %v3049
      %v3080 = vmul.f32 %v3022, %v3049
      %v3081 = vmul.f32 %v3023, %v3049
      %v3082 = vmul.f32 %v3024, %v3049
      %v3083 = vmul.f32 %v3025, %v3049
      %v3084 = vmul.f32 %v3026, %v3049
      %v3085 = vmul.f32 %v3027, %v3049
      %v3086 = vmul.f32 %v3028, %v3049
      %v3087 = vmul.f32 %v3029, %v3049
      %v3088 = vmul.f32 %v3030, %v3049
      %v3089 = vmul.f32 %v3031, %v3049
      %v3090 = vmul.f32 %v3032, %v3049
      %v3091 = vmul.f32 %v3033, %v3049
      %v3092 = vmul.f32 %v3034, %v3049
      %v3093 = vmul.f32 %v3035, %v3049
      %v3094 = vmul.f32 %v3036, %v3049
      %v3095 = vmul.f32 %v3037, %v3049
      %v3096 = vmul.f32 %v3038, %v3049
      %v3097 = vmul.f32 %v3039, %v3049
      %v3098 = vmul.f32 %v3040, %v3049
      %v3099 = vmul.f32 %v3041, %v3049
      %v3100 = vmul.f32 %v3042, %v3049
      %v3101 = vmul.f32 %v3043, %v3049
      %v3102 = vadd.f32 %v2939, %v3050
      %v3103 = vadd.f32 %v2940, %v3051
      %v3104 = vadd.f32 %v2941, %v3052
      %v3105 = vadd.f32 %v2942, %v3053
      %v3106 = vadd.f32 %v2943, %v3054
      %v3107 = vadd.f32 %v2944, %v3055
      %v3108 = vadd.f32 %v2945, %v3056
      %v3109 = vadd.f32 %v2946, %v3057
      %v3110 = vadd.f32 %v2947, %v3058
      %v3111 = vadd.f32 %v2948, %v3059
      %v3112 = vadd.f32 %v2949, %v3060
      %v3113 = vadd.f32 %v2950, %v3061
      %v3114 = vadd.f32 %v2951, %v3062
      %v3115 = vadd.f32 %v2952, %v3063
      %v3116 = vadd.f32 %v2953, %v3064
      %v3117 = vadd.f32 %v2954, %v3065
      %v3118 = vadd.f32 %v2955, %v3066
      %v3119 = vadd.f32 %v2956, %v3067
      %v3120 = vadd.f32 %v2957, %v3068
      %v3121 = vadd.f32 %v2958, %v3069
      %v3122 = vadd.f32 %v2959, %v3070
      %v3123 = vadd.f32 %v2960, %v3071
      %v3124 = vadd.f32 %v2961, %v3072
      %v3125 = vadd.f32 %v2962, %v3073
      %v3126 = vadd.f32 %v2963, %v3074
      %v3127 = vadd.f32 %v2964, %v3075
      %v3128 = vadd.f32 %v2965, %v3076
      %v3129 = vadd.f32 %v2966, %v3077
      %v3130 = vadd.f32 %v2967, %v3078
      %v3131 = vadd.f32 %v2968, %v3079
      %v3132 = vadd.f32 %v2969, %v3080
      %v3133 = vadd.f32 %v2970, %v3081
      %v3134 = vadd.f32 %v2971, %v3082
      %v3135 = vadd.f32 %v2972, %v3083
      %v3136 = vadd.f32 %v2973, %v3084
      %v3137 = vadd.f32 %v2974, %v3085
      %v3138 = vadd.f32 %v2975, %v3086
      %v3139 = vadd.f32 %v2976, %v3087
      %v3140 = vadd.f32 %v2977, %v3088
      %v3141 = vadd.f32 %v2978, %v3089
      %v3142 = vadd.f32 %v2979, %v3090
      %v3143 = vadd.f32 %v2980, %v3091
      %v3144 = vadd.f32 %v2981, %v3092
      %v3145 = vadd.f32 %v2982, %v3093
      %v3146 = vadd.f32 %v2983, %v3094
      %v3147 = vadd.f32 %v2984, %v3095
      %v3148 = vadd.f32 %v2985, %v3096
      %v3149 = vadd.f32 %v2986, %v3097
      %v3150 = vadd.f32 %v2987, %v3098
      %v3151 = vadd.f32 %v2988, %v3099
      %v3152 = vadd.f32 %v2989, %v3100
      %v3153 = vadd.f32 %v2990, %v3101
      %v3154 = vld [vmem:[%s2991 + $0x7] sm:$0xff]
      %v3155 = vld [vmem:[%s2991 + $0xf] sm:$0xff]
      %v3156 = vld [vmem:[%s2991 + $0x27] sm:$0xff]
      %v3157 = vld [vmem:[%s2991 + $0x2f] sm:$0xff]
      %v3158 = vld [vmem:[%s2991 + $0x47] sm:$0xff]
      %v3159 = vld [vmem:[%s2991 + $0x4f] sm:$0xff]
      %v3160 = vld [vmem:[%s2991 + $0x67] sm:$0xff]
      %v3161 = vld [vmem:[%s2991 + $0x6f] sm:$0xff]
      %v3162 = vld [vmem:[%s2991 + $0x87] sm:$0xff]
      %v3163 = vld [vmem:[%s2991 + $0x8f] sm:$0xff]
      %v3164 = vld [vmem:[%s2991 + $0xa7] sm:$0xff]
      %v3165 = vld [vmem:[%s2991 + $0xaf] sm:$0xff]
      %v3166 = vld [vmem:[%s2991 + $0xc7] sm:$0xff]
      %v3167 = vld [vmem:[%s2991 + $0xcf] sm:$0xff]
      %v3168 = vld [vmem:[%s2991 + $0xe7] sm:$0xff]
      %v3169 = vld [vmem:[%s2991 + $0xef] sm:$0xff]
      %v3170 = vld [vmem:[%s2991 + $0x107] sm:$0xff]
      %v3171 = vld [vmem:[%s2991 + $0x10f] sm:$0xff]
      %v3172 = vld [vmem:[%s2991 + $0x127] sm:$0xff]
      %v3173 = vld [vmem:[%s2991 + $0x12f] sm:$0xff]
      %v3174 = vld [vmem:[%s2991 + $0x147] sm:$0xff]
      %v3175 = vld [vmem:[%s2991 + $0x14f] sm:$0xff]
      %v3176 = vld [vmem:[%s2991 + $0x167] sm:$0xff]
      %v3177 = vld [vmem:[%s2991 + $0x16f] sm:$0xff]
      %v3178 = vld [vmem:[%s2991 + $0x187] sm:$0xff]
      %v3179 = vld [vmem:[%s2991 + $0x18f] sm:$0xff]
      %v3180 = vld [vmem:[%s2991 + $0x1a7] sm:$0xff]
      %v3181 = vld [vmem:[%s2991 + $0x1af] sm:$0xff]
      %v3182 = vld [vmem:[%s2991 + $0x1c7] sm:$0xff]
      %v3183 = vld [vmem:[%s2991 + $0x1cf] sm:$0xff]
      %v3184 = vld [vmem:[%s2991 + $0x1e7] sm:$0xff]
      %v3185 = vld [vmem:[%s2991 + $0x1ef] sm:$0xff]
      %v3186 = vld [vmem:[%s2991 + $0x207] sm:$0xff]
      %v3187 = vld [vmem:[%s2991 + $0x20f] sm:$0xff]
      %v3188 = vld [vmem:[%s2991 + $0x227] sm:$0xff]
      %v3189 = vld [vmem:[%s2991 + $0x22f] sm:$0xff]
      %v3190 = vld [vmem:[%s2991 + $0x247] sm:$0xff]
      %v3191 = vld [vmem:[%s2991 + $0x24f] sm:$0xff]
      %v3192 = vld [vmem:[%s2991 + $0x267] sm:$0xff]
      %v3193 = vld [vmem:[%s2991 + $0x26f] sm:$0xff]
      %v3194 = vld [vmem:[%s2991 + $0x287] sm:$0xff]
      %v3195 = vld [vmem:[%s2991 + $0x28f] sm:$0xff]
      %v3196 = vld [vmem:[%s2991 + $0x2a7] sm:$0xff]
      %v3197 = vld [vmem:[%s2991 + $0x2af] sm:$0xff]
      %v3198 = vld [vmem:[%s2991 + $0x2c7] sm:$0xff]
      %v3199 = vld [vmem:[%s2991 + $0x2cf] sm:$0xff]
      %v3200 = vld [vmem:[%s2991 + $0x2e7] sm:$0xff]
      %v3201 = vld [vmem:[%s2991 + $0x2ef] sm:$0xff]
      %v3202 = vld [vmem:[%s2991 + $0x307] sm:$0xff]
      %v3203 = vld [vmem:[%s2991 + $0x30f] sm:$0xff]
      %v3204 = vld [vmem:[%s2991 + $0x327] sm:$0xff]
      %v3205 = vld [vmem:[%s2991 + $0x32f] sm:$0xff]
      %v3206 = vld [vmem:[%s3044 + $0x1] sm:$0x1]
      %v3207 = vlaneseq
      %v3208 = vshrl.u32 %v3207, 7
      %v3209 = vsub.s32 0, %v3208
      %v3210 = vrot.slane %v3206, %v3209
      %v3211 = vmul.f32 %v3154, %v3210
      %v3212 = vmul.f32 %v3155, %v3210
      %v3213 = vmul.f32 %v3156, %v3210
      %v3214 = vmul.f32 %v3157, %v3210
      %v3215 = vmul.f32 %v3158, %v3210
      %v3216 = vmul.f32 %v3159, %v3210
      %v3217 = vmul.f32 %v3160, %v3210
      %v3218 = vmul.f32 %v3161, %v3210
      %v3219 = vmul.f32 %v3162, %v3210
      %v3220 = vmul.f32 %v3163, %v3210
      %v3221 = vmul.f32 %v3164, %v3210
      %v3222 = vmul.f32 %v3165, %v3210
      %v3223 = vmul.f32 %v3166, %v3210
      %v3224 = vmul.f32 %v3167, %v3210
      %v3225 = vmul.f32 %v3168, %v3210
      %v3226 = vmul.f32 %v3169, %v3210
      %v3227 = vmul.f32 %v3170, %v3210
      %v3228 = vmul.f32 %v3171, %v3210
      %v3229 = vmul.f32 %v3172, %v3210
      %v3230 = vmul.f32 %v3173, %v3210
      %v3231 = vmul.f32 %v3174, %v3210
      %v3232 = vmul.f32 %v3175, %v3210
      %v3233 = vmul.f32 %v3176, %v3210
      %v3234 = vmul.f32 %v3177, %v3210
      %v3235 = vmul.f32 %v3178, %v3210
      %v3236 = vmul.f32 %v3179, %v3210
      %v3237 = vmul.f32 %v3180, %v3210
      %v3238 = vmul.f32 %v3181, %v3210
      %v3239 = vmul.f32 %v3182, %v3210
      %v3240 = vmul.f32 %v3183, %v3210
      %v3241 = vmul.f32 %v3184, %v3210
      %v3242 = vmul.f32 %v3185, %v3210
      %v3243 = vmul.f32 %v3186, %v3210
      %v3244 = vmul.f32 %v3187, %v3210
      %v3245 = vmul.f32 %v3188, %v3210
      %v3246 = vmul.f32 %v3189, %v3210
      %v3247 = vmul.f32 %v3190, %v3210
      %v3248 = vmul.f32 %v3191, %v3210
      %v3249 = vmul.f32 %v3192, %v3210
      %v3250 = vmul.f32 %v3193, %v3210
      %v3251 = vmul.f32 %v3194, %v3210
      %v3252 = vmul.f32 %v3195, %v3210
      %v3253 = vmul.f32 %v3196, %v3210
      %v3254 = vmul.f32 %v3197, %v3210
      %v3255 = vmul.f32 %v3198, %v3210
      %v3256 = vmul.f32 %v3199, %v3210
      %v3257 = vmul.f32 %v3200, %v3210
      %v3258 = vmul.f32 %v3201, %v3210
      %v3259 = vmul.f32 %v3202, %v3210
      %v3260 = vmul.f32 %v3203, %v3210
      %v3261 = vmul.f32 %v3204, %v3210
      %v3262 = vmul.f32 %v3205, %v3210
      %v3263 = vadd.f32 %v3102, %v3211
      %v3264 = vadd.f32 %v3103, %v3212
      %v3265 = vadd.f32 %v3104, %v3213
      %v3266 = vadd.f32 %v3105, %v3214
      %v3267 = vadd.f32 %v3106, %v3215
      %v3268 = vadd.f32 %v3107, %v3216
      %v3269 = vadd.f32 %v3108, %v3217
      %v3270 = vadd.f32 %v3109, %v3218
      %v3271 = vadd.f32 %v3110, %v3219
      %v3272 = vadd.f32 %v3111, %v3220
      %v3273 = vadd.f32 %v3112, %v3221
      %v3274 = vadd.f32 %v3113, %v3222
      %v3275 = vadd.f32 %v3114, %v3223
      %v3276 = vadd.f32 %v3115, %v3224
      %v3277 = vadd.f32 %v3116, %v3225
      %v3278 = vadd.f32 %v3117, %v3226
      %v3279 = vadd.f32 %v3118, %v3227
      %v3280 = vadd.f32 %v3119, %v3228
      %v3281 = vadd.f32 %v3120, %v3229
      %v3282 = vadd.f32 %v3121, %v3230
      %v3283 = vadd.f32 %v3122, %v3231
      %v3284 = vadd.f32 %v3123, %v3232
      %v3285 = vadd.f32 %v3124, %v3233
      %v3286 = vadd.f32 %v3125, %v3234
      %v3287 = vadd.f32 %v3126, %v3235
      %v3288 = vadd.f32 %v3127, %v3236
      %v3289 = vadd.f32 %v3128, %v3237
      %v3290 = vadd.f32 %v3129, %v3238
      %v3291 = vadd.f32 %v3130, %v3239
      %v3292 = vadd.f32 %v3131, %v3240
      %v3293 = vadd.f32 %v3132, %v3241
      %v3294 = vadd.f32 %v3133, %v3242
      %v3295 = vadd.f32 %v3134, %v3243
      %v3296 = vadd.f32 %v3135, %v3244
      %v3297 = vadd.f32 %v3136, %v3245
      %v3298 = vadd.f32 %v3137, %v3246
      %v3299 = vadd.f32 %v3138, %v3247
      %v3300 = vadd.f32 %v3139, %v3248
      %v3301 = vadd.f32 %v3140, %v3249
      %v3302 = vadd.f32 %v3141, %v3250
      %v3303 = vadd.f32 %v3142, %v3251
      %v3304 = vadd.f32 %v3143, %v3252
      %v3305 = vadd.f32 %v3144, %v3253
      %v3306 = vadd.f32 %v3145, %v3254
      %v3307 = vadd.f32 %v3146, %v3255
      %v3308 = vadd.f32 %v3147, %v3256
      %v3309 = vadd.f32 %v3148, %v3257
      %v3310 = vadd.f32 %v3149, %v3258
      %v3311 = vadd.f32 %v3150, %v3259
      %v3312 = vadd.f32 %v3151, %v3260
      %v3313 = vadd.f32 %v3152, %v3261
      %v3314 = vadd.f32 %v3153, %v3262
      %v3315 = vld [vmem:[%s2991 + $0x8] sm:$0xff]
      %v3316 = vld [vmem:[%s2991 + $0x10] sm:$0xff]
      %v3317 = vld [vmem:[%s2991 + $0x28] sm:$0xff]
      %v3318 = vld [vmem:[%s2991 + $0x30] sm:$0xff]
      %v3319 = vld [vmem:[%s2991 + $0x48] sm:$0xff]
      %v3320 = vld [vmem:[%s2991 + $0x50] sm:$0xff]
      %v3321 = vld [vmem:[%s2991 + $0x68] sm:$0xff]
      %v3322 = vld [vmem:[%s2991 + $0x70] sm:$0xff]
      %v3323 = vld [vmem:[%s2991 + $0x88] sm:$0xff]
      %v3324 = vld [vmem:[%s2991 + $0x90] sm:$0xff]
      %v3325 = vld [vmem:[%s2991 + $0xa8] sm:$0xff]
      %v3326 = vld [vmem:[%s2991 + $0xb0] sm:$0xff]
      %v3327 = vld [vmem:[%s2991 + $0xc8] sm:$0xff]
      %v3328 = vld [vmem:[%s2991 + $0xd0] sm:$0xff]
      %v3329 = vld [vmem:[%s2991 + $0xe8] sm:$0xff]
      %v3330 = vld [vmem:[%s2991 + $0xf0] sm:$0xff]
      %v3331 = vld [vmem:[%s2991 + $0x108] sm:$0xff]
      %v3332 = vld [vmem:[%s2991 + $0x110] sm:$0xff]
      %v3333 = vld [vmem:[%s2991 + $0x128] sm:$0xff]
      %v3334 = vld [vmem:[%s2991 + $0x130] sm:$0xff]
      %v3335 = vld [vmem:[%s2991 + $0x148] sm:$0xff]
      %v3336 = vld [vmem:[%s2991 + $0x150] sm:$0xff]
      %v3337 = vld [vmem:[%s2991 + $0x168] sm:$0xff]
      %v3338 = vld [vmem:[%s2991 + $0x170] sm:$0xff]
      %v3339 = vld [vmem:[%s2991 + $0x188] sm:$0xff]
      %v3340 = vld [vmem:[%s2991 + $0x190] sm:$0xff]
      %v3341 = vld [vmem:[%s2991 + $0x1a8] sm:$0xff]
      %v3342 = vld [vmem:[%s2991 + $0x1b0] sm:$0xff]
      %v3343 = vld [vmem:[%s2991 + $0x1c8] sm:$0xff]
      %v3344 = vld [vmem:[%s2991 + $0x1d0] sm:$0xff]
      %v3345 = vld [vmem:[%s2991 + $0x1e8] sm:$0xff]
      %v3346 = vld [vmem:[%s2991 + $0x1f0] sm:$0xff]
      %v3347 = vld [vmem:[%s2991 + $0x208] sm:$0xff]
      %v3348 = vld [vmem:[%s2991 + $0x210] sm:$0xff]
      %v3349 = vld [vmem:[%s2991 + $0x228] sm:$0xff]
      %v3350 = vld [vmem:[%s2991 + $0x230] sm:$0xff]
      %v3351 = vld [vmem:[%s2991 + $0x248] sm:$0xff]
      %v3352 = vld [vmem:[%s2991 + $0x250] sm:$0xff]
      %v3353 = vld [vmem:[%s2991 + $0x268] sm:$0xff]
      %v3354 = vld [vmem:[%s2991 + $0x270] sm:$0xff]
      %v3355 = vld [vmem:[%s2991 + $0x288] sm:$0xff]
      %v3356 = vld [vmem:[%s2991 + $0x290] sm:$0xff]
      %v3357 = vld [vmem:[%s2991 + $0x2a8] sm:$0xff]
      %v3358 = vld [vmem:[%s2991 + $0x2b0] sm:$0xff]
      %v3359 = vld [vmem:[%s2991 + $0x2c8] sm:$0xff]
      %v3360 = vld [vmem:[%s2991 + $0x2d0] sm:$0xff]
      %v3361 = vld [vmem:[%s2991 + $0x2e8] sm:$0xff]
      %v3362 = vld [vmem:[%s2991 + $0x2f0] sm:$0xff]
      %v3363 = vld [vmem:[%s2991 + $0x308] sm:$0xff]
      %v3364 = vld [vmem:[%s2991 + $0x310] sm:$0xff]
      %v3365 = vld [vmem:[%s2991 + $0x328] sm:$0xff]
      %v3366 = vld [vmem:[%s2991 + $0x330] sm:$0xff]
      %v3367 = vld [vmem:[%s3044 + $0x2] sm:$0x1]
      %v3368 = vlaneseq
      %v3369 = vshrl.u32 %v3368, 7
      %v3370 = vsub.s32 0, %v3369
      %v3371 = vrot.slane %v3367, %v3370
      %v3372 = vmul.f32 %v3315, %v3371
      %v3373 = vmul.f32 %v3316, %v3371
      %v3374 = vmul.f32 %v3317, %v3371
      %v3375 = vmul.f32 %v3318, %v3371
      %v3376 = vmul.f32 %v3319, %v3371
      %v3377 = vmul.f32 %v3320, %v3371
      %v3378 = vmul.f32 %v3321, %v3371
      %v3379 = vmul.f32 %v3322, %v3371
      %v3380 = vmul.f32 %v3323, %v3371
      %v3381 = vmul.f32 %v3324, %v3371
      %v3382 = vmul.f32 %v3325, %v3371
      %v3383 = vmul.f32 %v3326, %v3371
      %v3384 = vmul.f32 %v3327, %v3371
      %v3385 = vmul.f32 %v3328, %v3371
      %v3386 = vmul.f32 %v3329, %v3371
      %v3387 = vmul.f32 %v3330, %v3371
      %v3388 = vmul.f32 %v3331, %v3371
      %v3389 = vmul.f32 %v3332, %v3371
      %v3390 = vmul.f32 %v3333, %v3371
      %v3391 = vmul.f32 %v3334, %v3371
      %v3392 = vmul.f32 %v3335, %v3371
      %v3393 = vmul.f32 %v3336, %v3371
      %v3394 = vmul.f32 %v3337, %v3371
      %v3395 = vmul.f32 %v3338, %v3371
      %v3396 = vmul.f32 %v3339, %v3371
      %v3397 = vmul.f32 %v3340, %v3371
      %v3398 = vmul.f32 %v3341, %v3371
      %v3399 = vmul.f32 %v3342, %v3371
      %v3400 = vmul.f32 %v3343, %v3371
      %v3401 = vmul.f32 %v3344, %v3371
      %v3402 = vmul.f32 %v3345, %v3371
      %v3403 = vmul.f32 %v3346, %v3371
      %v3404 = vmul.f32 %v3347, %v3371
      %v3405 = vmul.f32 %v3348, %v3371
      %v3406 = vmul.f32 %v3349, %v3371
      %v3407 = vmul.f32 %v3350, %v3371
      %v3408 = vmul.f32 %v3351, %v3371
      %v3409 = vmul.f32 %v3352, %v3371
      %v3410 = vmul.f32 %v3353, %v3371
      %v3411 = vmul.f32 %v3354, %v3371
      %v3412 = vmul.f32 %v3355, %v3371
      %v3413 = vmul.f32 %v3356, %v3371
      %v3414 = vmul.f32 %v3357, %v3371
      %v3415 = vmul.f32 %v3358, %v3371
      %v3416 = vmul.f32 %v3359, %v3371
      %v3417 = vmul.f32 %v3360, %v3371
      %v3418 = vmul.f32 %v3361, %v3371
      %v3419 = vmul.f32 %v3362, %v3371
      %v3420 = vmul.f32 %v3363, %v3371
      %v3421 = vmul.f32 %v3364, %v3371
      %v3422 = vmul.f32 %v3365, %v3371
      %v3423 = vmul.f32 %v3366, %v3371
      %v3424 = vadd.f32 %v3263, %v3372
      %v3425 = vadd.f32 %v3264, %v3373
      %v3426 = vadd.f32 %v3265, %v3374
      %v3427 = vadd.f32 %v3266, %v3375
      %v3428 = vadd.f32 %v3267, %v3376
      %v3429 = vadd.f32 %v3268, %v3377
      %v3430 = vadd.f32 %v3269, %v3378
      %v3431 = vadd.f32 %v3270, %v3379
      %v3432 = vadd.f32 %v3271, %v3380
      %v3433 = vadd.f32 %v3272, %v3381
      %v3434 = vadd.f32 %v3273, %v3382
      %v3435 = vadd.f32 %v3274, %v3383
      %v3436 = vadd.f32 %v3275, %v3384
      %v3437 = vadd.f32 %v3276, %v3385
      %v3438 = vadd.f32 %v3277, %v3386
      %v3439 = vadd.f32 %v3278, %v3387
      %v3440 = vadd.f32 %v3279, %v3388
      %v3441 = vadd.f32 %v3280, %v3389
      %v3442 = vadd.f32 %v3281, %v3390
      %v3443 = vadd.f32 %v3282, %v3391
      %v3444 = vadd.f32 %v3283, %v3392
      %v3445 = vadd.f32 %v3284, %v3393
      %v3446 = vadd.f32 %v3285, %v3394
      %v3447 = vadd.f32 %v3286, %v3395
      %v3448 = vadd.f32 %v3287, %v3396
      %v3449 = vadd.f32 %v3288, %v3397
      %v3450 = vadd.f32 %v3289, %v3398
      %v3451 = vadd.f32 %v3290, %v3399
      %v3452 = vadd.f32 %v3291, %v3400
      %v3453 = vadd.f32 %v3292, %v3401
      %v3454 = vadd.f32 %v3293, %v3402
      %v3455 = vadd.f32 %v3294, %v3403
      %v3456 = vadd.f32 %v3295, %v3404
      %v3457 = vadd.f32 %v3296, %v3405
      %v3458 = vadd.f32 %v3297, %v3406
      %v3459 = vadd.f32 %v3298, %v3407
      %v3460 = vadd.f32 %v3299, %v3408
      %v3461 = vadd.f32 %v3300, %v3409
      %v3462 = vadd.f32 %v3301, %v3410
      %v3463 = vadd.f32 %v3302, %v3411
      %v3464 = vadd.f32 %v3303, %v3412
      %v3465 = vadd.f32 %v3304, %v3413
      %v3466 = vadd.f32 %v3305, %v3414
      %v3467 = vadd.f32 %v3306, %v3415
      %v3468 = vadd.f32 %v3307, %v3416
      %v3469 = vadd.f32 %v3308, %v3417
      %v3470 = vadd.f32 %v3309, %v3418
      %v3471 = vadd.f32 %v3310, %v3419
      %v3472 = vadd.f32 %v3311, %v3420
      %v3473 = vadd.f32 %v3312, %v3421
      %v3474 = vadd.f32 %v3313, %v3422
      %v3475 = vadd.f32 %v3314, %v3423
      %v3476 = vld [vmem:[%s2991 + $0x9] sm:$0xff]
      %v3477 = vld [vmem:[%s2991 + $0x11] sm:$0xff]
      %v3478 = vld [vmem:[%s2991 + $0x29] sm:$0xff]
      %v3479 = vld [vmem:[%s2991 + $0x31] sm:$0xff]
      %v3480 = vld [vmem:[%s2991 + $0x49] sm:$0xff]
      %v3481 = vld [vmem:[%s2991 + $0x51] sm:$0xff]
      %v3482 = vld [vmem:[%s2991 + $0x69] sm:$0xff]
      %v3483 = vld [vmem:[%s2991 + $0x71] sm:$0xff]
      %v3484 = vld [vmem:[%s2991 + $0x89] sm:$0xff]
      %v3485 = vld [vmem:[%s2991 + $0x91] sm:$0xff]
      %v3486 = vld [vmem:[%s2991 + $0xa9] sm:$0xff]
      %v3487 = vld [vmem:[%s2991 + $0xb1] sm:$0xff]
      %v3488 = vld [vmem:[%s2991 + $0xc9] sm:$0xff]
      %v3489 = vld [vmem:[%s2991 + $0xd1] sm:$0xff]
      %v3490 = vld [vmem:[%s2991 + $0xe9] sm:$0xff]
      %v3491 = vld [vmem:[%s2991 + $0xf1] sm:$0xff]
      %v3492 = vld [vmem:[%s2991 + $0x109] sm:$0xff]
      %v3493 = vld [vmem:[%s2991 + $0x111] sm:$0xff]
      %v3494 = vld [vmem:[%s2991 + $0x129] sm:$0xff]
      %v3495 = vld [vmem:[%s2991 + $0x131] sm:$0xff]
      %v3496 = vld [vmem:[%s2991 + $0x149] sm:$0xff]
      %v3497 = vld [vmem:[%s2991 + $0x151] sm:$0xff]
      %v3498 = vld [vmem:[%s2991 + $0x169] sm:$0xff]
      %v3499 = vld [vmem:[%s2991 + $0x171] sm:$0xff]
      %v3500 = vld [vmem:[%s2991 + $0x189] sm:$0xff]
      %v3501 = vld [vmem:[%s2991 + $0x191] sm:$0xff]
      %v3502 = vld [vmem:[%s2991 + $0x1a9] sm:$0xff]
      %v3503 = vld [vmem:[%s2991 + $0x1b1] sm:$0xff]
      %v3504 = vld [vmem:[%s2991 + $0x1c9] sm:$0xff]
      %v3505 = vld [vmem:[%s2991 + $0x1d1] sm:$0xff]
      %v3506 = vld [vmem:[%s2991 + $0x1e9] sm:$0xff]
      %v3507 = vld [vmem:[%s2991 + $0x1f1] sm:$0xff]
      %v3508 = vld [vmem:[%s2991 + $0x209] sm:$0xff]
      %v3509 = vld [vmem:[%s2991 + $0x211] sm:$0xff]
      %v3510 = vld [vmem:[%s2991 + $0x229] sm:$0xff]
      %v3511 = vld [vmem:[%s2991 + $0x231] sm:$0xff]
      %v3512 = vld [vmem:[%s2991 + $0x249] sm:$0xff]
      %v3513 = vld [vmem:[%s2991 + $0x251] sm:$0xff]
      %v3514 = vld [vmem:[%s2991 + $0x269] sm:$0xff]
      %v3515 = vld [vmem:[%s2991 + $0x271] sm:$0xff]
      %v3516 = vld [vmem:[%s2991 + $0x289] sm:$0xff]
      %v3517 = vld [vmem:[%s2991 + $0x291] sm:$0xff]
      %v3518 = vld [vmem:[%s2991 + $0x2a9] sm:$0xff]
      %v3519 = vld [vmem:[%s2991 + $0x2b1] sm:$0xff]
      %v3520 = vld [vmem:[%s2991 + $0x2c9] sm:$0xff]
      %v3521 = vld [vmem:[%s2991 + $0x2d1] sm:$0xff]
      %v3522 = vld [vmem:[%s2991 + $0x2e9] sm:$0xff]
      %v3523 = vld [vmem:[%s2991 + $0x2f1] sm:$0xff]
      %v3524 = vld [vmem:[%s2991 + $0x309] sm:$0xff]
      %v3525 = vld [vmem:[%s2991 + $0x311] sm:$0xff]
      %v3526 = vld [vmem:[%s2991 + $0x329] sm:$0xff]
      %v3527 = vld [vmem:[%s2991 + $0x331] sm:$0xff]
      %v3528 = vld [vmem:[%s3044 + $0x3] sm:$0x1]
      %v3529 = vlaneseq
      %v3530 = vshrl.u32 %v3529, 7
      %v3531 = vsub.s32 0, %v3530
      %v3532 = vrot.slane %v3528, %v3531
      %v3533 = vmul.f32 %v3476, %v3532
      %v3534 = vmul.f32 %v3477, %v3532
      %v3535 = vmul.f32 %v3478, %v3532
      %v3536 = vmul.f32 %v3479, %v3532
      %v3537 = vmul.f32 %v3480, %v3532
      %v3538 = vmul.f32 %v3481, %v3532
      %v3539 = vmul.f32 %v3482, %v3532
      %v3540 = vmul.f32 %v3483, %v3532
      %v3541 = vmul.f32 %v3484, %v3532
      %v3542 = vmul.f32 %v3485, %v3532
      %v3543 = vmul.f32 %v3486, %v3532
      %v3544 = vmul.f32 %v3487, %v3532
      %v3545 = vmul.f32 %v3488, %v3532
      %v3546 = vmul.f32 %v3489, %v3532
      %v3547 = vmul.f32 %v3490, %v3532
      %v3548 = vmul.f32 %v3491, %v3532
      %v3549 = vmul.f32 %v3492, %v3532
      %v3550 = vmul.f32 %v3493, %v3532
      %v3551 = vmul.f32 %v3494, %v3532
      %v3552 = vmul.f32 %v3495, %v3532
      %v3553 = vmul.f32 %v3496, %v3532
      %v3554 = vmul.f32 %v3497, %v3532
      %v3555 = vmul.f32 %v3498, %v3532
      %v3556 = vmul.f32 %v3499, %v3532
      %v3557 = vmul.f32 %v3500, %v3532
      %v3558 = vmul.f32 %v3501, %v3532
      %v3559 = vmul.f32 %v3502, %v3532
      %v3560 = vmul.f32 %v3503, %v3532
      %v3561 = vmul.f32 %v3504, %v3532
      %v3562 = vmul.f32 %v3505, %v3532
      %v3563 = vmul.f32 %v3506, %v3532
      %v3564 = vmul.f32 %v3507, %v3532
      %v3565 = vmul.f32 %v3508, %v3532
      %v3566 = vmul.f32 %v3509, %v3532
      %v3567 = vmul.f32 %v3510, %v3532
      %v3568 = vmul.f32 %v3511, %v3532
      %v3569 = vmul.f32 %v3512, %v3532
      %v3570 = vmul.f32 %v3513, %v3532
      %v3571 = vmul.f32 %v3514, %v3532
      %v3572 = vmul.f32 %v3515, %v3532
      %v3573 = vmul.f32 %v3516, %v3532
      %v3574 = vmul.f32 %v3517, %v3532
      %v3575 = vmul.f32 %v3518, %v3532
      %v3576 = vmul.f32 %v3519, %v3532
      %v3577 = vmul.f32 %v3520, %v3532
      %v3578 = vmul.f32 %v3521, %v3532
      %v3579 = vmul.f32 %v3522, %v3532
      %v3580 = vmul.f32 %v3523, %v3532
      %v3581 = vmul.f32 %v3524, %v3532
      %v3582 = vmul.f32 %v3525, %v3532
      %v3583 = vmul.f32 %v3526, %v3532
      %v3584 = vmul.f32 %v3527, %v3532
      %v3585 = vadd.f32 %v3424, %v3533
      %v3586 = vadd.f32 %v3425, %v3534
      %v3587 = vadd.f32 %v3426, %v3535
      %v3588 = vadd.f32 %v3427, %v3536
      %v3589 = vadd.f32 %v3428, %v3537
      %v3590 = vadd.f32 %v3429, %v3538
      %v3591 = vadd.f32 %v3430, %v3539
      %v3592 = vadd.f32 %v3431, %v3540
      %v3593 = vadd.f32 %v3432, %v3541
      %v3594 = vadd.f32 %v3433, %v3542
      %v3595 = vadd.f32 %v3434, %v3543
      %v3596 = vadd.f32 %v3435, %v3544
      %v3597 = vadd.f32 %v3436, %v3545
      %v3598 = vadd.f32 %v3437, %v3546
      %v3599 = vadd.f32 %v3438, %v3547
      %v3600 = vadd.f32 %v3439, %v3548
      %v3601 = vadd.f32 %v3440, %v3549
      %v3602 = vadd.f32 %v3441, %v3550
      %v3603 = vadd.f32 %v3442, %v3551
      %v3604 = vadd.f32 %v3443, %v3552
      %v3605 = vadd.f32 %v3444, %v3553
      %v3606 = vadd.f32 %v3445, %v3554
      %v3607 = vadd.f32 %v3446, %v3555
      %v3608 = vadd.f32 %v3447, %v3556
      %v3609 = vadd.f32 %v3448, %v3557
      %v3610 = vadd.f32 %v3449, %v3558
      %v3611 = vadd.f32 %v3450, %v3559
      %v3612 = vadd.f32 %v3451, %v3560
      %v3613 = vadd.f32 %v3452, %v3561
      %v3614 = vadd.f32 %v3453, %v3562
      %v3615 = vadd.f32 %v3454, %v3563
      %v3616 = vadd.f32 %v3455, %v3564
      %v3617 = vadd.f32 %v3456, %v3565
      %v3618 = vadd.f32 %v3457, %v3566
      %v3619 = vadd.f32 %v3458, %v3567
      %v3620 = vadd.f32 %v3459, %v3568
      %v3621 = vadd.f32 %v3460, %v3569
      %v3622 = vadd.f32 %v3461, %v3570
      %v3623 = vadd.f32 %v3462, %v3571
      %v3624 = vadd.f32 %v3463, %v3572
      %v3625 = vadd.f32 %v3464, %v3573
      %v3626 = vadd.f32 %v3465, %v3574
      %v3627 = vadd.f32 %v3466, %v3575
      %v3628 = vadd.f32 %v3467, %v3576
      %v3629 = vadd.f32 %v3468, %v3577
      %v3630 = vadd.f32 %v3469, %v3578
      %v3631 = vadd.f32 %v3470, %v3579
      %v3632 = vadd.f32 %v3471, %v3580
      %v3633 = vadd.f32 %v3472, %v3581
      %v3634 = vadd.f32 %v3473, %v3582
      %v3635 = vadd.f32 %v3474, %v3583
      %v3636 = vadd.f32 %v3475, %v3584
      %v3637 = vld [vmem:[%s2991 + $0xa] sm:$0xff]
      %v3638 = vld [vmem:[%s2991 + $0x12] sm:$0xff]
      %v3639 = vld [vmem:[%s2991 + $0x2a] sm:$0xff]
      %v3640 = vld [vmem:[%s2991 + $0x32] sm:$0xff]
      %v3641 = vld [vmem:[%s2991 + $0x4a] sm:$0xff]
      %v3642 = vld [vmem:[%s2991 + $0x52] sm:$0xff]
      %v3643 = vld [vmem:[%s2991 + $0x6a] sm:$0xff]
      %v3644 = vld [vmem:[%s2991 + $0x72] sm:$0xff]
      %v3645 = vld [vmem:[%s2991 + $0x8a] sm:$0xff]
      %v3646 = vld [vmem:[%s2991 + $0x92] sm:$0xff]
      %v3647 = vld [vmem:[%s2991 + $0xaa] sm:$0xff]
      %v3648 = vld [vmem:[%s2991 + $0xb2] sm:$0xff]
      %v3649 = vld [vmem:[%s2991 + $0xca] sm:$0xff]
      %v3650 = vld [vmem:[%s2991 + $0xd2] sm:$0xff]
      %v3651 = vld [vmem:[%s2991 + $0xea] sm:$0xff]
      %v3652 = vld [vmem:[%s2991 + $0xf2] sm:$0xff]
      %v3653 = vld [vmem:[%s2991 + $0x10a] sm:$0xff]
      %v3654 = vld [vmem:[%s2991 + $0x112] sm:$0xff]
      %v3655 = vld [vmem:[%s2991 + $0x12a] sm:$0xff]
      %v3656 = vld [vmem:[%s2991 + $0x132] sm:$0xff]
      %v3657 = vld [vmem:[%s2991 + $0x14a] sm:$0xff]
      %v3658 = vld [vmem:[%s2991 + $0x152] sm:$0xff]
      %v3659 = vld [vmem:[%s2991 + $0x16a] sm:$0xff]
      %v3660 = vld [vmem:[%s2991 + $0x172] sm:$0xff]
      %v3661 = vld [vmem:[%s2991 + $0x18a] sm:$0xff]
      %v3662 = vld [vmem:[%s2991 + $0x192] sm:$0xff]
      %v3663 = vld [vmem:[%s2991 + $0x1aa] sm:$0xff]
      %v3664 = vld [vmem:[%s2991 + $0x1b2] sm:$0xff]
      %v3665 = vld [vmem:[%s2991 + $0x1ca] sm:$0xff]
      %v3666 = vld [vmem:[%s2991 + $0x1d2] sm:$0xff]
      %v3667 = vld [vmem:[%s2991 + $0x1ea] sm:$0xff]
      %v3668 = vld [vmem:[%s2991 + $0x1f2] sm:$0xff]
      %v3669 = vld [vmem:[%s2991 + $0x20a] sm:$0xff]
      %v3670 = vld [vmem:[%s2991 + $0x212] sm:$0xff]
      %v3671 = vld [vmem:[%s2991 + $0x22a] sm:$0xff]
      %v3672 = vld [vmem:[%s2991 + $0x232] sm:$0xff]
      %v3673 = vld [vmem:[%s2991 + $0x24a] sm:$0xff]
      %v3674 = vld [vmem:[%s2991 + $0x252] sm:$0xff]
      %v3675 = vld [vmem:[%s2991 + $0x26a] sm:$0xff]
      %v3676 = vld [vmem:[%s2991 + $0x272] sm:$0xff]
      %v3677 = vld [vmem:[%s2991 + $0x28a] sm:$0xff]
      %v3678 = vld [vmem:[%s2991 + $0x292] sm:$0xff]
      %v3679 = vld [vmem:[%s2991 + $0x2aa] sm:$0xff]
      %v3680 = vld [vmem:[%s2991 + $0x2b2] sm:$0xff]
      %v3681 = vld [vmem:[%s2991 + $0x2ca] sm:$0xff]
      %v3682 = vld [vmem:[%s2991 + $0x2d2] sm:$0xff]
      %v3683 = vld [vmem:[%s2991 + $0x2ea] sm:$0xff]
      %v3684 = vld [vmem:[%s2991 + $0x2f2] sm:$0xff]
      %v3685 = vld [vmem:[%s2991 + $0x30a] sm:$0xff]
      %v3686 = vld [vmem:[%s2991 + $0x312] sm:$0xff]
      %v3687 = vld [vmem:[%s2991 + $0x32a] sm:$0xff]
      %v3688 = vld [vmem:[%s2991 + $0x332] sm:$0xff]
      %v3689 = vld [vmem:[%s3044 + $0x4] sm:$0x1]
      %v3690 = vlaneseq
      %v3691 = vshrl.u32 %v3690, 7
      %v3692 = vsub.s32 0, %v3691
      %v3693 = vrot.slane %v3689, %v3692
      %v3694 = vmul.f32 %v3637, %v3693
      %v3695 = vmul.f32 %v3638, %v3693
      %v3696 = vmul.f32 %v3639, %v3693
      %v3697 = vmul.f32 %v3640, %v3693
      %v3698 = vmul.f32 %v3641, %v3693
      %v3699 = vmul.f32 %v3642, %v3693
      %v3700 = vmul.f32 %v3643, %v3693
      %v3701 = vmul.f32 %v3644, %v3693
      %v3702 = vmul.f32 %v3645, %v3693
      %v3703 = vmul.f32 %v3646, %v3693
      %v3704 = vmul.f32 %v3647, %v3693
      %v3705 = vmul.f32 %v3648, %v3693
      %v3706 = vmul.f32 %v3649, %v3693
      %v3707 = vmul.f32 %v3650, %v3693
      %v3708 = vmul.f32 %v3651, %v3693
      %v3709 = vmul.f32 %v3652, %v3693
      %v3710 = vmul.f32 %v3653, %v3693
      %v3711 = vmul.f32 %v3654, %v3693
      %v3712 = vmul.f32 %v3655, %v3693
      %v3713 = vmul.f32 %v3656, %v3693
      %v3714 = vmul.f32 %v3657, %v3693
      %v3715 = vmul.f32 %v3658, %v3693
      %v3716 = vmul.f32 %v3659, %v3693
      %v3717 = vmul.f32 %v3660, %v3693
      %v3718 = vmul.f32 %v3661, %v3693
      %v3719 = vmul.f32 %v3662, %v3693
      %v3720 = vmul.f32 %v3663, %v3693
      %v3721 = vmul.f32 %v3664, %v3693
      %v3722 = vmul.f32 %v3665, %v3693
      %v3723 = vmul.f32 %v3666, %v3693
      %v3724 = vmul.f32 %v3667, %v3693
      %v3725 = vmul.f32 %v3668, %v3693
      %v3726 = vmul.f32 %v3669, %v3693
      %v3727 = vmul.f32 %v3670, %v3693
      %v3728 = vmul.f32 %v3671, %v3693
      %v3729 = vmul.f32 %v3672, %v3693
      %v3730 = vmul.f32 %v3673, %v3693
      %v3731 = vmul.f32 %v3674, %v3693
      %v3732 = vmul.f32 %v3675, %v3693
      %v3733 = vmul.f32 %v3676, %v3693
      %v3734 = vmul.f32 %v3677, %v3693
      %v3735 = vmul.f32 %v3678, %v3693
      %v3736 = vmul.f32 %v3679, %v3693
      %v3737 = vmul.f32 %v3680, %v3693
      %v3738 = vmul.f32 %v3681, %v3693
      %v3739 = vmul.f32 %v3682, %v3693
      %v3740 = vmul.f32 %v3683, %v3693
      %v3741 = vmul.f32 %v3684, %v3693
      %v3742 = vmul.f32 %v3685, %v3693
      %v3743 = vmul.f32 %v3686, %v3693
      %v3744 = vmul.f32 %v3687, %v3693
      %v3745 = vmul.f32 %v3688, %v3693
      %v3746 = vadd.f32 %v3585, %v3694
      %v3747 = vadd.f32 %v3586, %v3695
      %v3748 = vadd.f32 %v3587, %v3696
      %v3749 = vadd.f32 %v3588, %v3697
      %v3750 = vadd.f32 %v3589, %v3698
      %v3751 = vadd.f32 %v3590, %v3699
      %v3752 = vadd.f32 %v3591, %v3700
      %v3753 = vadd.f32 %v3592, %v3701
      %v3754 = vadd.f32 %v3593, %v3702
      %v3755 = vadd.f32 %v3594, %v3703
      %v3756 = vadd.f32 %v3595, %v3704
      %v3757 = vadd.f32 %v3596, %v3705
      %v3758 = vadd.f32 %v3597, %v3706
      %v3759 = vadd.f32 %v3598, %v3707
      %v3760 = vadd.f32 %v3599, %v3708
      %v3761 = vadd.f32 %v3600, %v3709
      %v3762 = vadd.f32 %v3601, %v3710
      %v3763 = vadd.f32 %v3602, %v3711
      %v3764 = vadd.f32 %v3603, %v3712
      %v3765 = vadd.f32 %v3604, %v3713
      %v3766 = vadd.f32 %v3605, %v3714
      %v3767 = vadd.f32 %v3606, %v3715
      %v3768 = vadd.f32 %v3607, %v3716
      %v3769 = vadd.f32 %v3608, %v3717
      %v3770 = vadd.f32 %v3609, %v3718
      %v3771 = vadd.f32 %v3610, %v3719
      %v3772 = vadd.f32 %v3611, %v3720
      %v3773 = vadd.f32 %v3612, %v3721
      %v3774 = vadd.f32 %v3613, %v3722
      %v3775 = vadd.f32 %v3614, %v3723
      %v3776 = vadd.f32 %v3615, %v3724
      %v3777 = vadd.f32 %v3616, %v3725
      %v3778 = vadd.f32 %v3617, %v3726
      %v3779 = vadd.f32 %v3618, %v3727
      %v3780 = vadd.f32 %v3619, %v3728
      %v3781 = vadd.f32 %v3620, %v3729
      %v3782 = vadd.f32 %v3621, %v3730
      %v3783 = vadd.f32 %v3622, %v3731
      %v3784 = vadd.f32 %v3623, %v3732
      %v3785 = vadd.f32 %v3624, %v3733
      %v3786 = vadd.f32 %v3625, %v3734
      %v3787 = vadd.f32 %v3626, %v3735
      %v3788 = vadd.f32 %v3627, %v3736
      %v3789 = vadd.f32 %v3628, %v3737
      %v3790 = vadd.f32 %v3629, %v3738
      %v3791 = vadd.f32 %v3630, %v3739
      %v3792 = vadd.f32 %v3631, %v3740
      %v3793 = vadd.f32 %v3632, %v3741
      %v3794 = vadd.f32 %v3633, %v3742
      %v3795 = vadd.f32 %v3634, %v3743
      %v3796 = vadd.f32 %v3635, %v3744
      %v3797 = vadd.f32 %v3636, %v3745
      %s3798 = scalar_lea.vmem [#allocation2], 128
      %v3799 = vld [vmem:[%s3798 + $0x6] sm:$0xff]
      %v3800 = vld [vmem:[%s3798 + $0xe] sm:$0xff]
      %v3801 = vld [vmem:[%s3798 + $0x26] sm:$0xff]
      %v3802 = vld [vmem:[%s3798 + $0x2e] sm:$0xff]
      %v3803 = vld [vmem:[%s3798 + $0x46] sm:$0xff]
      %v3804 = vld [vmem:[%s3798 + $0x4e] sm:$0xff]
      %v3805 = vld [vmem:[%s3798 + $0x66] sm:$0xff]
      %v3806 = vld [vmem:[%s3798 + $0x6e] sm:$0xff]
      %v3807 = vld [vmem:[%s3798 + $0x86] sm:$0xff]
      %v3808 = vld [vmem:[%s3798 + $0x8e] sm:$0xff]
      %v3809 = vld [vmem:[%s3798 + $0xa6] sm:$0xff]
      %v3810 = vld [vmem:[%s3798 + $0xae] sm:$0xff]
      %v3811 = vld [vmem:[%s3798 + $0xc6] sm:$0xff]
      %v3812 = vld [vmem:[%s3798 + $0xce] sm:$0xff]
      %v3813 = vld [vmem:[%s3798 + $0xe6] sm:$0xff]
      %v3814 = vld [vmem:[%s3798 + $0xee] sm:$0xff]
      %v3815 = vld [vmem:[%s3798 + $0x106] sm:$0xff]
      %v3816 = vld [vmem:[%s3798 + $0x10e] sm:$0xff]
      %v3817 = vld [vmem:[%s3798 + $0x126] sm:$0xff]
      %v3818 = vld [vmem:[%s3798 + $0x12e] sm:$0xff]
      %v3819 = vld [vmem:[%s3798 + $0x146] sm:$0xff]
      %v3820 = vld [vmem:[%s3798 + $0x14e] sm:$0xff]
      %v3821 = vld [vmem:[%s3798 + $0x166] sm:$0xff]
      %v3822 = vld [vmem:[%s3798 + $0x16e] sm:$0xff]
      %v3823 = vld [vmem:[%s3798 + $0x186] sm:$0xff]
      %v3824 = vld [vmem:[%s3798 + $0x18e] sm:$0xff]
      %v3825 = vld [vmem:[%s3798 + $0x1a6] sm:$0xff]
      %v3826 = vld [vmem:[%s3798 + $0x1ae] sm:$0xff]
      %v3827 = vld [vmem:[%s3798 + $0x1c6] sm:$0xff]
      %v3828 = vld [vmem:[%s3798 + $0x1ce] sm:$0xff]
      %v3829 = vld [vmem:[%s3798 + $0x1e6] sm:$0xff]
      %v3830 = vld [vmem:[%s3798 + $0x1ee] sm:$0xff]
      %v3831 = vld [vmem:[%s3798 + $0x206] sm:$0xff]
      %v3832 = vld [vmem:[%s3798 + $0x20e] sm:$0xff]
      %v3833 = vld [vmem:[%s3798 + $0x226] sm:$0xff]
      %v3834 = vld [vmem:[%s3798 + $0x22e] sm:$0xff]
      %v3835 = vld [vmem:[%s3798 + $0x246] sm:$0xff]
      %v3836 = vld [vmem:[%s3798 + $0x24e] sm:$0xff]
      %v3837 = vld [vmem:[%s3798 + $0x266] sm:$0xff]
      %v3838 = vld [vmem:[%s3798 + $0x26e] sm:$0xff]
      %v3839 = vld [vmem:[%s3798 + $0x286] sm:$0xff]
      %v3840 = vld [vmem:[%s3798 + $0x28e] sm:$0xff]
      %v3841 = vld [vmem:[%s3798 + $0x2a6] sm:$0xff]
      %v3842 = vld [vmem:[%s3798 + $0x2ae] sm:$0xff]
      %v3843 = vld [vmem:[%s3798 + $0x2c6] sm:$0xff]
      %v3844 = vld [vmem:[%s3798 + $0x2ce] sm:$0xff]
      %v3845 = vld [vmem:[%s3798 + $0x2e6] sm:$0xff]
      %v3846 = vld [vmem:[%s3798 + $0x2ee] sm:$0xff]
      %v3847 = vld [vmem:[%s3798 + $0x306] sm:$0xff]
      %v3848 = vld [vmem:[%s3798 + $0x30e] sm:$0xff]
      %v3849 = vld [vmem:[%s3798 + $0x326] sm:$0xff]
      %v3850 = vld [vmem:[%s3798 + $0x32e] sm:$0xff]
      %s3851 = scalar_lea.vmem %s1, 32
      %v3852 = vld [vmem:[%s3851] sm:$0x1]
      %v3853 = vlaneseq
      %v3854 = vshrl.u32 %v3853, 7
      %v3855 = vsub.s32 0, %v3854
      %v3856 = vrot.slane %v3852, %v3855
      %v3857 = vmul.f32 %v3799, %v3856
      %v3858 = vmul.f32 %v3800, %v3856
      %v3859 = vmul.f32 %v3801, %v3856
      %v3860 = vmul.f32 %v3802, %v3856
      %v3861 = vmul.f32 %v3803, %v3856
      %v3862 = vmul.f32 %v3804, %v3856
      %v3863 = vmul.f32 %v3805, %v3856
      %v3864 = vmul.f32 %v3806, %v3856
      %v3865 = vmul.f32 %v3807, %v3856
      %v3866 = vmul.f32 %v3808, %v3856
      %v3867 = vmul.f32 %v3809, %v3856
      %v3868 = vmul.f32 %v3810, %v3856
      %v3869 = vmul.f32 %v3811, %v3856
      %v3870 = vmul.f32 %v3812, %v3856
      %v3871 = vmul.f32 %v3813, %v3856
      %v3872 = vmul.f32 %v3814, %v3856
      %v3873 = vmul.f32 %v3815, %v3856
      %v3874 = vmul.f32 %v3816, %v3856
      %v3875 = vmul.f32 %v3817, %v3856
      %v3876 = vmul.f32 %v3818, %v3856
      %v3877 = vmul.f32 %v3819, %v3856
      %v3878 = vmul.f32 %v3820, %v3856
      %v3879 = vmul.f32 %v3821, %v3856
      %v3880 = vmul.f32 %v3822, %v3856
      %v3881 = vmul.f32 %v3823, %v3856
      %v3882 = vmul.f32 %v3824, %v3856
      %v3883 = vmul.f32 %v3825, %v3856
      %v3884 = vmul.f32 %v3826, %v3856
      %v3885 = vmul.f32 %v3827, %v3856
      %v3886 = vmul.f32 %v3828, %v3856
      %v3887 = vmul.f32 %v3829, %v3856
      %v3888 = vmul.f32 %v3830, %v3856
      %v3889 = vmul.f32 %v3831, %v3856
      %v3890 = vmul.f32 %v3832, %v3856
      %v3891 = vmul.f32 %v3833, %v3856
      %v3892 = vmul.f32 %v3834, %v3856
      %v3893 = vmul.f32 %v3835, %v3856
      %v3894 = vmul.f32 %v3836, %v3856
      %v3895 = vmul.f32 %v3837, %v3856
      %v3896 = vmul.f32 %v3838, %v3856
      %v3897 = vmul.f32 %v3839, %v3856
      %v3898 = vmul.f32 %v3840, %v3856
      %v3899 = vmul.f32 %v3841, %v3856
      %v3900 = vmul.f32 %v3842, %v3856
      %v3901 = vmul.f32 %v3843, %v3856
      %v3902 = vmul.f32 %v3844, %v3856
      %v3903 = vmul.f32 %v3845, %v3856
      %v3904 = vmul.f32 %v3846, %v3856
      %v3905 = vmul.f32 %v3847, %v3856
      %v3906 = vmul.f32 %v3848, %v3856
      %v3907 = vmul.f32 %v3849, %v3856
      %v3908 = vmul.f32 %v3850, %v3856
      %v3909 = vadd.f32 %v3746, %v3857
      %v3910 = vadd.f32 %v3747, %v3858
      %v3911 = vadd.f32 %v3748, %v3859
      %v3912 = vadd.f32 %v3749, %v3860
      %v3913 = vadd.f32 %v3750, %v3861
      %v3914 = vadd.f32 %v3751, %v3862
      %v3915 = vadd.f32 %v3752, %v3863
      %v3916 = vadd.f32 %v3753, %v3864
      %v3917 = vadd.f32 %v3754, %v3865
      %v3918 = vadd.f32 %v3755, %v3866
      %v3919 = vadd.f32 %v3756, %v3867
      %v3920 = vadd.f32 %v3757, %v3868
      %v3921 = vadd.f32 %v3758, %v3869
      %v3922 = vadd.f32 %v3759, %v3870
      %v3923 = vadd.f32 %v3760, %v3871
      %v3924 = vadd.f32 %v3761, %v3872
      %v3925 = vadd.f32 %v3762, %v3873
      %v3926 = vadd.f32 %v3763, %v3874
      %v3927 = vadd.f32 %v3764, %v3875
      %v3928 = vadd.f32 %v3765, %v3876
      %v3929 = vadd.f32 %v3766, %v3877
      %v3930 = vadd.f32 %v3767, %v3878
      %v3931 = vadd.f32 %v3768, %v3879
      %v3932 = vadd.f32 %v3769, %v3880
      %v3933 = vadd.f32 %v3770, %v3881
      %v3934 = vadd.f32 %v3771, %v3882
      %v3935 = vadd.f32 %v3772, %v3883
      %v3936 = vadd.f32 %v3773, %v3884
      %v3937 = vadd.f32 %v3774, %v3885
      %v3938 = vadd.f32 %v3775, %v3886
      %v3939 = vadd.f32 %v3776, %v3887
      %v3940 = vadd.f32 %v3777, %v3888
      %v3941 = vadd.f32 %v3778, %v3889
      %v3942 = vadd.f32 %v3779, %v3890
      %v3943 = vadd.f32 %v3780, %v3891
      %v3944 = vadd.f32 %v3781, %v3892
      %v3945 = vadd.f32 %v3782, %v3893
      %v3946 = vadd.f32 %v3783, %v3894
      %v3947 = vadd.f32 %v3784, %v3895
      %v3948 = vadd.f32 %v3785, %v3896
      %v3949 = vadd.f32 %v3786, %v3897
      %v3950 = vadd.f32 %v3787, %v3898
      %v3951 = vadd.f32 %v3788, %v3899
      %v3952 = vadd.f32 %v3789, %v3900
      %v3953 = vadd.f32 %v3790, %v3901
      %v3954 = vadd.f32 %v3791, %v3902
      %v3955 = vadd.f32 %v3792, %v3903
      %v3956 = vadd.f32 %v3793, %v3904
      %v3957 = vadd.f32 %v3794, %v3905
      %v3958 = vadd.f32 %v3795, %v3906
      %v3959 = vadd.f32 %v3796, %v3907
      %v3960 = vadd.f32 %v3797, %v3908
      %v3961 = vld [vmem:[%s3798 + $0x7] sm:$0xff]
      %v3962 = vld [vmem:[%s3798 + $0xf] sm:$0xff]
      %v3963 = vld [vmem:[%s3798 + $0x27] sm:$0xff]
      %v3964 = vld [vmem:[%s3798 + $0x2f] sm:$0xff]
      %v3965 = vld [vmem:[%s3798 + $0x47] sm:$0xff]
      %v3966 = vld [vmem:[%s3798 + $0x4f] sm:$0xff]
      %v3967 = vld [vmem:[%s3798 + $0x67] sm:$0xff]
      %v3968 = vld [vmem:[%s3798 + $0x6f] sm:$0xff]
      %v3969 = vld [vmem:[%s3798 + $0x87] sm:$0xff]
      %v3970 = vld [vmem:[%s3798 + $0x8f] sm:$0xff]
      %v3971 = vld [vmem:[%s3798 + $0xa7] sm:$0xff]
      %v3972 = vld [vmem:[%s3798 + $0xaf] sm:$0xff]
      %v3973 = vld [vmem:[%s3798 + $0xc7] sm:$0xff]
      %v3974 = vld [vmem:[%s3798 + $0xcf] sm:$0xff]
      %v3975 = vld [vmem:[%s3798 + $0xe7] sm:$0xff]
      %v3976 = vld [vmem:[%s3798 + $0xef] sm:$0xff]
      %v3977 = vld [vmem:[%s3798 + $0x107] sm:$0xff]
      %v3978 = vld [vmem:[%s3798 + $0x10f] sm:$0xff]
      %v3979 = vld [vmem:[%s3798 + $0x127] sm:$0xff]
      %v3980 = vld [vmem:[%s3798 + $0x12f] sm:$0xff]
      %v3981 = vld [vmem:[%s3798 + $0x147] sm:$0xff]
      %v3982 = vld [vmem:[%s3798 + $0x14f] sm:$0xff]
      %v3983 = vld [vmem:[%s3798 + $0x167] sm:$0xff]
      %v3984 = vld [vmem:[%s3798 + $0x16f] sm:$0xff]
      %v3985 = vld [vmem:[%s3798 + $0x187] sm:$0xff]
      %v3986 = vld [vmem:[%s3798 + $0x18f] sm:$0xff]
      %v3987 = vld [vmem:[%s3798 + $0x1a7] sm:$0xff]
      %v3988 = vld [vmem:[%s3798 + $0x1af] sm:$0xff]
      %v3989 = vld [vmem:[%s3798 + $0x1c7] sm:$0xff]
      %v3990 = vld [vmem:[%s3798 + $0x1cf] sm:$0xff]
      %v3991 = vld [vmem:[%s3798 + $0x1e7] sm:$0xff]
      %v3992 = vld [vmem:[%s3798 + $0x1ef] sm:$0xff]
      %v3993 = vld [vmem:[%s3798 + $0x207] sm:$0xff]
      %v3994 = vld [vmem:[%s3798 + $0x20f] sm:$0xff]
      %v3995 = vld [vmem:[%s3798 + $0x227] sm:$0xff]
      %v3996 = vld [vmem:[%s3798 + $0x22f] sm:$0xff]
      %v3997 = vld [vmem:[%s3798 + $0x247] sm:$0xff]
      %v3998 = vld [vmem:[%s3798 + $0x24f] sm:$0xff]
      %v3999 = vld [vmem:[%s3798 + $0x267] sm:$0xff]
      %v4000 = vld [vmem:[%s3798 + $0x26f] sm:$0xff]
      %v4001 = vld [vmem:[%s3798 + $0x287] sm:$0xff]
      %v4002 = vld [vmem:[%s3798 + $0x28f] sm:$0xff]
      %v4003 = vld [vmem:[%s3798 + $0x2a7] sm:$0xff]
      %v4004 = vld [vmem:[%s3798 + $0x2af] sm:$0xff]
      %v4005 = vld [vmem:[%s3798 + $0x2c7] sm:$0xff]
      %v4006 = vld [vmem:[%s3798 + $0x2cf] sm:$0xff]
      %v4007 = vld [vmem:[%s3798 + $0x2e7] sm:$0xff]
      %v4008 = vld [vmem:[%s3798 + $0x2ef] sm:$0xff]
      %v4009 = vld [vmem:[%s3798 + $0x307] sm:$0xff]
      %v4010 = vld [vmem:[%s3798 + $0x30f] sm:$0xff]
      %v4011 = vld [vmem:[%s3798 + $0x327] sm:$0xff]
      %v4012 = vld [vmem:[%s3798 + $0x32f] sm:$0xff]
      %v4013 = vld [vmem:[%s3851 + $0x1] sm:$0x1]
      %v4014 = vlaneseq
      %v4015 = vshrl.u32 %v4014, 7
      %v4016 = vsub.s32 0, %v4015
      %v4017 = vrot.slane %v4013, %v4016
      %v4018 = vmul.f32 %v3961, %v4017
      %v4019 = vmul.f32 %v3962, %v4017
      %v4020 = vmul.f32 %v3963, %v4017
      %v4021 = vmul.f32 %v3964, %v4017
      %v4022 = vmul.f32 %v3965, %v4017
      %v4023 = vmul.f32 %v3966, %v4017
      %v4024 = vmul.f32 %v3967, %v4017
      %v4025 = vmul.f32 %v3968, %v4017
      %v4026 = vmul.f32 %v3969, %v4017
      %v4027 = vmul.f32 %v3970, %v4017
      %v4028 = vmul.f32 %v3971, %v4017
      %v4029 = vmul.f32 %v3972, %v4017
      %v4030 = vmul.f32 %v3973, %v4017
      %v4031 = vmul.f32 %v3974, %v4017
      %v4032 = vmul.f32 %v3975, %v4017
      %v4033 = vmul.f32 %v3976, %v4017
      %v4034 = vmul.f32 %v3977, %v4017
      %v4035 = vmul.f32 %v3978, %v4017
      %v4036 = vmul.f32 %v3979, %v4017
      %v4037 = vmul.f32 %v3980, %v4017
      %v4038 = vmul.f32 %v3981, %v4017
      %v4039 = vmul.f32 %v3982, %v4017
      %v4040 = vmul.f32 %v3983, %v4017
      %v4041 = vmul.f32 %v3984, %v4017
      %v4042 = vmul.f32 %v3985, %v4017
      %v4043 = vmul.f32 %v3986, %v4017
      %v4044 = vmul.f32 %v3987, %v4017
      %v4045 = vmul.f32 %v3988, %v4017
      %v4046 = vmul.f32 %v3989, %v4017
      %v4047 = vmul.f32 %v3990, %v4017
      %v4048 = vmul.f32 %v3991, %v4017
      %v4049 = vmul.f32 %v3992, %v4017
      %v4050 = vmul.f32 %v3993, %v4017
      %v4051 = vmul.f32 %v3994, %v4017
      %v4052 = vmul.f32 %v3995, %v4017
      %v4053 = vmul.f32 %v3996, %v4017
      %v4054 = vmul.f32 %v3997, %v4017
      %v4055 = vmul.f32 %v3998, %v4017
      %v4056 = vmul.f32 %v3999, %v4017
      %v4057 = vmul.f32 %v4000, %v4017
      %v4058 = vmul.f32 %v4001, %v4017
      %v4059 = vmul.f32 %v4002, %v4017
      %v4060 = vmul.f32 %v4003, %v4017
      %v4061 = vmul.f32 %v4004, %v4017
      %v4062 = vmul.f32 %v4005, %v4017
      %v4063 = vmul.f32 %v4006, %v4017
      %v4064 = vmul.f32 %v4007, %v4017
      %v4065 = vmul.f32 %v4008, %v4017
      %v4066 = vmul.f32 %v4009, %v4017
      %v4067 = vmul.f32 %v4010, %v4017
      %v4068 = vmul.f32 %v4011, %v4017
      %v4069 = vmul.f32 %v4012, %v4017
      %v4070 = vadd.f32 %v3909, %v4018
      %v4071 = vadd.f32 %v3910, %v4019
      %v4072 = vadd.f32 %v3911, %v4020
      %v4073 = vadd.f32 %v3912, %v4021
      %v4074 = vadd.f32 %v3913, %v4022
      %v4075 = vadd.f32 %v3914, %v4023
      %v4076 = vadd.f32 %v3915, %v4024
      %v4077 = vadd.f32 %v3916, %v4025
      %v4078 = vadd.f32 %v3917, %v4026
      %v4079 = vadd.f32 %v3918, %v4027
      %v4080 = vadd.f32 %v3919, %v4028
      %v4081 = vadd.f32 %v3920, %v4029
      %v4082 = vadd.f32 %v3921, %v4030
      %v4083 = vadd.f32 %v3922, %v4031
      %v4084 = vadd.f32 %v3923, %v4032
      %v4085 = vadd.f32 %v3924, %v4033
      %v4086 = vadd.f32 %v3925, %v4034
      %v4087 = vadd.f32 %v3926, %v4035
      %v4088 = vadd.f32 %v3927, %v4036
      %v4089 = vadd.f32 %v3928, %v4037
      %v4090 = vadd.f32 %v3929, %v4038
      %v4091 = vadd.f32 %v3930, %v4039
      %v4092 = vadd.f32 %v3931, %v4040
      %v4093 = vadd.f32 %v3932, %v4041
      %v4094 = vadd.f32 %v3933, %v4042
      %v4095 = vadd.f32 %v3934, %v4043
      %v4096 = vadd.f32 %v3935, %v4044
      %v4097 = vadd.f32 %v3936, %v4045
      %v4098 = vadd.f32 %v3937, %v4046
      %v4099 = vadd.f32 %v3938, %v4047
      %v4100 = vadd.f32 %v3939, %v4048
      %v4101 = vadd.f32 %v3940, %v4049
      %v4102 = vadd.f32 %v3941, %v4050
      %v4103 = vadd.f32 %v3942, %v4051
      %v4104 = vadd.f32 %v3943, %v4052
      %v4105 = vadd.f32 %v3944, %v4053
      %v4106 = vadd.f32 %v3945, %v4054
      %v4107 = vadd.f32 %v3946, %v4055
      %v4108 = vadd.f32 %v3947, %v4056
      %v4109 = vadd.f32 %v3948, %v4057
      %v4110 = vadd.f32 %v3949, %v4058
      %v4111 = vadd.f32 %v3950, %v4059
      %v4112 = vadd.f32 %v3951, %v4060
      %v4113 = vadd.f32 %v3952, %v4061
      %v4114 = vadd.f32 %v3953, %v4062
      %v4115 = vadd.f32 %v3954, %v4063
      %v4116 = vadd.f32 %v3955, %v4064
      %v4117 = vadd.f32 %v3956, %v4065
      %v4118 = vadd.f32 %v3957, %v4066
      %v4119 = vadd.f32 %v3958, %v4067
      %v4120 = vadd.f32 %v3959, %v4068
      %v4121 = vadd.f32 %v3960, %v4069
      %v4122 = vld [vmem:[%s3798 + $0x8] sm:$0xff]
      %v4123 = vld [vmem:[%s3798 + $0x10] sm:$0xff]
      %v4124 = vld [vmem:[%s3798 + $0x28] sm:$0xff]
      %v4125 = vld [vmem:[%s3798 + $0x30] sm:$0xff]
      %v4126 = vld [vmem:[%s3798 + $0x48] sm:$0xff]
      %v4127 = vld [vmem:[%s3798 + $0x50] sm:$0xff]
      %v4128 = vld [vmem:[%s3798 + $0x68] sm:$0xff]
      %v4129 = vld [vmem:[%s3798 + $0x70] sm:$0xff]
      %v4130 = vld [vmem:[%s3798 + $0x88] sm:$0xff]
      %v4131 = vld [vmem:[%s3798 + $0x90] sm:$0xff]
      %v4132 = vld [vmem:[%s3798 + $0xa8] sm:$0xff]
      %v4133 = vld [vmem:[%s3798 + $0xb0] sm:$0xff]
      %v4134 = vld [vmem:[%s3798 + $0xc8] sm:$0xff]
      %v4135 = vld [vmem:[%s3798 + $0xd0] sm:$0xff]
      %v4136 = vld [vmem:[%s3798 + $0xe8] sm:$0xff]
      %v4137 = vld [vmem:[%s3798 + $0xf0] sm:$0xff]
      %v4138 = vld [vmem:[%s3798 + $0x108] sm:$0xff]
      %v4139 = vld [vmem:[%s3798 + $0x110] sm:$0xff]
      %v4140 = vld [vmem:[%s3798 + $0x128] sm:$0xff]
      %v4141 = vld [vmem:[%s3798 + $0x130] sm:$0xff]
      %v4142 = vld [vmem:[%s3798 + $0x148] sm:$0xff]
      %v4143 = vld [vmem:[%s3798 + $0x150] sm:$0xff]
      %v4144 = vld [vmem:[%s3798 + $0x168] sm:$0xff]
      %v4145 = vld [vmem:[%s3798 + $0x170] sm:$0xff]
      %v4146 = vld [vmem:[%s3798 + $0x188] sm:$0xff]
      %v4147 = vld [vmem:[%s3798 + $0x190] sm:$0xff]
      %v4148 = vld [vmem:[%s3798 + $0x1a8] sm:$0xff]
      %v4149 = vld [vmem:[%s3798 + $0x1b0] sm:$0xff]
      %v4150 = vld [vmem:[%s3798 + $0x1c8] sm:$0xff]
      %v4151 = vld [vmem:[%s3798 + $0x1d0] sm:$0xff]
      %v4152 = vld [vmem:[%s3798 + $0x1e8] sm:$0xff]
      %v4153 = vld [vmem:[%s3798 + $0x1f0] sm:$0xff]
      %v4154 = vld [vmem:[%s3798 + $0x208] sm:$0xff]
      %v4155 = vld [vmem:[%s3798 + $0x210] sm:$0xff]
      %v4156 = vld [vmem:[%s3798 + $0x228] sm:$0xff]
      %v4157 = vld [vmem:[%s3798 + $0x230] sm:$0xff]
      %v4158 = vld [vmem:[%s3798 + $0x248] sm:$0xff]
      %v4159 = vld [vmem:[%s3798 + $0x250] sm:$0xff]
      %v4160 = vld [vmem:[%s3798 + $0x268] sm:$0xff]
      %v4161 = vld [vmem:[%s3798 + $0x270] sm:$0xff]
      %v4162 = vld [vmem:[%s3798 + $0x288] sm:$0xff]
      %v4163 = vld [vmem:[%s3798 + $0x290] sm:$0xff]
      %v4164 = vld [vmem:[%s3798 + $0x2a8] sm:$0xff]
      %v4165 = vld [vmem:[%s3798 + $0x2b0] sm:$0xff]
      %v4166 = vld [vmem:[%s3798 + $0x2c8] sm:$0xff]
      %v4167 = vld [vmem:[%s3798 + $0x2d0] sm:$0xff]
      %v4168 = vld [vmem:[%s3798 + $0x2e8] sm:$0xff]
      %v4169 = vld [vmem:[%s3798 + $0x2f0] sm:$0xff]
      %v4170 = vld [vmem:[%s3798 + $0x308] sm:$0xff]
      %v4171 = vld [vmem:[%s3798 + $0x310] sm:$0xff]
      %v4172 = vld [vmem:[%s3798 + $0x328] sm:$0xff]
      %v4173 = vld [vmem:[%s3798 + $0x330] sm:$0xff]
      %v4174 = vld [vmem:[%s3851 + $0x2] sm:$0x1]
      %v4175 = vlaneseq
      %v4176 = vshrl.u32 %v4175, 7
      %v4177 = vsub.s32 0, %v4176
      %v4178 = vrot.slane %v4174, %v4177
      %v4179 = vmul.f32 %v4122, %v4178
      %v4180 = vmul.f32 %v4123, %v4178
      %v4181 = vmul.f32 %v4124, %v4178
      %v4182 = vmul.f32 %v4125, %v4178
      %v4183 = vmul.f32 %v4126, %v4178
      %v4184 = vmul.f32 %v4127, %v4178
      %v4185 = vmul.f32 %v4128, %v4178
      %v4186 = vmul.f32 %v4129, %v4178
      %v4187 = vmul.f32 %v4130, %v4178
      %v4188 = vmul.f32 %v4131, %v4178
      %v4189 = vmul.f32 %v4132, %v4178
      %v4190 = vmul.f32 %v4133, %v4178
      %v4191 = vmul.f32 %v4134, %v4178
      %v4192 = vmul.f32 %v4135, %v4178
      %v4193 = vmul.f32 %v4136, %v4178
      %v4194 = vmul.f32 %v4137, %v4178
      %v4195 = vmul.f32 %v4138, %v4178
      %v4196 = vmul.f32 %v4139, %v4178
      %v4197 = vmul.f32 %v4140, %v4178
      %v4198 = vmul.f32 %v4141, %v4178
      %v4199 = vmul.f32 %v4142, %v4178
      %v4200 = vmul.f32 %v4143, %v4178
      %v4201 = vmul.f32 %v4144, %v4178
      %v4202 = vmul.f32 %v4145, %v4178
      %v4203 = vmul.f32 %v4146, %v4178
      %v4204 = vmul.f32 %v4147, %v4178
      %v4205 = vmul.f32 %v4148, %v4178
      %v4206 = vmul.f32 %v4149, %v4178
      %v4207 = vmul.f32 %v4150, %v4178
      %v4208 = vmul.f32 %v4151, %v4178
      %v4209 = vmul.f32 %v4152, %v4178
      %v4210 = vmul.f32 %v4153, %v4178
      %v4211 = vmul.f32 %v4154, %v4178
      %v4212 = vmul.f32 %v4155, %v4178
      %v4213 = vmul.f32 %v4156, %v4178
      %v4214 = vmul.f32 %v4157, %v4178
      %v4215 = vmul.f32 %v4158, %v4178
      %v4216 = vmul.f32 %v4159, %v4178
      %v4217 = vmul.f32 %v4160, %v4178
      %v4218 = vmul.f32 %v4161, %v4178
      %v4219 = vmul.f32 %v4162, %v4178
      %v4220 = vmul.f32 %v4163, %v4178
      %v4221 = vmul.f32 %v4164, %v4178
      %v4222 = vmul.f32 %v4165, %v4178
      %v4223 = vmul.f32 %v4166, %v4178
      %v4224 = vmul.f32 %v4167, %v4178
      %v4225 = vmul.f32 %v4168, %v4178
      %v4226 = vmul.f32 %v4169, %v4178
      %v4227 = vmul.f32 %v4170, %v4178
      %v4228 = vmul.f32 %v4171, %v4178
      %v4229 = vmul.f32 %v4172, %v4178
      %v4230 = vmul.f32 %v4173, %v4178
      %v4231 = vadd.f32 %v4070, %v4179
      %v4232 = vadd.f32 %v4071, %v4180
      %v4233 = vadd.f32 %v4072, %v4181
      %v4234 = vadd.f32 %v4073, %v4182
      %v4235 = vadd.f32 %v4074, %v4183
      %v4236 = vadd.f32 %v4075, %v4184
      %v4237 = vadd.f32 %v4076, %v4185
      %v4238 = vadd.f32 %v4077, %v4186
      %v4239 = vadd.f32 %v4078, %v4187
      %v4240 = vadd.f32 %v4079, %v4188
      %v4241 = vadd.f32 %v4080, %v4189
      %v4242 = vadd.f32 %v4081, %v4190
      %v4243 = vadd.f32 %v4082, %v4191
      %v4244 = vadd.f32 %v4083, %v4192
      %v4245 = vadd.f32 %v4084, %v4193
      %v4246 = vadd.f32 %v4085, %v4194
      %v4247 = vadd.f32 %v4086, %v4195
      %v4248 = vadd.f32 %v4087, %v4196
      %v4249 = vadd.f32 %v4088, %v4197
      %v4250 = vadd.f32 %v4089, %v4198
      %v4251 = vadd.f32 %v4090, %v4199
      %v4252 = vadd.f32 %v4091, %v4200
      %v4253 = vadd.f32 %v4092, %v4201
      %v4254 = vadd.f32 %v4093, %v4202
      %v4255 = vadd.f32 %v4094, %v4203
      %v4256 = vadd.f32 %v4095, %v4204
      %v4257 = vadd.f32 %v4096, %v4205
      %v4258 = vadd.f32 %v4097, %v4206
      %v4259 = vadd.f32 %v4098, %v4207
      %v4260 = vadd.f32 %v4099, %v4208
      %v4261 = vadd.f32 %v4100, %v4209
      %v4262 = vadd.f32 %v4101, %v4210
      %v4263 = vadd.f32 %v4102, %v4211
      %v4264 = vadd.f32 %v4103, %v4212
      %v4265 = vadd.f32 %v4104, %v4213
      %v4266 = vadd.f32 %v4105, %v4214
      %v4267 = vadd.f32 %v4106, %v4215
      %v4268 = vadd.f32 %v4107, %v4216
      %v4269 = vadd.f32 %v4108, %v4217
      %v4270 = vadd.f32 %v4109, %v4218
      %v4271 = vadd.f32 %v4110, %v4219
      %v4272 = vadd.f32 %v4111, %v4220
      %v4273 = vadd.f32 %v4112, %v4221
      %v4274 = vadd.f32 %v4113, %v4222
      %v4275 = vadd.f32 %v4114, %v4223
      %v4276 = vadd.f32 %v4115, %v4224
      %v4277 = vadd.f32 %v4116, %v4225
      %v4278 = vadd.f32 %v4117, %v4226
      %v4279 = vadd.f32 %v4118, %v4227
      %v4280 = vadd.f32 %v4119, %v4228
      %v4281 = vadd.f32 %v4120, %v4229
      %v4282 = vadd.f32 %v4121, %v4230
      %v4283 = vld [vmem:[%s3798 + $0x9] sm:$0xff]
      %v4284 = vld [vmem:[%s3798 + $0x11] sm:$0xff]
      %v4285 = vld [vmem:[%s3798 + $0x29] sm:$0xff]
      %v4286 = vld [vmem:[%s3798 + $0x31] sm:$0xff]
      %v4287 = vld [vmem:[%s3798 + $0x49] sm:$0xff]
      %v4288 = vld [vmem:[%s3798 + $0x51] sm:$0xff]
      %v4289 = vld [vmem:[%s3798 + $0x69] sm:$0xff]
      %v4290 = vld [vmem:[%s3798 + $0x71] sm:$0xff]
      %v4291 = vld [vmem:[%s3798 + $0x89] sm:$0xff]
      %v4292 = vld [vmem:[%s3798 + $0x91] sm:$0xff]
      %v4293 = vld [vmem:[%s3798 + $0xa9] sm:$0xff]
      %v4294 = vld [vmem:[%s3798 + $0xb1] sm:$0xff]
      %v4295 = vld [vmem:[%s3798 + $0xc9] sm:$0xff]
      %v4296 = vld [vmem:[%s3798 + $0xd1] sm:$0xff]
      %v4297 = vld [vmem:[%s3798 + $0xe9] sm:$0xff]
      %v4298 = vld [vmem:[%s3798 + $0xf1] sm:$0xff]
      %v4299 = vld [vmem:[%s3798 + $0x109] sm:$0xff]
      %v4300 = vld [vmem:[%s3798 + $0x111] sm:$0xff]
      %v4301 = vld [vmem:[%s3798 + $0x129] sm:$0xff]
      %v4302 = vld [vmem:[%s3798 + $0x131] sm:$0xff]
      %v4303 = vld [vmem:[%s3798 + $0x149] sm:$0xff]
      %v4304 = vld [vmem:[%s3798 + $0x151] sm:$0xff]
      %v4305 = vld [vmem:[%s3798 + $0x169] sm:$0xff]
      %v4306 = vld [vmem:[%s3798 + $0x171] sm:$0xff]
      %v4307 = vld [vmem:[%s3798 + $0x189] sm:$0xff]
      %v4308 = vld [vmem:[%s3798 + $0x191] sm:$0xff]
      %v4309 = vld [vmem:[%s3798 + $0x1a9] sm:$0xff]
      %v4310 = vld [vmem:[%s3798 + $0x1b1] sm:$0xff]
      %v4311 = vld [vmem:[%s3798 + $0x1c9] sm:$0xff]
      %v4312 = vld [vmem:[%s3798 + $0x1d1] sm:$0xff]
      %v4313 = vld [vmem:[%s3798 + $0x1e9] sm:$0xff]
      %v4314 = vld [vmem:[%s3798 + $0x1f1] sm:$0xff]
      %v4315 = vld [vmem:[%s3798 + $0x209] sm:$0xff]
      %v4316 = vld [vmem:[%s3798 + $0x211] sm:$0xff]
      %v4317 = vld [vmem:[%s3798 + $0x229] sm:$0xff]
      %v4318 = vld [vmem:[%s3798 + $0x231] sm:$0xff]
      %v4319 = vld [vmem:[%s3798 + $0x249] sm:$0xff]
      %v4320 = vld [vmem:[%s3798 + $0x251] sm:$0xff]
      %v4321 = vld [vmem:[%s3798 + $0x269] sm:$0xff]
      %v4322 = vld [vmem:[%s3798 + $0x271] sm:$0xff]
      %v4323 = vld [vmem:[%s3798 + $0x289] sm:$0xff]
      %v4324 = vld [vmem:[%s3798 + $0x291] sm:$0xff]
      %v4325 = vld [vmem:[%s3798 + $0x2a9] sm:$0xff]
      %v4326 = vld [vmem:[%s3798 + $0x2b1] sm:$0xff]
      %v4327 = vld [vmem:[%s3798 + $0x2c9] sm:$0xff]
      %v4328 = vld [vmem:[%s3798 + $0x2d1] sm:$0xff]
      %v4329 = vld [vmem:[%s3798 + $0x2e9] sm:$0xff]
      %v4330 = vld [vmem:[%s3798 + $0x2f1] sm:$0xff]
      %v4331 = vld [vmem:[%s3798 + $0x309] sm:$0xff]
      %v4332 = vld [vmem:[%s3798 + $0x311] sm:$0xff]
      %v4333 = vld [vmem:[%s3798 + $0x329] sm:$0xff]
      %v4334 = vld [vmem:[%s3798 + $0x331] sm:$0xff]
      %v4335 = vld [vmem:[%s3851 + $0x3] sm:$0x1]
      %v4336 = vlaneseq
      %v4337 = vshrl.u32 %v4336, 7
      %v4338 = vsub.s32 0, %v4337
      %v4339 = vrot.slane %v4335, %v4338
      %v4340 = vmul.f32 %v4283, %v4339
      %v4341 = vmul.f32 %v4284, %v4339
      %v4342 = vmul.f32 %v4285, %v4339
      %v4343 = vmul.f32 %v4286, %v4339
      %v4344 = vmul.f32 %v4287, %v4339
      %v4345 = vmul.f32 %v4288, %v4339
      %v4346 = vmul.f32 %v4289, %v4339
      %v4347 = vmul.f32 %v4290, %v4339
      %v4348 = vmul.f32 %v4291, %v4339
      %v4349 = vmul.f32 %v4292, %v4339
      %v4350 = vmul.f32 %v4293, %v4339
      %v4351 = vmul.f32 %v4294, %v4339
      %v4352 = vmul.f32 %v4295, %v4339
      %v4353 = vmul.f32 %v4296, %v4339
      %v4354 = vmul.f32 %v4297, %v4339
      %v4355 = vmul.f32 %v4298, %v4339
      %v4356 = vmul.f32 %v4299, %v4339
      %v4357 = vmul.f32 %v4300, %v4339
      %v4358 = vmul.f32 %v4301, %v4339
      %v4359 = vmul.f32 %v4302, %v4339
      %v4360 = vmul.f32 %v4303, %v4339
      %v4361 = vmul.f32 %v4304, %v4339
      %v4362 = vmul.f32 %v4305, %v4339
      %v4363 = vmul.f32 %v4306, %v4339
      %v4364 = vmul.f32 %v4307, %v4339
      %v4365 = vmul.f32 %v4308, %v4339
      %v4366 = vmul.f32 %v4309, %v4339
      %v4367 = vmul.f32 %v4310, %v4339
      %v4368 = vmul.f32 %v4311, %v4339
      %v4369 = vmul.f32 %v4312, %v4339
      %v4370 = vmul.f32 %v4313, %v4339
      %v4371 = vmul.f32 %v4314, %v4339
      %v4372 = vmul.f32 %v4315, %v4339
      %v4373 = vmul.f32 %v4316, %v4339
      %v4374 = vmul.f32 %v4317, %v4339
      %v4375 = vmul.f32 %v4318, %v4339
      %v4376 = vmul.f32 %v4319, %v4339
      %v4377 = vmul.f32 %v4320, %v4339
      %v4378 = vmul.f32 %v4321, %v4339
      %v4379 = vmul.f32 %v4322, %v4339
      %v4380 = vmul.f32 %v4323, %v4339
      %v4381 = vmul.f32 %v4324, %v4339
      %v4382 = vmul.f32 %v4325, %v4339
      %v4383 = vmul.f32 %v4326, %v4339
      %v4384 = vmul.f32 %v4327, %v4339
      %v4385 = vmul.f32 %v4328, %v4339
      %v4386 = vmul.f32 %v4329, %v4339
      %v4387 = vmul.f32 %v4330, %v4339
      %v4388 = vmul.f32 %v4331, %v4339
      %v4389 = vmul.f32 %v4332, %v4339
      %v4390 = vmul.f32 %v4333, %v4339
      %v4391 = vmul.f32 %v4334, %v4339
      %v4392 = vadd.f32 %v4231, %v4340
      %v4393 = vadd.f32 %v4232, %v4341
      %v4394 = vadd.f32 %v4233, %v4342
      %v4395 = vadd.f32 %v4234, %v4343
      %v4396 = vadd.f32 %v4235, %v4344
      %v4397 = vadd.f32 %v4236, %v4345
      %v4398 = vadd.f32 %v4237, %v4346
      %v4399 = vadd.f32 %v4238, %v4347
      %v4400 = vadd.f32 %v4239, %v4348
      %v4401 = vadd.f32 %v4240, %v4349
      %v4402 = vadd.f32 %v4241, %v4350
      %v4403 = vadd.f32 %v4242, %v4351
      %v4404 = vadd.f32 %v4243, %v4352
      %v4405 = vadd.f32 %v4244, %v4353
      %v4406 = vadd.f32 %v4245, %v4354
      %v4407 = vadd.f32 %v4246, %v4355
      %v4408 = vadd.f32 %v4247, %v4356
      %v4409 = vadd.f32 %v4248, %v4357
      %v4410 = vadd.f32 %v4249, %v4358
      %v4411 = vadd.f32 %v4250, %v4359
      %v4412 = vadd.f32 %v4251, %v4360
      %v4413 = vadd.f32 %v4252, %v4361
      %v4414 = vadd.f32 %v4253, %v4362
      %v4415 = vadd.f32 %v4254, %v4363
      %v4416 = vadd.f32 %v4255, %v4364
      %v4417 = vadd.f32 %v4256, %v4365
      %v4418 = vadd.f32 %v4257, %v4366
      %v4419 = vadd.f32 %v4258, %v4367
      %v4420 = vadd.f32 %v4259, %v4368
      %v4421 = vadd.f32 %v4260, %v4369
      %v4422 = vadd.f32 %v4261, %v4370
      %v4423 = vadd.f32 %v4262, %v4371
      %v4424 = vadd.f32 %v4263, %v4372
      %v4425 = vadd.f32 %v4264, %v4373
      %v4426 = vadd.f32 %v4265, %v4374
      %v4427 = vadd.f32 %v4266, %v4375
      %v4428 = vadd.f32 %v4267, %v4376
      %v4429 = vadd.f32 %v4268, %v4377
      %v4430 = vadd.f32 %v4269, %v4378
      %v4431 = vadd.f32 %v4270, %v4379
      %v4432 = vadd.f32 %v4271, %v4380
      %v4433 = vadd.f32 %v4272, %v4381
      %v4434 = vadd.f32 %v4273, %v4382
      %v4435 = vadd.f32 %v4274, %v4383
      %v4436 = vadd.f32 %v4275, %v4384
      %v4437 = vadd.f32 %v4276, %v4385
      %v4438 = vadd.f32 %v4277, %v4386
      %v4439 = vadd.f32 %v4278, %v4387
      %v4440 = vadd.f32 %v4279, %v4388
      %v4441 = vadd.f32 %v4280, %v4389
      %v4442 = vadd.f32 %v4281, %v4390
      %v4443 = vadd.f32 %v4282, %v4391
      %v4444 = vld [vmem:[%s3798 + $0xa] sm:$0xff]
      %v4445 = vld [vmem:[%s3798 + $0x12] sm:$0xff]
      %v4446 = vld [vmem:[%s3798 + $0x2a] sm:$0xff]
      %v4447 = vld [vmem:[%s3798 + $0x32] sm:$0xff]
      %v4448 = vld [vmem:[%s3798 + $0x4a] sm:$0xff]
      %v4449 = vld [vmem:[%s3798 + $0x52] sm:$0xff]
      %v4450 = vld [vmem:[%s3798 + $0x6a] sm:$0xff]
      %v4451 = vld [vmem:[%s3798 + $0x72] sm:$0xff]
      %v4452 = vld [vmem:[%s3798 + $0x8a] sm:$0xff]
      %v4453 = vld [vmem:[%s3798 + $0x92] sm:$0xff]
      %v4454 = vld [vmem:[%s3798 + $0xaa] sm:$0xff]
      %v4455 = vld [vmem:[%s3798 + $0xb2] sm:$0xff]
      %v4456 = vld [vmem:[%s3798 + $0xca] sm:$0xff]
      %v4457 = vld [vmem:[%s3798 + $0xd2] sm:$0xff]
      %v4458 = vld [vmem:[%s3798 + $0xea] sm:$0xff]
      %v4459 = vld [vmem:[%s3798 + $0xf2] sm:$0xff]
      %v4460 = vld [vmem:[%s3798 + $0x10a] sm:$0xff]
      %v4461 = vld [vmem:[%s3798 + $0x112] sm:$0xff]
      %v4462 = vld [vmem:[%s3798 + $0x12a] sm:$0xff]
      %v4463 = vld [vmem:[%s3798 + $0x132] sm:$0xff]
      %v4464 = vld [vmem:[%s3798 + $0x14a] sm:$0xff]
      %v4465 = vld [vmem:[%s3798 + $0x152] sm:$0xff]
      %v4466 = vld [vmem:[%s3798 + $0x16a] sm:$0xff]
      %v4467 = vld [vmem:[%s3798 + $0x172] sm:$0xff]
      %v4468 = vld [vmem:[%s3798 + $0x18a] sm:$0xff]
      %v4469 = vld [vmem:[%s3798 + $0x192] sm:$0xff]
      %v4470 = vld [vmem:[%s3798 + $0x1aa] sm:$0xff]
      %v4471 = vld [vmem:[%s3798 + $0x1b2] sm:$0xff]
      %v4472 = vld [vmem:[%s3798 + $0x1ca] sm:$0xff]
      %v4473 = vld [vmem:[%s3798 + $0x1d2] sm:$0xff]
      %v4474 = vld [vmem:[%s3798 + $0x1ea] sm:$0xff]
      %v4475 = vld [vmem:[%s3798 + $0x1f2] sm:$0xff]
      %v4476 = vld [vmem:[%s3798 + $0x20a] sm:$0xff]
      %v4477 = vld [vmem:[%s3798 + $0x212] sm:$0xff]
      %v4478 = vld [vmem:[%s3798 + $0x22a] sm:$0xff]
      %v4479 = vld [vmem:[%s3798 + $0x232] sm:$0xff]
      %v4480 = vld [vmem:[%s3798 + $0x24a] sm:$0xff]
      %v4481 = vld [vmem:[%s3798 + $0x252] sm:$0xff]
      %v4482 = vld [vmem:[%s3798 + $0x26a] sm:$0xff]
      %v4483 = vld [vmem:[%s3798 + $0x272] sm:$0xff]
      %v4484 = vld [vmem:[%s3798 + $0x28a] sm:$0xff]
      %v4485 = vld [vmem:[%s3798 + $0x292] sm:$0xff]
      %v4486 = vld [vmem:[%s3798 + $0x2aa] sm:$0xff]
      %v4487 = vld [vmem:[%s3798 + $0x2b2] sm:$0xff]
      %v4488 = vld [vmem:[%s3798 + $0x2ca] sm:$0xff]
      %v4489 = vld [vmem:[%s3798 + $0x2d2] sm:$0xff]
      %v4490 = vld [vmem:[%s3798 + $0x2ea] sm:$0xff]
      %v4491 = vld [vmem:[%s3798 + $0x2f2] sm:$0xff]
      %v4492 = vld [vmem:[%s3798 + $0x30a] sm:$0xff]
      %v4493 = vld [vmem:[%s3798 + $0x312] sm:$0xff]
      %v4494 = vld [vmem:[%s3798 + $0x32a] sm:$0xff]
      %v4495 = vld [vmem:[%s3798 + $0x332] sm:$0xff]
      %v4496 = vld [vmem:[%s3851 + $0x4] sm:$0x1]
      %v4497 = vlaneseq
      %v4498 = vshrl.u32 %v4497, 7
      %v4499 = vsub.s32 0, %v4498
      %v4500 = vrot.slane %v4496, %v4499
      %v4501 = vmul.f32 %v4444, %v4500
      %v4502 = vmul.f32 %v4445, %v4500
      %v4503 = vmul.f32 %v4446, %v4500
      %v4504 = vmul.f32 %v4447, %v4500
      %v4505 = vmul.f32 %v4448, %v4500
      %v4506 = vmul.f32 %v4449, %v4500
      %v4507 = vmul.f32 %v4450, %v4500
      %v4508 = vmul.f32 %v4451, %v4500
      %v4509 = vmul.f32 %v4452, %v4500
      %v4510 = vmul.f32 %v4453, %v4500
      %v4511 = vmul.f32 %v4454, %v4500
      %v4512 = vmul.f32 %v4455, %v4500
      %v4513 = vmul.f32 %v4456, %v4500
      %v4514 = vmul.f32 %v4457, %v4500
      %v4515 = vmul.f32 %v4458, %v4500
      %v4516 = vmul.f32 %v4459, %v4500
      %v4517 = vmul.f32 %v4460, %v4500
      %v4518 = vmul.f32 %v4461, %v4500
      %v4519 = vmul.f32 %v4462, %v4500
      %v4520 = vmul.f32 %v4463, %v4500
      %v4521 = vmul.f32 %v4464, %v4500
      %v4522 = vmul.f32 %v4465, %v4500
      %v4523 = vmul.f32 %v4466, %v4500
      %v4524 = vmul.f32 %v4467, %v4500
      %v4525 = vmul.f32 %v4468, %v4500
      %v4526 = vmul.f32 %v4469, %v4500
      %v4527 = vmul.f32 %v4470, %v4500
      %v4528 = vmul.f32 %v4471, %v4500
      %v4529 = vmul.f32 %v4472, %v4500
      %v4530 = vmul.f32 %v4473, %v4500
      %v4531 = vmul.f32 %v4474, %v4500
      %v4532 = vmul.f32 %v4475, %v4500
      %v4533 = vmul.f32 %v4476, %v4500
      %v4534 = vmul.f32 %v4477, %v4500
      %v4535 = vmul.f32 %v4478, %v4500
      %v4536 = vmul.f32 %v4479, %v4500
      %v4537 = vmul.f32 %v4480, %v4500
      %v4538 = vmul.f32 %v4481, %v4500
      %v4539 = vmul.f32 %v4482, %v4500
      %v4540 = vmul.f32 %v4483, %v4500
      %v4541 = vmul.f32 %v4484, %v4500
      %v4542 = vmul.f32 %v4485, %v4500
      %v4543 = vmul.f32 %v4486, %v4500
      %v4544 = vmul.f32 %v4487, %v4500
      %v4545 = vmul.f32 %v4488, %v4500
      %v4546 = vmul.f32 %v4489, %v4500
      %v4547 = vmul.f32 %v4490, %v4500
      %v4548 = vmul.f32 %v4491, %v4500
      %v4549 = vmul.f32 %v4492, %v4500
      %v4550 = vmul.f32 %v4493, %v4500
      %v4551 = vmul.f32 %v4494, %v4500
      %v4552 = vmul.f32 %v4495, %v4500
      %v4553 = vadd.f32 %v4392, %v4501
      %v4554 = vadd.f32 %v4393, %v4502
      %v4555 = vadd.f32 %v4394, %v4503
      %v4556 = vadd.f32 %v4395, %v4504
      %v4557 = vadd.f32 %v4396, %v4505
      %v4558 = vadd.f32 %v4397, %v4506
      %v4559 = vadd.f32 %v4398, %v4507
      %v4560 = vadd.f32 %v4399, %v4508
      %v4561 = vadd.f32 %v4400, %v4509
      %v4562 = vadd.f32 %v4401, %v4510
      %v4563 = vadd.f32 %v4402, %v4511
      %v4564 = vadd.f32 %v4403, %v4512
      %v4565 = vadd.f32 %v4404, %v4513
      %v4566 = vadd.f32 %v4405, %v4514
      %v4567 = vadd.f32 %v4406, %v4515
      %v4568 = vadd.f32 %v4407, %v4516
      %v4569 = vadd.f32 %v4408, %v4517
      %v4570 = vadd.f32 %v4409, %v4518
      %v4571 = vadd.f32 %v4410, %v4519
      %v4572 = vadd.f32 %v4411, %v4520
      %v4573 = vadd.f32 %v4412, %v4521
      %v4574 = vadd.f32 %v4413, %v4522
      %v4575 = vadd.f32 %v4414, %v4523
      %v4576 = vadd.f32 %v4415, %v4524
      %v4577 = vadd.f32 %v4416, %v4525
      %v4578 = vadd.f32 %v4417, %v4526
      %v4579 = vadd.f32 %v4418, %v4527
      %v4580 = vadd.f32 %v4419, %v4528
      %v4581 = vadd.f32 %v4420, %v4529
      %v4582 = vadd.f32 %v4421, %v4530
      %v4583 = vadd.f32 %v4422, %v4531
      %v4584 = vadd.f32 %v4423, %v4532
      %v4585 = vadd.f32 %v4424, %v4533
      %v4586 = vadd.f32 %v4425, %v4534
      %v4587 = vadd.f32 %v4426, %v4535
      %v4588 = vadd.f32 %v4427, %v4536
      %v4589 = vadd.f32 %v4428, %v4537
      %v4590 = vadd.f32 %v4429, %v4538
      %v4591 = vadd.f32 %v4430, %v4539
      %v4592 = vadd.f32 %v4431, %v4540
      %v4593 = vadd.f32 %v4432, %v4541
      %v4594 = vadd.f32 %v4433, %v4542
      %v4595 = vadd.f32 %v4434, %v4543
      %v4596 = vadd.f32 %v4435, %v4544
      %v4597 = vadd.f32 %v4436, %v4545
      %v4598 = vadd.f32 %v4437, %v4546
      %v4599 = vadd.f32 %v4438, %v4547
      %v4600 = vadd.f32 %v4439, %v4548
      %v4601 = vadd.f32 %v4440, %v4549
      %v4602 = vadd.f32 %v4441, %v4550
      %v4603 = vadd.f32 %v4442, %v4551
      %v4604 = vadd.f32 %v4443, %v4552
      %v4605 = vld [vmem:[%s2] sm:$0x1]
      %v4607 = vlaneseq
      %v4608 = vshrl.u32 %v4607, 7
      %v4609 = vsub.s32 0, %v4608
      %v4610 = vrot.slane %v4605, %v4609
      %v4612 = vadd.f32 %v4553, %v4610
      %v4613 = vadd.f32 %v4554, %v4610
      %v4614 = vadd.f32 %v4555, %v4610
      %v4615 = vadd.f32 %v4556, %v4610
      %v4616 = vadd.f32 %v4557, %v4610
      %v4617 = vadd.f32 %v4558, %v4610
      %v4618 = vadd.f32 %v4559, %v4610
      %v4619 = vadd.f32 %v4560, %v4610
      %v4620 = vadd.f32 %v4561, %v4610
      %v4621 = vadd.f32 %v4562, %v4610
      %v4622 = vadd.f32 %v4563, %v4610
      %v4623 = vadd.f32 %v4564, %v4610
      %v4624 = vadd.f32 %v4565, %v4610
      %v4625 = vadd.f32 %v4566, %v4610
      %v4626 = vadd.f32 %v4567, %v4610
      %v4627 = vadd.f32 %v4568, %v4610
      %v4628 = vadd.f32 %v4569, %v4610
      %v4629 = vadd.f32 %v4570, %v4610
      %v4630 = vadd.f32 %v4571, %v4610
      %v4631 = vadd.f32 %v4572, %v4610
      %v4632 = vadd.f32 %v4573, %v4610
      %v4633 = vadd.f32 %v4574, %v4610
      %v4634 = vadd.f32 %v4575, %v4610
      %v4635 = vadd.f32 %v4576, %v4610
      %v4636 = vadd.f32 %v4577, %v4610
      %v4637 = vadd.f32 %v4578, %v4610
      %v4638 = vadd.f32 %v4579, %v4610
      %v4639 = vadd.f32 %v4580, %v4610
      %v4640 = vadd.f32 %v4581, %v4610
      %v4641 = vadd.f32 %v4582, %v4610
      %v4642 = vadd.f32 %v4583, %v4610
      %v4643 = vadd.f32 %v4584, %v4610
      %v4644 = vadd.f32 %v4585, %v4610
      %v4645 = vadd.f32 %v4586, %v4610
      %v4646 = vadd.f32 %v4587, %v4610
      %v4647 = vadd.f32 %v4588, %v4610
      %v4648 = vadd.f32 %v4589, %v4610
      %v4649 = vadd.f32 %v4590, %v4610
      %v4650 = vadd.f32 %v4591, %v4610
      %v4651 = vadd.f32 %v4592, %v4610
      %v4652 = vadd.f32 %v4593, %v4610
      %v4653 = vadd.f32 %v4594, %v4610
      %v4654 = vadd.f32 %v4595, %v4610
      %v4655 = vadd.f32 %v4596, %v4610
      %v4656 = vadd.f32 %v4597, %v4610
      %v4657 = vadd.f32 %v4598, %v4610
      %v4658 = vadd.f32 %v4599, %v4610
      %v4659 = vadd.f32 %v4600, %v4610
      %v4660 = vadd.f32 %v4601, %v4610
      %v4661 = vadd.f32 %v4602, %v4610
      %v4662 = vadd.f32 %v4603, %v4610
      %v4663 = vadd.f32 %v4604, %v4610
      %s4664 = ssub.s32 %s231, 9
      %v4665 = vstv %s4664
      %v4666 = vadd.s32 %v4665, 1
      %v4667 = vadd.s32 %v4665, 2
      %v4668 = vadd.s32 %v4665, 3
      %v4669 = vadd.s32 %v4665, 4
      %v4670 = vadd.s32 %v4665, 5
      %v4671 = vadd.s32 %v4665, 6
      %v4672 = vadd.s32 %v4665, 7
      %v4673 = vadd.s32 %v4665, 8
      %v4674 = vadd.s32 %v4665, 9
      %v4675 = vadd.s32 %v4665, 10
      %v4676 = vadd.s32 %v4665, 11
      %v4677 = vadd.s32 %v4665, 12
      %v4678 = vadd.s32 %v4665, 13
      %v4679 = vadd.s32 %v4665, 14
      %v4680 = vadd.s32 %v4665, 15
      %v4681 = vadd.s32 %v4665, 16
      %v4682 = vadd.s32 %v4665, 17
      %v4683 = vadd.s32 %v4665, 18
      %v4684 = vadd.s32 %v4665, 19
      %v4685 = vadd.s32 %v4665, 20
      %v4686 = vadd.s32 %v4665, 21
      %v4687 = vadd.s32 %v4665, 22
      %v4688 = vadd.s32 %v4665, 23
      %v4689 = vadd.s32 %v4665, 24
      %v4690 = vadd.s32 %v4665, 25
      %v4691 = vlaneseq
      %v4692 = vshrl.u32 %v4691, 7
      %v4693 = vadd.s32 %v4692, 8
      %vm4694 = vcmp.ge.s32.totalorder %v4665, 0
      %vm4695 = vcmp.ge.s32.totalorder %v4666, 0
      %vm4696 = vcmp.ge.s32.totalorder %v4667, 0
      %vm4697 = vcmp.ge.s32.totalorder %v4668, 0
      %vm4698 = vcmp.ge.s32.totalorder %v4669, 0
      %vm4699 = vcmp.ge.s32.totalorder %v4670, 0
      %vm4700 = vcmp.ge.s32.totalorder %v4671, 0
      %vm4701 = vcmp.ge.s32.totalorder %v4672, 0
      %vm4702 = vcmp.ge.s32.totalorder %v4673, 0
      %vm4703 = vcmp.ge.s32.totalorder %v4674, 0
      %vm4704 = vcmp.ge.s32.totalorder %v4675, 0
      %vm4705 = vcmp.ge.s32.totalorder %v4676, 0
      %vm4706 = vcmp.ge.s32.totalorder %v4677, 0
      %vm4707 = vcmp.ge.s32.totalorder %v4678, 0
      %vm4708 = vcmp.ge.s32.totalorder %v4679, 0
      %vm4709 = vcmp.ge.s32.totalorder %v4680, 0
      %vm4710 = vcmp.ge.s32.totalorder %v4681, 0
      %vm4711 = vcmp.ge.s32.totalorder %v4682, 0
      %vm4712 = vcmp.ge.s32.totalorder %v4683, 0
      %vm4713 = vcmp.ge.s32.totalorder %v4684, 0
      %vm4714 = vcmp.ge.s32.totalorder %v4685, 0
      %vm4715 = vcmp.ge.s32.totalorder %v4686, 0
      %vm4716 = vcmp.ge.s32.totalorder %v4687, 0
      %vm4717 = vcmp.ge.s32.totalorder %v4688, 0
      %vm4718 = vcmp.ge.s32.totalorder %v4689, 0
      %vm4719 = vcmp.ge.s32.totalorder %v4690, 0
      %vm4720 = vcmp.lt.s32.totalorder %v4665, 16
      %vm4721 = vcmp.lt.s32.totalorder %v4666, 16
      %vm4722 = vcmp.lt.s32.totalorder %v4667, 16
      %vm4723 = vcmp.lt.s32.totalorder %v4668, 16
      %vm4724 = vcmp.lt.s32.totalorder %v4669, 16
      %vm4725 = vcmp.lt.s32.totalorder %v4670, 16
      %vm4726 = vcmp.lt.s32.totalorder %v4671, 16
      %vm4727 = vcmp.lt.s32.totalorder %v4672, 16
      %vm4728 = vcmp.lt.s32.totalorder %v4673, 16
      %vm4729 = vcmp.lt.s32.totalorder %v4674, 16
      %vm4730 = vcmp.lt.s32.totalorder %v4675, 16
      %vm4731 = vcmp.lt.s32.totalorder %v4676, 16
      %vm4732 = vcmp.lt.s32.totalorder %v4677, 16
      %vm4733 = vcmp.lt.s32.totalorder %v4678, 16
      %vm4734 = vcmp.lt.s32.totalorder %v4679, 16
      %vm4735 = vcmp.lt.s32.totalorder %v4680, 16
      %vm4736 = vcmp.lt.s32.totalorder %v4681, 16
      %vm4737 = vcmp.lt.s32.totalorder %v4682, 16
      %vm4738 = vcmp.lt.s32.totalorder %v4683, 16
      %vm4739 = vcmp.lt.s32.totalorder %v4684, 16
      %vm4740 = vcmp.lt.s32.totalorder %v4685, 16
      %vm4741 = vcmp.lt.s32.totalorder %v4686, 16
      %vm4742 = vcmp.lt.s32.totalorder %v4687, 16
      %vm4743 = vcmp.lt.s32.totalorder %v4688, 16
      %vm4744 = vcmp.lt.s32.totalorder %v4689, 16
      %vm4745 = vcmp.lt.s32.totalorder %v4690, 16
      %vm4746 = vmand %vm4694, %vm4720
      %vm4747 = vmand %vm4695, %vm4721
      %vm4748 = vmand %vm4696, %vm4722
      %vm4749 = vmand %vm4697, %vm4723
      %vm4750 = vmand %vm4698, %vm4724
      %vm4751 = vmand %vm4699, %vm4725
      %vm4752 = vmand %vm4700, %vm4726
      %vm4753 = vmand %vm4701, %vm4727
      %vm4754 = vmand %vm4702, %vm4728
      %vm4755 = vmand %vm4703, %vm4729
      %vm4756 = vmand %vm4704, %vm4730
      %vm4757 = vmand %vm4705, %vm4731
      %vm4758 = vmand %vm4706, %vm4732
      %vm4759 = vmand %vm4707, %vm4733
      %vm4760 = vmand %vm4708, %vm4734
      %vm4761 = vmand %vm4709, %vm4735
      %vm4762 = vmand %vm4710, %vm4736
      %vm4763 = vmand %vm4711, %vm4737
      %vm4764 = vmand %vm4712, %vm4738
      %vm4765 = vmand %vm4713, %vm4739
      %vm4766 = vmand %vm4714, %vm4740
      %vm4767 = vmand %vm4715, %vm4741
      %vm4768 = vmand %vm4716, %vm4742
      %vm4769 = vmand %vm4717, %vm4743
      %vm4770 = vmand %vm4718, %vm4744
      %vm4771 = vmand %vm4719, %vm4745
      %vm4772 = vcmp.lt.s32.totalorder %v4692, 16
      %vm4773 = vcmp.lt.s32.totalorder %v4693, 16
      %vm4774 = vmand %vm4746, %vm4772
      %vm4775 = vmand %vm4746, %vm4773
      %vm4776 = vmand %vm4747, %vm4772
      %vm4777 = vmand %vm4747, %vm4773
      %vm4778 = vmand %vm4748, %vm4772
      %vm4779 = vmand %vm4748, %vm4773
      %vm4780 = vmand %vm4749, %vm4772
      %vm4781 = vmand %vm4749, %vm4773
      %vm4782 = vmand %vm4750, %vm4772
      %vm4783 = vmand %vm4750, %vm4773
      %vm4784 = vmand %vm4751, %vm4772
      %vm4785 = vmand %vm4751, %vm4773
      %vm4786 = vmand %vm4752, %vm4772
      %vm4787 = vmand %vm4752, %vm4773
      %vm4788 = vmand %vm4753, %vm4772
      %vm4789 = vmand %vm4753, %vm4773
      %vm4790 = vmand %vm4754, %vm4772
      %vm4791 = vmand %vm4754, %vm4773
      %vm4792 = vmand %vm4755, %vm4772
      %vm4793 = vmand %vm4755, %vm4773
      %vm4794 = vmand %vm4756, %vm4772
      %vm4795 = vmand %vm4756, %vm4773
      %vm4796 = vmand %vm4757, %vm4772
      %vm4797 = vmand %vm4757, %vm4773
      %vm4798 = vmand %vm4758, %vm4772
      %vm4799 = vmand %vm4758, %vm4773
      %vm4800 = vmand %vm4759, %vm4772
      %vm4801 = vmand %vm4759, %vm4773
      %vm4802 = vmand %vm4760, %vm4772
      %vm4803 = vmand %vm4760, %vm4773
      %vm4804 = vmand %vm4761, %vm4772
      %vm4805 = vmand %vm4761, %vm4773
      %vm4806 = vmand %vm4762, %vm4772
      %vm4807 = vmand %vm4762, %vm4773
      %vm4808 = vmand %vm4763, %vm4772
      %vm4809 = vmand %vm4763, %vm4773
      %vm4810 = vmand %vm4764, %vm4772
      %vm4811 = vmand %vm4764, %vm4773
      %vm4812 = vmand %vm4765, %vm4772
      %vm4813 = vmand %vm4765, %vm4773
      %vm4814 = vmand %vm4766, %vm4772
      %vm4815 = vmand %vm4766, %vm4773
      %vm4816 = vmand %vm4767, %vm4772
      %vm4817 = vmand %vm4767, %vm4773
      %vm4818 = vmand %vm4768, %vm4772
      %vm4819 = vmand %vm4768, %vm4773
      %vm4820 = vmand %vm4769, %vm4772
      %vm4821 = vmand %vm4769, %vm4773
      %vm4822 = vmand %vm4770, %vm4772
      %vm4823 = vmand %vm4770, %vm4773
      %vm4824 = vmand %vm4771, %vm4772
      %vm4825 = vmand %vm4771, %vm4773
      %v4826 = vsel %vm4774, 1, 0
      %v4827 = vsel %vm4775, 1, 0
      %v4828 = vsel %vm4776, 1, 0
      %v4829 = vsel %vm4777, 1, 0
      %v4830 = vsel %vm4778, 1, 0
      %v4831 = vsel %vm4779, 1, 0
      %v4832 = vsel %vm4780, 1, 0
      %v4833 = vsel %vm4781, 1, 0
      %v4834 = vsel %vm4782, 1, 0
      %v4835 = vsel %vm4783, 1, 0
      %v4836 = vsel %vm4784, 1, 0
      %v4837 = vsel %vm4785, 1, 0
      %v4838 = vsel %vm4786, 1, 0
      %v4839 = vsel %vm4787, 1, 0
      %v4840 = vsel %vm4788, 1, 0
      %v4841 = vsel %vm4789, 1, 0
      %v4842 = vsel %vm4790, 1, 0
      %v4843 = vsel %vm4791, 1, 0
      %v4844 = vsel %vm4792, 1, 0
      %v4845 = vsel %vm4793, 1, 0
      %v4846 = vsel %vm4794, 1, 0
      %v4847 = vsel %vm4795, 1, 0
      %v4848 = vsel %vm4796, 1, 0
      %v4849 = vsel %vm4797, 1, 0
      %v4850 = vsel %vm4798, 1, 0
      %v4851 = vsel %vm4799, 1, 0
      %v4852 = vsel %vm4800, 1, 0
      %v4853 = vsel %vm4801, 1, 0
      %v4854 = vsel %vm4802, 1, 0
      %v4855 = vsel %vm4803, 1, 0
      %v4856 = vsel %vm4804, 1, 0
      %v4857 = vsel %vm4805, 1, 0
      %v4858 = vsel %vm4806, 1, 0
      %v4859 = vsel %vm4807, 1, 0
      %v4860 = vsel %vm4808, 1, 0
      %v4861 = vsel %vm4809, 1, 0
      %v4862 = vsel %vm4810, 1, 0
      %v4863 = vsel %vm4811, 1, 0
      %v4864 = vsel %vm4812, 1, 0
      %v4865 = vsel %vm4813, 1, 0
      %v4866 = vsel %vm4814, 1, 0
      %v4867 = vsel %vm4815, 1, 0
      %v4868 = vsel %vm4816, 1, 0
      %v4869 = vsel %vm4817, 1, 0
      %v4870 = vsel %vm4818, 1, 0
      %v4871 = vsel %vm4819, 1, 0
      %v4872 = vsel %vm4820, 1, 0
      %v4873 = vsel %vm4821, 1, 0
      %v4874 = vsel %vm4822, 1, 0
      %v4875 = vsel %vm4823, 1, 0
      %v4876 = vsel %vm4824, 1, 0
      %v4877 = vsel %vm4825, 1, 0
      %vm4878 = vcmp.eq.s32.totalorder %v4826, 1
      %vm4879 = vcmp.eq.s32.totalorder %v4827, 1
      %vm4880 = vcmp.eq.s32.totalorder %v4828, 1
      %vm4881 = vcmp.eq.s32.totalorder %v4829, 1
      %vm4882 = vcmp.eq.s32.totalorder %v4830, 1
      %vm4883 = vcmp.eq.s32.totalorder %v4831, 1
      %vm4884 = vcmp.eq.s32.totalorder %v4832, 1
      %vm4885 = vcmp.eq.s32.totalorder %v4833, 1
      %vm4886 = vcmp.eq.s32.totalorder %v4834, 1
      %vm4887 = vcmp.eq.s32.totalorder %v4835, 1
      %vm4888 = vcmp.eq.s32.totalorder %v4836, 1
      %vm4889 = vcmp.eq.s32.totalorder %v4837, 1
      %vm4890 = vcmp.eq.s32.totalorder %v4838, 1
      %vm4891 = vcmp.eq.s32.totalorder %v4839, 1
      %vm4892 = vcmp.eq.s32.totalorder %v4840, 1
      %vm4893 = vcmp.eq.s32.totalorder %v4841, 1
      %vm4894 = vcmp.eq.s32.totalorder %v4842, 1
      %vm4895 = vcmp.eq.s32.totalorder %v4843, 1
      %vm4896 = vcmp.eq.s32.totalorder %v4844, 1
      %vm4897 = vcmp.eq.s32.totalorder %v4845, 1
      %vm4898 = vcmp.eq.s32.totalorder %v4846, 1
      %vm4899 = vcmp.eq.s32.totalorder %v4847, 1
      %vm4900 = vcmp.eq.s32.totalorder %v4848, 1
      %vm4901 = vcmp.eq.s32.totalorder %v4849, 1
      %vm4902 = vcmp.eq.s32.totalorder %v4850, 1
      %vm4903 = vcmp.eq.s32.totalorder %v4851, 1
      %vm4904 = vcmp.eq.s32.totalorder %v4852, 1
      %vm4905 = vcmp.eq.s32.totalorder %v4853, 1
      %vm4906 = vcmp.eq.s32.totalorder %v4854, 1
      %vm4907 = vcmp.eq.s32.totalorder %v4855, 1
      %vm4908 = vcmp.eq.s32.totalorder %v4856, 1
      %vm4909 = vcmp.eq.s32.totalorder %v4857, 1
      %vm4910 = vcmp.eq.s32.totalorder %v4858, 1
      %vm4911 = vcmp.eq.s32.totalorder %v4859, 1
      %vm4912 = vcmp.eq.s32.totalorder %v4860, 1
      %vm4913 = vcmp.eq.s32.totalorder %v4861, 1
      %vm4914 = vcmp.eq.s32.totalorder %v4862, 1
      %vm4915 = vcmp.eq.s32.totalorder %v4863, 1
      %vm4916 = vcmp.eq.s32.totalorder %v4864, 1
      %vm4917 = vcmp.eq.s32.totalorder %v4865, 1
      %vm4918 = vcmp.eq.s32.totalorder %v4866, 1
      %vm4919 = vcmp.eq.s32.totalorder %v4867, 1
      %vm4920 = vcmp.eq.s32.totalorder %v4868, 1
      %vm4921 = vcmp.eq.s32.totalorder %v4869, 1
      %vm4922 = vcmp.eq.s32.totalorder %v4870, 1
      %vm4923 = vcmp.eq.s32.totalorder %v4871, 1
      %vm4924 = vcmp.eq.s32.totalorder %v4872, 1
      %vm4925 = vcmp.eq.s32.totalorder %v4873, 1
      %vm4926 = vcmp.eq.s32.totalorder %v4874, 1
      %vm4927 = vcmp.eq.s32.totalorder %v4875, 1
      %vm4928 = vcmp.eq.s32.totalorder %v4876, 1
      %vm4929 = vcmp.eq.s32.totalorder %v4877, 1
      %v4930 = vsel %vm4878, %v4612, 0.0
      %v4931 = vsel %vm4879, %v4613, 0.0
      %v4932 = vsel %vm4880, %v4614, 0.0
      %v4933 = vsel %vm4881, %v4615, 0.0
      %v4934 = vsel %vm4882, %v4616, 0.0
      %v4935 = vsel %vm4883, %v4617, 0.0
      %v4936 = vsel %vm4884, %v4618, 0.0
      %v4937 = vsel %vm4885, %v4619, 0.0
      %v4938 = vsel %vm4886, %v4620, 0.0
      %v4939 = vsel %vm4887, %v4621, 0.0
      %v4940 = vsel %vm4888, %v4622, 0.0
      %v4941 = vsel %vm4889, %v4623, 0.0
      %v4942 = vsel %vm4890, %v4624, 0.0
      %v4943 = vsel %vm4891, %v4625, 0.0
      %v4944 = vsel %vm4892, %v4626, 0.0
      %v4945 = vsel %vm4893, %v4627, 0.0
      %v4946 = vsel %vm4894, %v4628, 0.0
      %v4947 = vsel %vm4895, %v4629, 0.0
      %v4948 = vsel %vm4896, %v4630, 0.0
      %v4949 = vsel %vm4897, %v4631, 0.0
      %v4950 = vsel %vm4898, %v4632, 0.0
      %v4951 = vsel %vm4899, %v4633, 0.0
      %v4952 = vsel %vm4900, %v4634, 0.0
      %v4953 = vsel %vm4901, %v4635, 0.0
      %v4954 = vsel %vm4902, %v4636, 0.0
      %v4955 = vsel %vm4903, %v4637, 0.0
      %v4956 = vsel %vm4904, %v4638, 0.0
      %v4957 = vsel %vm4905, %v4639, 0.0
      %v4958 = vsel %vm4906, %v4640, 0.0
      %v4959 = vsel %vm4907, %v4641, 0.0
      %v4960 = vsel %vm4908, %v4642, 0.0
      %v4961 = vsel %vm4909, %v4643, 0.0
      %v4962 = vsel %vm4910, %v4644, 0.0
      %v4963 = vsel %vm4911, %v4645, 0.0
      %v4964 = vsel %vm4912, %v4646, 0.0
      %v4965 = vsel %vm4913, %v4647, 0.0
      %v4966 = vsel %vm4914, %v4648, 0.0
      %v4967 = vsel %vm4915, %v4649, 0.0
      %v4968 = vsel %vm4916, %v4650, 0.0
      %v4969 = vsel %vm4917, %v4651, 0.0
      %v4970 = vsel %vm4918, %v4652, 0.0
      %v4971 = vsel %vm4919, %v4653, 0.0
      %v4972 = vsel %vm4920, %v4654, 0.0
      %v4973 = vsel %vm4921, %v4655, 0.0
      %v4974 = vsel %vm4922, %v4656, 0.0
      %v4975 = vsel %vm4923, %v4657, 0.0
      %v4976 = vsel %vm4924, %v4658, 0.0
      %v4977 = vsel %vm4925, %v4659, 0.0
      %v4978 = vsel %vm4926, %v4660, 0.0
      %v4979 = vsel %vm4927, %v4661, 0.0
      %v4980 = vsel %vm4928, %v4662, 0.0
      %v4981 = vsel %vm4929, %v4663, 0.0
      %4982 = vst [vmem:[#allocation3 + $0x10] sm:$0xff] %v4930
      %4983 = vst [vmem:[#allocation3 + $0x18] sm:$0xff] %v4931
      %4984 = vst [vmem:[#allocation3 + $0x40] sm:$0xff] %v4932
      %4985 = vst [vmem:[#allocation3 + $0x48] sm:$0xff] %v4933
      %4986 = vst [vmem:[#allocation3 + $0x70] sm:$0xff] %v4934
      %4987 = vst [vmem:[#allocation3 + $0x78] sm:$0xff] %v4935
      %4988 = vst [vmem:[#allocation3 + $0xa0] sm:$0xff] %v4936
      %4989 = vst [vmem:[#allocation3 + $0xa8] sm:$0xff] %v4937
      %4990 = vst [vmem:[#allocation3 + $0xd0] sm:$0xff] %v4938
      %4991 = vst [vmem:[#allocation3 + $0xd8] sm:$0xff] %v4939
      %4992 = vst [vmem:[#allocation3 + $0x100] sm:$0xff] %v4940
      %4993 = vst [vmem:[#allocation3 + $0x108] sm:$0xff] %v4941
      %4994 = vst [vmem:[#allocation3 + $0x130] sm:$0xff] %v4942
      %4995 = vst [vmem:[#allocation3 + $0x138] sm:$0xff] %v4943
      %4996 = vst [vmem:[#allocation3 + $0x160] sm:$0xff] %v4944
      %4997 = vst [vmem:[#allocation3 + $0x168] sm:$0xff] %v4945
      %4998 = vst [vmem:[#allocation3 + $0x190] sm:$0xff] %v4946
      %4999 = vst [vmem:[#allocation3 + $0x198] sm:$0xff] %v4947
      %5000 = vst [vmem:[#allocation3 + $0x1c0] sm:$0xff] %v4948
      %5001 = vst [vmem:[#allocation3 + $0x1c8] sm:$0xff] %v4949
      %5002 = vst [vmem:[#allocation3 + $0x1f0] sm:$0xff] %v4950
      %5003 = vst [vmem:[#allocation3 + $0x1f8] sm:$0xff] %v4951
      %5004 = vst [vmem:[#allocation3 + $0x220] sm:$0xff] %v4952
      %5005 = vst [vmem:[#allocation3 + $0x228] sm:$0xff] %v4953
      %5006 = vst [vmem:[#allocation3 + $0x250] sm:$0xff] %v4954
      %5007 = vst [vmem:[#allocation3 + $0x258] sm:$0xff] %v4955
      %5008 = vst [vmem:[#allocation3 + $0x280] sm:$0xff] %v4956
      %5009 = vst [vmem:[#allocation3 + $0x288] sm:$0xff] %v4957
      %5010 = vst [vmem:[#allocation3 + $0x2b0] sm:$0xff] %v4958
      %5011 = vst [vmem:[#allocation3 + $0x2b8] sm:$0xff] %v4959
      %5012 = vst [vmem:[#allocation3 + $0x2e0] sm:$0xff] %v4960
      %5013 = vst [vmem:[#allocation3 + $0x2e8] sm:$0xff] %v4961
      %5014 = vst [vmem:[#allocation3 + $0x310] sm:$0xff] %v4962
      %5015 = vst [vmem:[#allocation3 + $0x318] sm:$0xff] %v4963
      %5016 = vst [vmem:[#allocation3 + $0x340] sm:$0xff] %v4964
      %5017 = vst [vmem:[#allocation3 + $0x348] sm:$0xff] %v4965
      %5018 = vst [vmem:[#allocation3 + $0x370] sm:$0xff] %v4966
      %5019 = vst [vmem:[#allocation3 + $0x378] sm:$0xff] %v4967
      %5020 = vst [vmem:[#allocation3 + $0x3a0] sm:$0xff] %v4968
      %5021 = vst [vmem:[#allocation3 + $0x3a8] sm:$0xff] %v4969
      %5022 = vst [vmem:[#allocation3 + $0x3d0] sm:$0xff] %v4970
      %5023 = vst [vmem:[#allocation3 + $0x3d8] sm:$0xff] %v4971
      %5024 = vst [vmem:[#allocation3 + $0x400] sm:$0xff] %v4972
      %5025 = vst [vmem:[#allocation3 + $0x408] sm:$0xff] %v4973
      %5026 = vst [vmem:[#allocation3 + $0x430] sm:$0xff] %v4974
      %5027 = vst [vmem:[#allocation3 + $0x438] sm:$0xff] %v4975
      %5028 = vst [vmem:[#allocation3 + $0x460] sm:$0xff] %v4976
      %5029 = vst [vmem:[#allocation3 + $0x468] sm:$0xff] %v4977
      %5030 = vst [vmem:[#allocation3 + $0x490] sm:$0xff] %v4978
      %5031 = vst [vmem:[#allocation3 + $0x498] sm:$0xff] %v4979
      %5032 = vst [vmem:[#allocation3 + $0x4c0] sm:$0xff] %v4980
      %5033 = vst [vmem:[#allocation3 + $0x4c8] sm:$0xff] %v4981
      %v5034 = vld [vmem:[#allocation3 + $0x7] sm:$0xff]
      %v5035 = vld [vmem:[#allocation3 + $0xf] sm:$0xff]
      %v5036 = vld [vmem:[#allocation3 + $0x37] sm:$0xff]
      %v5037 = vld [vmem:[#allocation3 + $0x3f] sm:$0xff]
      %v5038 = vld [vmem:[#allocation3 + $0x67] sm:$0xff]
      %v5039 = vld [vmem:[#allocation3 + $0x6f] sm:$0xff]
      %v5040 = vld [vmem:[#allocation3 + $0x97] sm:$0xff]
      %v5041 = vld [vmem:[#allocation3 + $0x9f] sm:$0xff]
      %v5042 = vld [vmem:[#allocation3 + $0xc7] sm:$0xff]
      %v5043 = vld [vmem:[#allocation3 + $0xcf] sm:$0xff]
      %v5044 = vld [vmem:[#allocation3 + $0xf7] sm:$0xff]
      %v5045 = vld [vmem:[#allocation3 + $0xff] sm:$0xff]
      %v5046 = vld [vmem:[#allocation3 + $0x127] sm:$0xff]
      %v5047 = vld [vmem:[#allocation3 + $0x12f] sm:$0xff]
      %v5048 = vld [vmem:[#allocation3 + $0x157] sm:$0xff]
      %v5049 = vld [vmem:[#allocation3 + $0x15f] sm:$0xff]
      %v5050 = vld [vmem:[%s3] sm:$0x1]
      %v5051 = vlaneseq
      %v5052 = vshrl.u32 %v5051, 7
      %v5053 = vsub.s32 0, %v5052
      %v5054 = vrot.slane %v5050, %v5053
      %v5055 = vmul.f32 %v5034, %v5054
      %v5056 = vmul.f32 %v5035, %v5054
      %v5057 = vmul.f32 %v5036, %v5054
      %v5058 = vmul.f32 %v5037, %v5054
      %v5059 = vmul.f32 %v5038, %v5054
      %v5060 = vmul.f32 %v5039, %v5054
      %v5061 = vmul.f32 %v5040, %v5054
      %v5062 = vmul.f32 %v5041, %v5054
      %v5063 = vmul.f32 %v5042, %v5054
      %v5064 = vmul.f32 %v5043, %v5054
      %v5065 = vmul.f32 %v5044, %v5054
      %v5066 = vmul.f32 %v5045, %v5054
      %v5067 = vmul.f32 %v5046, %v5054
      %v5068 = vmul.f32 %v5047, %v5054
      %v5069 = vmul.f32 %v5048, %v5054
      %v5070 = vmul.f32 %v5049, %v5054
      %v5071 = vld [vmem:[#allocation3 + $0xa] sm:$0xff]
      %v5072 = vld [vmem:[#allocation3 + $0x12] sm:$0xff]
      %v5073 = vld [vmem:[#allocation3 + $0x3a] sm:$0xff]
      %v5074 = vld [vmem:[#allocation3 + $0x42] sm:$0xff]
      %v5075 = vld [vmem:[#allocation3 + $0x6a] sm:$0xff]
      %v5076 = vld [vmem:[#allocation3 + $0x72] sm:$0xff]
      %v5077 = vld [vmem:[#allocation3 + $0x9a] sm:$0xff]
      %v5078 = vld [vmem:[#allocation3 + $0xa2] sm:$0xff]
      %v5079 = vld [vmem:[#allocation3 + $0xca] sm:$0xff]
      %v5080 = vld [vmem:[#allocation3 + $0xd2] sm:$0xff]
      %v5081 = vld [vmem:[#allocation3 + $0xfa] sm:$0xff]
      %v5082 = vld [vmem:[#allocation3 + $0x102] sm:$0xff]
      %v5083 = vld [vmem:[#allocation3 + $0x12a] sm:$0xff]
      %v5084 = vld [vmem:[#allocation3 + $0x132] sm:$0xff]
      %v5085 = vld [vmem:[#allocation3 + $0x15a] sm:$0xff]
      %v5086 = vld [vmem:[#allocation3 + $0x162] sm:$0xff]
      %v5087 = vld [vmem:[%s3 + $0x1] sm:$0x1]
      %v5088 = vlaneseq
      %v5089 = vshrl.u32 %v5088, 7
      %v5090 = vsub.s32 0, %v5089
      %v5091 = vrot.slane %v5087, %v5090
      %v5092 = vmul.f32 %v5071, %v5091
      %v5093 = vmul.f32 %v5072, %v5091
      %v5094 = vmul.f32 %v5073, %v5091
      %v5095 = vmul.f32 %v5074, %v5091
      %v5096 = vmul.f32 %v5075, %v5091
      %v5097 = vmul.f32 %v5076, %v5091
      %v5098 = vmul.f32 %v5077, %v5091
      %v5099 = vmul.f32 %v5078, %v5091
      %v5100 = vmul.f32 %v5079, %v5091
      %v5101 = vmul.f32 %v5080, %v5091
      %v5102 = vmul.f32 %v5081, %v5091
      %v5103 = vmul.f32 %v5082, %v5091
      %v5104 = vmul.f32 %v5083, %v5091
      %v5105 = vmul.f32 %v5084, %v5091
      %v5106 = vmul.f32 %v5085, %v5091
      %v5107 = vmul.f32 %v5086, %v5091
      %v5108 = vadd.f32 %v5055, %v5092
      %v5109 = vadd.f32 %v5056, %v5093
      %v5110 = vadd.f32 %v5057, %v5094
      %v5111 = vadd.f32 %v5058, %v5095
      %v5112 = vadd.f32 %v5059, %v5096
      %v5113 = vadd.f32 %v5060, %v5097
      %v5114 = vadd.f32 %v5061, %v5098
      %v5115 = vadd.f32 %v5062, %v5099
      %v5116 = vadd.f32 %v5063, %v5100
      %v5117 = vadd.f32 %v5064, %v5101
      %v5118 = vadd.f32 %v5065, %v5102
      %v5119 = vadd.f32 %v5066, %v5103
      %v5120 = vadd.f32 %v5067, %v5104
      %v5121 = vadd.f32 %v5068, %v5105
      %v5122 = vadd.f32 %v5069, %v5106
      %v5123 = vadd.f32 %v5070, %v5107
      %v5124 = vld [vmem:[#allocation3 + $0xd] sm:$0xff]
      %v5125 = vld [vmem:[#allocation3 + $0x15] sm:$0xff]
      %v5126 = vld [vmem:[#allocation3 + $0x3d] sm:$0xff]
      %v5127 = vld [vmem:[#allocation3 + $0x45] sm:$0xff]
      %v5128 = vld [vmem:[#allocation3 + $0x6d] sm:$0xff]
      %v5129 = vld [vmem:[#allocation3 + $0x75] sm:$0xff]
      %v5130 = vld [vmem:[#allocation3 + $0x9d] sm:$0xff]
      %v5131 = vld [vmem:[#allocation3 + $0xa5] sm:$0xff]
      %v5132 = vld [vmem:[#allocation3 + $0xcd] sm:$0xff]
      %v5133 = vld [vmem:[#allocation3 + $0xd5] sm:$0xff]
      %v5134 = vld [vmem:[#allocation3 + $0xfd] sm:$0xff]
      %v5135 = vld [vmem:[#allocation3 + $0x105] sm:$0xff]
      %v5136 = vld [vmem:[#allocation3 + $0x12d] sm:$0xff]
      %v5137 = vld [vmem:[#allocation3 + $0x135] sm:$0xff]
      %v5138 = vld [vmem:[#allocation3 + $0x15d] sm:$0xff]
      %v5139 = vld [vmem:[#allocation3 + $0x165] sm:$0xff]
      %v5140 = vld [vmem:[%s3 + $0x2] sm:$0x1]
      %v5141 = vlaneseq
      %v5142 = vshrl.u32 %v5141, 7
      %v5143 = vsub.s32 0, %v5142
      %v5144 = vrot.slane %v5140, %v5143
      %v5145 = vmul.f32 %v5124, %v5144
      %v5146 = vmul.f32 %v5125, %v5144
      %v5147 = vmul.f32 %v5126, %v5144
      %v5148 = vmul.f32 %v5127, %v5144
      %v5149 = vmul.f32 %v5128, %v5144
      %v5150 = vmul.f32 %v5129, %v5144
      %v5151 = vmul.f32 %v5130, %v5144
      %v5152 = vmul.f32 %v5131, %v5144
      %v5153 = vmul.f32 %v5132, %v5144
      %v5154 = vmul.f32 %v5133, %v5144
      %v5155 = vmul.f32 %v5134, %v5144
      %v5156 = vmul.f32 %v5135, %v5144
      %v5157 = vmul.f32 %v5136, %v5144
      %v5158 = vmul.f32 %v5137, %v5144
      %v5159 = vmul.f32 %v5138, %v5144
      %v5160 = vmul.f32 %v5139, %v5144
      %v5161 = vadd.f32 %v5108, %v5145
      %v5162 = vadd.f32 %v5109, %v5146
      %v5163 = vadd.f32 %v5110, %v5147
      %v5164 = vadd.f32 %v5111, %v5148
      %v5165 = vadd.f32 %v5112, %v5149
      %v5166 = vadd.f32 %v5113, %v5150
      %v5167 = vadd.f32 %v5114, %v5151
      %v5168 = vadd.f32 %v5115, %v5152
      %v5169 = vadd.f32 %v5116, %v5153
      %v5170 = vadd.f32 %v5117, %v5154
      %v5171 = vadd.f32 %v5118, %v5155
      %v5172 = vadd.f32 %v5119, %v5156
      %v5173 = vadd.f32 %v5120, %v5157
      %v5174 = vadd.f32 %v5121, %v5158
      %v5175 = vadd.f32 %v5122, %v5159
      %v5176 = vadd.f32 %v5123, %v5160
      %v5177 = vld [vmem:[#allocation3 + $0x10] sm:$0xff]
      %v5178 = vld [vmem:[#allocation3 + $0x18] sm:$0xff]
      %v5179 = vld [vmem:[#allocation3 + $0x40] sm:$0xff]
      %v5180 = vld [vmem:[#allocation3 + $0x48] sm:$0xff]
      %v5181 = vld [vmem:[#allocation3 + $0x70] sm:$0xff]
      %v5182 = vld [vmem:[#allocation3 + $0x78] sm:$0xff]
      %v5183 = vld [vmem:[#allocation3 + $0xa0] sm:$0xff]
      %v5184 = vld [vmem:[#allocation3 + $0xa8] sm:$0xff]
      %v5185 = vld [vmem:[#allocation3 + $0xd0] sm:$0xff]
      %v5186 = vld [vmem:[#allocation3 + $0xd8] sm:$0xff]
      %v5187 = vld [vmem:[#allocation3 + $0x100] sm:$0xff]
      %v5188 = vld [vmem:[#allocation3 + $0x108] sm:$0xff]
      %v5189 = vld [vmem:[#allocation3 + $0x130] sm:$0xff]
      %v5190 = vld [vmem:[#allocation3 + $0x138] sm:$0xff]
      %v5191 = vld [vmem:[#allocation3 + $0x160] sm:$0xff]
      %v5192 = vld [vmem:[#allocation3 + $0x168] sm:$0xff]
      %v5193 = vld [vmem:[%s3 + $0x3] sm:$0x1]
      %v5194 = vlaneseq
      %v5195 = vshrl.u32 %v5194, 7
      %v5196 = vsub.s32 0, %v5195
      %v5197 = vrot.slane %v5193, %v5196
      %v5198 = vmul.f32 %v5177, %v5197
      %v5199 = vmul.f32 %v5178, %v5197
      %v5200 = vmul.f32 %v5179, %v5197
      %v5201 = vmul.f32 %v5180, %v5197
      %v5202 = vmul.f32 %v5181, %v5197
      %v5203 = vmul.f32 %v5182, %v5197
      %v5204 = vmul.f32 %v5183, %v5197
      %v5205 = vmul.f32 %v5184, %v5197
      %v5206 = vmul.f32 %v5185, %v5197
      %v5207 = vmul.f32 %v5186, %v5197
      %v5208 = vmul.f32 %v5187, %v5197
      %v5209 = vmul.f32 %v5188, %v5197
      %v5210 = vmul.f32 %v5189, %v5197
      %v5211 = vmul.f32 %v5190, %v5197
      %v5212 = vmul.f32 %v5191, %v5197
      %v5213 = vmul.f32 %v5192, %v5197
      %v5214 = vadd.f32 %v5161, %v5198
      %v5215 = vadd.f32 %v5162, %v5199
      %v5216 = vadd.f32 %v5163, %v5200
      %v5217 = vadd.f32 %v5164, %v5201
      %v5218 = vadd.f32 %v5165, %v5202
      %v5219 = vadd.f32 %v5166, %v5203
      %v5220 = vadd.f32 %v5167, %v5204
      %v5221 = vadd.f32 %v5168, %v5205
      %v5222 = vadd.f32 %v5169, %v5206
      %v5223 = vadd.f32 %v5170, %v5207
      %v5224 = vadd.f32 %v5171, %v5208
      %v5225 = vadd.f32 %v5172, %v5209
      %v5226 = vadd.f32 %v5173, %v5210
      %v5227 = vadd.f32 %v5174, %v5211
      %v5228 = vadd.f32 %v5175, %v5212
      %v5229 = vadd.f32 %v5176, %v5213
      %v5230 = vld [vmem:[#allocation3 + $0x13] sm:$0xff]
      %v5231 = vld [vmem:[#allocation3 + $0x1b] sm:$0xff]
      %v5232 = vld [vmem:[#allocation3 + $0x43] sm:$0xff]
      %v5233 = vld [vmem:[#allocation3 + $0x4b] sm:$0xff]
      %v5234 = vld [vmem:[#allocation3 + $0x73] sm:$0xff]
      %v5235 = vld [vmem:[#allocation3 + $0x7b] sm:$0xff]
      %v5236 = vld [vmem:[#allocation3 + $0xa3] sm:$0xff]
      %v5237 = vld [vmem:[#allocation3 + $0xab] sm:$0xff]
      %v5238 = vld [vmem:[#allocation3 + $0xd3] sm:$0xff]
      %v5239 = vld [vmem:[#allocation3 + $0xdb] sm:$0xff]
      %v5240 = vld [vmem:[#allocation3 + $0x103] sm:$0xff]
      %v5241 = vld [vmem:[#allocation3 + $0x10b] sm:$0xff]
      %v5242 = vld [vmem:[#allocation3 + $0x133] sm:$0xff]
      %v5243 = vld [vmem:[#allocation3 + $0x13b] sm:$0xff]
      %v5244 = vld [vmem:[#allocation3 + $0x163] sm:$0xff]
      %v5245 = vld [vmem:[#allocation3 + $0x16b] sm:$0xff]
      %v5246 = vld [vmem:[%s3 + $0x4] sm:$0x1]
      %v5247 = vlaneseq
      %v5248 = vshrl.u32 %v5247, 7
      %v5249 = vsub.s32 0, %v5248
      %v5250 = vrot.slane %v5246, %v5249
      %v5251 = vmul.f32 %v5230, %v5250
      %v5252 = vmul.f32 %v5231, %v5250
      %v5253 = vmul.f32 %v5232, %v5250
      %v5254 = vmul.f32 %v5233, %v5250
      %v5255 = vmul.f32 %v5234, %v5250
      %v5256 = vmul.f32 %v5235, %v5250
      %v5257 = vmul.f32 %v5236, %v5250
      %v5258 = vmul.f32 %v5237, %v5250
      %v5259 = vmul.f32 %v5238, %v5250
      %v5260 = vmul.f32 %v5239, %v5250
      %v5261 = vmul.f32 %v5240, %v5250
      %v5262 = vmul.f32 %v5241, %v5250
      %v5263 = vmul.f32 %v5242, %v5250
      %v5264 = vmul.f32 %v5243, %v5250
      %v5265 = vmul.f32 %v5244, %v5250
      %v5266 = vmul.f32 %v5245, %v5250
      %v5267 = vadd.f32 %v5214, %v5251
      %v5268 = vadd.f32 %v5215, %v5252
      %v5269 = vadd.f32 %v5216, %v5253
      %v5270 = vadd.f32 %v5217, %v5254
      %v5271 = vadd.f32 %v5218, %v5255
      %v5272 = vadd.f32 %v5219, %v5256
      %v5273 = vadd.f32 %v5220, %v5257
      %v5274 = vadd.f32 %v5221, %v5258
      %v5275 = vadd.f32 %v5222, %v5259
      %v5276 = vadd.f32 %v5223, %v5260
      %v5277 = vadd.f32 %v5224, %v5261
      %v5278 = vadd.f32 %v5225, %v5262
      %v5279 = vadd.f32 %v5226, %v5263
      %v5280 = vadd.f32 %v5227, %v5264
      %v5281 = vadd.f32 %v5228, %v5265
      %v5282 = vadd.f32 %v5229, %v5266
      %v5283 = vld [vmem:[#allocation3 + $0x16] sm:$0xff]
      %v5284 = vld [vmem:[#allocation3 + $0x1e] sm:$0xff]
      %v5285 = vld [vmem:[#allocation3 + $0x46] sm:$0xff]
      %v5286 = vld [vmem:[#allocation3 + $0x4e] sm:$0xff]
      %v5287 = vld [vmem:[#allocation3 + $0x76] sm:$0xff]
      %v5288 = vld [vmem:[#allocation3 + $0x7e] sm:$0xff]
      %v5289 = vld [vmem:[#allocation3 + $0xa6] sm:$0xff]
      %v5290 = vld [vmem:[#allocation3 + $0xae] sm:$0xff]
      %v5291 = vld [vmem:[#allocation3 + $0xd6] sm:$0xff]
      %v5292 = vld [vmem:[#allocation3 + $0xde] sm:$0xff]
      %v5293 = vld [vmem:[#allocation3 + $0x106] sm:$0xff]
      %v5294 = vld [vmem:[#allocation3 + $0x10e] sm:$0xff]
      %v5295 = vld [vmem:[#allocation3 + $0x136] sm:$0xff]
      %v5296 = vld [vmem:[#allocation3 + $0x13e] sm:$0xff]
      %v5297 = vld [vmem:[#allocation3 + $0x166] sm:$0xff]
      %v5298 = vld [vmem:[#allocation3 + $0x16e] sm:$0xff]
      %v5299 = vld [vmem:[%s3 + $0x5] sm:$0x1]
      %v5300 = vlaneseq
      %v5301 = vshrl.u32 %v5300, 7
      %v5302 = vsub.s32 0, %v5301
      %v5303 = vrot.slane %v5299, %v5302
      %v5304 = vmul.f32 %v5283, %v5303
      %v5305 = vmul.f32 %v5284, %v5303
      %v5306 = vmul.f32 %v5285, %v5303
      %v5307 = vmul.f32 %v5286, %v5303
      %v5308 = vmul.f32 %v5287, %v5303
      %v5309 = vmul.f32 %v5288, %v5303
      %v5310 = vmul.f32 %v5289, %v5303
      %v5311 = vmul.f32 %v5290, %v5303
      %v5312 = vmul.f32 %v5291, %v5303
      %v5313 = vmul.f32 %v5292, %v5303
      %v5314 = vmul.f32 %v5293, %v5303
      %v5315 = vmul.f32 %v5294, %v5303
      %v5316 = vmul.f32 %v5295, %v5303
      %v5317 = vmul.f32 %v5296, %v5303
      %v5318 = vmul.f32 %v5297, %v5303
      %v5319 = vmul.f32 %v5298, %v5303
      %v5320 = vadd.f32 %v5267, %v5304
      %v5321 = vadd.f32 %v5268, %v5305
      %v5322 = vadd.f32 %v5269, %v5306
      %v5323 = vadd.f32 %v5270, %v5307
      %v5324 = vadd.f32 %v5271, %v5308
      %v5325 = vadd.f32 %v5272, %v5309
      %v5326 = vadd.f32 %v5273, %v5310
      %v5327 = vadd.f32 %v5274, %v5311
      %v5328 = vadd.f32 %v5275, %v5312
      %v5329 = vadd.f32 %v5276, %v5313
      %v5330 = vadd.f32 %v5277, %v5314
      %v5331 = vadd.f32 %v5278, %v5315
      %v5332 = vadd.f32 %v5279, %v5316
      %v5333 = vadd.f32 %v5280, %v5317
      %v5334 = vadd.f32 %v5281, %v5318
      %v5335 = vadd.f32 %v5282, %v5319
      %v5336 = vld [vmem:[#allocation3 + $0x19] sm:$0xff]
      %v5337 = vld [vmem:[#allocation3 + $0x21] sm:$0xff]
      %v5338 = vld [vmem:[#allocation3 + $0x49] sm:$0xff]
      %v5339 = vld [vmem:[#allocation3 + $0x51] sm:$0xff]
      %v5340 = vld [vmem:[#allocation3 + $0x79] sm:$0xff]
      %v5341 = vld [vmem:[#allocation3 + $0x81] sm:$0xff]
      %v5342 = vld [vmem:[#allocation3 + $0xa9] sm:$0xff]
      %v5343 = vld [vmem:[#allocation3 + $0xb1] sm:$0xff]
      %v5344 = vld [vmem:[#allocation3 + $0xd9] sm:$0xff]
      %v5345 = vld [vmem:[#allocation3 + $0xe1] sm:$0xff]
      %v5346 = vld [vmem:[#allocation3 + $0x109] sm:$0xff]
      %v5347 = vld [vmem:[#allocation3 + $0x111] sm:$0xff]
      %v5348 = vld [vmem:[#allocation3 + $0x139] sm:$0xff]
      %v5349 = vld [vmem:[#allocation3 + $0x141] sm:$0xff]
      %v5350 = vld [vmem:[#allocation3 + $0x169] sm:$0xff]
      %v5351 = vld [vmem:[#allocation3 + $0x171] sm:$0xff]
      %v5352 = vld [vmem:[%s3 + $0x6] sm:$0x1]
      %v5353 = vlaneseq
      %v5354 = vshrl.u32 %v5353, 7
      %v5355 = vsub.s32 0, %v5354
      %v5356 = vrot.slane %v5352, %v5355
      %v5357 = vmul.f32 %v5336, %v5356
      %v5358 = vmul.f32 %v5337, %v5356
      %v5359 = vmul.f32 %v5338, %v5356
      %v5360 = vmul.f32 %v5339, %v5356
      %v5361 = vmul.f32 %v5340, %v5356
      %v5362 = vmul.f32 %v5341, %v5356
      %v5363 = vmul.f32 %v5342, %v5356
      %v5364 = vmul.f32 %v5343, %v5356
      %v5365 = vmul.f32 %v5344, %v5356
      %v5366 = vmul.f32 %v5345, %v5356
      %v5367 = vmul.f32 %v5346, %v5356
      %v5368 = vmul.f32 %v5347, %v5356
      %v5369 = vmul.f32 %v5348, %v5356
      %v5370 = vmul.f32 %v5349, %v5356
      %v5371 = vmul.f32 %v5350, %v5356
      %v5372 = vmul.f32 %v5351, %v5356
      %v5373 = vadd.f32 %v5320, %v5357
      %v5374 = vadd.f32 %v5321, %v5358
      %v5375 = vadd.f32 %v5322, %v5359
      %v5376 = vadd.f32 %v5323, %v5360
      %v5377 = vadd.f32 %v5324, %v5361
      %v5378 = vadd.f32 %v5325, %v5362
      %v5379 = vadd.f32 %v5326, %v5363
      %v5380 = vadd.f32 %v5327, %v5364
      %v5381 = vadd.f32 %v5328, %v5365
      %v5382 = vadd.f32 %v5329, %v5366
      %v5383 = vadd.f32 %v5330, %v5367
      %v5384 = vadd.f32 %v5331, %v5368
      %v5385 = vadd.f32 %v5332, %v5369
      %v5386 = vadd.f32 %v5333, %v5370
      %v5387 = vadd.f32 %v5334, %v5371
      %v5388 = vadd.f32 %v5335, %v5372
      %s5389 = scalar_lea.vmem [#allocation3], 144
      %v5390 = vld [vmem:[%s5389 + $0x7] sm:$0xff]
      %v5391 = vld [vmem:[%s5389 + $0xf] sm:$0xff]
      %v5392 = vld [vmem:[%s5389 + $0x37] sm:$0xff]
      %v5393 = vld [vmem:[%s5389 + $0x3f] sm:$0xff]
      %v5394 = vld [vmem:[%s5389 + $0x67] sm:$0xff]
      %v5395 = vld [vmem:[%s5389 + $0x6f] sm:$0xff]
      %v5396 = vld [vmem:[%s5389 + $0x97] sm:$0xff]
      %v5397 = vld [vmem:[%s5389 + $0x9f] sm:$0xff]
      %v5398 = vld [vmem:[%s5389 + $0xc7] sm:$0xff]
      %v5399 = vld [vmem:[%s5389 + $0xcf] sm:$0xff]
      %v5400 = vld [vmem:[%s5389 + $0xf7] sm:$0xff]
      %v5401 = vld [vmem:[%s5389 + $0xff] sm:$0xff]
      %v5402 = vld [vmem:[%s5389 + $0x127] sm:$0xff]
      %v5403 = vld [vmem:[%s5389 + $0x12f] sm:$0xff]
      %v5404 = vld [vmem:[%s5389 + $0x157] sm:$0xff]
      %v5405 = vld [vmem:[%s5389 + $0x15f] sm:$0xff]
      %s5406 = scalar_lea.vmem %s3, 8
      %v5407 = vld [vmem:[%s5406] sm:$0x1]
      %v5408 = vlaneseq
      %v5409 = vshrl.u32 %v5408, 7
      %v5410 = vsub.s32 0, %v5409
      %v5411 = vrot.slane %v5407, %v5410
      %v5412 = vmul.f32 %v5390, %v5411
      %v5413 = vmul.f32 %v5391, %v5411
      %v5414 = vmul.f32 %v5392, %v5411
      %v5415 = vmul.f32 %v5393, %v5411
      %v5416 = vmul.f32 %v5394, %v5411
      %v5417 = vmul.f32 %v5395, %v5411
      %v5418 = vmul.f32 %v5396, %v5411
      %v5419 = vmul.f32 %v5397, %v5411
      %v5420 = vmul.f32 %v5398, %v5411
      %v5421 = vmul.f32 %v5399, %v5411
      %v5422 = vmul.f32 %v5400, %v5411
      %v5423 = vmul.f32 %v5401, %v5411
      %v5424 = vmul.f32 %v5402, %v5411
      %v5425 = vmul.f32 %v5403, %v5411
      %v5426 = vmul.f32 %v5404, %v5411
      %v5427 = vmul.f32 %v5405, %v5411
      %v5428 = vadd.f32 %v5373, %v5412
      %v5429 = vadd.f32 %v5374, %v5413
      %v5430 = vadd.f32 %v5375, %v5414
      %v5431 = vadd.f32 %v5376, %v5415
      %v5432 = vadd.f32 %v5377, %v5416
      %v5433 = vadd.f32 %v5378, %v5417
      %v5434 = vadd.f32 %v5379, %v5418
      %v5435 = vadd.f32 %v5380, %v5419
      %v5436 = vadd.f32 %v5381, %v5420
      %v5437 = vadd.f32 %v5382, %v5421
      %v5438 = vadd.f32 %v5383, %v5422
      %v5439 = vadd.f32 %v5384, %v5423
      %v5440 = vadd.f32 %v5385, %v5424
      %v5441 = vadd.f32 %v5386, %v5425
      %v5442 = vadd.f32 %v5387, %v5426
      %v5443 = vadd.f32 %v5388, %v5427
      %v5444 = vld [vmem:[%s5389 + $0xa] sm:$0xff]
      %v5445 = vld [vmem:[%s5389 + $0x12] sm:$0xff]
      %v5446 = vld [vmem:[%s5389 + $0x3a] sm:$0xff]
      %v5447 = vld [vmem:[%s5389 + $0x42] sm:$0xff]
      %v5448 = vld [vmem:[%s5389 + $0x6a] sm:$0xff]
      %v5449 = vld [vmem:[%s5389 + $0x72] sm:$0xff]
      %v5450 = vld [vmem:[%s5389 + $0x9a] sm:$0xff]
      %v5451 = vld [vmem:[%s5389 + $0xa2] sm:$0xff]
      %v5452 = vld [vmem:[%s5389 + $0xca] sm:$0xff]
      %v5453 = vld [vmem:[%s5389 + $0xd2] sm:$0xff]
      %v5454 = vld [vmem:[%s5389 + $0xfa] sm:$0xff]
      %v5455 = vld [vmem:[%s5389 + $0x102] sm:$0xff]
      %v5456 = vld [vmem:[%s5389 + $0x12a] sm:$0xff]
      %v5457 = vld [vmem:[%s5389 + $0x132] sm:$0xff]
      %v5458 = vld [vmem:[%s5389 + $0x15a] sm:$0xff]
      %v5459 = vld [vmem:[%s5389 + $0x162] sm:$0xff]
      %v5460 = vld [vmem:[%s5406 + $0x1] sm:$0x1]
      %v5461 = vlaneseq
      %v5462 = vshrl.u32 %v5461, 7
      %v5463 = vsub.s32 0, %v5462
      %v5464 = vrot.slane %v5460, %v5463
      %v5465 = vmul.f32 %v5444, %v5464
      %v5466 = vmul.f32 %v5445, %v5464
      %v5467 = vmul.f32 %v5446, %v5464
      %v5468 = vmul.f32 %v5447, %v5464
      %v5469 = vmul.f32 %v5448, %v5464
      %v5470 = vmul.f32 %v5449, %v5464
      %v5471 = vmul.f32 %v5450, %v5464
      %v5472 = vmul.f32 %v5451, %v5464
      %v5473 = vmul.f32 %v5452, %v5464
      %v5474 = vmul.f32 %v5453, %v5464
      %v5475 = vmul.f32 %v5454, %v5464
      %v5476 = vmul.f32 %v5455, %v5464
      %v5477 = vmul.f32 %v5456, %v5464
      %v5478 = vmul.f32 %v5457, %v5464
      %v5479 = vmul.f32 %v5458, %v5464
      %v5480 = vmul.f32 %v5459, %v5464
      %v5481 = vadd.f32 %v5428, %v5465
      %v5482 = vadd.f32 %v5429, %v5466
      %v5483 = vadd.f32 %v5430, %v5467
      %v5484 = vadd.f32 %v5431, %v5468
      %v5485 = vadd.f32 %v5432, %v5469
      %v5486 = vadd.f32 %v5433, %v5470
      %v5487 = vadd.f32 %v5434, %v5471
      %v5488 = vadd.f32 %v5435, %v5472
      %v5489 = vadd.f32 %v5436, %v5473
      %v5490 = vadd.f32 %v5437, %v5474
      %v5491 = vadd.f32 %v5438, %v5475
      %v5492 = vadd.f32 %v5439, %v5476
      %v5493 = vadd.f32 %v5440, %v5477
      %v5494 = vadd.f32 %v5441, %v5478
      %v5495 = vadd.f32 %v5442, %v5479
      %v5496 = vadd.f32 %v5443, %v5480
      %v5497 = vld [vmem:[%s5389 + $0xd] sm:$0xff]
      %v5498 = vld [vmem:[%s5389 + $0x15] sm:$0xff]
      %v5499 = vld [vmem:[%s5389 + $0x3d] sm:$0xff]
      %v5500 = vld [vmem:[%s5389 + $0x45] sm:$0xff]
      %v5501 = vld [vmem:[%s5389 + $0x6d] sm:$0xff]
      %v5502 = vld [vmem:[%s5389 + $0x75] sm:$0xff]
      %v5503 = vld [vmem:[%s5389 + $0x9d] sm:$0xff]
      %v5504 = vld [vmem:[%s5389 + $0xa5] sm:$0xff]
      %v5505 = vld [vmem:[%s5389 + $0xcd] sm:$0xff]
      %v5506 = vld [vmem:[%s5389 + $0xd5] sm:$0xff]
      %v5507 = vld [vmem:[%s5389 + $0xfd] sm:$0xff]
      %v5508 = vld [vmem:[%s5389 + $0x105] sm:$0xff]
      %v5509 = vld [vmem:[%s5389 + $0x12d] sm:$0xff]
      %v5510 = vld [vmem:[%s5389 + $0x135] sm:$0xff]
      %v5511 = vld [vmem:[%s5389 + $0x15d] sm:$0xff]
      %v5512 = vld [vmem:[%s5389 + $0x165] sm:$0xff]
      %v5513 = vld [vmem:[%s5406 + $0x2] sm:$0x1]
      %v5514 = vlaneseq
      %v5515 = vshrl.u32 %v5514, 7
      %v5516 = vsub.s32 0, %v5515
      %v5517 = vrot.slane %v5513, %v5516
      %v5518 = vmul.f32 %v5497, %v5517
      %v5519 = vmul.f32 %v5498, %v5517
      %v5520 = vmul.f32 %v5499, %v5517
      %v5521 = vmul.f32 %v5500, %v5517
      %v5522 = vmul.f32 %v5501, %v5517
      %v5523 = vmul.f32 %v5502, %v5517
      %v5524 = vmul.f32 %v5503, %v5517
      %v5525 = vmul.f32 %v5504, %v5517
      %v5526 = vmul.f32 %v5505, %v5517
      %v5527 = vmul.f32 %v5506, %v5517
      %v5528 = vmul.f32 %v5507, %v5517
      %v5529 = vmul.f32 %v5508, %v5517
      %v5530 = vmul.f32 %v5509, %v5517
      %v5531 = vmul.f32 %v5510, %v5517
      %v5532 = vmul.f32 %v5511, %v5517
      %v5533 = vmul.f32 %v5512, %v5517
      %v5534 = vadd.f32 %v5481, %v5518
      %v5535 = vadd.f32 %v5482, %v5519
      %v5536 = vadd.f32 %v5483, %v5520
      %v5537 = vadd.f32 %v5484, %v5521
      %v5538 = vadd.f32 %v5485, %v5522
      %v5539 = vadd.f32 %v5486, %v5523
      %v5540 = vadd.f32 %v5487, %v5524
      %v5541 = vadd.f32 %v5488, %v5525
      %v5542 = vadd.f32 %v5489, %v5526
      %v5543 = vadd.f32 %v5490, %v5527
      %v5544 = vadd.f32 %v5491, %v5528
      %v5545 = vadd.f32 %v5492, %v5529
      %v5546 = vadd.f32 %v5493, %v5530
      %v5547 = vadd.f32 %v5494, %v5531
      %v5548 = vadd.f32 %v5495, %v5532
      %v5549 = vadd.f32 %v5496, %v5533
      %v5550 = vld [vmem:[%s5389 + $0x10] sm:$0xff]
      %v5551 = vld [vmem:[%s5389 + $0x18] sm:$0xff]
      %v5552 = vld [vmem:[%s5389 + $0x40] sm:$0xff]
      %v5553 = vld [vmem:[%s5389 + $0x48] sm:$0xff]
      %v5554 = vld [vmem:[%s5389 + $0x70] sm:$0xff]
      %v5555 = vld [vmem:[%s5389 + $0x78] sm:$0xff]
      %v5556 = vld [vmem:[%s5389 + $0xa0] sm:$0xff]
      %v5557 = vld [vmem:[%s5389 + $0xa8] sm:$0xff]
      %v5558 = vld [vmem:[%s5389 + $0xd0] sm:$0xff]
      %v5559 = vld [vmem:[%s5389 + $0xd8] sm:$0xff]
      %v5560 = vld [vmem:[%s5389 + $0x100] sm:$0xff]
      %v5561 = vld [vmem:[%s5389 + $0x108] sm:$0xff]
      %v5562 = vld [vmem:[%s5389 + $0x130] sm:$0xff]
      %v5563 = vld [vmem:[%s5389 + $0x138] sm:$0xff]
      %v5564 = vld [vmem:[%s5389 + $0x160] sm:$0xff]
      %v5565 = vld [vmem:[%s5389 + $0x168] sm:$0xff]
      %v5566 = vld [vmem:[%s5406 + $0x3] sm:$0x1]
      %v5567 = vlaneseq
      %v5568 = vshrl.u32 %v5567, 7
      %v5569 = vsub.s32 0, %v5568
      %v5570 = vrot.slane %v5566, %v5569
      %v5571 = vmul.f32 %v5550, %v5570
      %v5572 = vmul.f32 %v5551, %v5570
      %v5573 = vmul.f32 %v5552, %v5570
      %v5574 = vmul.f32 %v5553, %v5570
      %v5575 = vmul.f32 %v5554, %v5570
      %v5576 = vmul.f32 %v5555, %v5570
      %v5577 = vmul.f32 %v5556, %v5570
      %v5578 = vmul.f32 %v5557, %v5570
      %v5579 = vmul.f32 %v5558, %v5570
      %v5580 = vmul.f32 %v5559, %v5570
      %v5581 = vmul.f32 %v5560, %v5570
      %v5582 = vmul.f32 %v5561, %v5570
      %v5583 = vmul.f32 %v5562, %v5570
      %v5584 = vmul.f32 %v5563, %v5570
      %v5585 = vmul.f32 %v5564, %v5570
      %v5586 = vmul.f32 %v5565, %v5570
      %v5587 = vadd.f32 %v5534, %v5571
      %v5588 = vadd.f32 %v5535, %v5572
      %v5589 = vadd.f32 %v5536, %v5573
      %v5590 = vadd.f32 %v5537, %v5574
      %v5591 = vadd.f32 %v5538, %v5575
      %v5592 = vadd.f32 %v5539, %v5576
      %v5593 = vadd.f32 %v5540, %v5577
      %v5594 = vadd.f32 %v5541, %v5578
      %v5595 = vadd.f32 %v5542, %v5579
      %v5596 = vadd.f32 %v5543, %v5580
      %v5597 = vadd.f32 %v5544, %v5581
      %v5598 = vadd.f32 %v5545, %v5582
      %v5599 = vadd.f32 %v5546, %v5583
      %v5600 = vadd.f32 %v5547, %v5584
      %v5601 = vadd.f32 %v5548, %v5585
      %v5602 = vadd.f32 %v5549, %v5586
      %v5603 = vld [vmem:[%s5389 + $0x13] sm:$0xff]
      %v5604 = vld [vmem:[%s5389 + $0x1b] sm:$0xff]
      %v5605 = vld [vmem:[%s5389 + $0x43] sm:$0xff]
      %v5606 = vld [vmem:[%s5389 + $0x4b] sm:$0xff]
      %v5607 = vld [vmem:[%s5389 + $0x73] sm:$0xff]
      %v5608 = vld [vmem:[%s5389 + $0x7b] sm:$0xff]
      %v5609 = vld [vmem:[%s5389 + $0xa3] sm:$0xff]
      %v5610 = vld [vmem:[%s5389 + $0xab] sm:$0xff]
      %v5611 = vld [vmem:[%s5389 + $0xd3] sm:$0xff]
      %v5612 = vld [vmem:[%s5389 + $0xdb] sm:$0xff]
      %v5613 = vld [vmem:[%s5389 + $0x103] sm:$0xff]
      %v5614 = vld [vmem:[%s5389 + $0x10b] sm:$0xff]
      %v5615 = vld [vmem:[%s5389 + $0x133] sm:$0xff]
      %v5616 = vld [vmem:[%s5389 + $0x13b] sm:$0xff]
      %v5617 = vld [vmem:[%s5389 + $0x163] sm:$0xff]
      %v5618 = vld [vmem:[%s5389 + $0x16b] sm:$0xff]
      %v5619 = vld [vmem:[%s5406 + $0x4] sm:$0x1]
      %v5620 = vlaneseq
      %v5621 = vshrl.u32 %v5620, 7
      %v5622 = vsub.s32 0, %v5621
      %v5623 = vrot.slane %v5619, %v5622
      %v5624 = vmul.f32 %v5603, %v5623
      %v5625 = vmul.f32 %v5604, %v5623
      %v5626 = vmul.f32 %v5605, %v5623
      %v5627 = vmul.f32 %v5606, %v5623
      %v5628 = vmul.f32 %v5607, %v5623
      %v5629 = vmul.f32 %v5608, %v5623
      %v5630 = vmul.f32 %v5609, %v5623
      %v5631 = vmul.f32 %v5610, %v5623
      %v5632 = vmul.f32 %v5611, %v5623
      %v5633 = vmul.f32 %v5612, %v5623
      %v5634 = vmul.f32 %v5613, %v5623
      %v5635 = vmul.f32 %v5614, %v5623
      %v5636 = vmul.f32 %v5615, %v5623
      %v5637 = vmul.f32 %v5616, %v5623
      %v5638 = vmul.f32 %v5617, %v5623
      %v5639 = vmul.f32 %v5618, %v5623
      %v5640 = vadd.f32 %v5587, %v5624
      %v5641 = vadd.f32 %v5588, %v5625
      %v5642 = vadd.f32 %v5589, %v5626
      %v5643 = vadd.f32 %v5590, %v5627
      %v5644 = vadd.f32 %v5591, %v5628
      %v5645 = vadd.f32 %v5592, %v5629
      %v5646 = vadd.f32 %v5593, %v5630
      %v5647 = vadd.f32 %v5594, %v5631
      %v5648 = vadd.f32 %v5595, %v5632
      %v5649 = vadd.f32 %v5596, %v5633
      %v5650 = vadd.f32 %v5597, %v5634
      %v5651 = vadd.f32 %v5598, %v5635
      %v5652 = vadd.f32 %v5599, %v5636
      %v5653 = vadd.f32 %v5600, %v5637
      %v5654 = vadd.f32 %v5601, %v5638
      %v5655 = vadd.f32 %v5602, %v5639
      %v5656 = vld [vmem:[%s5389 + $0x16] sm:$0xff]
      %v5657 = vld [vmem:[%s5389 + $0x1e] sm:$0xff]
      %v5658 = vld [vmem:[%s5389 + $0x46] sm:$0xff]
      %v5659 = vld [vmem:[%s5389 + $0x4e] sm:$0xff]
      %v5660 = vld [vmem:[%s5389 + $0x76] sm:$0xff]
      %v5661 = vld [vmem:[%s5389 + $0x7e] sm:$0xff]
      %v5662 = vld [vmem:[%s5389 + $0xa6] sm:$0xff]
      %v5663 = vld [vmem:[%s5389 + $0xae] sm:$0xff]
      %v5664 = vld [vmem:[%s5389 + $0xd6] sm:$0xff]
      %v5665 = vld [vmem:[%s5389 + $0xde] sm:$0xff]
      %v5666 = vld [vmem:[%s5389 + $0x106] sm:$0xff]
      %v5667 = vld [vmem:[%s5389 + $0x10e] sm:$0xff]
      %v5668 = vld [vmem:[%s5389 + $0x136] sm:$0xff]
      %v5669 = vld [vmem:[%s5389 + $0x13e] sm:$0xff]
      %v5670 = vld [vmem:[%s5389 + $0x166] sm:$0xff]
      %v5671 = vld [vmem:[%s5389 + $0x16e] sm:$0xff]
      %v5672 = vld [vmem:[%s5406 + $0x5] sm:$0x1]
      %v5673 = vlaneseq
      %v5674 = vshrl.u32 %v5673, 7
      %v5675 = vsub.s32 0, %v5674
      %v5676 = vrot.slane %v5672, %v5675
      %v5677 = vmul.f32 %v5656, %v5676
      %v5678 = vmul.f32 %v5657, %v5676
      %v5679 = vmul.f32 %v5658, %v5676
      %v5680 = vmul.f32 %v5659, %v5676
      %v5681 = vmul.f32 %v5660, %v5676
      %v5682 = vmul.f32 %v5661, %v5676
      %v5683 = vmul.f32 %v5662, %v5676
      %v5684 = vmul.f32 %v5663, %v5676
      %v5685 = vmul.f32 %v5664, %v5676
      %v5686 = vmul.f32 %v5665, %v5676
      %v5687 = vmul.f32 %v5666, %v5676
      %v5688 = vmul.f32 %v5667, %v5676
      %v5689 = vmul.f32 %v5668, %v5676
      %v5690 = vmul.f32 %v5669, %v5676
      %v5691 = vmul.f32 %v5670, %v5676
      %v5692 = vmul.f32 %v5671, %v5676
      %v5693 = vadd.f32 %v5640, %v5677
      %v5694 = vadd.f32 %v5641, %v5678
      %v5695 = vadd.f32 %v5642, %v5679
      %v5696 = vadd.f32 %v5643, %v5680
      %v5697 = vadd.f32 %v5644, %v5681
      %v5698 = vadd.f32 %v5645, %v5682
      %v5699 = vadd.f32 %v5646, %v5683
      %v5700 = vadd.f32 %v5647, %v5684
      %v5701 = vadd.f32 %v5648, %v5685
      %v5702 = vadd.f32 %v5649, %v5686
      %v5703 = vadd.f32 %v5650, %v5687
      %v5704 = vadd.f32 %v5651, %v5688
      %v5705 = vadd.f32 %v5652, %v5689
      %v5706 = vadd.f32 %v5653, %v5690
      %v5707 = vadd.f32 %v5654, %v5691
      %v5708 = vadd.f32 %v5655, %v5692
      %v5709 = vld [vmem:[%s5389 + $0x19] sm:$0xff]
      %v5710 = vld [vmem:[%s5389 + $0x21] sm:$0xff]
      %v5711 = vld [vmem:[%s5389 + $0x49] sm:$0xff]
      %v5712 = vld [vmem:[%s5389 + $0x51] sm:$0xff]
      %v5713 = vld [vmem:[%s5389 + $0x79] sm:$0xff]
      %v5714 = vld [vmem:[%s5389 + $0x81] sm:$0xff]
      %v5715 = vld [vmem:[%s5389 + $0xa9] sm:$0xff]
      %v5716 = vld [vmem:[%s5389 + $0xb1] sm:$0xff]
      %v5717 = vld [vmem:[%s5389 + $0xd9] sm:$0xff]
      %v5718 = vld [vmem:[%s5389 + $0xe1] sm:$0xff]
      %v5719 = vld [vmem:[%s5389 + $0x109] sm:$0xff]
      %v5720 = vld [vmem:[%s5389 + $0x111] sm:$0xff]
      %v5721 = vld [vmem:[%s5389 + $0x139] sm:$0xff]
      %v5722 = vld [vmem:[%s5389 + $0x141] sm:$0xff]
      %v5723 = vld [vmem:[%s5389 + $0x169] sm:$0xff]
      %v5724 = vld [vmem:[%s5389 + $0x171] sm:$0xff]
      %v5725 = vld [vmem:[%s5406 + $0x6] sm:$0x1]
      %v5726 = vlaneseq
      %v5727 = vshrl.u32 %v5726, 7
      %v5728 = vsub.s32 0, %v5727
      %v5729 = vrot.slane %v5725, %v5728
      %v5730 = vmul.f32 %v5709, %v5729
      %v5731 = vmul.f32 %v5710, %v5729
      %v5732 = vmul.f32 %v5711, %v5729
      %v5733 = vmul.f32 %v5712, %v5729
      %v5734 = vmul.f32 %v5713, %v5729
      %v5735 = vmul.f32 %v5714, %v5729
      %v5736 = vmul.f32 %v5715, %v5729
      %v5737 = vmul.f32 %v5716, %v5729
      %v5738 = vmul.f32 %v5717, %v5729
      %v5739 = vmul.f32 %v5718, %v5729
      %v5740 = vmul.f32 %v5719, %v5729
      %v5741 = vmul.f32 %v5720, %v5729
      %v5742 = vmul.f32 %v5721, %v5729
      %v5743 = vmul.f32 %v5722, %v5729
      %v5744 = vmul.f32 %v5723, %v5729
      %v5745 = vmul.f32 %v5724, %v5729
      %v5746 = vadd.f32 %v5693, %v5730
      %v5747 = vadd.f32 %v5694, %v5731
      %v5748 = vadd.f32 %v5695, %v5732
      %v5749 = vadd.f32 %v5696, %v5733
      %v5750 = vadd.f32 %v5697, %v5734
      %v5751 = vadd.f32 %v5698, %v5735
      %v5752 = vadd.f32 %v5699, %v5736
      %v5753 = vadd.f32 %v5700, %v5737
      %v5754 = vadd.f32 %v5701, %v5738
      %v5755 = vadd.f32 %v5702, %v5739
      %v5756 = vadd.f32 %v5703, %v5740
      %v5757 = vadd.f32 %v5704, %v5741
      %v5758 = vadd.f32 %v5705, %v5742
      %v5759 = vadd.f32 %v5706, %v5743
      %v5760 = vadd.f32 %v5707, %v5744
      %v5761 = vadd.f32 %v5708, %v5745
      %s5762 = scalar_lea.vmem [#allocation3], 288
      %v5763 = vld [vmem:[%s5762 + $0x7] sm:$0xff]
      %v5764 = vld [vmem:[%s5762 + $0xf] sm:$0xff]
      %v5765 = vld [vmem:[%s5762 + $0x37] sm:$0xff]
      %v5766 = vld [vmem:[%s5762 + $0x3f] sm:$0xff]
      %v5767 = vld [vmem:[%s5762 + $0x67] sm:$0xff]
      %v5768 = vld [vmem:[%s5762 + $0x6f] sm:$0xff]
      %v5769 = vld [vmem:[%s5762 + $0x97] sm:$0xff]
      %v5770 = vld [vmem:[%s5762 + $0x9f] sm:$0xff]
      %v5771 = vld [vmem:[%s5762 + $0xc7] sm:$0xff]
      %v5772 = vld [vmem:[%s5762 + $0xcf] sm:$0xff]
      %v5773 = vld [vmem:[%s5762 + $0xf7] sm:$0xff]
      %v5774 = vld [vmem:[%s5762 + $0xff] sm:$0xff]
      %v5775 = vld [vmem:[%s5762 + $0x127] sm:$0xff]
      %v5776 = vld [vmem:[%s5762 + $0x12f] sm:$0xff]
      %v5777 = vld [vmem:[%s5762 + $0x157] sm:$0xff]
      %v5778 = vld [vmem:[%s5762 + $0x15f] sm:$0xff]
      %s5779 = scalar_lea.vmem %s3, 16
      %v5780 = vld [vmem:[%s5779] sm:$0x1]
      %v5781 = vlaneseq
      %v5782 = vshrl.u32 %v5781, 7
      %v5783 = vsub.s32 0, %v5782
      %v5784 = vrot.slane %v5780, %v5783
      %v5785 = vmul.f32 %v5763, %v5784
      %v5786 = vmul.f32 %v5764, %v5784
      %v5787 = vmul.f32 %v5765, %v5784
      %v5788 = vmul.f32 %v5766, %v5784
      %v5789 = vmul.f32 %v5767, %v5784
      %v5790 = vmul.f32 %v5768, %v5784
      %v5791 = vmul.f32 %v5769, %v5784
      %v5792 = vmul.f32 %v5770, %v5784
      %v5793 = vmul.f32 %v5771, %v5784
      %v5794 = vmul.f32 %v5772, %v5784
      %v5795 = vmul.f32 %v5773, %v5784
      %v5796 = vmul.f32 %v5774, %v5784
      %v5797 = vmul.f32 %v5775, %v5784
      %v5798 = vmul.f32 %v5776, %v5784
      %v5799 = vmul.f32 %v5777, %v5784
      %v5800 = vmul.f32 %v5778, %v5784
      %v5801 = vadd.f32 %v5746, %v5785
      %v5802 = vadd.f32 %v5747, %v5786
      %v5803 = vadd.f32 %v5748, %v5787
      %v5804 = vadd.f32 %v5749, %v5788
      %v5805 = vadd.f32 %v5750, %v5789
      %v5806 = vadd.f32 %v5751, %v5790
      %v5807 = vadd.f32 %v5752, %v5791
      %v5808 = vadd.f32 %v5753, %v5792
      %v5809 = vadd.f32 %v5754, %v5793
      %v5810 = vadd.f32 %v5755, %v5794
      %v5811 = vadd.f32 %v5756, %v5795
      %v5812 = vadd.f32 %v5757, %v5796
      %v5813 = vadd.f32 %v5758, %v5797
      %v5814 = vadd.f32 %v5759, %v5798
      %v5815 = vadd.f32 %v5760, %v5799
      %v5816 = vadd.f32 %v5761, %v5800
      %v5817 = vld [vmem:[%s5762 + $0xa] sm:$0xff]
      %v5818 = vld [vmem:[%s5762 + $0x12] sm:$0xff]
      %v5819 = vld [vmem:[%s5762 + $0x3a] sm:$0xff]
      %v5820 = vld [vmem:[%s5762 + $0x42] sm:$0xff]
      %v5821 = vld [vmem:[%s5762 + $0x6a] sm:$0xff]
      %v5822 = vld [vmem:[%s5762 + $0x72] sm:$0xff]
      %v5823 = vld [vmem:[%s5762 + $0x9a] sm:$0xff]
      %v5824 = vld [vmem:[%s5762 + $0xa2] sm:$0xff]
      %v5825 = vld [vmem:[%s5762 + $0xca] sm:$0xff]
      %v5826 = vld [vmem:[%s5762 + $0xd2] sm:$0xff]
      %v5827 = vld [vmem:[%s5762 + $0xfa] sm:$0xff]
      %v5828 = vld [vmem:[%s5762 + $0x102] sm:$0xff]
      %v5829 = vld [vmem:[%s5762 + $0x12a] sm:$0xff]
      %v5830 = vld [vmem:[%s5762 + $0x132] sm:$0xff]
      %v5831 = vld [vmem:[%s5762 + $0x15a] sm:$0xff]
      %v5832 = vld [vmem:[%s5762 + $0x162] sm:$0xff]
      %v5833 = vld [vmem:[%s5779 + $0x1] sm:$0x1]
      %v5834 = vlaneseq
      %v5835 = vshrl.u32 %v5834, 7
      %v5836 = vsub.s32 0, %v5835
      %v5837 = vrot.slane %v5833, %v5836
      %v5838 = vmul.f32 %v5817, %v5837
      %v5839 = vmul.f32 %v5818, %v5837
      %v5840 = vmul.f32 %v5819, %v5837
      %v5841 = vmul.f32 %v5820, %v5837
      %v5842 = vmul.f32 %v5821, %v5837
      %v5843 = vmul.f32 %v5822, %v5837
      %v5844 = vmul.f32 %v5823, %v5837
      %v5845 = vmul.f32 %v5824, %v5837
      %v5846 = vmul.f32 %v5825, %v5837
      %v5847 = vmul.f32 %v5826, %v5837
      %v5848 = vmul.f32 %v5827, %v5837
      %v5849 = vmul.f32 %v5828, %v5837
      %v5850 = vmul.f32 %v5829, %v5837
      %v5851 = vmul.f32 %v5830, %v5837
      %v5852 = vmul.f32 %v5831, %v5837
      %v5853 = vmul.f32 %v5832, %v5837
      %v5854 = vadd.f32 %v5801, %v5838
      %v5855 = vadd.f32 %v5802, %v5839
      %v5856 = vadd.f32 %v5803, %v5840
      %v5857 = vadd.f32 %v5804, %v5841
      %v5858 = vadd.f32 %v5805, %v5842
      %v5859 = vadd.f32 %v5806, %v5843
      %v5860 = vadd.f32 %v5807, %v5844
      %v5861 = vadd.f32 %v5808, %v5845
      %v5862 = vadd.f32 %v5809, %v5846
      %v5863 = vadd.f32 %v5810, %v5847
      %v5864 = vadd.f32 %v5811, %v5848
      %v5865 = vadd.f32 %v5812, %v5849
      %v5866 = vadd.f32 %v5813, %v5850
      %v5867 = vadd.f32 %v5814, %v5851
      %v5868 = vadd.f32 %v5815, %v5852
      %v5869 = vadd.f32 %v5816, %v5853
      %v5870 = vld [vmem:[%s5762 + $0xd] sm:$0xff]
      %v5871 = vld [vmem:[%s5762 + $0x15] sm:$0xff]
      %v5872 = vld [vmem:[%s5762 + $0x3d] sm:$0xff]
      %v5873 = vld [vmem:[%s5762 + $0x45] sm:$0xff]
      %v5874 = vld [vmem:[%s5762 + $0x6d] sm:$0xff]
      %v5875 = vld [vmem:[%s5762 + $0x75] sm:$0xff]
      %v5876 = vld [vmem:[%s5762 + $0x9d] sm:$0xff]
      %v5877 = vld [vmem:[%s5762 + $0xa5] sm:$0xff]
      %v5878 = vld [vmem:[%s5762 + $0xcd] sm:$0xff]
      %v5879 = vld [vmem:[%s5762 + $0xd5] sm:$0xff]
      %v5880 = vld [vmem:[%s5762 + $0xfd] sm:$0xff]
      %v5881 = vld [vmem:[%s5762 + $0x105] sm:$0xff]
      %v5882 = vld [vmem:[%s5762 + $0x12d] sm:$0xff]
      %v5883 = vld [vmem:[%s5762 + $0x135] sm:$0xff]
      %v5884 = vld [vmem:[%s5762 + $0x15d] sm:$0xff]
      %v5885 = vld [vmem:[%s5762 + $0x165] sm:$0xff]
      %v5886 = vld [vmem:[%s5779 + $0x2] sm:$0x1]
      %v5887 = vlaneseq
      %v5888 = vshrl.u32 %v5887, 7
      %v5889 = vsub.s32 0, %v5888
      %v5890 = vrot.slane %v5886, %v5889
      %v5891 = vmul.f32 %v5870, %v5890
      %v5892 = vmul.f32 %v5871, %v5890
      %v5893 = vmul.f32 %v5872, %v5890
      %v5894 = vmul.f32 %v5873, %v5890
      %v5895 = vmul.f32 %v5874, %v5890
      %v5896 = vmul.f32 %v5875, %v5890
      %v5897 = vmul.f32 %v5876, %v5890
      %v5898 = vmul.f32 %v5877, %v5890
      %v5899 = vmul.f32 %v5878, %v5890
      %v5900 = vmul.f32 %v5879, %v5890
      %v5901 = vmul.f32 %v5880, %v5890
      %v5902 = vmul.f32 %v5881, %v5890
      %v5903 = vmul.f32 %v5882, %v5890
      %v5904 = vmul.f32 %v5883, %v5890
      %v5905 = vmul.f32 %v5884, %v5890
      %v5906 = vmul.f32 %v5885, %v5890
      %v5907 = vadd.f32 %v5854, %v5891
      %v5908 = vadd.f32 %v5855, %v5892
      %v5909 = vadd.f32 %v5856, %v5893
      %v5910 = vadd.f32 %v5857, %v5894
      %v5911 = vadd.f32 %v5858, %v5895
      %v5912 = vadd.f32 %v5859, %v5896
      %v5913 = vadd.f32 %v5860, %v5897
      %v5914 = vadd.f32 %v5861, %v5898
      %v5915 = vadd.f32 %v5862, %v5899
      %v5916 = vadd.f32 %v5863, %v5900
      %v5917 = vadd.f32 %v5864, %v5901
      %v5918 = vadd.f32 %v5865, %v5902
      %v5919 = vadd.f32 %v5866, %v5903
      %v5920 = vadd.f32 %v5867, %v5904
      %v5921 = vadd.f32 %v5868, %v5905
      %v5922 = vadd.f32 %v5869, %v5906
      %v5923 = vld [vmem:[%s5762 + $0x10] sm:$0xff]
      %v5924 = vld [vmem:[%s5762 + $0x18] sm:$0xff]
      %v5925 = vld [vmem:[%s5762 + $0x40] sm:$0xff]
      %v5926 = vld [vmem:[%s5762 + $0x48] sm:$0xff]
      %v5927 = vld [vmem:[%s5762 + $0x70] sm:$0xff]
      %v5928 = vld [vmem:[%s5762 + $0x78] sm:$0xff]
      %v5929 = vld [vmem:[%s5762 + $0xa0] sm:$0xff]
      %v5930 = vld [vmem:[%s5762 + $0xa8] sm:$0xff]
      %v5931 = vld [vmem:[%s5762 + $0xd0] sm:$0xff]
      %v5932 = vld [vmem:[%s5762 + $0xd8] sm:$0xff]
      %v5933 = vld [vmem:[%s5762 + $0x100] sm:$0xff]
      %v5934 = vld [vmem:[%s5762 + $0x108] sm:$0xff]
      %v5935 = vld [vmem:[%s5762 + $0x130] sm:$0xff]
      %v5936 = vld [vmem:[%s5762 + $0x138] sm:$0xff]
      %v5937 = vld [vmem:[%s5762 + $0x160] sm:$0xff]
      %v5938 = vld [vmem:[%s5762 + $0x168] sm:$0xff]
      %v5939 = vld [vmem:[%s5779 + $0x3] sm:$0x1]
      %v5940 = vlaneseq
      %v5941 = vshrl.u32 %v5940, 7
      %v5942 = vsub.s32 0, %v5941
      %v5943 = vrot.slane %v5939, %v5942
      %v5944 = vmul.f32 %v5923, %v5943
      %v5945 = vmul.f32 %v5924, %v5943
      %v5946 = vmul.f32 %v5925, %v5943
      %v5947 = vmul.f32 %v5926, %v5943
      %v5948 = vmul.f32 %v5927, %v5943
      %v5949 = vmul.f32 %v5928, %v5943
      %v5950 = vmul.f32 %v5929, %v5943
      %v5951 = vmul.f32 %v5930, %v5943
      %v5952 = vmul.f32 %v5931, %v5943
      %v5953 = vmul.f32 %v5932, %v5943
      %v5954 = vmul.f32 %v5933, %v5943
      %v5955 = vmul.f32 %v5934, %v5943
      %v5956 = vmul.f32 %v5935, %v5943
      %v5957 = vmul.f32 %v5936, %v5943
      %v5958 = vmul.f32 %v5937, %v5943
      %v5959 = vmul.f32 %v5938, %v5943
      %v5960 = vadd.f32 %v5907, %v5944
      %v5961 = vadd.f32 %v5908, %v5945
      %v5962 = vadd.f32 %v5909, %v5946
      %v5963 = vadd.f32 %v5910, %v5947
      %v5964 = vadd.f32 %v5911, %v5948
      %v5965 = vadd.f32 %v5912, %v5949
      %v5966 = vadd.f32 %v5913, %v5950
      %v5967 = vadd.f32 %v5914, %v5951
      %v5968 = vadd.f32 %v5915, %v5952
      %v5969 = vadd.f32 %v5916, %v5953
      %v5970 = vadd.f32 %v5917, %v5954
      %v5971 = vadd.f32 %v5918, %v5955
      %v5972 = vadd.f32 %v5919, %v5956
      %v5973 = vadd.f32 %v5920, %v5957
      %v5974 = vadd.f32 %v5921, %v5958
      %v5975 = vadd.f32 %v5922, %v5959
      %v5976 = vld [vmem:[%s5762 + $0x13] sm:$0xff]
      %v5977 = vld [vmem:[%s5762 + $0x1b] sm:$0xff]
      %v5978 = vld [vmem:[%s5762 + $0x43] sm:$0xff]
      %v5979 = vld [vmem:[%s5762 + $0x4b] sm:$0xff]
      %v5980 = vld [vmem:[%s5762 + $0x73] sm:$0xff]
      %v5981 = vld [vmem:[%s5762 + $0x7b] sm:$0xff]
      %v5982 = vld [vmem:[%s5762 + $0xa3] sm:$0xff]
      %v5983 = vld [vmem:[%s5762 + $0xab] sm:$0xff]
      %v5984 = vld [vmem:[%s5762 + $0xd3] sm:$0xff]
      %v5985 = vld [vmem:[%s5762 + $0xdb] sm:$0xff]
      %v5986 = vld [vmem:[%s5762 + $0x103] sm:$0xff]
      %v5987 = vld [vmem:[%s5762 + $0x10b] sm:$0xff]
      %v5988 = vld [vmem:[%s5762 + $0x133] sm:$0xff]
      %v5989 = vld [vmem:[%s5762 + $0x13b] sm:$0xff]
      %v5990 = vld [vmem:[%s5762 + $0x163] sm:$0xff]
      %v5991 = vld [vmem:[%s5762 + $0x16b] sm:$0xff]
      %v5992 = vld [vmem:[%s5779 + $0x4] sm:$0x1]
      %v5993 = vlaneseq
      %v5994 = vshrl.u32 %v5993, 7
      %v5995 = vsub.s32 0, %v5994
      %v5996 = vrot.slane %v5992, %v5995
      %v5997 = vmul.f32 %v5976, %v5996
      %v5998 = vmul.f32 %v5977, %v5996
      %v5999 = vmul.f32 %v5978, %v5996
      %v6000 = vmul.f32 %v5979, %v5996
      %v6001 = vmul.f32 %v5980, %v5996
      %v6002 = vmul.f32 %v5981, %v5996
      %v6003 = vmul.f32 %v5982, %v5996
      %v6004 = vmul.f32 %v5983, %v5996
      %v6005 = vmul.f32 %v5984, %v5996
      %v6006 = vmul.f32 %v5985, %v5996
      %v6007 = vmul.f32 %v5986, %v5996
      %v6008 = vmul.f32 %v5987, %v5996
      %v6009 = vmul.f32 %v5988, %v5996
      %v6010 = vmul.f32 %v5989, %v5996
      %v6011 = vmul.f32 %v5990, %v5996
      %v6012 = vmul.f32 %v5991, %v5996
      %v6013 = vadd.f32 %v5960, %v5997
      %v6014 = vadd.f32 %v5961, %v5998
      %v6015 = vadd.f32 %v5962, %v5999
      %v6016 = vadd.f32 %v5963, %v6000
      %v6017 = vadd.f32 %v5964, %v6001
      %v6018 = vadd.f32 %v5965, %v6002
      %v6019 = vadd.f32 %v5966, %v6003
      %v6020 = vadd.f32 %v5967, %v6004
      %v6021 = vadd.f32 %v5968, %v6005
      %v6022 = vadd.f32 %v5969, %v6006
      %v6023 = vadd.f32 %v5970, %v6007
      %v6024 = vadd.f32 %v5971, %v6008
      %v6025 = vadd.f32 %v5972, %v6009
      %v6026 = vadd.f32 %v5973, %v6010
      %v6027 = vadd.f32 %v5974, %v6011
      %v6028 = vadd.f32 %v5975, %v6012
      %v6029 = vld [vmem:[%s5762 + $0x16] sm:$0xff]
      %v6030 = vld [vmem:[%s5762 + $0x1e] sm:$0xff]
      %v6031 = vld [vmem:[%s5762 + $0x46] sm:$0xff]
      %v6032 = vld [vmem:[%s5762 + $0x4e] sm:$0xff]
      %v6033 = vld [vmem:[%s5762 + $0x76] sm:$0xff]
      %v6034 = vld [vmem:[%s5762 + $0x7e] sm:$0xff]
      %v6035 = vld [vmem:[%s5762 + $0xa6] sm:$0xff]
      %v6036 = vld [vmem:[%s5762 + $0xae] sm:$0xff]
      %v6037 = vld [vmem:[%s5762 + $0xd6] sm:$0xff]
      %v6038 = vld [vmem:[%s5762 + $0xde] sm:$0xff]
      %v6039 = vld [vmem:[%s5762 + $0x106] sm:$0xff]
      %v6040 = vld [vmem:[%s5762 + $0x10e] sm:$0xff]
      %v6041 = vld [vmem:[%s5762 + $0x136] sm:$0xff]
      %v6042 = vld [vmem:[%s5762 + $0x13e] sm:$0xff]
      %v6043 = vld [vmem:[%s5762 + $0x166] sm:$0xff]
      %v6044 = vld [vmem:[%s5762 + $0x16e] sm:$0xff]
      %v6045 = vld [vmem:[%s5779 + $0x5] sm:$0x1]
      %v6046 = vlaneseq
      %v6047 = vshrl.u32 %v6046, 7
      %v6048 = vsub.s32 0, %v6047
      %v6049 = vrot.slane %v6045, %v6048
      %v6050 = vmul.f32 %v6029, %v6049
      %v6051 = vmul.f32 %v6030, %v6049
      %v6052 = vmul.f32 %v6031, %v6049
      %v6053 = vmul.f32 %v6032, %v6049
      %v6054 = vmul.f32 %v6033, %v6049
      %v6055 = vmul.f32 %v6034, %v6049
      %v6056 = vmul.f32 %v6035, %v6049
      %v6057 = vmul.f32 %v6036, %v6049
      %v6058 = vmul.f32 %v6037, %v6049
      %v6059 = vmul.f32 %v6038, %v6049
      %v6060 = vmul.f32 %v6039, %v6049
      %v6061 = vmul.f32 %v6040, %v6049
      %v6062 = vmul.f32 %v6041, %v6049
      %v6063 = vmul.f32 %v6042, %v6049
      %v6064 = vmul.f32 %v6043, %v6049
      %v6065 = vmul.f32 %v6044, %v6049
      %v6066 = vadd.f32 %v6013, %v6050
      %v6067 = vadd.f32 %v6014, %v6051
      %v6068 = vadd.f32 %v6015, %v6052
      %v6069 = vadd.f32 %v6016, %v6053
      %v6070 = vadd.f32 %v6017, %v6054
      %v6071 = vadd.f32 %v6018, %v6055
      %v6072 = vadd.f32 %v6019, %v6056
      %v6073 = vadd.f32 %v6020, %v6057
      %v6074 = vadd.f32 %v6021, %v6058
      %v6075 = vadd.f32 %v6022, %v6059
      %v6076 = vadd.f32 %v6023, %v6060
      %v6077 = vadd.f32 %v6024, %v6061
      %v6078 = vadd.f32 %v6025, %v6062
      %v6079 = vadd.f32 %v6026, %v6063
      %v6080 = vadd.f32 %v6027, %v6064
      %v6081 = vadd.f32 %v6028, %v6065
      %v6082 = vld [vmem:[%s5762 + $0x19] sm:$0xff]
      %v6083 = vld [vmem:[%s5762 + $0x21] sm:$0xff]
      %v6084 = vld [vmem:[%s5762 + $0x49] sm:$0xff]
      %v6085 = vld [vmem:[%s5762 + $0x51] sm:$0xff]
      %v6086 = vld [vmem:[%s5762 + $0x79] sm:$0xff]
      %v6087 = vld [vmem:[%s5762 + $0x81] sm:$0xff]
      %v6088 = vld [vmem:[%s5762 + $0xa9] sm:$0xff]
      %v6089 = vld [vmem:[%s5762 + $0xb1] sm:$0xff]
      %v6090 = vld [vmem:[%s5762 + $0xd9] sm:$0xff]
      %v6091 = vld [vmem:[%s5762 + $0xe1] sm:$0xff]
      %v6092 = vld [vmem:[%s5762 + $0x109] sm:$0xff]
      %v6093 = vld [vmem:[%s5762 + $0x111] sm:$0xff]
      %v6094 = vld [vmem:[%s5762 + $0x139] sm:$0xff]
      %v6095 = vld [vmem:[%s5762 + $0x141] sm:$0xff]
      %v6096 = vld [vmem:[%s5762 + $0x169] sm:$0xff]
      %v6097 = vld [vmem:[%s5762 + $0x171] sm:$0xff]
      %v6098 = vld [vmem:[%s5779 + $0x6] sm:$0x1]
      %v6099 = vlaneseq
      %v6100 = vshrl.u32 %v6099, 7
      %v6101 = vsub.s32 0, %v6100
      %v6102 = vrot.slane %v6098, %v6101
      %v6103 = vmul.f32 %v6082, %v6102
      %v6104 = vmul.f32 %v6083, %v6102
      %v6105 = vmul.f32 %v6084, %v6102
      %v6106 = vmul.f32 %v6085, %v6102
      %v6107 = vmul.f32 %v6086, %v6102
      %v6108 = vmul.f32 %v6087, %v6102
      %v6109 = vmul.f32 %v6088, %v6102
      %v6110 = vmul.f32 %v6089, %v6102
      %v6111 = vmul.f32 %v6090, %v6102
      %v6112 = vmul.f32 %v6091, %v6102
      %v6113 = vmul.f32 %v6092, %v6102
      %v6114 = vmul.f32 %v6093, %v6102
      %v6115 = vmul.f32 %v6094, %v6102
      %v6116 = vmul.f32 %v6095, %v6102
      %v6117 = vmul.f32 %v6096, %v6102
      %v6118 = vmul.f32 %v6097, %v6102
      %v6119 = vadd.f32 %v6066, %v6103
      %v6120 = vadd.f32 %v6067, %v6104
      %v6121 = vadd.f32 %v6068, %v6105
      %v6122 = vadd.f32 %v6069, %v6106
      %v6123 = vadd.f32 %v6070, %v6107
      %v6124 = vadd.f32 %v6071, %v6108
      %v6125 = vadd.f32 %v6072, %v6109
      %v6126 = vadd.f32 %v6073, %v6110
      %v6127 = vadd.f32 %v6074, %v6111
      %v6128 = vadd.f32 %v6075, %v6112
      %v6129 = vadd.f32 %v6076, %v6113
      %v6130 = vadd.f32 %v6077, %v6114
      %v6131 = vadd.f32 %v6078, %v6115
      %v6132 = vadd.f32 %v6079, %v6116
      %v6133 = vadd.f32 %v6080, %v6117
      %v6134 = vadd.f32 %v6081, %v6118
      %s6135 = scalar_lea.vmem [#allocation3], 432
      %v6136 = vld [vmem:[%s6135 + $0x7] sm:$0xff]
      %v6137 = vld [vmem:[%s6135 + $0xf] sm:$0xff]
      %v6138 = vld [vmem:[%s6135 + $0x37] sm:$0xff]
      %v6139 = vld [vmem:[%s6135 + $0x3f] sm:$0xff]
      %v6140 = vld [vmem:[%s6135 + $0x67] sm:$0xff]
      %v6141 = vld [vmem:[%s6135 + $0x6f] sm:$0xff]
      %v6142 = vld [vmem:[%s6135 + $0x97] sm:$0xff]
      %v6143 = vld [vmem:[%s6135 + $0x9f] sm:$0xff]
      %v6144 = vld [vmem:[%s6135 + $0xc7] sm:$0xff]
      %v6145 = vld [vmem:[%s6135 + $0xcf] sm:$0xff]
      %v6146 = vld [vmem:[%s6135 + $0xf7] sm:$0xff]
      %v6147 = vld [vmem:[%s6135 + $0xff] sm:$0xff]
      %v6148 = vld [vmem:[%s6135 + $0x127] sm:$0xff]
      %v6149 = vld [vmem:[%s6135 + $0x12f] sm:$0xff]
      %v6150 = vld [vmem:[%s6135 + $0x157] sm:$0xff]
      %v6151 = vld [vmem:[%s6135 + $0x15f] sm:$0xff]
      %s6152 = scalar_lea.vmem %s3, 24
      %v6153 = vld [vmem:[%s6152] sm:$0x1]
      %v6154 = vlaneseq
      %v6155 = vshrl.u32 %v6154, 7
      %v6156 = vsub.s32 0, %v6155
      %v6157 = vrot.slane %v6153, %v6156
      %v6158 = vmul.f32 %v6136, %v6157
      %v6159 = vmul.f32 %v6137, %v6157
      %v6160 = vmul.f32 %v6138, %v6157
      %v6161 = vmul.f32 %v6139, %v6157
      %v6162 = vmul.f32 %v6140, %v6157
      %v6163 = vmul.f32 %v6141, %v6157
      %v6164 = vmul.f32 %v6142, %v6157
      %v6165 = vmul.f32 %v6143, %v6157
      %v6166 = vmul.f32 %v6144, %v6157
      %v6167 = vmul.f32 %v6145, %v6157
      %v6168 = vmul.f32 %v6146, %v6157
      %v6169 = vmul.f32 %v6147, %v6157
      %v6170 = vmul.f32 %v6148, %v6157
      %v6171 = vmul.f32 %v6149, %v6157
      %v6172 = vmul.f32 %v6150, %v6157
      %v6173 = vmul.f32 %v6151, %v6157
      %v6174 = vadd.f32 %v6119, %v6158
      %v6175 = vadd.f32 %v6120, %v6159
      %v6176 = vadd.f32 %v6121, %v6160
      %v6177 = vadd.f32 %v6122, %v6161
      %v6178 = vadd.f32 %v6123, %v6162
      %v6179 = vadd.f32 %v6124, %v6163
      %v6180 = vadd.f32 %v6125, %v6164
      %v6181 = vadd.f32 %v6126, %v6165
      %v6182 = vadd.f32 %v6127, %v6166
      %v6183 = vadd.f32 %v6128, %v6167
      %v6184 = vadd.f32 %v6129, %v6168
      %v6185 = vadd.f32 %v6130, %v6169
      %v6186 = vadd.f32 %v6131, %v6170
      %v6187 = vadd.f32 %v6132, %v6171
      %v6188 = vadd.f32 %v6133, %v6172
      %v6189 = vadd.f32 %v6134, %v6173
      %v6190 = vld [vmem:[%s6135 + $0xa] sm:$0xff]
      %v6191 = vld [vmem:[%s6135 + $0x12] sm:$0xff]
      %v6192 = vld [vmem:[%s6135 + $0x3a] sm:$0xff]
      %v6193 = vld [vmem:[%s6135 + $0x42] sm:$0xff]
      %v6194 = vld [vmem:[%s6135 + $0x6a] sm:$0xff]
      %v6195 = vld [vmem:[%s6135 + $0x72] sm:$0xff]
      %v6196 = vld [vmem:[%s6135 + $0x9a] sm:$0xff]
      %v6197 = vld [vmem:[%s6135 + $0xa2] sm:$0xff]
      %v6198 = vld [vmem:[%s6135 + $0xca] sm:$0xff]
      %v6199 = vld [vmem:[%s6135 + $0xd2] sm:$0xff]
      %v6200 = vld [vmem:[%s6135 + $0xfa] sm:$0xff]
      %v6201 = vld [vmem:[%s6135 + $0x102] sm:$0xff]
      %v6202 = vld [vmem:[%s6135 + $0x12a] sm:$0xff]
      %v6203 = vld [vmem:[%s6135 + $0x132] sm:$0xff]
      %v6204 = vld [vmem:[%s6135 + $0x15a] sm:$0xff]
      %v6205 = vld [vmem:[%s6135 + $0x162] sm:$0xff]
      %v6206 = vld [vmem:[%s6152 + $0x1] sm:$0x1]
      %v6207 = vlaneseq
      %v6208 = vshrl.u32 %v6207, 7
      %v6209 = vsub.s32 0, %v6208
      %v6210 = vrot.slane %v6206, %v6209
      %v6211 = vmul.f32 %v6190, %v6210
      %v6212 = vmul.f32 %v6191, %v6210
      %v6213 = vmul.f32 %v6192, %v6210
      %v6214 = vmul.f32 %v6193, %v6210
      %v6215 = vmul.f32 %v6194, %v6210
      %v6216 = vmul.f32 %v6195, %v6210
      %v6217 = vmul.f32 %v6196, %v6210
      %v6218 = vmul.f32 %v6197, %v6210
      %v6219 = vmul.f32 %v6198, %v6210
      %v6220 = vmul.f32 %v6199, %v6210
      %v6221 = vmul.f32 %v6200, %v6210
      %v6222 = vmul.f32 %v6201, %v6210
      %v6223 = vmul.f32 %v6202, %v6210
      %v6224 = vmul.f32 %v6203, %v6210
      %v6225 = vmul.f32 %v6204, %v6210
      %v6226 = vmul.f32 %v6205, %v6210
      %v6227 = vadd.f32 %v6174, %v6211
      %v6228 = vadd.f32 %v6175, %v6212
      %v6229 = vadd.f32 %v6176, %v6213
      %v6230 = vadd.f32 %v6177, %v6214
      %v6231 = vadd.f32 %v6178, %v6215
      %v6232 = vadd.f32 %v6179, %v6216
      %v6233 = vadd.f32 %v6180, %v6217
      %v6234 = vadd.f32 %v6181, %v6218
      %v6235 = vadd.f32 %v6182, %v6219
      %v6236 = vadd.f32 %v6183, %v6220
      %v6237 = vadd.f32 %v6184, %v6221
      %v6238 = vadd.f32 %v6185, %v6222
      %v6239 = vadd.f32 %v6186, %v6223
      %v6240 = vadd.f32 %v6187, %v6224
      %v6241 = vadd.f32 %v6188, %v6225
      %v6242 = vadd.f32 %v6189, %v6226
      %v6243 = vld [vmem:[%s6135 + $0xd] sm:$0xff]
      %v6244 = vld [vmem:[%s6135 + $0x15] sm:$0xff]
      %v6245 = vld [vmem:[%s6135 + $0x3d] sm:$0xff]
      %v6246 = vld [vmem:[%s6135 + $0x45] sm:$0xff]
      %v6247 = vld [vmem:[%s6135 + $0x6d] sm:$0xff]
      %v6248 = vld [vmem:[%s6135 + $0x75] sm:$0xff]
      %v6249 = vld [vmem:[%s6135 + $0x9d] sm:$0xff]
      %v6250 = vld [vmem:[%s6135 + $0xa5] sm:$0xff]
      %v6251 = vld [vmem:[%s6135 + $0xcd] sm:$0xff]
      %v6252 = vld [vmem:[%s6135 + $0xd5] sm:$0xff]
      %v6253 = vld [vmem:[%s6135 + $0xfd] sm:$0xff]
      %v6254 = vld [vmem:[%s6135 + $0x105] sm:$0xff]
      %v6255 = vld [vmem:[%s6135 + $0x12d] sm:$0xff]
      %v6256 = vld [vmem:[%s6135 + $0x135] sm:$0xff]
      %v6257 = vld [vmem:[%s6135 + $0x15d] sm:$0xff]
      %v6258 = vld [vmem:[%s6135 + $0x165] sm:$0xff]
      %v6259 = vld [vmem:[%s6152 + $0x2] sm:$0x1]
      %v6260 = vlaneseq
      %v6261 = vshrl.u32 %v6260, 7
      %v6262 = vsub.s32 0, %v6261
      %v6263 = vrot.slane %v6259, %v6262
      %v6264 = vmul.f32 %v6243, %v6263
      %v6265 = vmul.f32 %v6244, %v6263
      %v6266 = vmul.f32 %v6245, %v6263
      %v6267 = vmul.f32 %v6246, %v6263
      %v6268 = vmul.f32 %v6247, %v6263
      %v6269 = vmul.f32 %v6248, %v6263
      %v6270 = vmul.f32 %v6249, %v6263
      %v6271 = vmul.f32 %v6250, %v6263
      %v6272 = vmul.f32 %v6251, %v6263
      %v6273 = vmul.f32 %v6252, %v6263
      %v6274 = vmul.f32 %v6253, %v6263
      %v6275 = vmul.f32 %v6254, %v6263
      %v6276 = vmul.f32 %v6255, %v6263
      %v6277 = vmul.f32 %v6256, %v6263
      %v6278 = vmul.f32 %v6257, %v6263
      %v6279 = vmul.f32 %v6258, %v6263
      %v6280 = vadd.f32 %v6227, %v6264
      %v6281 = vadd.f32 %v6228, %v6265
      %v6282 = vadd.f32 %v6229, %v6266
      %v6283 = vadd.f32 %v6230, %v6267
      %v6284 = vadd.f32 %v6231, %v6268
      %v6285 = vadd.f32 %v6232, %v6269
      %v6286 = vadd.f32 %v6233, %v6270
      %v6287 = vadd.f32 %v6234, %v6271
      %v6288 = vadd.f32 %v6235, %v6272
      %v6289 = vadd.f32 %v6236, %v6273
      %v6290 = vadd.f32 %v6237, %v6274
      %v6291 = vadd.f32 %v6238, %v6275
      %v6292 = vadd.f32 %v6239, %v6276
      %v6293 = vadd.f32 %v6240, %v6277
      %v6294 = vadd.f32 %v6241, %v6278
      %v6295 = vadd.f32 %v6242, %v6279
      %v6296 = vld [vmem:[%s6135 + $0x10] sm:$0xff]
      %v6297 = vld [vmem:[%s6135 + $0x18] sm:$0xff]
      %v6298 = vld [vmem:[%s6135 + $0x40] sm:$0xff]
      %v6299 = vld [vmem:[%s6135 + $0x48] sm:$0xff]
      %v6300 = vld [vmem:[%s6135 + $0x70] sm:$0xff]
      %v6301 = vld [vmem:[%s6135 + $0x78] sm:$0xff]
      %v6302 = vld [vmem:[%s6135 + $0xa0] sm:$0xff]
      %v6303 = vld [vmem:[%s6135 + $0xa8] sm:$0xff]
      %v6304 = vld [vmem:[%s6135 + $0xd0] sm:$0xff]
      %v6305 = vld [vmem:[%s6135 + $0xd8] sm:$0xff]
      %v6306 = vld [vmem:[%s6135 + $0x100] sm:$0xff]
      %v6307 = vld [vmem:[%s6135 + $0x108] sm:$0xff]
      %v6308 = vld [vmem:[%s6135 + $0x130] sm:$0xff]
      %v6309 = vld [vmem:[%s6135 + $0x138] sm:$0xff]
      %v6310 = vld [vmem:[%s6135 + $0x160] sm:$0xff]
      %v6311 = vld [vmem:[%s6135 + $0x168] sm:$0xff]
      %v6312 = vld [vmem:[%s6152 + $0x3] sm:$0x1]
      %v6313 = vlaneseq
      %v6314 = vshrl.u32 %v6313, 7
      %v6315 = vsub.s32 0, %v6314
      %v6316 = vrot.slane %v6312, %v6315
      %v6317 = vmul.f32 %v6296, %v6316
      %v6318 = vmul.f32 %v6297, %v6316
      %v6319 = vmul.f32 %v6298, %v6316
      %v6320 = vmul.f32 %v6299, %v6316
      %v6321 = vmul.f32 %v6300, %v6316
      %v6322 = vmul.f32 %v6301, %v6316
      %v6323 = vmul.f32 %v6302, %v6316
      %v6324 = vmul.f32 %v6303, %v6316
      %v6325 = vmul.f32 %v6304, %v6316
      %v6326 = vmul.f32 %v6305, %v6316
      %v6327 = vmul.f32 %v6306, %v6316
      %v6328 = vmul.f32 %v6307, %v6316
      %v6329 = vmul.f32 %v6308, %v6316
      %v6330 = vmul.f32 %v6309, %v6316
      %v6331 = vmul.f32 %v6310, %v6316
      %v6332 = vmul.f32 %v6311, %v6316
      %v6333 = vadd.f32 %v6280, %v6317
      %v6334 = vadd.f32 %v6281, %v6318
      %v6335 = vadd.f32 %v6282, %v6319
      %v6336 = vadd.f32 %v6283, %v6320
      %v6337 = vadd.f32 %v6284, %v6321
      %v6338 = vadd.f32 %v6285, %v6322
      %v6339 = vadd.f32 %v6286, %v6323
      %v6340 = vadd.f32 %v6287, %v6324
      %v6341 = vadd.f32 %v6288, %v6325
      %v6342 = vadd.f32 %v6289, %v6326
      %v6343 = vadd.f32 %v6290, %v6327
      %v6344 = vadd.f32 %v6291, %v6328
      %v6345 = vadd.f32 %v6292, %v6329
      %v6346 = vadd.f32 %v6293, %v6330
      %v6347 = vadd.f32 %v6294, %v6331
      %v6348 = vadd.f32 %v6295, %v6332
      %v6349 = vld [vmem:[%s6135 + $0x13] sm:$0xff]
      %v6350 = vld [vmem:[%s6135 + $0x1b] sm:$0xff]
      %v6351 = vld [vmem:[%s6135 + $0x43] sm:$0xff]
      %v6352 = vld [vmem:[%s6135 + $0x4b] sm:$0xff]
      %v6353 = vld [vmem:[%s6135 + $0x73] sm:$0xff]
      %v6354 = vld [vmem:[%s6135 + $0x7b] sm:$0xff]
      %v6355 = vld [vmem:[%s6135 + $0xa3] sm:$0xff]
      %v6356 = vld [vmem:[%s6135 + $0xab] sm:$0xff]
      %v6357 = vld [vmem:[%s6135 + $0xd3] sm:$0xff]
      %v6358 = vld [vmem:[%s6135 + $0xdb] sm:$0xff]
      %v6359 = vld [vmem:[%s6135 + $0x103] sm:$0xff]
      %v6360 = vld [vmem:[%s6135 + $0x10b] sm:$0xff]
      %v6361 = vld [vmem:[%s6135 + $0x133] sm:$0xff]
      %v6362 = vld [vmem:[%s6135 + $0x13b] sm:$0xff]
      %v6363 = vld [vmem:[%s6135 + $0x163] sm:$0xff]
      %v6364 = vld [vmem:[%s6135 + $0x16b] sm:$0xff]
      %v6365 = vld [vmem:[%s6152 + $0x4] sm:$0x1]
      %v6366 = vlaneseq
      %v6367 = vshrl.u32 %v6366, 7
      %v6368 = vsub.s32 0, %v6367
      %v6369 = vrot.slane %v6365, %v6368
      %v6370 = vmul.f32 %v6349, %v6369
      %v6371 = vmul.f32 %v6350, %v6369
      %v6372 = vmul.f32 %v6351, %v6369
      %v6373 = vmul.f32 %v6352, %v6369
      %v6374 = vmul.f32 %v6353, %v6369
      %v6375 = vmul.f32 %v6354, %v6369
      %v6376 = vmul.f32 %v6355, %v6369
      %v6377 = vmul.f32 %v6356, %v6369
      %v6378 = vmul.f32 %v6357, %v6369
      %v6379 = vmul.f32 %v6358, %v6369
      %v6380 = vmul.f32 %v6359, %v6369
      %v6381 = vmul.f32 %v6360, %v6369
      %v6382 = vmul.f32 %v6361, %v6369
      %v6383 = vmul.f32 %v6362, %v6369
      %v6384 = vmul.f32 %v6363, %v6369
      %v6385 = vmul.f32 %v6364, %v6369
      %v6386 = vadd.f32 %v6333, %v6370
      %v6387 = vadd.f32 %v6334, %v6371
      %v6388 = vadd.f32 %v6335, %v6372
      %v6389 = vadd.f32 %v6336, %v6373
      %v6390 = vadd.f32 %v6337, %v6374
      %v6391 = vadd.f32 %v6338, %v6375
      %v6392 = vadd.f32 %v6339, %v6376
      %v6393 = vadd.f32 %v6340, %v6377
      %v6394 = vadd.f32 %v6341, %v6378
      %v6395 = vadd.f32 %v6342, %v6379
      %v6396 = vadd.f32 %v6343, %v6380
      %v6397 = vadd.f32 %v6344, %v6381
      %v6398 = vadd.f32 %v6345, %v6382
      %v6399 = vadd.f32 %v6346, %v6383
      %v6400 = vadd.f32 %v6347, %v6384
      %v6401 = vadd.f32 %v6348, %v6385
      %v6402 = vld [vmem:[%s6135 + $0x16] sm:$0xff]
      %v6403 = vld [vmem:[%s6135 + $0x1e] sm:$0xff]
      %v6404 = vld [vmem:[%s6135 + $0x46] sm:$0xff]
      %v6405 = vld [vmem:[%s6135 + $0x4e] sm:$0xff]
      %v6406 = vld [vmem:[%s6135 + $0x76] sm:$0xff]
      %v6407 = vld [vmem:[%s6135 + $0x7e] sm:$0xff]
      %v6408 = vld [vmem:[%s6135 + $0xa6] sm:$0xff]
      %v6409 = vld [vmem:[%s6135 + $0xae] sm:$0xff]
      %v6410 = vld [vmem:[%s6135 + $0xd6] sm:$0xff]
      %v6411 = vld [vmem:[%s6135 + $0xde] sm:$0xff]
      %v6412 = vld [vmem:[%s6135 + $0x106] sm:$0xff]
      %v6413 = vld [vmem:[%s6135 + $0x10e] sm:$0xff]
      %v6414 = vld [vmem:[%s6135 + $0x136] sm:$0xff]
      %v6415 = vld [vmem:[%s6135 + $0x13e] sm:$0xff]
      %v6416 = vld [vmem:[%s6135 + $0x166] sm:$0xff]
      %v6417 = vld [vmem:[%s6135 + $0x16e] sm:$0xff]
      %v6418 = vld [vmem:[%s6152 + $0x5] sm:$0x1]
      %v6419 = vlaneseq
      %v6420 = vshrl.u32 %v6419, 7
      %v6421 = vsub.s32 0, %v6420
      %v6422 = vrot.slane %v6418, %v6421
      %v6423 = vmul.f32 %v6402, %v6422
      %v6424 = vmul.f32 %v6403, %v6422
      %v6425 = vmul.f32 %v6404, %v6422
      %v6426 = vmul.f32 %v6405, %v6422
      %v6427 = vmul.f32 %v6406, %v6422
      %v6428 = vmul.f32 %v6407, %v6422
      %v6429 = vmul.f32 %v6408, %v6422
      %v6430 = vmul.f32 %v6409, %v6422
      %v6431 = vmul.f32 %v6410, %v6422
      %v6432 = vmul.f32 %v6411, %v6422
      %v6433 = vmul.f32 %v6412, %v6422
      %v6434 = vmul.f32 %v6413, %v6422
      %v6435 = vmul.f32 %v6414, %v6422
      %v6436 = vmul.f32 %v6415, %v6422
      %v6437 = vmul.f32 %v6416, %v6422
      %v6438 = vmul.f32 %v6417, %v6422
      %v6439 = vadd.f32 %v6386, %v6423
      %v6440 = vadd.f32 %v6387, %v6424
      %v6441 = vadd.f32 %v6388, %v6425
      %v6442 = vadd.f32 %v6389, %v6426
      %v6443 = vadd.f32 %v6390, %v6427
      %v6444 = vadd.f32 %v6391, %v6428
      %v6445 = vadd.f32 %v6392, %v6429
      %v6446 = vadd.f32 %v6393, %v6430
      %v6447 = vadd.f32 %v6394, %v6431
      %v6448 = vadd.f32 %v6395, %v6432
      %v6449 = vadd.f32 %v6396, %v6433
      %v6450 = vadd.f32 %v6397, %v6434
      %v6451 = vadd.f32 %v6398, %v6435
      %v6452 = vadd.f32 %v6399, %v6436
      %v6453 = vadd.f32 %v6400, %v6437
      %v6454 = vadd.f32 %v6401, %v6438
      %v6455 = vld [vmem:[%s6135 + $0x19] sm:$0xff]
      %v6456 = vld [vmem:[%s6135 + $0x21] sm:$0xff]
      %v6457 = vld [vmem:[%s6135 + $0x49] sm:$0xff]
      %v6458 = vld [vmem:[%s6135 + $0x51] sm:$0xff]
      %v6459 = vld [vmem:[%s6135 + $0x79] sm:$0xff]
      %v6460 = vld [vmem:[%s6135 + $0x81] sm:$0xff]
      %v6461 = vld [vmem:[%s6135 + $0xa9] sm:$0xff]
      %v6462 = vld [vmem:[%s6135 + $0xb1] sm:$0xff]
      %v6463 = vld [vmem:[%s6135 + $0xd9] sm:$0xff]
      %v6464 = vld [vmem:[%s6135 + $0xe1] sm:$0xff]
      %v6465 = vld [vmem:[%s6135 + $0x109] sm:$0xff]
      %v6466 = vld [vmem:[%s6135 + $0x111] sm:$0xff]
      %v6467 = vld [vmem:[%s6135 + $0x139] sm:$0xff]
      %v6468 = vld [vmem:[%s6135 + $0x141] sm:$0xff]
      %v6469 = vld [vmem:[%s6135 + $0x169] sm:$0xff]
      %v6470 = vld [vmem:[%s6135 + $0x171] sm:$0xff]
      %v6471 = vld [vmem:[%s6152 + $0x6] sm:$0x1]
      %v6472 = vlaneseq
      %v6473 = vshrl.u32 %v6472, 7
      %v6474 = vsub.s32 0, %v6473
      %v6475 = vrot.slane %v6471, %v6474
      %v6476 = vmul.f32 %v6455, %v6475
      %v6477 = vmul.f32 %v6456, %v6475
      %v6478 = vmul.f32 %v6457, %v6475
      %v6479 = vmul.f32 %v6458, %v6475
      %v6480 = vmul.f32 %v6459, %v6475
      %v6481 = vmul.f32 %v6460, %v6475
      %v6482 = vmul.f32 %v6461, %v6475
      %v6483 = vmul.f32 %v6462, %v6475
      %v6484 = vmul.f32 %v6463, %v6475
      %v6485 = vmul.f32 %v6464, %v6475
      %v6486 = vmul.f32 %v6465, %v6475
      %v6487 = vmul.f32 %v6466, %v6475
      %v6488 = vmul.f32 %v6467, %v6475
      %v6489 = vmul.f32 %v6468, %v6475
      %v6490 = vmul.f32 %v6469, %v6475
      %v6491 = vmul.f32 %v6470, %v6475
      %v6492 = vadd.f32 %v6439, %v6476
      %v6493 = vadd.f32 %v6440, %v6477
      %v6494 = vadd.f32 %v6441, %v6478
      %v6495 = vadd.f32 %v6442, %v6479
      %v6496 = vadd.f32 %v6443, %v6480
      %v6497 = vadd.f32 %v6444, %v6481
      %v6498 = vadd.f32 %v6445, %v6482
      %v6499 = vadd.f32 %v6446, %v6483
      %v6500 = vadd.f32 %v6447, %v6484
      %v6501 = vadd.f32 %v6448, %v6485
      %v6502 = vadd.f32 %v6449, %v6486
      %v6503 = vadd.f32 %v6450, %v6487
      %v6504 = vadd.f32 %v6451, %v6488
      %v6505 = vadd.f32 %v6452, %v6489
      %v6506 = vadd.f32 %v6453, %v6490
      %v6507 = vadd.f32 %v6454, %v6491
      %s6508 = scalar_lea.vmem [#allocation3], 576
      %v6509 = vld [vmem:[%s6508 + $0x7] sm:$0xff]
      %v6510 = vld [vmem:[%s6508 + $0xf] sm:$0xff]
      %v6511 = vld [vmem:[%s6508 + $0x37] sm:$0xff]
      %v6512 = vld [vmem:[%s6508 + $0x3f] sm:$0xff]
      %v6513 = vld [vmem:[%s6508 + $0x67] sm:$0xff]
      %v6514 = vld [vmem:[%s6508 + $0x6f] sm:$0xff]
      %v6515 = vld [vmem:[%s6508 + $0x97] sm:$0xff]
      %v6516 = vld [vmem:[%s6508 + $0x9f] sm:$0xff]
      %v6517 = vld [vmem:[%s6508 + $0xc7] sm:$0xff]
      %v6518 = vld [vmem:[%s6508 + $0xcf] sm:$0xff]
      %v6519 = vld [vmem:[%s6508 + $0xf7] sm:$0xff]
      %v6520 = vld [vmem:[%s6508 + $0xff] sm:$0xff]
      %v6521 = vld [vmem:[%s6508 + $0x127] sm:$0xff]
      %v6522 = vld [vmem:[%s6508 + $0x12f] sm:$0xff]
      %v6523 = vld [vmem:[%s6508 + $0x157] sm:$0xff]
      %v6524 = vld [vmem:[%s6508 + $0x15f] sm:$0xff]
      %s6525 = scalar_lea.vmem %s3, 32
      %v6526 = vld [vmem:[%s6525] sm:$0x1]
      %v6527 = vlaneseq
      %v6528 = vshrl.u32 %v6527, 7
      %v6529 = vsub.s32 0, %v6528
      %v6530 = vrot.slane %v6526, %v6529
      %v6531 = vmul.f32 %v6509, %v6530
      %v6532 = vmul.f32 %v6510, %v6530
      %v6533 = vmul.f32 %v6511, %v6530
      %v6534 = vmul.f32 %v6512, %v6530
      %v6535 = vmul.f32 %v6513, %v6530
      %v6536 = vmul.f32 %v6514, %v6530
      %v6537 = vmul.f32 %v6515, %v6530
      %v6538 = vmul.f32 %v6516, %v6530
      %v6539 = vmul.f32 %v6517, %v6530
      %v6540 = vmul.f32 %v6518, %v6530
      %v6541 = vmul.f32 %v6519, %v6530
      %v6542 = vmul.f32 %v6520, %v6530
      %v6543 = vmul.f32 %v6521, %v6530
      %v6544 = vmul.f32 %v6522, %v6530
      %v6545 = vmul.f32 %v6523, %v6530
      %v6546 = vmul.f32 %v6524, %v6530
      %v6547 = vadd.f32 %v6492, %v6531
      %v6548 = vadd.f32 %v6493, %v6532
      %v6549 = vadd.f32 %v6494, %v6533
      %v6550 = vadd.f32 %v6495, %v6534
      %v6551 = vadd.f32 %v6496, %v6535
      %v6552 = vadd.f32 %v6497, %v6536
      %v6553 = vadd.f32 %v6498, %v6537
      %v6554 = vadd.f32 %v6499, %v6538
      %v6555 = vadd.f32 %v6500, %v6539
      %v6556 = vadd.f32 %v6501, %v6540
      %v6557 = vadd.f32 %v6502, %v6541
      %v6558 = vadd.f32 %v6503, %v6542
      %v6559 = vadd.f32 %v6504, %v6543
      %v6560 = vadd.f32 %v6505, %v6544
      %v6561 = vadd.f32 %v6506, %v6545
      %v6562 = vadd.f32 %v6507, %v6546
      %v6563 = vld [vmem:[%s6508 + $0xa] sm:$0xff]
      %v6564 = vld [vmem:[%s6508 + $0x12] sm:$0xff]
      %v6565 = vld [vmem:[%s6508 + $0x3a] sm:$0xff]
      %v6566 = vld [vmem:[%s6508 + $0x42] sm:$0xff]
      %v6567 = vld [vmem:[%s6508 + $0x6a] sm:$0xff]
      %v6568 = vld [vmem:[%s6508 + $0x72] sm:$0xff]
      %v6569 = vld [vmem:[%s6508 + $0x9a] sm:$0xff]
      %v6570 = vld [vmem:[%s6508 + $0xa2] sm:$0xff]
      %v6571 = vld [vmem:[%s6508 + $0xca] sm:$0xff]
      %v6572 = vld [vmem:[%s6508 + $0xd2] sm:$0xff]
      %v6573 = vld [vmem:[%s6508 + $0xfa] sm:$0xff]
      %v6574 = vld [vmem:[%s6508 + $0x102] sm:$0xff]
      %v6575 = vld [vmem:[%s6508 + $0x12a] sm:$0xff]
      %v6576 = vld [vmem:[%s6508 + $0x132] sm:$0xff]
      %v6577 = vld [vmem:[%s6508 + $0x15a] sm:$0xff]
      %v6578 = vld [vmem:[%s6508 + $0x162] sm:$0xff]
      %v6579 = vld [vmem:[%s6525 + $0x1] sm:$0x1]
      %v6580 = vlaneseq
      %v6581 = vshrl.u32 %v6580, 7
      %v6582 = vsub.s32 0, %v6581
      %v6583 = vrot.slane %v6579, %v6582
      %v6584 = vmul.f32 %v6563, %v6583
      %v6585 = vmul.f32 %v6564, %v6583
      %v6586 = vmul.f32 %v6565, %v6583
      %v6587 = vmul.f32 %v6566, %v6583
      %v6588 = vmul.f32 %v6567, %v6583
      %v6589 = vmul.f32 %v6568, %v6583
      %v6590 = vmul.f32 %v6569, %v6583
      %v6591 = vmul.f32 %v6570, %v6583
      %v6592 = vmul.f32 %v6571, %v6583
      %v6593 = vmul.f32 %v6572, %v6583
      %v6594 = vmul.f32 %v6573, %v6583
      %v6595 = vmul.f32 %v6574, %v6583
      %v6596 = vmul.f32 %v6575, %v6583
      %v6597 = vmul.f32 %v6576, %v6583
      %v6598 = vmul.f32 %v6577, %v6583
      %v6599 = vmul.f32 %v6578, %v6583
      %v6600 = vadd.f32 %v6547, %v6584
      %v6601 = vadd.f32 %v6548, %v6585
      %v6602 = vadd.f32 %v6549, %v6586
      %v6603 = vadd.f32 %v6550, %v6587
      %v6604 = vadd.f32 %v6551, %v6588
      %v6605 = vadd.f32 %v6552, %v6589
      %v6606 = vadd.f32 %v6553, %v6590
      %v6607 = vadd.f32 %v6554, %v6591
      %v6608 = vadd.f32 %v6555, %v6592
      %v6609 = vadd.f32 %v6556, %v6593
      %v6610 = vadd.f32 %v6557, %v6594
      %v6611 = vadd.f32 %v6558, %v6595
      %v6612 = vadd.f32 %v6559, %v6596
      %v6613 = vadd.f32 %v6560, %v6597
      %v6614 = vadd.f32 %v6561, %v6598
      %v6615 = vadd.f32 %v6562, %v6599
      %v6616 = vld [vmem:[%s6508 + $0xd] sm:$0xff]
      %v6617 = vld [vmem:[%s6508 + $0x15] sm:$0xff]
      %v6618 = vld [vmem:[%s6508 + $0x3d] sm:$0xff]
      %v6619 = vld [vmem:[%s6508 + $0x45] sm:$0xff]
      %v6620 = vld [vmem:[%s6508 + $0x6d] sm:$0xff]
      %v6621 = vld [vmem:[%s6508 + $0x75] sm:$0xff]
      %v6622 = vld [vmem:[%s6508 + $0x9d] sm:$0xff]
      %v6623 = vld [vmem:[%s6508 + $0xa5] sm:$0xff]
      %v6624 = vld [vmem:[%s6508 + $0xcd] sm:$0xff]
      %v6625 = vld [vmem:[%s6508 + $0xd5] sm:$0xff]
      %v6626 = vld [vmem:[%s6508 + $0xfd] sm:$0xff]
      %v6627 = vld [vmem:[%s6508 + $0x105] sm:$0xff]
      %v6628 = vld [vmem:[%s6508 + $0x12d] sm:$0xff]
      %v6629 = vld [vmem:[%s6508 + $0x135] sm:$0xff]
      %v6630 = vld [vmem:[%s6508 + $0x15d] sm:$0xff]
      %v6631 = vld [vmem:[%s6508 + $0x165] sm:$0xff]
      %v6632 = vld [vmem:[%s6525 + $0x2] sm:$0x1]
      %v6633 = vlaneseq
      %v6634 = vshrl.u32 %v6633, 7
      %v6635 = vsub.s32 0, %v6634
      %v6636 = vrot.slane %v6632, %v6635
      %v6637 = vmul.f32 %v6616, %v6636
      %v6638 = vmul.f32 %v6617, %v6636
      %v6639 = vmul.f32 %v6618, %v6636
      %v6640 = vmul.f32 %v6619, %v6636
      %v6641 = vmul.f32 %v6620, %v6636
      %v6642 = vmul.f32 %v6621, %v6636
      %v6643 = vmul.f32 %v6622, %v6636
      %v6644 = vmul.f32 %v6623, %v6636
      %v6645 = vmul.f32 %v6624, %v6636
      %v6646 = vmul.f32 %v6625, %v6636
      %v6647 = vmul.f32 %v6626, %v6636
      %v6648 = vmul.f32 %v6627, %v6636
      %v6649 = vmul.f32 %v6628, %v6636
      %v6650 = vmul.f32 %v6629, %v6636
      %v6651 = vmul.f32 %v6630, %v6636
      %v6652 = vmul.f32 %v6631, %v6636
      %v6653 = vadd.f32 %v6600, %v6637
      %v6654 = vadd.f32 %v6601, %v6638
      %v6655 = vadd.f32 %v6602, %v6639
      %v6656 = vadd.f32 %v6603, %v6640
      %v6657 = vadd.f32 %v6604, %v6641
      %v6658 = vadd.f32 %v6605, %v6642
      %v6659 = vadd.f32 %v6606, %v6643
      %v6660 = vadd.f32 %v6607, %v6644
      %v6661 = vadd.f32 %v6608, %v6645
      %v6662 = vadd.f32 %v6609, %v6646
      %v6663 = vadd.f32 %v6610, %v6647
      %v6664 = vadd.f32 %v6611, %v6648
      %v6665 = vadd.f32 %v6612, %v6649
      %v6666 = vadd.f32 %v6613, %v6650
      %v6667 = vadd.f32 %v6614, %v6651
      %v6668 = vadd.f32 %v6615, %v6652
      %v6669 = vld [vmem:[%s6508 + $0x10] sm:$0xff]
      %v6670 = vld [vmem:[%s6508 + $0x18] sm:$0xff]
      %v6671 = vld [vmem:[%s6508 + $0x40] sm:$0xff]
      %v6672 = vld [vmem:[%s6508 + $0x48] sm:$0xff]
      %v6673 = vld [vmem:[%s6508 + $0x70] sm:$0xff]
      %v6674 = vld [vmem:[%s6508 + $0x78] sm:$0xff]
      %v6675 = vld [vmem:[%s6508 + $0xa0] sm:$0xff]
      %v6676 = vld [vmem:[%s6508 + $0xa8] sm:$0xff]
      %v6677 = vld [vmem:[%s6508 + $0xd0] sm:$0xff]
      %v6678 = vld [vmem:[%s6508 + $0xd8] sm:$0xff]
      %v6679 = vld [vmem:[%s6508 + $0x100] sm:$0xff]
      %v6680 = vld [vmem:[%s6508 + $0x108] sm:$0xff]
      %v6681 = vld [vmem:[%s6508 + $0x130] sm:$0xff]
      %v6682 = vld [vmem:[%s6508 + $0x138] sm:$0xff]
      %v6683 = vld [vmem:[%s6508 + $0x160] sm:$0xff]
      %v6684 = vld [vmem:[%s6508 + $0x168] sm:$0xff]
      %v6685 = vld [vmem:[%s6525 + $0x3] sm:$0x1]
      %v6686 = vlaneseq
      %v6687 = vshrl.u32 %v6686, 7
      %v6688 = vsub.s32 0, %v6687
      %v6689 = vrot.slane %v6685, %v6688
      %v6690 = vmul.f32 %v6669, %v6689
      %v6691 = vmul.f32 %v6670, %v6689
      %v6692 = vmul.f32 %v6671, %v6689
      %v6693 = vmul.f32 %v6672, %v6689
      %v6694 = vmul.f32 %v6673, %v6689
      %v6695 = vmul.f32 %v6674, %v6689
      %v6696 = vmul.f32 %v6675, %v6689
      %v6697 = vmul.f32 %v6676, %v6689
      %v6698 = vmul.f32 %v6677, %v6689
      %v6699 = vmul.f32 %v6678, %v6689
      %v6700 = vmul.f32 %v6679, %v6689
      %v6701 = vmul.f32 %v6680, %v6689
      %v6702 = vmul.f32 %v6681, %v6689
      %v6703 = vmul.f32 %v6682, %v6689
      %v6704 = vmul.f32 %v6683, %v6689
      %v6705 = vmul.f32 %v6684, %v6689
      %v6706 = vadd.f32 %v6653, %v6690
      %v6707 = vadd.f32 %v6654, %v6691
      %v6708 = vadd.f32 %v6655, %v6692
      %v6709 = vadd.f32 %v6656, %v6693
      %v6710 = vadd.f32 %v6657, %v6694
      %v6711 = vadd.f32 %v6658, %v6695
      %v6712 = vadd.f32 %v6659, %v6696
      %v6713 = vadd.f32 %v6660, %v6697
      %v6714 = vadd.f32 %v6661, %v6698
      %v6715 = vadd.f32 %v6662, %v6699
      %v6716 = vadd.f32 %v6663, %v6700
      %v6717 = vadd.f32 %v6664, %v6701
      %v6718 = vadd.f32 %v6665, %v6702
      %v6719 = vadd.f32 %v6666, %v6703
      %v6720 = vadd.f32 %v6667, %v6704
      %v6721 = vadd.f32 %v6668, %v6705
      %v6722 = vld [vmem:[%s6508 + $0x13] sm:$0xff]
      %v6723 = vld [vmem:[%s6508 + $0x1b] sm:$0xff]
      %v6724 = vld [vmem:[%s6508 + $0x43] sm:$0xff]
      %v6725 = vld [vmem:[%s6508 + $0x4b] sm:$0xff]
      %v6726 = vld [vmem:[%s6508 + $0x73] sm:$0xff]
      %v6727 = vld [vmem:[%s6508 + $0x7b] sm:$0xff]
      %v6728 = vld [vmem:[%s6508 + $0xa3] sm:$0xff]
      %v6729 = vld [vmem:[%s6508 + $0xab] sm:$0xff]
      %v6730 = vld [vmem:[%s6508 + $0xd3] sm:$0xff]
      %v6731 = vld [vmem:[%s6508 + $0xdb] sm:$0xff]
      %v6732 = vld [vmem:[%s6508 + $0x103] sm:$0xff]
      %v6733 = vld [vmem:[%s6508 + $0x10b] sm:$0xff]
      %v6734 = vld [vmem:[%s6508 + $0x133] sm:$0xff]
      %v6735 = vld [vmem:[%s6508 + $0x13b] sm:$0xff]
      %v6736 = vld [vmem:[%s6508 + $0x163] sm:$0xff]
      %v6737 = vld [vmem:[%s6508 + $0x16b] sm:$0xff]
      %v6738 = vld [vmem:[%s6525 + $0x4] sm:$0x1]
      %v6739 = vlaneseq
      %v6740 = vshrl.u32 %v6739, 7
      %v6741 = vsub.s32 0, %v6740
      %v6742 = vrot.slane %v6738, %v6741
      %v6743 = vmul.f32 %v6722, %v6742
      %v6744 = vmul.f32 %v6723, %v6742
      %v6745 = vmul.f32 %v6724, %v6742
      %v6746 = vmul.f32 %v6725, %v6742
      %v6747 = vmul.f32 %v6726, %v6742
      %v6748 = vmul.f32 %v6727, %v6742
      %v6749 = vmul.f32 %v6728, %v6742
      %v6750 = vmul.f32 %v6729, %v6742
      %v6751 = vmul.f32 %v6730, %v6742
      %v6752 = vmul.f32 %v6731, %v6742
      %v6753 = vmul.f32 %v6732, %v6742
      %v6754 = vmul.f32 %v6733, %v6742
      %v6755 = vmul.f32 %v6734, %v6742
      %v6756 = vmul.f32 %v6735, %v6742
      %v6757 = vmul.f32 %v6736, %v6742
      %v6758 = vmul.f32 %v6737, %v6742
      %v6759 = vadd.f32 %v6706, %v6743
      %v6760 = vadd.f32 %v6707, %v6744
      %v6761 = vadd.f32 %v6708, %v6745
      %v6762 = vadd.f32 %v6709, %v6746
      %v6763 = vadd.f32 %v6710, %v6747
      %v6764 = vadd.f32 %v6711, %v6748
      %v6765 = vadd.f32 %v6712, %v6749
      %v6766 = vadd.f32 %v6713, %v6750
      %v6767 = vadd.f32 %v6714, %v6751
      %v6768 = vadd.f32 %v6715, %v6752
      %v6769 = vadd.f32 %v6716, %v6753
      %v6770 = vadd.f32 %v6717, %v6754
      %v6771 = vadd.f32 %v6718, %v6755
      %v6772 = vadd.f32 %v6719, %v6756
      %v6773 = vadd.f32 %v6720, %v6757
      %v6774 = vadd.f32 %v6721, %v6758
      %v6775 = vld [vmem:[%s6508 + $0x16] sm:$0xff]
      %v6776 = vld [vmem:[%s6508 + $0x1e] sm:$0xff]
      %v6777 = vld [vmem:[%s6508 + $0x46] sm:$0xff]
      %v6778 = vld [vmem:[%s6508 + $0x4e] sm:$0xff]
      %v6779 = vld [vmem:[%s6508 + $0x76] sm:$0xff]
      %v6780 = vld [vmem:[%s6508 + $0x7e] sm:$0xff]
      %v6781 = vld [vmem:[%s6508 + $0xa6] sm:$0xff]
      %v6782 = vld [vmem:[%s6508 + $0xae] sm:$0xff]
      %v6783 = vld [vmem:[%s6508 + $0xd6] sm:$0xff]
      %v6784 = vld [vmem:[%s6508 + $0xde] sm:$0xff]
      %v6785 = vld [vmem:[%s6508 + $0x106] sm:$0xff]
      %v6786 = vld [vmem:[%s6508 + $0x10e] sm:$0xff]
      %v6787 = vld [vmem:[%s6508 + $0x136] sm:$0xff]
      %v6788 = vld [vmem:[%s6508 + $0x13e] sm:$0xff]
      %v6789 = vld [vmem:[%s6508 + $0x166] sm:$0xff]
      %v6790 = vld [vmem:[%s6508 + $0x16e] sm:$0xff]
      %v6791 = vld [vmem:[%s6525 + $0x5] sm:$0x1]
      %v6792 = vlaneseq
      %v6793 = vshrl.u32 %v6792, 7
      %v6794 = vsub.s32 0, %v6793
      %v6795 = vrot.slane %v6791, %v6794
      %v6796 = vmul.f32 %v6775, %v6795
      %v6797 = vmul.f32 %v6776, %v6795
      %v6798 = vmul.f32 %v6777, %v6795
      %v6799 = vmul.f32 %v6778, %v6795
      %v6800 = vmul.f32 %v6779, %v6795
      %v6801 = vmul.f32 %v6780, %v6795
      %v6802 = vmul.f32 %v6781, %v6795
      %v6803 = vmul.f32 %v6782, %v6795
      %v6804 = vmul.f32 %v6783, %v6795
      %v6805 = vmul.f32 %v6784, %v6795
      %v6806 = vmul.f32 %v6785, %v6795
      %v6807 = vmul.f32 %v6786, %v6795
      %v6808 = vmul.f32 %v6787, %v6795
      %v6809 = vmul.f32 %v6788, %v6795
      %v6810 = vmul.f32 %v6789, %v6795
      %v6811 = vmul.f32 %v6790, %v6795
      %v6812 = vadd.f32 %v6759, %v6796
      %v6813 = vadd.f32 %v6760, %v6797
      %v6814 = vadd.f32 %v6761, %v6798
      %v6815 = vadd.f32 %v6762, %v6799
      %v6816 = vadd.f32 %v6763, %v6800
      %v6817 = vadd.f32 %v6764, %v6801
      %v6818 = vadd.f32 %v6765, %v6802
      %v6819 = vadd.f32 %v6766, %v6803
      %v6820 = vadd.f32 %v6767, %v6804
      %v6821 = vadd.f32 %v6768, %v6805
      %v6822 = vadd.f32 %v6769, %v6806
      %v6823 = vadd.f32 %v6770, %v6807
      %v6824 = vadd.f32 %v6771, %v6808
      %v6825 = vadd.f32 %v6772, %v6809
      %v6826 = vadd.f32 %v6773, %v6810
      %v6827 = vadd.f32 %v6774, %v6811
      %v6828 = vld [vmem:[%s6508 + $0x19] sm:$0xff]
      %v6829 = vld [vmem:[%s6508 + $0x21] sm:$0xff]
      %v6830 = vld [vmem:[%s6508 + $0x49] sm:$0xff]
      %v6831 = vld [vmem:[%s6508 + $0x51] sm:$0xff]
      %v6832 = vld [vmem:[%s6508 + $0x79] sm:$0xff]
      %v6833 = vld [vmem:[%s6508 + $0x81] sm:$0xff]
      %v6834 = vld [vmem:[%s6508 + $0xa9] sm:$0xff]
      %v6835 = vld [vmem:[%s6508 + $0xb1] sm:$0xff]
      %v6836 = vld [vmem:[%s6508 + $0xd9] sm:$0xff]
      %v6837 = vld [vmem:[%s6508 + $0xe1] sm:$0xff]
      %v6838 = vld [vmem:[%s6508 + $0x109] sm:$0xff]
      %v6839 = vld [vmem:[%s6508 + $0x111] sm:$0xff]
      %v6840 = vld [vmem:[%s6508 + $0x139] sm:$0xff]
      %v6841 = vld [vmem:[%s6508 + $0x141] sm:$0xff]
      %v6842 = vld [vmem:[%s6508 + $0x169] sm:$0xff]
      %v6843 = vld [vmem:[%s6508 + $0x171] sm:$0xff]
      %v6844 = vld [vmem:[%s6525 + $0x6] sm:$0x1]
      %v6845 = vlaneseq
      %v6846 = vshrl.u32 %v6845, 7
      %v6847 = vsub.s32 0, %v6846
      %v6848 = vrot.slane %v6844, %v6847
      %v6849 = vmul.f32 %v6828, %v6848
      %v6850 = vmul.f32 %v6829, %v6848
      %v6851 = vmul.f32 %v6830, %v6848
      %v6852 = vmul.f32 %v6831, %v6848
      %v6853 = vmul.f32 %v6832, %v6848
      %v6854 = vmul.f32 %v6833, %v6848
      %v6855 = vmul.f32 %v6834, %v6848
      %v6856 = vmul.f32 %v6835, %v6848
      %v6857 = vmul.f32 %v6836, %v6848
      %v6858 = vmul.f32 %v6837, %v6848
      %v6859 = vmul.f32 %v6838, %v6848
      %v6860 = vmul.f32 %v6839, %v6848
      %v6861 = vmul.f32 %v6840, %v6848
      %v6862 = vmul.f32 %v6841, %v6848
      %v6863 = vmul.f32 %v6842, %v6848
      %v6864 = vmul.f32 %v6843, %v6848
      %v6865 = vadd.f32 %v6812, %v6849
      %v6866 = vadd.f32 %v6813, %v6850
      %v6867 = vadd.f32 %v6814, %v6851
      %v6868 = vadd.f32 %v6815, %v6852
      %v6869 = vadd.f32 %v6816, %v6853
      %v6870 = vadd.f32 %v6817, %v6854
      %v6871 = vadd.f32 %v6818, %v6855
      %v6872 = vadd.f32 %v6819, %v6856
      %v6873 = vadd.f32 %v6820, %v6857
      %v6874 = vadd.f32 %v6821, %v6858
      %v6875 = vadd.f32 %v6822, %v6859
      %v6876 = vadd.f32 %v6823, %v6860
      %v6877 = vadd.f32 %v6824, %v6861
      %v6878 = vadd.f32 %v6825, %v6862
      %v6879 = vadd.f32 %v6826, %v6863
      %v6880 = vadd.f32 %v6827, %v6864
      %s6881 = scalar_lea.vmem [#allocation3], 720
      %v6882 = vld [vmem:[%s6881 + $0x7] sm:$0xff]
      %v6883 = vld [vmem:[%s6881 + $0xf] sm:$0xff]
      %v6884 = vld [vmem:[%s6881 + $0x37] sm:$0xff]
      %v6885 = vld [vmem:[%s6881 + $0x3f] sm:$0xff]
      %v6886 = vld [vmem:[%s6881 + $0x67] sm:$0xff]
      %v6887 = vld [vmem:[%s6881 + $0x6f] sm:$0xff]
      %v6888 = vld [vmem:[%s6881 + $0x97] sm:$0xff]
      %v6889 = vld [vmem:[%s6881 + $0x9f] sm:$0xff]
      %v6890 = vld [vmem:[%s6881 + $0xc7] sm:$0xff]
      %v6891 = vld [vmem:[%s6881 + $0xcf] sm:$0xff]
      %v6892 = vld [vmem:[%s6881 + $0xf7] sm:$0xff]
      %v6893 = vld [vmem:[%s6881 + $0xff] sm:$0xff]
      %v6894 = vld [vmem:[%s6881 + $0x127] sm:$0xff]
      %v6895 = vld [vmem:[%s6881 + $0x12f] sm:$0xff]
      %v6896 = vld [vmem:[%s6881 + $0x157] sm:$0xff]
      %v6897 = vld [vmem:[%s6881 + $0x15f] sm:$0xff]
      %s6898 = scalar_lea.vmem %s3, 40
      %v6899 = vld [vmem:[%s6898] sm:$0x1]
      %v6900 = vlaneseq
      %v6901 = vshrl.u32 %v6900, 7
      %v6902 = vsub.s32 0, %v6901
      %v6903 = vrot.slane %v6899, %v6902
      %v6904 = vmul.f32 %v6882, %v6903
      %v6905 = vmul.f32 %v6883, %v6903
      %v6906 = vmul.f32 %v6884, %v6903
      %v6907 = vmul.f32 %v6885, %v6903
      %v6908 = vmul.f32 %v6886, %v6903
      %v6909 = vmul.f32 %v6887, %v6903
      %v6910 = vmul.f32 %v6888, %v6903
      %v6911 = vmul.f32 %v6889, %v6903
      %v6912 = vmul.f32 %v6890, %v6903
      %v6913 = vmul.f32 %v6891, %v6903
      %v6914 = vmul.f32 %v6892, %v6903
      %v6915 = vmul.f32 %v6893, %v6903
      %v6916 = vmul.f32 %v6894, %v6903
      %v6917 = vmul.f32 %v6895, %v6903
      %v6918 = vmul.f32 %v6896, %v6903
      %v6919 = vmul.f32 %v6897, %v6903
      %v6920 = vadd.f32 %v6865, %v6904
      %v6921 = vadd.f32 %v6866, %v6905
      %v6922 = vadd.f32 %v6867, %v6906
      %v6923 = vadd.f32 %v6868, %v6907
      %v6924 = vadd.f32 %v6869, %v6908
      %v6925 = vadd.f32 %v6870, %v6909
      %v6926 = vadd.f32 %v6871, %v6910
      %v6927 = vadd.f32 %v6872, %v6911
      %v6928 = vadd.f32 %v6873, %v6912
      %v6929 = vadd.f32 %v6874, %v6913
      %v6930 = vadd.f32 %v6875, %v6914
      %v6931 = vadd.f32 %v6876, %v6915
      %v6932 = vadd.f32 %v6877, %v6916
      %v6933 = vadd.f32 %v6878, %v6917
      %v6934 = vadd.f32 %v6879, %v6918
      %v6935 = vadd.f32 %v6880, %v6919
      %v6936 = vld [vmem:[%s6881 + $0xa] sm:$0xff]
      %v6937 = vld [vmem:[%s6881 + $0x12] sm:$0xff]
      %v6938 = vld [vmem:[%s6881 + $0x3a] sm:$0xff]
      %v6939 = vld [vmem:[%s6881 + $0x42] sm:$0xff]
      %v6940 = vld [vmem:[%s6881 + $0x6a] sm:$0xff]
      %v6941 = vld [vmem:[%s6881 + $0x72] sm:$0xff]
      %v6942 = vld [vmem:[%s6881 + $0x9a] sm:$0xff]
      %v6943 = vld [vmem:[%s6881 + $0xa2] sm:$0xff]
      %v6944 = vld [vmem:[%s6881 + $0xca] sm:$0xff]
      %v6945 = vld [vmem:[%s6881 + $0xd2] sm:$0xff]
      %v6946 = vld [vmem:[%s6881 + $0xfa] sm:$0xff]
      %v6947 = vld [vmem:[%s6881 + $0x102] sm:$0xff]
      %v6948 = vld [vmem:[%s6881 + $0x12a] sm:$0xff]
      %v6949 = vld [vmem:[%s6881 + $0x132] sm:$0xff]
      %v6950 = vld [vmem:[%s6881 + $0x15a] sm:$0xff]
      %v6951 = vld [vmem:[%s6881 + $0x162] sm:$0xff]
      %v6952 = vld [vmem:[%s6898 + $0x1] sm:$0x1]
      %v6953 = vlaneseq
      %v6954 = vshrl.u32 %v6953, 7
      %v6955 = vsub.s32 0, %v6954
      %v6956 = vrot.slane %v6952, %v6955
      %v6957 = vmul.f32 %v6936, %v6956
      %v6958 = vmul.f32 %v6937, %v6956
      %v6959 = vmul.f32 %v6938, %v6956
      %v6960 = vmul.f32 %v6939, %v6956
      %v6961 = vmul.f32 %v6940, %v6956
      %v6962 = vmul.f32 %v6941, %v6956
      %v6963 = vmul.f32 %v6942, %v6956
      %v6964 = vmul.f32 %v6943, %v6956
      %v6965 = vmul.f32 %v6944, %v6956
      %v6966 = vmul.f32 %v6945, %v6956
      %v6967 = vmul.f32 %v6946, %v6956
      %v6968 = vmul.f32 %v6947, %v6956
      %v6969 = vmul.f32 %v6948, %v6956
      %v6970 = vmul.f32 %v6949, %v6956
      %v6971 = vmul.f32 %v6950, %v6956
      %v6972 = vmul.f32 %v6951, %v6956
      %v6973 = vadd.f32 %v6920, %v6957
      %v6974 = vadd.f32 %v6921, %v6958
      %v6975 = vadd.f32 %v6922, %v6959
      %v6976 = vadd.f32 %v6923, %v6960
      %v6977 = vadd.f32 %v6924, %v6961
      %v6978 = vadd.f32 %v6925, %v6962
      %v6979 = vadd.f32 %v6926, %v6963
      %v6980 = vadd.f32 %v6927, %v6964
      %v6981 = vadd.f32 %v6928, %v6965
      %v6982 = vadd.f32 %v6929, %v6966
      %v6983 = vadd.f32 %v6930, %v6967
      %v6984 = vadd.f32 %v6931, %v6968
      %v6985 = vadd.f32 %v6932, %v6969
      %v6986 = vadd.f32 %v6933, %v6970
      %v6987 = vadd.f32 %v6934, %v6971
      %v6988 = vadd.f32 %v6935, %v6972
      %v6989 = vld [vmem:[%s6881 + $0xd] sm:$0xff]
      %v6990 = vld [vmem:[%s6881 + $0x15] sm:$0xff]
      %v6991 = vld [vmem:[%s6881 + $0x3d] sm:$0xff]
      %v6992 = vld [vmem:[%s6881 + $0x45] sm:$0xff]
      %v6993 = vld [vmem:[%s6881 + $0x6d] sm:$0xff]
      %v6994 = vld [vmem:[%s6881 + $0x75] sm:$0xff]
      %v6995 = vld [vmem:[%s6881 + $0x9d] sm:$0xff]
      %v6996 = vld [vmem:[%s6881 + $0xa5] sm:$0xff]
      %v6997 = vld [vmem:[%s6881 + $0xcd] sm:$0xff]
      %v6998 = vld [vmem:[%s6881 + $0xd5] sm:$0xff]
      %v6999 = vld [vmem:[%s6881 + $0xfd] sm:$0xff]
      %v7000 = vld [vmem:[%s6881 + $0x105] sm:$0xff]
      %v7001 = vld [vmem:[%s6881 + $0x12d] sm:$0xff]
      %v7002 = vld [vmem:[%s6881 + $0x135] sm:$0xff]
      %v7003 = vld [vmem:[%s6881 + $0x15d] sm:$0xff]
      %v7004 = vld [vmem:[%s6881 + $0x165] sm:$0xff]
      %v7005 = vld [vmem:[%s6898 + $0x2] sm:$0x1]
      %v7006 = vlaneseq
      %v7007 = vshrl.u32 %v7006, 7
      %v7008 = vsub.s32 0, %v7007
      %v7009 = vrot.slane %v7005, %v7008
      %v7010 = vmul.f32 %v6989, %v7009
      %v7011 = vmul.f32 %v6990, %v7009
      %v7012 = vmul.f32 %v6991, %v7009
      %v7013 = vmul.f32 %v6992, %v7009
      %v7014 = vmul.f32 %v6993, %v7009
      %v7015 = vmul.f32 %v6994, %v7009
      %v7016 = vmul.f32 %v6995, %v7009
      %v7017 = vmul.f32 %v6996, %v7009
      %v7018 = vmul.f32 %v6997, %v7009
      %v7019 = vmul.f32 %v6998, %v7009
      %v7020 = vmul.f32 %v6999, %v7009
      %v7021 = vmul.f32 %v7000, %v7009
      %v7022 = vmul.f32 %v7001, %v7009
      %v7023 = vmul.f32 %v7002, %v7009
      %v7024 = vmul.f32 %v7003, %v7009
      %v7025 = vmul.f32 %v7004, %v7009
      %v7026 = vadd.f32 %v6973, %v7010
      %v7027 = vadd.f32 %v6974, %v7011
      %v7028 = vadd.f32 %v6975, %v7012
      %v7029 = vadd.f32 %v6976, %v7013
      %v7030 = vadd.f32 %v6977, %v7014
      %v7031 = vadd.f32 %v6978, %v7015
      %v7032 = vadd.f32 %v6979, %v7016
      %v7033 = vadd.f32 %v6980, %v7017
      %v7034 = vadd.f32 %v6981, %v7018
      %v7035 = vadd.f32 %v6982, %v7019
      %v7036 = vadd.f32 %v6983, %v7020
      %v7037 = vadd.f32 %v6984, %v7021
      %v7038 = vadd.f32 %v6985, %v7022
      %v7039 = vadd.f32 %v6986, %v7023
      %v7040 = vadd.f32 %v6987, %v7024
      %v7041 = vadd.f32 %v6988, %v7025
      %v7042 = vld [vmem:[%s6881 + $0x10] sm:$0xff]
      %v7043 = vld [vmem:[%s6881 + $0x18] sm:$0xff]
      %v7044 = vld [vmem:[%s6881 + $0x40] sm:$0xff]
      %v7045 = vld [vmem:[%s6881 + $0x48] sm:$0xff]
      %v7046 = vld [vmem:[%s6881 + $0x70] sm:$0xff]
      %v7047 = vld [vmem:[%s6881 + $0x78] sm:$0xff]
      %v7048 = vld [vmem:[%s6881 + $0xa0] sm:$0xff]
      %v7049 = vld [vmem:[%s6881 + $0xa8] sm:$0xff]
      %v7050 = vld [vmem:[%s6881 + $0xd0] sm:$0xff]
      %v7051 = vld [vmem:[%s6881 + $0xd8] sm:$0xff]
      %v7052 = vld [vmem:[%s6881 + $0x100] sm:$0xff]
      %v7053 = vld [vmem:[%s6881 + $0x108] sm:$0xff]
      %v7054 = vld [vmem:[%s6881 + $0x130] sm:$0xff]
      %v7055 = vld [vmem:[%s6881 + $0x138] sm:$0xff]
      %v7056 = vld [vmem:[%s6881 + $0x160] sm:$0xff]
      %v7057 = vld [vmem:[%s6881 + $0x168] sm:$0xff]
      %v7058 = vld [vmem:[%s6898 + $0x3] sm:$0x1]
      %v7059 = vlaneseq
      %v7060 = vshrl.u32 %v7059, 7
      %v7061 = vsub.s32 0, %v7060
      %v7062 = vrot.slane %v7058, %v7061
      %v7063 = vmul.f32 %v7042, %v7062
      %v7064 = vmul.f32 %v7043, %v7062
      %v7065 = vmul.f32 %v7044, %v7062
      %v7066 = vmul.f32 %v7045, %v7062
      %v7067 = vmul.f32 %v7046, %v7062
      %v7068 = vmul.f32 %v7047, %v7062
      %v7069 = vmul.f32 %v7048, %v7062
      %v7070 = vmul.f32 %v7049, %v7062
      %v7071 = vmul.f32 %v7050, %v7062
      %v7072 = vmul.f32 %v7051, %v7062
      %v7073 = vmul.f32 %v7052, %v7062
      %v7074 = vmul.f32 %v7053, %v7062
      %v7075 = vmul.f32 %v7054, %v7062
      %v7076 = vmul.f32 %v7055, %v7062
      %v7077 = vmul.f32 %v7056, %v7062
      %v7078 = vmul.f32 %v7057, %v7062
      %v7079 = vadd.f32 %v7026, %v7063
      %v7080 = vadd.f32 %v7027, %v7064
      %v7081 = vadd.f32 %v7028, %v7065
      %v7082 = vadd.f32 %v7029, %v7066
      %v7083 = vadd.f32 %v7030, %v7067
      %v7084 = vadd.f32 %v7031, %v7068
      %v7085 = vadd.f32 %v7032, %v7069
      %v7086 = vadd.f32 %v7033, %v7070
      %v7087 = vadd.f32 %v7034, %v7071
      %v7088 = vadd.f32 %v7035, %v7072
      %v7089 = vadd.f32 %v7036, %v7073
      %v7090 = vadd.f32 %v7037, %v7074
      %v7091 = vadd.f32 %v7038, %v7075
      %v7092 = vadd.f32 %v7039, %v7076
      %v7093 = vadd.f32 %v7040, %v7077
      %v7094 = vadd.f32 %v7041, %v7078
      %v7095 = vld [vmem:[%s6881 + $0x13] sm:$0xff]
      %v7096 = vld [vmem:[%s6881 + $0x1b] sm:$0xff]
      %v7097 = vld [vmem:[%s6881 + $0x43] sm:$0xff]
      %v7098 = vld [vmem:[%s6881 + $0x4b] sm:$0xff]
      %v7099 = vld [vmem:[%s6881 + $0x73] sm:$0xff]
      %v7100 = vld [vmem:[%s6881 + $0x7b] sm:$0xff]
      %v7101 = vld [vmem:[%s6881 + $0xa3] sm:$0xff]
      %v7102 = vld [vmem:[%s6881 + $0xab] sm:$0xff]
      %v7103 = vld [vmem:[%s6881 + $0xd3] sm:$0xff]
      %v7104 = vld [vmem:[%s6881 + $0xdb] sm:$0xff]
      %v7105 = vld [vmem:[%s6881 + $0x103] sm:$0xff]
      %v7106 = vld [vmem:[%s6881 + $0x10b] sm:$0xff]
      %v7107 = vld [vmem:[%s6881 + $0x133] sm:$0xff]
      %v7108 = vld [vmem:[%s6881 + $0x13b] sm:$0xff]
      %v7109 = vld [vmem:[%s6881 + $0x163] sm:$0xff]
      %v7110 = vld [vmem:[%s6881 + $0x16b] sm:$0xff]
      %v7111 = vld [vmem:[%s6898 + $0x4] sm:$0x1]
      %v7112 = vlaneseq
      %v7113 = vshrl.u32 %v7112, 7
      %v7114 = vsub.s32 0, %v7113
      %v7115 = vrot.slane %v7111, %v7114
      %v7116 = vmul.f32 %v7095, %v7115
      %v7117 = vmul.f32 %v7096, %v7115
      %v7118 = vmul.f32 %v7097, %v7115
      %v7119 = vmul.f32 %v7098, %v7115
      %v7120 = vmul.f32 %v7099, %v7115
      %v7121 = vmul.f32 %v7100, %v7115
      %v7122 = vmul.f32 %v7101, %v7115
      %v7123 = vmul.f32 %v7102, %v7115
      %v7124 = vmul.f32 %v7103, %v7115
      %v7125 = vmul.f32 %v7104, %v7115
      %v7126 = vmul.f32 %v7105, %v7115
      %v7127 = vmul.f32 %v7106, %v7115
      %v7128 = vmul.f32 %v7107, %v7115
      %v7129 = vmul.f32 %v7108, %v7115
      %v7130 = vmul.f32 %v7109, %v7115
      %v7131 = vmul.f32 %v7110, %v7115
      %v7132 = vadd.f32 %v7079, %v7116
      %v7133 = vadd.f32 %v7080, %v7117
      %v7134 = vadd.f32 %v7081, %v7118
      %v7135 = vadd.f32 %v7082, %v7119
      %v7136 = vadd.f32 %v7083, %v7120
      %v7137 = vadd.f32 %v7084, %v7121
      %v7138 = vadd.f32 %v7085, %v7122
      %v7139 = vadd.f32 %v7086, %v7123
      %v7140 = vadd.f32 %v7087, %v7124
      %v7141 = vadd.f32 %v7088, %v7125
      %v7142 = vadd.f32 %v7089, %v7126
      %v7143 = vadd.f32 %v7090, %v7127
      %v7144 = vadd.f32 %v7091, %v7128
      %v7145 = vadd.f32 %v7092, %v7129
      %v7146 = vadd.f32 %v7093, %v7130
      %v7147 = vadd.f32 %v7094, %v7131
      %v7148 = vld [vmem:[%s6881 + $0x16] sm:$0xff]
      %v7149 = vld [vmem:[%s6881 + $0x1e] sm:$0xff]
      %v7150 = vld [vmem:[%s6881 + $0x46] sm:$0xff]
      %v7151 = vld [vmem:[%s6881 + $0x4e] sm:$0xff]
      %v7152 = vld [vmem:[%s6881 + $0x76] sm:$0xff]
      %v7153 = vld [vmem:[%s6881 + $0x7e] sm:$0xff]
      %v7154 = vld [vmem:[%s6881 + $0xa6] sm:$0xff]
      %v7155 = vld [vmem:[%s6881 + $0xae] sm:$0xff]
      %v7156 = vld [vmem:[%s6881 + $0xd6] sm:$0xff]
      %v7157 = vld [vmem:[%s6881 + $0xde] sm:$0xff]
      %v7158 = vld [vmem:[%s6881 + $0x106] sm:$0xff]
      %v7159 = vld [vmem:[%s6881 + $0x10e] sm:$0xff]
      %v7160 = vld [vmem:[%s6881 + $0x136] sm:$0xff]
      %v7161 = vld [vmem:[%s6881 + $0x13e] sm:$0xff]
      %v7162 = vld [vmem:[%s6881 + $0x166] sm:$0xff]
      %v7163 = vld [vmem:[%s6881 + $0x16e] sm:$0xff]
      %v7164 = vld [vmem:[%s6898 + $0x5] sm:$0x1]
      %v7165 = vlaneseq
      %v7166 = vshrl.u32 %v7165, 7
      %v7167 = vsub.s32 0, %v7166
      %v7168 = vrot.slane %v7164, %v7167
      %v7169 = vmul.f32 %v7148, %v7168
      %v7170 = vmul.f32 %v7149, %v7168
      %v7171 = vmul.f32 %v7150, %v7168
      %v7172 = vmul.f32 %v7151, %v7168
      %v7173 = vmul.f32 %v7152, %v7168
      %v7174 = vmul.f32 %v7153, %v7168
      %v7175 = vmul.f32 %v7154, %v7168
      %v7176 = vmul.f32 %v7155, %v7168
      %v7177 = vmul.f32 %v7156, %v7168
      %v7178 = vmul.f32 %v7157, %v7168
      %v7179 = vmul.f32 %v7158, %v7168
      %v7180 = vmul.f32 %v7159, %v7168
      %v7181 = vmul.f32 %v7160, %v7168
      %v7182 = vmul.f32 %v7161, %v7168
      %v7183 = vmul.f32 %v7162, %v7168
      %v7184 = vmul.f32 %v7163, %v7168
      %v7185 = vadd.f32 %v7132, %v7169
      %v7186 = vadd.f32 %v7133, %v7170
      %v7187 = vadd.f32 %v7134, %v7171
      %v7188 = vadd.f32 %v7135, %v7172
      %v7189 = vadd.f32 %v7136, %v7173
      %v7190 = vadd.f32 %v7137, %v7174
      %v7191 = vadd.f32 %v7138, %v7175
      %v7192 = vadd.f32 %v7139, %v7176
      %v7193 = vadd.f32 %v7140, %v7177
      %v7194 = vadd.f32 %v7141, %v7178
      %v7195 = vadd.f32 %v7142, %v7179
      %v7196 = vadd.f32 %v7143, %v7180
      %v7197 = vadd.f32 %v7144, %v7181
      %v7198 = vadd.f32 %v7145, %v7182
      %v7199 = vadd.f32 %v7146, %v7183
      %v7200 = vadd.f32 %v7147, %v7184
      %v7201 = vld [vmem:[%s6881 + $0x19] sm:$0xff]
      %v7202 = vld [vmem:[%s6881 + $0x21] sm:$0xff]
      %v7203 = vld [vmem:[%s6881 + $0x49] sm:$0xff]
      %v7204 = vld [vmem:[%s6881 + $0x51] sm:$0xff]
      %v7205 = vld [vmem:[%s6881 + $0x79] sm:$0xff]
      %v7206 = vld [vmem:[%s6881 + $0x81] sm:$0xff]
      %v7207 = vld [vmem:[%s6881 + $0xa9] sm:$0xff]
      %v7208 = vld [vmem:[%s6881 + $0xb1] sm:$0xff]
      %v7209 = vld [vmem:[%s6881 + $0xd9] sm:$0xff]
      %v7210 = vld [vmem:[%s6881 + $0xe1] sm:$0xff]
      %v7211 = vld [vmem:[%s6881 + $0x109] sm:$0xff]
      %v7212 = vld [vmem:[%s6881 + $0x111] sm:$0xff]
      %v7213 = vld [vmem:[%s6881 + $0x139] sm:$0xff]
      %v7214 = vld [vmem:[%s6881 + $0x141] sm:$0xff]
      %v7215 = vld [vmem:[%s6881 + $0x169] sm:$0xff]
      %v7216 = vld [vmem:[%s6881 + $0x171] sm:$0xff]
      %v7217 = vld [vmem:[%s6898 + $0x6] sm:$0x1]
      %v7218 = vlaneseq
      %v7219 = vshrl.u32 %v7218, 7
      %v7220 = vsub.s32 0, %v7219
      %v7221 = vrot.slane %v7217, %v7220
      %v7222 = vmul.f32 %v7201, %v7221
      %v7223 = vmul.f32 %v7202, %v7221
      %v7224 = vmul.f32 %v7203, %v7221
      %v7225 = vmul.f32 %v7204, %v7221
      %v7226 = vmul.f32 %v7205, %v7221
      %v7227 = vmul.f32 %v7206, %v7221
      %v7228 = vmul.f32 %v7207, %v7221
      %v7229 = vmul.f32 %v7208, %v7221
      %v7230 = vmul.f32 %v7209, %v7221
      %v7231 = vmul.f32 %v7210, %v7221
      %v7232 = vmul.f32 %v7211, %v7221
      %v7233 = vmul.f32 %v7212, %v7221
      %v7234 = vmul.f32 %v7213, %v7221
      %v7235 = vmul.f32 %v7214, %v7221
      %v7236 = vmul.f32 %v7215, %v7221
      %v7237 = vmul.f32 %v7216, %v7221
      %v7238 = vadd.f32 %v7185, %v7222
      %v7239 = vadd.f32 %v7186, %v7223
      %v7240 = vadd.f32 %v7187, %v7224
      %v7241 = vadd.f32 %v7188, %v7225
      %v7242 = vadd.f32 %v7189, %v7226
      %v7243 = vadd.f32 %v7190, %v7227
      %v7244 = vadd.f32 %v7191, %v7228
      %v7245 = vadd.f32 %v7192, %v7229
      %v7246 = vadd.f32 %v7193, %v7230
      %v7247 = vadd.f32 %v7194, %v7231
      %v7248 = vadd.f32 %v7195, %v7232
      %v7249 = vadd.f32 %v7196, %v7233
      %v7250 = vadd.f32 %v7197, %v7234
      %v7251 = vadd.f32 %v7198, %v7235
      %v7252 = vadd.f32 %v7199, %v7236
      %v7253 = vadd.f32 %v7200, %v7237
      %s7254 = scalar_lea.vmem [#allocation3], 864
      %v7255 = vld [vmem:[%s7254 + $0x7] sm:$0xff]
      %v7256 = vld [vmem:[%s7254 + $0xf] sm:$0xff]
      %v7257 = vld [vmem:[%s7254 + $0x37] sm:$0xff]
      %v7258 = vld [vmem:[%s7254 + $0x3f] sm:$0xff]
      %v7259 = vld [vmem:[%s7254 + $0x67] sm:$0xff]
      %v7260 = vld [vmem:[%s7254 + $0x6f] sm:$0xff]
      %v7261 = vld [vmem:[%s7254 + $0x97] sm:$0xff]
      %v7262 = vld [vmem:[%s7254 + $0x9f] sm:$0xff]
      %v7263 = vld [vmem:[%s7254 + $0xc7] sm:$0xff]
      %v7264 = vld [vmem:[%s7254 + $0xcf] sm:$0xff]
      %v7265 = vld [vmem:[%s7254 + $0xf7] sm:$0xff]
      %v7266 = vld [vmem:[%s7254 + $0xff] sm:$0xff]
      %v7267 = vld [vmem:[%s7254 + $0x127] sm:$0xff]
      %v7268 = vld [vmem:[%s7254 + $0x12f] sm:$0xff]
      %v7269 = vld [vmem:[%s7254 + $0x157] sm:$0xff]
      %v7270 = vld [vmem:[%s7254 + $0x15f] sm:$0xff]
      %s7271 = scalar_lea.vmem %s3, 48
      %v7272 = vld [vmem:[%s7271] sm:$0x1]
      %v7273 = vlaneseq
      %v7274 = vshrl.u32 %v7273, 7
      %v7275 = vsub.s32 0, %v7274
      %v7276 = vrot.slane %v7272, %v7275
      %v7277 = vmul.f32 %v7255, %v7276
      %v7278 = vmul.f32 %v7256, %v7276
      %v7279 = vmul.f32 %v7257, %v7276
      %v7280 = vmul.f32 %v7258, %v7276
      %v7281 = vmul.f32 %v7259, %v7276
      %v7282 = vmul.f32 %v7260, %v7276
      %v7283 = vmul.f32 %v7261, %v7276
      %v7284 = vmul.f32 %v7262, %v7276
      %v7285 = vmul.f32 %v7263, %v7276
      %v7286 = vmul.f32 %v7264, %v7276
      %v7287 = vmul.f32 %v7265, %v7276
      %v7288 = vmul.f32 %v7266, %v7276
      %v7289 = vmul.f32 %v7267, %v7276
      %v7290 = vmul.f32 %v7268, %v7276
      %v7291 = vmul.f32 %v7269, %v7276
      %v7292 = vmul.f32 %v7270, %v7276
      %v7293 = vadd.f32 %v7238, %v7277
      %v7294 = vadd.f32 %v7239, %v7278
      %v7295 = vadd.f32 %v7240, %v7279
      %v7296 = vadd.f32 %v7241, %v7280
      %v7297 = vadd.f32 %v7242, %v7281
      %v7298 = vadd.f32 %v7243, %v7282
      %v7299 = vadd.f32 %v7244, %v7283
      %v7300 = vadd.f32 %v7245, %v7284
      %v7301 = vadd.f32 %v7246, %v7285
      %v7302 = vadd.f32 %v7247, %v7286
      %v7303 = vadd.f32 %v7248, %v7287
      %v7304 = vadd.f32 %v7249, %v7288
      %v7305 = vadd.f32 %v7250, %v7289
      %v7306 = vadd.f32 %v7251, %v7290
      %v7307 = vadd.f32 %v7252, %v7291
      %v7308 = vadd.f32 %v7253, %v7292
      %v7309 = vld [vmem:[%s7254 + $0xa] sm:$0xff]
      %v7310 = vld [vmem:[%s7254 + $0x12] sm:$0xff]
      %v7311 = vld [vmem:[%s7254 + $0x3a] sm:$0xff]
      %v7312 = vld [vmem:[%s7254 + $0x42] sm:$0xff]
      %v7313 = vld [vmem:[%s7254 + $0x6a] sm:$0xff]
      %v7314 = vld [vmem:[%s7254 + $0x72] sm:$0xff]
      %v7315 = vld [vmem:[%s7254 + $0x9a] sm:$0xff]
      %v7316 = vld [vmem:[%s7254 + $0xa2] sm:$0xff]
      %v7317 = vld [vmem:[%s7254 + $0xca] sm:$0xff]
      %v7318 = vld [vmem:[%s7254 + $0xd2] sm:$0xff]
      %v7319 = vld [vmem:[%s7254 + $0xfa] sm:$0xff]
      %v7320 = vld [vmem:[%s7254 + $0x102] sm:$0xff]
      %v7321 = vld [vmem:[%s7254 + $0x12a] sm:$0xff]
      %v7322 = vld [vmem:[%s7254 + $0x132] sm:$0xff]
      %v7323 = vld [vmem:[%s7254 + $0x15a] sm:$0xff]
      %v7324 = vld [vmem:[%s7254 + $0x162] sm:$0xff]
      %v7325 = vld [vmem:[%s7271 + $0x1] sm:$0x1]
      %v7326 = vlaneseq
      %v7327 = vshrl.u32 %v7326, 7
      %v7328 = vsub.s32 0, %v7327
      %v7329 = vrot.slane %v7325, %v7328
      %v7330 = vmul.f32 %v7309, %v7329
      %v7331 = vmul.f32 %v7310, %v7329
      %v7332 = vmul.f32 %v7311, %v7329
      %v7333 = vmul.f32 %v7312, %v7329
      %v7334 = vmul.f32 %v7313, %v7329
      %v7335 = vmul.f32 %v7314, %v7329
      %v7336 = vmul.f32 %v7315, %v7329
      %v7337 = vmul.f32 %v7316, %v7329
      %v7338 = vmul.f32 %v7317, %v7329
      %v7339 = vmul.f32 %v7318, %v7329
      %v7340 = vmul.f32 %v7319, %v7329
      %v7341 = vmul.f32 %v7320, %v7329
      %v7342 = vmul.f32 %v7321, %v7329
      %v7343 = vmul.f32 %v7322, %v7329
      %v7344 = vmul.f32 %v7323, %v7329
      %v7345 = vmul.f32 %v7324, %v7329
      %v7346 = vadd.f32 %v7293, %v7330
      %v7347 = vadd.f32 %v7294, %v7331
      %v7348 = vadd.f32 %v7295, %v7332
      %v7349 = vadd.f32 %v7296, %v7333
      %v7350 = vadd.f32 %v7297, %v7334
      %v7351 = vadd.f32 %v7298, %v7335
      %v7352 = vadd.f32 %v7299, %v7336
      %v7353 = vadd.f32 %v7300, %v7337
      %v7354 = vadd.f32 %v7301, %v7338
      %v7355 = vadd.f32 %v7302, %v7339
      %v7356 = vadd.f32 %v7303, %v7340
      %v7357 = vadd.f32 %v7304, %v7341
      %v7358 = vadd.f32 %v7305, %v7342
      %v7359 = vadd.f32 %v7306, %v7343
      %v7360 = vadd.f32 %v7307, %v7344
      %v7361 = vadd.f32 %v7308, %v7345
      %v7362 = vld [vmem:[%s7254 + $0xd] sm:$0xff]
      %v7363 = vld [vmem:[%s7254 + $0x15] sm:$0xff]
      %v7364 = vld [vmem:[%s7254 + $0x3d] sm:$0xff]
      %v7365 = vld [vmem:[%s7254 + $0x45] sm:$0xff]
      %v7366 = vld [vmem:[%s7254 + $0x6d] sm:$0xff]
      %v7367 = vld [vmem:[%s7254 + $0x75] sm:$0xff]
      %v7368 = vld [vmem:[%s7254 + $0x9d] sm:$0xff]
      %v7369 = vld [vmem:[%s7254 + $0xa5] sm:$0xff]
      %v7370 = vld [vmem:[%s7254 + $0xcd] sm:$0xff]
      %v7371 = vld [vmem:[%s7254 + $0xd5] sm:$0xff]
      %v7372 = vld [vmem:[%s7254 + $0xfd] sm:$0xff]
      %v7373 = vld [vmem:[%s7254 + $0x105] sm:$0xff]
      %v7374 = vld [vmem:[%s7254 + $0x12d] sm:$0xff]
      %v7375 = vld [vmem:[%s7254 + $0x135] sm:$0xff]
      %v7376 = vld [vmem:[%s7254 + $0x15d] sm:$0xff]
      %v7377 = vld [vmem:[%s7254 + $0x165] sm:$0xff]
      %v7378 = vld [vmem:[%s7271 + $0x2] sm:$0x1]
      %v7379 = vlaneseq
      %v7380 = vshrl.u32 %v7379, 7
      %v7381 = vsub.s32 0, %v7380
      %v7382 = vrot.slane %v7378, %v7381
      %v7383 = vmul.f32 %v7362, %v7382
      %v7384 = vmul.f32 %v7363, %v7382
      %v7385 = vmul.f32 %v7364, %v7382
      %v7386 = vmul.f32 %v7365, %v7382
      %v7387 = vmul.f32 %v7366, %v7382
      %v7388 = vmul.f32 %v7367, %v7382
      %v7389 = vmul.f32 %v7368, %v7382
      %v7390 = vmul.f32 %v7369, %v7382
      %v7391 = vmul.f32 %v7370, %v7382
      %v7392 = vmul.f32 %v7371, %v7382
      %v7393 = vmul.f32 %v7372, %v7382
      %v7394 = vmul.f32 %v7373, %v7382
      %v7395 = vmul.f32 %v7374, %v7382
      %v7396 = vmul.f32 %v7375, %v7382
      %v7397 = vmul.f32 %v7376, %v7382
      %v7398 = vmul.f32 %v7377, %v7382
      %v7399 = vadd.f32 %v7346, %v7383
      %v7400 = vadd.f32 %v7347, %v7384
      %v7401 = vadd.f32 %v7348, %v7385
      %v7402 = vadd.f32 %v7349, %v7386
      %v7403 = vadd.f32 %v7350, %v7387
      %v7404 = vadd.f32 %v7351, %v7388
      %v7405 = vadd.f32 %v7352, %v7389
      %v7406 = vadd.f32 %v7353, %v7390
      %v7407 = vadd.f32 %v7354, %v7391
      %v7408 = vadd.f32 %v7355, %v7392
      %v7409 = vadd.f32 %v7356, %v7393
      %v7410 = vadd.f32 %v7357, %v7394
      %v7411 = vadd.f32 %v7358, %v7395
      %v7412 = vadd.f32 %v7359, %v7396
      %v7413 = vadd.f32 %v7360, %v7397
      %v7414 = vadd.f32 %v7361, %v7398
      %v7415 = vld [vmem:[%s7254 + $0x10] sm:$0xff]
      %v7416 = vld [vmem:[%s7254 + $0x18] sm:$0xff]
      %v7417 = vld [vmem:[%s7254 + $0x40] sm:$0xff]
      %v7418 = vld [vmem:[%s7254 + $0x48] sm:$0xff]
      %v7419 = vld [vmem:[%s7254 + $0x70] sm:$0xff]
      %v7420 = vld [vmem:[%s7254 + $0x78] sm:$0xff]
      %v7421 = vld [vmem:[%s7254 + $0xa0] sm:$0xff]
      %v7422 = vld [vmem:[%s7254 + $0xa8] sm:$0xff]
      %v7423 = vld [vmem:[%s7254 + $0xd0] sm:$0xff]
      %v7424 = vld [vmem:[%s7254 + $0xd8] sm:$0xff]
      %v7425 = vld [vmem:[%s7254 + $0x100] sm:$0xff]
      %v7426 = vld [vmem:[%s7254 + $0x108] sm:$0xff]
      %v7427 = vld [vmem:[%s7254 + $0x130] sm:$0xff]
      %v7428 = vld [vmem:[%s7254 + $0x138] sm:$0xff]
      %v7429 = vld [vmem:[%s7254 + $0x160] sm:$0xff]
      %v7430 = vld [vmem:[%s7254 + $0x168] sm:$0xff]
      %v7431 = vld [vmem:[%s7271 + $0x3] sm:$0x1]
      %v7432 = vlaneseq
      %v7433 = vshrl.u32 %v7432, 7
      %v7434 = vsub.s32 0, %v7433
      %v7435 = vrot.slane %v7431, %v7434
      %v7436 = vmul.f32 %v7415, %v7435
      %v7437 = vmul.f32 %v7416, %v7435
      %v7438 = vmul.f32 %v7417, %v7435
      %v7439 = vmul.f32 %v7418, %v7435
      %v7440 = vmul.f32 %v7419, %v7435
      %v7441 = vmul.f32 %v7420, %v7435
      %v7442 = vmul.f32 %v7421, %v7435
      %v7443 = vmul.f32 %v7422, %v7435
      %v7444 = vmul.f32 %v7423, %v7435
      %v7445 = vmul.f32 %v7424, %v7435
      %v7446 = vmul.f32 %v7425, %v7435
      %v7447 = vmul.f32 %v7426, %v7435
      %v7448 = vmul.f32 %v7427, %v7435
      %v7449 = vmul.f32 %v7428, %v7435
      %v7450 = vmul.f32 %v7429, %v7435
      %v7451 = vmul.f32 %v7430, %v7435
      %v7452 = vadd.f32 %v7399, %v7436
      %v7453 = vadd.f32 %v7400, %v7437
      %v7454 = vadd.f32 %v7401, %v7438
      %v7455 = vadd.f32 %v7402, %v7439
      %v7456 = vadd.f32 %v7403, %v7440
      %v7457 = vadd.f32 %v7404, %v7441
      %v7458 = vadd.f32 %v7405, %v7442
      %v7459 = vadd.f32 %v7406, %v7443
      %v7460 = vadd.f32 %v7407, %v7444
      %v7461 = vadd.f32 %v7408, %v7445
      %v7462 = vadd.f32 %v7409, %v7446
      %v7463 = vadd.f32 %v7410, %v7447
      %v7464 = vadd.f32 %v7411, %v7448
      %v7465 = vadd.f32 %v7412, %v7449
      %v7466 = vadd.f32 %v7413, %v7450
      %v7467 = vadd.f32 %v7414, %v7451
      %v7468 = vld [vmem:[%s7254 + $0x13] sm:$0xff]
      %v7469 = vld [vmem:[%s7254 + $0x1b] sm:$0xff]
      %v7470 = vld [vmem:[%s7254 + $0x43] sm:$0xff]
      %v7471 = vld [vmem:[%s7254 + $0x4b] sm:$0xff]
      %v7472 = vld [vmem:[%s7254 + $0x73] sm:$0xff]
      %v7473 = vld [vmem:[%s7254 + $0x7b] sm:$0xff]
      %v7474 = vld [vmem:[%s7254 + $0xa3] sm:$0xff]
      %v7475 = vld [vmem:[%s7254 + $0xab] sm:$0xff]
      %v7476 = vld [vmem:[%s7254 + $0xd3] sm:$0xff]
      %v7477 = vld [vmem:[%s7254 + $0xdb] sm:$0xff]
      %v7478 = vld [vmem:[%s7254 + $0x103] sm:$0xff]
      %v7479 = vld [vmem:[%s7254 + $0x10b] sm:$0xff]
      %v7480 = vld [vmem:[%s7254 + $0x133] sm:$0xff]
      %v7481 = vld [vmem:[%s7254 + $0x13b] sm:$0xff]
      %v7482 = vld [vmem:[%s7254 + $0x163] sm:$0xff]
      %v7483 = vld [vmem:[%s7254 + $0x16b] sm:$0xff]
      %v7484 = vld [vmem:[%s7271 + $0x4] sm:$0x1]
      %v7485 = vlaneseq
      %v7486 = vshrl.u32 %v7485, 7
      %v7487 = vsub.s32 0, %v7486
      %v7488 = vrot.slane %v7484, %v7487
      %v7489 = vmul.f32 %v7468, %v7488
      %v7490 = vmul.f32 %v7469, %v7488
      %v7491 = vmul.f32 %v7470, %v7488
      %v7492 = vmul.f32 %v7471, %v7488
      %v7493 = vmul.f32 %v7472, %v7488
      %v7494 = vmul.f32 %v7473, %v7488
      %v7495 = vmul.f32 %v7474, %v7488
      %v7496 = vmul.f32 %v7475, %v7488
      %v7497 = vmul.f32 %v7476, %v7488
      %v7498 = vmul.f32 %v7477, %v7488
      %v7499 = vmul.f32 %v7478, %v7488
      %v7500 = vmul.f32 %v7479, %v7488
      %v7501 = vmul.f32 %v7480, %v7488
      %v7502 = vmul.f32 %v7481, %v7488
      %v7503 = vmul.f32 %v7482, %v7488
      %v7504 = vmul.f32 %v7483, %v7488
      %v7505 = vadd.f32 %v7452, %v7489
      %v7506 = vadd.f32 %v7453, %v7490
      %v7507 = vadd.f32 %v7454, %v7491
      %v7508 = vadd.f32 %v7455, %v7492
      %v7509 = vadd.f32 %v7456, %v7493
      %v7510 = vadd.f32 %v7457, %v7494
      %v7511 = vadd.f32 %v7458, %v7495
      %v7512 = vadd.f32 %v7459, %v7496
      %v7513 = vadd.f32 %v7460, %v7497
      %v7514 = vadd.f32 %v7461, %v7498
      %v7515 = vadd.f32 %v7462, %v7499
      %v7516 = vadd.f32 %v7463, %v7500
      %v7517 = vadd.f32 %v7464, %v7501
      %v7518 = vadd.f32 %v7465, %v7502
      %v7519 = vadd.f32 %v7466, %v7503
      %v7520 = vadd.f32 %v7467, %v7504
      %v7521 = vld [vmem:[%s7254 + $0x16] sm:$0xff]
      %v7522 = vld [vmem:[%s7254 + $0x1e] sm:$0xff]
      %v7523 = vld [vmem:[%s7254 + $0x46] sm:$0xff]
      %v7524 = vld [vmem:[%s7254 + $0x4e] sm:$0xff]
      %v7525 = vld [vmem:[%s7254 + $0x76] sm:$0xff]
      %v7526 = vld [vmem:[%s7254 + $0x7e] sm:$0xff]
      %v7527 = vld [vmem:[%s7254 + $0xa6] sm:$0xff]
      %v7528 = vld [vmem:[%s7254 + $0xae] sm:$0xff]
      %v7529 = vld [vmem:[%s7254 + $0xd6] sm:$0xff]
      %v7530 = vld [vmem:[%s7254 + $0xde] sm:$0xff]
      %v7531 = vld [vmem:[%s7254 + $0x106] sm:$0xff]
      %v7532 = vld [vmem:[%s7254 + $0x10e] sm:$0xff]
      %v7533 = vld [vmem:[%s7254 + $0x136] sm:$0xff]
      %v7534 = vld [vmem:[%s7254 + $0x13e] sm:$0xff]
      %v7535 = vld [vmem:[%s7254 + $0x166] sm:$0xff]
      %v7536 = vld [vmem:[%s7254 + $0x16e] sm:$0xff]
      %v7537 = vld [vmem:[%s7271 + $0x5] sm:$0x1]
      %v7538 = vlaneseq
      %v7539 = vshrl.u32 %v7538, 7
      %v7540 = vsub.s32 0, %v7539
      %v7541 = vrot.slane %v7537, %v7540
      %v7542 = vmul.f32 %v7521, %v7541
      %v7543 = vmul.f32 %v7522, %v7541
      %v7544 = vmul.f32 %v7523, %v7541
      %v7545 = vmul.f32 %v7524, %v7541
      %v7546 = vmul.f32 %v7525, %v7541
      %v7547 = vmul.f32 %v7526, %v7541
      %v7548 = vmul.f32 %v7527, %v7541
      %v7549 = vmul.f32 %v7528, %v7541
      %v7550 = vmul.f32 %v7529, %v7541
      %v7551 = vmul.f32 %v7530, %v7541
      %v7552 = vmul.f32 %v7531, %v7541
      %v7553 = vmul.f32 %v7532, %v7541
      %v7554 = vmul.f32 %v7533, %v7541
      %v7555 = vmul.f32 %v7534, %v7541
      %v7556 = vmul.f32 %v7535, %v7541
      %v7557 = vmul.f32 %v7536, %v7541
      %v7558 = vadd.f32 %v7505, %v7542
      %v7559 = vadd.f32 %v7506, %v7543
      %v7560 = vadd.f32 %v7507, %v7544
      %v7561 = vadd.f32 %v7508, %v7545
      %v7562 = vadd.f32 %v7509, %v7546
      %v7563 = vadd.f32 %v7510, %v7547
      %v7564 = vadd.f32 %v7511, %v7548
      %v7565 = vadd.f32 %v7512, %v7549
      %v7566 = vadd.f32 %v7513, %v7550
      %v7567 = vadd.f32 %v7514, %v7551
      %v7568 = vadd.f32 %v7515, %v7552
      %v7569 = vadd.f32 %v7516, %v7553
      %v7570 = vadd.f32 %v7517, %v7554
      %v7571 = vadd.f32 %v7518, %v7555
      %v7572 = vadd.f32 %v7519, %v7556
      %v7573 = vadd.f32 %v7520, %v7557
      %v7574 = vld [vmem:[%s7254 + $0x19] sm:$0xff]
      %v7575 = vld [vmem:[%s7254 + $0x21] sm:$0xff]
      %v7576 = vld [vmem:[%s7254 + $0x49] sm:$0xff]
      %v7577 = vld [vmem:[%s7254 + $0x51] sm:$0xff]
      %v7578 = vld [vmem:[%s7254 + $0x79] sm:$0xff]
      %v7579 = vld [vmem:[%s7254 + $0x81] sm:$0xff]
      %v7580 = vld [vmem:[%s7254 + $0xa9] sm:$0xff]
      %v7581 = vld [vmem:[%s7254 + $0xb1] sm:$0xff]
      %v7582 = vld [vmem:[%s7254 + $0xd9] sm:$0xff]
      %v7583 = vld [vmem:[%s7254 + $0xe1] sm:$0xff]
      %v7584 = vld [vmem:[%s7254 + $0x109] sm:$0xff]
      %v7585 = vld [vmem:[%s7254 + $0x111] sm:$0xff]
      %v7586 = vld [vmem:[%s7254 + $0x139] sm:$0xff]
      %v7587 = vld [vmem:[%s7254 + $0x141] sm:$0xff]
      %v7588 = vld [vmem:[%s7254 + $0x169] sm:$0xff]
      %v7589 = vld [vmem:[%s7254 + $0x171] sm:$0xff]
      %v7590 = vld [vmem:[%s7271 + $0x6] sm:$0x1]
      %v7591 = vlaneseq
      %v7592 = vshrl.u32 %v7591, 7
      %v7593 = vsub.s32 0, %v7592
      %v7594 = vrot.slane %v7590, %v7593
      %v7595 = vmul.f32 %v7574, %v7594
      %v7596 = vmul.f32 %v7575, %v7594
      %v7597 = vmul.f32 %v7576, %v7594
      %v7598 = vmul.f32 %v7577, %v7594
      %v7599 = vmul.f32 %v7578, %v7594
      %v7600 = vmul.f32 %v7579, %v7594
      %v7601 = vmul.f32 %v7580, %v7594
      %v7602 = vmul.f32 %v7581, %v7594
      %v7603 = vmul.f32 %v7582, %v7594
      %v7604 = vmul.f32 %v7583, %v7594
      %v7605 = vmul.f32 %v7584, %v7594
      %v7606 = vmul.f32 %v7585, %v7594
      %v7607 = vmul.f32 %v7586, %v7594
      %v7608 = vmul.f32 %v7587, %v7594
      %v7609 = vmul.f32 %v7588, %v7594
      %v7610 = vmul.f32 %v7589, %v7594
      %v7611 = vadd.f32 %v7558, %v7595
      %v7612 = vadd.f32 %v7559, %v7596
      %v7613 = vadd.f32 %v7560, %v7597
      %v7614 = vadd.f32 %v7561, %v7598
      %v7615 = vadd.f32 %v7562, %v7599
      %v7616 = vadd.f32 %v7563, %v7600
      %v7617 = vadd.f32 %v7564, %v7601
      %v7618 = vadd.f32 %v7565, %v7602
      %v7619 = vadd.f32 %v7566, %v7603
      %v7620 = vadd.f32 %v7567, %v7604
      %v7621 = vadd.f32 %v7568, %v7605
      %v7622 = vadd.f32 %v7569, %v7606
      %v7623 = vadd.f32 %v7570, %v7607
      %v7624 = vadd.f32 %v7571, %v7608
      %v7625 = vadd.f32 %v7572, %v7609
      %v7626 = vadd.f32 %v7573, %v7610
      %v7627 = vld [vmem:[%s4] sm:$0xff]
      %v7628 = vld [vmem:[%s4 + $0x8] sm:$0xff]
      %v7629 = vld [vmem:[%s4 + $0x10] sm:$0xff]
      %v7630 = vld [vmem:[%s4 + $0x18] sm:$0xff]
      %v7631 = vld [vmem:[%s4 + $0x20] sm:$0xff]
      %v7632 = vld [vmem:[%s4 + $0x28] sm:$0xff]
      %v7633 = vld [vmem:[%s4 + $0x30] sm:$0xff]
      %v7634 = vld [vmem:[%s4 + $0x38] sm:$0xff]
      %v7635 = vld [vmem:[%s4 + $0x40] sm:$0xff]
      %v7636 = vld [vmem:[%s4 + $0x48] sm:$0xff]
      %v7637 = vld [vmem:[%s4 + $0x50] sm:$0xff]
      %v7638 = vld [vmem:[%s4 + $0x58] sm:$0xff]
      %v7639 = vld [vmem:[%s4 + $0x60] sm:$0xff]
      %v7640 = vld [vmem:[%s4 + $0x68] sm:$0xff]
      %v7641 = vld [vmem:[%s4 + $0x70] sm:$0xff]
      %v7642 = vld [vmem:[%s4 + $0x78] sm:$0xff]
      %7643 = vmatprep.subr.mxu0 0.0
      %7644 = vmatpush1.msra.mxu0 %v7627
      %7645 = vmatprep.subr.mxu0 0.0
      %7646 = vmatpush1.msra.mxu0 %v7628
      %7647 = vmatprep.subr.mxu0 0.0
      %7648 = vmatpush1.msra.mxu0 %v7629
      %7649 = vmatprep.subr.mxu0 0.0
      %7650 = vmatpush1.msra.mxu0 %v7630
      %7651 = vmatprep.subr.mxu0 0.0
      %7652 = vmatpush1.msra.mxu0 %v7631
      %7653 = vmatprep.subr.mxu0 0.0
      %7654 = vmatpush1.msra.mxu0 %v7632
      %7655 = vmatprep.subr.mxu0 0.0
      %7656 = vmatpush1.msra.mxu0 %v7633
      %7657 = vmatprep.subr.mxu0 0.0
      %7658 = vmatpush1.msra.mxu0 %v7634
      %7659 = vmatprep.subr.mxu0 0.0
      %7660 = vmatpush1.msra.mxu0 %v7635
      %7661 = vmatprep.subr.mxu0 0.0
      %7662 = vmatpush1.msra.mxu0 %v7636
      %7663 = vmatprep.subr.mxu0 0.0
      %7664 = vmatpush1.msra.mxu0 %v7637
      %7665 = vmatprep.subr.mxu0 0.0
      %7666 = vmatpush1.msra.mxu0 %v7638
      %7667 = vmatprep.subr.mxu0 0.0
      %7668 = vmatpush1.msra.mxu0 %v7639
      %7669 = vmatprep.subr.mxu0 0.0
      %7670 = vmatpush1.msra.mxu0 %v7640
      %7671 = vmatprep.subr.mxu0 0.0
      %7672 = vmatpush1.msra.mxu0 %v7641
      %7673 = vmatprep.subr.mxu0 0.0
      %7674 = vmatpush1.msra.mxu0 %v7642
      %7675 = vmatprep.subr.mxu0 0.0
      %7676 = vmatpush1.msra.mxu0 0.0
      %7677 = vmatprep.subr.mxu0 0.0
      %7678 = vmatpush1.msra.mxu0 0.0
      %7679 = vmatprep.subr.mxu0 0.0
      %7680 = vmatpush1.msra.mxu0 0.0
      %7681 = vmatprep.subr.mxu0 0.0
      %7682 = vmatpush1.msra.mxu0 0.0
      %7683 = vmatprep.subr.mxu0 0.0
      %7684 = vmatpush1.msra.mxu0 0.0
      %7685 = vmatprep.subr.mxu0 0.0
      %7686 = vmatpush1.msra.mxu0 0.0
      %7687 = vmatprep.subr.mxu0 0.0
      %7688 = vmatpush1.msra.mxu0 0.0
      %7689 = vmatprep.subr.mxu0 0.0
      %7690 = vmatpush1.msra.mxu0 0.0
      %7691 = vmatprep.subr.mxu0 0.0
      %7692 = vmatpush1.msra.mxu0 0.0
      %7693 = vmatprep.subr.mxu0 0.0
      %7694 = vmatpush1.msra.mxu0 0.0
      %7695 = vmatprep.subr.mxu0 0.0
      %7696 = vmatpush1.msra.mxu0 0.0
      %7697 = vmatprep.subr.mxu0 0.0
      %7698 = vmatpush1.msra.mxu0 0.0
      %7699 = vmatprep.subr.mxu0 0.0
      %7700 = vmatpush1.msra.mxu0 0.0
      %7701 = vmatprep.subr.mxu0 0.0
      %7702 = vmatpush1.msra.mxu0 0.0
      %7703 = vmatprep.subr.mxu0 0.0
      %7704 = vmatpush1.msra.mxu0 0.0
      %7705 = vmatprep.subr.mxu0 0.0
      %7706 = vmatpush1.msra.mxu0 0.0
      %7707 = vmatprep.mubr.f32.mxu0 0.0
      %7708 = vmatmul.mubr.f32.gmra.mrb[0].mxu0 %v7611
      %v7709 = vpop.f32.mrb[0].mxu0
      %v7710 = vadd.f32 0.0, %v7709
      %v7711 = vpop.f32.mrb[0].mxu0
      %7712 = vmatprep.mubr.f32.mxu0 0.0
      %7713 = vmatmul.mubr.f32.gmra.mrb[0].mxu0 %v7612
      %v7714 = vpop.f32.mrb[0].mxu0
      %v7715 = vadd.f32 0.0, %v7714
      %v7716 = vpop.f32.mrb[0].mxu0
      %7717 = vmatprep.mubr.f32.mxu0 0.0
      %7718 = vmatmul.mubr.f32.gmra.mrb[0].mxu0 %v7613
      %v7719 = vpop.f32.mrb[0].mxu0
      %v7720 = vadd.f32 0.0, %v7719
      %v7721 = vpop.f32.mrb[0].mxu0
      %7722 = vmatprep.mubr.f32.mxu0 0.0
      %7723 = vmatmul.mubr.f32.gmra.mrb[0].mxu0 %v7614
      %v7724 = vpop.f32.mrb[0].mxu0
      %v7725 = vadd.f32 0.0, %v7724
      %v7726 = vpop.f32.mrb[0].mxu0
      %7727 = vmatprep.mubr.f32.mxu0 0.0
      %7728 = vmatmul.mubr.f32.gmra.mrb[0].mxu0 %v7615
      %v7729 = vpop.f32.mrb[0].mxu0
      %v7730 = vadd.f32 0.0, %v7729
      %v7731 = vpop.f32.mrb[0].mxu0
      %7732 = vmatprep.mubr.f32.mxu0 0.0
      %7733 = vmatmul.mubr.f32.gmra.mrb[0].mxu0 %v7616
      %v7734 = vpop.f32.mrb[0].mxu0
      %v7735 = vadd.f32 0.0, %v7734
      %v7736 = vpop.f32.mrb[0].mxu0
      %7737 = vmatprep.mubr.f32.mxu0 0.0
      %7738 = vmatmul.mubr.f32.gmra.mrb[0].mxu0 %v7617
      %v7739 = vpop.f32.mrb[0].mxu0
      %v7740 = vadd.f32 0.0, %v7739
      %v7741 = vpop.f32.mrb[0].mxu0
      %7742 = vmatprep.mubr.f32.mxu0 0.0
      %7743 = vmatmul.mubr.f32.gmra.mrb[0].mxu0 %v7618
      %v7744 = vpop.f32.mrb[0].mxu0
      %v7745 = vadd.f32 0.0, %v7744
      %v7746 = vpop.f32.mrb[0].mxu0
      %7747 = vmatprep.mubr.f32.mxu0 0.0
      %7748 = vmatmul.mubr.f32.gmra.mrb[0].mxu0 %v7619
      %v7749 = vpop.f32.mrb[0].mxu0
      %v7750 = vadd.f32 0.0, %v7749
      %v7751 = vpop.f32.mrb[0].mxu0
      %7752 = vmatprep.mubr.f32.mxu0 0.0
      %7753 = vmatmul.mubr.f32.gmra.mrb[0].mxu0 %v7620
      %v7754 = vpop.f32.mrb[0].mxu0
      %v7755 = vadd.f32 0.0, %v7754
      %v7756 = vpop.f32.mrb[0].mxu0
      %7757 = vmatprep.mubr.f32.mxu0 0.0
      %7758 = vmatmul.mubr.f32.gmra.mrb[0].mxu0 %v7621
      %v7759 = vpop.f32.mrb[0].mxu0
      %v7760 = vadd.f32 0.0, %v7759
      %v7761 = vpop.f32.mrb[0].mxu0
      %7762 = vmatprep.mubr.f32.mxu0 0.0
      %7763 = vmatmul.mubr.f32.gmra.mrb[0].mxu0 %v7622
      %v7764 = vpop.f32.mrb[0].mxu0
      %v7765 = vadd.f32 0.0, %v7764
      %v7766 = vpop.f32.mrb[0].mxu0
      %7767 = vmatprep.mubr.f32.mxu0 0.0
      %7768 = vmatmul.mubr.f32.gmra.mrb[0].mxu0 %v7623
      %v7769 = vpop.f32.mrb[0].mxu0
      %v7770 = vadd.f32 0.0, %v7769
      %v7771 = vpop.f32.mrb[0].mxu0
      %7772 = vmatprep.mubr.f32.mxu0 0.0
      %7773 = vmatmul.mubr.f32.gmra.mrb[0].mxu0 %v7624
      %v7774 = vpop.f32.mrb[0].mxu0
      %v7775 = vadd.f32 0.0, %v7774
      %v7776 = vpop.f32.mrb[0].mxu0
      %7777 = vmatprep.mubr.f32.mxu0 0.0
      %7778 = vmatmul.mubr.f32.gmra.mrb[0].mxu0 %v7625
      %v7779 = vpop.f32.mrb[0].mxu0
      %v7780 = vadd.f32 0.0, %v7779
      %v7781 = vpop.f32.mrb[0].mxu0
      %7782 = vmatprep.mubr.f32.mxu0 0.0
      %7783 = vmatmul.mubr.f32.gmra.mrb[0].mxu0 %v7626
      %v7784 = vpop.f32.mrb[0].mxu0
      %v7785 = vadd.f32 0.0, %v7784
      %v7786 = vpop.f32.mrb[0].mxu0
      %7787 = vdwg.mxu0
      %v7788 = vld [vmem:[%s5] sm:$0x1]
      %v7790 = vlaneseq
      %v7791 = vshrl.u32 %v7790, 7
      %v7792 = vsub.s32 0, %v7791
      %v7793 = vrot.slane %v7788, %v7792
      %v7795 = vadd.f32 %v7710, %v7793
      %v7796 = vadd.f32 %v7715, %v7793
      %v7797 = vadd.f32 %v7720, %v7793
      %v7798 = vadd.f32 %v7725, %v7793
      %v7799 = vadd.f32 %v7730, %v7793
      %v7800 = vadd.f32 %v7735, %v7793
      %v7801 = vadd.f32 %v7740, %v7793
      %v7802 = vadd.f32 %v7745, %v7793
      %v7803 = vadd.f32 %v7750, %v7793
      %v7804 = vadd.f32 %v7755, %v7793
      %v7805 = vadd.f32 %v7760, %v7793
      %v7806 = vadd.f32 %v7765, %v7793
      %v7807 = vadd.f32 %v7770, %v7793
      %v7808 = vadd.f32 %v7775, %v7793
      %v7809 = vadd.f32 %v7780, %v7793
      %v7810 = vadd.f32 %v7785, %v7793
      %s7811 = scalar_lea.vmem [#allocation2], 352
      %v7812 = vld [vmem:[%s7811 + $0x8] sm:$0xff]
      %v7813 = vld [vmem:[%s7811 + $0x10] sm:$0xff]
      %v7814 = vld [vmem:[%s7811 + $0x28] sm:$0xff]
      %v7815 = vld [vmem:[%s7811 + $0x30] sm:$0xff]
      %v7816 = vld [vmem:[%s7811 + $0x48] sm:$0xff]
      %v7817 = vld [vmem:[%s7811 + $0x50] sm:$0xff]
      %v7818 = vld [vmem:[%s7811 + $0x68] sm:$0xff]
      %v7819 = vld [vmem:[%s7811 + $0x70] sm:$0xff]
      %v7820 = vld [vmem:[%s7811 + $0x88] sm:$0xff]
      %v7821 = vld [vmem:[%s7811 + $0x90] sm:$0xff]
      %v7822 = vld [vmem:[%s7811 + $0xa8] sm:$0xff]
      %v7823 = vld [vmem:[%s7811 + $0xb0] sm:$0xff]
      %v7824 = vld [vmem:[%s7811 + $0xc8] sm:$0xff]
      %v7825 = vld [vmem:[%s7811 + $0xd0] sm:$0xff]
      %v7826 = vld [vmem:[%s7811 + $0xe8] sm:$0xff]
      %v7827 = vld [vmem:[%s7811 + $0xf0] sm:$0xff]
      %v7828 = vmul.f32 %v7812, %v7795
      %v7829 = vmul.f32 %v7813, %v7796
      %v7830 = vmul.f32 %v7814, %v7797
      %v7831 = vmul.f32 %v7815, %v7798
      %v7832 = vmul.f32 %v7816, %v7799
      %v7833 = vmul.f32 %v7817, %v7800
      %v7834 = vmul.f32 %v7818, %v7801
      %v7835 = vmul.f32 %v7819, %v7802
      %v7836 = vmul.f32 %v7820, %v7803
      %v7837 = vmul.f32 %v7821, %v7804
      %v7838 = vmul.f32 %v7822, %v7805
      %v7839 = vmul.f32 %v7823, %v7806
      %v7840 = vmul.f32 %v7824, %v7807
      %v7841 = vmul.f32 %v7825, %v7808
      %v7842 = vmul.f32 %v7826, %v7809
      %v7843 = vmul.f32 %v7827, %v7810
      %7844 = vst [vmem:[%s229] sm:$0xff] %v7828
      %7845 = vst [vmem:[%s229 + $0x8] sm:$0xff] %v7829
      %7846 = vst [vmem:[%s229 + $0x10] sm:$0xff] %v7830
      %7847 = vst [vmem:[%s229 + $0x18] sm:$0xff] %v7831
      %7848 = vst [vmem:[%s229 + $0x20] sm:$0xff] %v7832
      %7849 = vst [vmem:[%s229 + $0x28] sm:$0xff] %v7833
      %7850 = vst [vmem:[%s229 + $0x30] sm:$0xff] %v7834
      %7851 = vst [vmem:[%s229 + $0x38] sm:$0xff] %v7835
      %7852 = vst [vmem:[%s229 + $0x40] sm:$0xff] %v7836
      %7853 = vst [vmem:[%s229 + $0x48] sm:$0xff] %v7837
      %7854 = vst [vmem:[%s229 + $0x50] sm:$0xff] %v7838
      %7855 = vst [vmem:[%s229 + $0x58] sm:$0xff] %v7839
      %7856 = vst [vmem:[%s229 + $0x60] sm:$0xff] %v7840
      %7857 = vst [vmem:[%s229 + $0x68] sm:$0xff] %v7841
      %7858 = vst [vmem:[%s229 + $0x70] sm:$0xff] %v7842
      %7859 = vst [vmem:[%s229 + $0x78] sm:$0xff] %v7843
      %s7860 = smul.u32 8, %s22
      %p7861 = scmp.lt.s32.totalorder %s21, 1
      %s7862 = scalar_select %p7861, %s21, 1
      %p7863 = scmp.lt.s32.totalorder %s7860, 15
      %s7864 = scalar_select %p7863, %s7860, 15
      %s7865 = smul.addr %s7864, 2
      %s7866 = smul.addr %s7862, 32
      %s7867 = sadd.s32 %s7865, %s7866
      %s7868 = smul.addr %s7867, 8
      %s7869 = scalar_lea.vmem %s6, %s7868
      // Predicated region
      $region75: #{lka_forward.1} parent=39 // pred_check
        %p7870 = pneg %p154
      $region76: #{lka_forward.1} parent=39 // pred_check_branch
        %7872 = sbr.rel (%p7870) target = $region78
      $region77: #{lka_forward.1} parent=39 // pred_region
        %s7873 = smul.u32 8, %s22
      $region78: #{lka_forward.1} parent=39 // pred_fallthru
        _
    $region40: #{lka_forward.1} parent=5 // pred_fallthru
      _
    %p7874 = scmp.le.s32.totalorder 2, %s12
    // Predicated region
    $region79: #{lka_forward.1} parent=5 // pred_check
      %p7875 = pneg %p7874
    $region80: #{lka_forward.1} parent=5 // pred_check_branch
      %7877 = sbr.rel (%p7875) target = $region82
    $region81: #{lka_forward.1} parent=5 // pred_region
      %s7878 = ssub.s32 %s12, 2
      // Predicated region
      $region83: #{lka_forward.1} parent=81 // pred_check
        %p7879 = pneg %p160
      $region84: #{lka_forward.1} parent=81 // pred_check_branch
        %7881 = sbr.rel (%p7879) target = $region86
      $region85: #{lka_forward.1} parent=81 // pred_region
        %s7882 = smul.u32 8, %s24
        %p7883 = scmp.lt.s32.totalorder %s23, 1
        %s7884 = scalar_select %p7883, %s23, 1
        %p7885 = scmp.lt.s32.totalorder %s7882, 15
        %s7886 = scalar_select %p7885, %s7882, 15
        %s7887 = smul.addr %s7886, 2
        %s7888 = smul.addr %s7884, 32
        %s7889 = sadd.s32 %s7887, %s7888
        %s7890 = smul.addr %s7889, 8
        %s7891 = scalar_lea.vmem %s6, %s7890
      $region86: #{lka_forward.1} parent=81 // pred_fallthru
        _
    $region82: #{lka_forward.1} parent=5 // pred_fallthru
      _
  $region6: #{lka_forward.1} parent=0 // loop_footer
    %s16 = sadd.s32 1, %s12
  $region7: #{lka_forward.1} parent=0 // loop_footer_branch
    %11 = sbr.rel target = $region3
  $region8: #{lka_forward.1} parent=0 // loop_exit
    _
  %7892 = vsyncmov [#allocation4]
  %s7893 = vpop.sfrf %7892
  %p7894 = scmp.eq.s32.totalorder %s7893, 0
  %p7895 = pneg %p7894
  %7897 = shalt.err (%p7895)

</llo_original>
